<compile_context>
chip_gen: v7x
topology: tpu7x:2x2x1
jax: 0.10.0
libtpu: 0.0.40
codegen_flags: <defaults>
</compile_context>

<pallas_src>
import functools

import numpy as np

import jax
import jax.numpy as jnp
from jax.experimental import pallas as pl
from jax.experimental.pallas import tpu as pltpu


# ----------------------------------------------------------------------------
# Fused kernel
# ----------------------------------------------------------------------------
def _softmax_last(x):
    m = jnp.max(x, axis=-1, keepdims=True)
    e = jnp.exp(x - m)
    return e * pl.reciprocal(jnp.sum(e, axis=-1, keepdims=True), approx=True)


def _rcu_fused_kernel(xyp_ref, wcat_ref, bcat_ref, wqkx_ref, bqkx_ref,
                      wqky_ref, bqky_ref, w6a_ref, w6b_ref, b6_ref,
                      ws_ref, bs_ref, o_ref, img_ref, *, C, H, W):
    """Whole RCU / ReverseStage forward for one batch element.

    xyp_ref : (H+2, W+2, C+1)  spatially zero-padded NHWC [x | 1-sigmoid(y)]
    wcat_ref: (9, C+1, 2C)     per-tap weights of "conv" (cols 0..C-1, Cin
                               permuted + summed y taps) and "conv1_32"
                               (cols C..2C-1, only the y_r row is non-zero)
    o_ref   : (H*W, 1)         updated y, pixel-major
    img_ref : (H+2, W+2, C)    VMEM scratch: zero-padded x_new image for score
    """
    f32 = jnp.float32
    HW = H * W
    CIN = xyp_ref.shape[-1]                     # C + 1
    NT = (((1,), (1,)), ((), ()))               # A @ B^T
    TN = (((0,), (0,)), ((), ()))               # A^T @ B

    # ---- fused 3x3 convs: "conv" (-> x1, ReLU) and "conv1_32" (-> x2) ------
    # Only 3 kw-shifted copies of the padded input (the kh shift is a free
    # leading-axis slice); per tap: one matmul (K=C+1, N=2C) into a local
    # accumulator, biases folded into the init, single epilogue use.
    xw = [xyp_ref[:, kw:kw + W, :] for kw in range(3)]       # (Hp, W, CIN)
    acc = jnp.broadcast_to(bcat_ref[...], (HW, 2 * C)).astype(f32)
    for k in range(9):
        kh, kw = divmod(k, 3)
        patch = xw[kw][kh:kh + H].reshape(HW, CIN)           # no-op re-tile
        acc = acc + jnp.dot(patch, wcat_ref[k], preferred_element_type=f32)
    x1 = jnp.maximum(acc[:, :C], 0.0)                        # (HW, C)
    x2 = acc[:, C:2 * C]                                     # (HW, C)

    # Residual x and reversed y come straight from the tap-(1,1) window.
    win = xw[1][1:1 + H].reshape(HW, CIN)
    x_res = win[:, :C]                                       # original x
    y_rev = win[:, C:C + 1]                                  # 1 - sigmoid(y)

    # ---- six 1x1 convs (two fused matmuls) + dual attention + conv6 --------
    qkx = jnp.dot(x1, wqkx_ref[...], preferred_element_type=f32) + bqkx_ref[...]
    qky = jnp.dot(x2, wqky_ref[...], preferred_element_type=f32) + bqky_ref[...]
    q1, k1 = qkx[:, 0:C], qkx[:, C:2 * C]
    q2, k2 = qkx[:, 2 * C:3 * C], qkx[:, 3 * C:4 * C]
    yq, yk = qky[:, 0:C], qky[:, C:2 * C]

    # spatial attention: p_hw[a,b] = softmax_b( sum_c q1[a,c] k2[b,c] )
    p_hw = _softmax_last(
        jax.lax.dot_general(q1, k2, NT, preferred_element_type=f32))
    # channel attention: p_c[i,j] = softmax_j( sum_p k1[p,i] q2[p,j] )
    p_c = _softmax_last(
        jax.lax.dot_general(k1, q2, TN, preferred_element_type=f32))

    xy_hw = jax.lax.dot_general(p_hw, yq, TN, preferred_element_type=f32)
    xy_c = jnp.dot(yk, p_c, preferred_element_type=f32)

    x_new = (x_res
             + jnp.dot(xy_hw, w6a_ref[...], preferred_element_type=f32)
             + jnp.dot(xy_c, w6b_ref[...], preferred_element_type=f32)
             + b6_ref[...])                                  # (HW, C)

    # ---- score 3x3 conv (C -> 1) on x_new, plus the reversed-y residual ----
    img_ref[...] = jnp.zeros_like(img_ref)          # zero border every step
    img_ref[1:1 + H, 1:1 + W, :] = x_new.reshape(H, W, C)
    iw = [img_ref[:, kw:kw + W, :] for kw in range(3)]
    score = jnp.broadcast_to(bs_ref[...], (HW, 1)).astype(f32)
    for k in range(9):
        kh, kw = divmod(k, 3)
        patch = iw[kw][kh:kh + H].reshape(HW, C)
        score = score + jnp.sum(patch * ws_ref[k], axis=-1, keepdims=True)

    o_ref[...] = (y_rev + score).astype(o_ref.dtype)


def _rcu_fused(xyp, w_cat, b_cat, wqkx, bqkx, wqky, bqky, w6a, w6b, b6,
               ws, bs, *, C):
    Bn, Hp, Wp, CIN = xyp.shape
    H, W = Hp - 2, Wp - 2
    HW = H * W
    kern = functools.partial(_rcu_fused_kernel, C=C, H=H, W=W)

    def rep(shape):
        n = len(shape)
        return pl.BlockSpec(shape, lambda b, _n=n: (0,) * _n)

    return pl.pallas_call(
        kern,
        out_shape=jax.ShapeDtypeStruct((Bn, HW, 1), jnp.float32),
        grid_spec=pltpu.PrefetchScalarGridSpec(
            num_scalar_prefetch=0,
            grid=(Bn,),
            in_specs=[
                pl.BlockSpec((None, Hp, Wp, CIN), lambda b: (b, 0, 0, 0)),
                rep(w_cat.shape), rep(b_cat.shape),
                rep(wqkx.shape), rep(bqkx.shape),
                rep(wqky.shape), rep(bqky.shape),
                rep(w6a.shape), rep(w6b.shape), rep(b6.shape),
                rep(ws.shape), rep(bs.shape),
            ],
            out_specs=pl.BlockSpec((None, HW, 1), lambda b: (b, 0, 0)),
            scratch_shapes=[pltpu.VMEM((Hp, Wp, C), jnp.float32)],
        ),
        compiler_params=pltpu.CompilerParams(
            dimension_semantics=("parallel",)),
    )(xyp, w_cat, b_cat, wqkx, bqkx, wqky, bqky, w6a, w6b, b6, ws, bs)


# ----------------------------------------------------------------------------
# One-time weight packing (outside the jitted forward)
# ----------------------------------------------------------------------------
def pack_reverse_stage_params(params, C=32):
    """Repack torch-layout conv weights into the kernel's fused layouts."""
    assert C == 32, "RCU's 1x1 attention convs are hard-wired to 32 channels"
    f32 = jnp.float32
    group = C // 8
    sub = C // group

    # "conv": permute the Cin axis so x channels come first, and sum the
    # `group` y positions into a single y_r input row (removes the interleave
    # concat at zero runtime cost).
    wconv = jnp.asarray(params["conv_w"], f32)               # (C, C+group, 3, 3)
    xin = np.array([(c // sub) * (sub + 1) + (c % sub) for c in range(C)])
    yin = np.array([g * (sub + 1) + sub for g in range(group)])
    wx = jnp.transpose(wconv[:, xin], (2, 3, 1, 0)).reshape(9, C, C)
    wy = jnp.transpose(wconv[:, yin].sum(axis=1), (1, 2, 0)).reshape(9, 1, C)
    w32 = jnp.transpose(jnp.asarray(params["conv1_32_w"], f32)[:, 0],
                        (1, 2, 0)).reshape(9, 1, C)
    # per-tap combined weight: rows 0..C-1 = x channels, row C = y_r channel;
    # cols 0..C-1 feed "conv" (x1), cols C..2C-1 feed "conv1_32" (x2).
    w_cat = jnp.zeros((9, C + 1, 2 * C), f32)
    w_cat = w_cat.at[:, :C, :C].set(wx)
    w_cat = w_cat.at[:, C:, :C].set(wy)
    w_cat = w_cat.at[:, C:, C:].set(w32)
    b_cat = jnp.concatenate(
        [jnp.asarray(params["conv_b"], f32),
         jnp.asarray(params["conv1_32_b"], f32)]).reshape(1, 2 * C)

    def cat1x1(names):
        Wm = jnp.concatenate(
            [jnp.asarray(params[n + "_w"], f32).reshape(C, C).T for n in names],
            axis=1)
        Bv = jnp.concatenate([jnp.asarray(params[n + "_b"], f32) for n in names])
        return Wm, Bv.reshape(1, -1)

    wqkx, bqkx = cat1x1(["q1", "k1", "q2", "k2"])            # (C, 4C), (1, 4C)
    wqky, bqky = cat1x1(["q3", "k3"])                        # (C, 2C), (1, 2C)

    w6 = jnp.asarray(params["conv6_w"], f32).reshape(C, 2 * C)
    ws = jnp.transpose(jnp.asarray(params["score_w"], f32)[0],
                       (1, 2, 0)).reshape(9, C)

    return {
        "w_cat": w_cat, "b_cat": b_cat,
        "wqkx": wqkx, "bqkx": bqkx, "wqky": wqky, "bqky": bqky,
        "w6a": w6[:, :C].T, "w6b": w6[:, C:].T,
        "b6": jnp.asarray(params["conv6_b"], f32).reshape(1, C),
        "ws": ws, "bs": jnp.asarray(params["score_b"], f32).reshape(1, 1),
    }


# ----------------------------------------------------------------------------
# ReverseStage forward
# ----------------------------------------------------------------------------
def reverse_stage_forward(x, y, packed):
    """x: (B, C, H, W) NCHW, y: (B, 1, H, W). Returns updated y (B, 1, H, W)."""
    B, C, H, W = x.shape
    # Tiny XLA prologue: reversed sigmoid + NHWC layout + spatial zero pad.
    # (Zero padding is correct for both convs since they pad their inputs.)
    y_r = 1.0 - jax.nn.sigmoid(y)                            # (B, 1, H, W)
    x_nhwc = jnp.transpose(x, (0, 2, 3, 1))                  # (B, H, W, C)
    y_nhwc = jnp.transpose(y_r, (0, 2, 3, 1))                # (B, H, W, 1)
    xyp = jnp.pad(jnp.concatenate([x_nhwc, y_nhwc], axis=-1),
                  ((0, 0), (1, 1), (1, 1), (0, 0)))          # (B, H+2, W+2, C+1)

    y_flat = _rcu_fused(
        xyp, packed["w_cat"], packed["b_cat"], packed["wqkx"], packed["bqkx"],
        packed["wqky"], packed["bqky"], packed["w6a"], packed["w6b"],
        packed["b6"], packed["ws"], packed["bs"], C=C)       # (B, H*W, 1)
    return y_flat.reshape(B, 1, H, W)


# ----------------------------------------------------------------------------
# Pure-JAX reference (HIGHEST precision) for the correctness check
# ----------------------------------------------------------------------------
def _reference(x, y, p):
    P = jax.lax.Precision.HIGHEST

    def conv2d(inp, w, b, pad):
        out = jax.lax.conv_general_dilated(
            inp, w, window_strides=(1, 1),
            padding=[(pad, pad), (pad, pad)],
            dimension_numbers=("NCHW", "OIHW", "NCHW"), precision=P)
        return out + b[None, :, None, None]

    B, C, H, W = x.shape
    HW = H * W
    group = C // 8
    sub = C // group

    y_r = 1.0 - jax.nn.sigmoid(y)
    parts = []
    for g in range(group):
        parts.append(x[:, g * sub:(g + 1) * sub])
        parts.append(y_r)
    x_cat = jnp.concatenate(parts, axis=1)

    x1 = jax.nn.relu(conv2d(x_cat, p["conv_w"], p["conv_b"], 1))
    x2 = conv2d(y_r, p["conv1_32_w"], p["conv1_32_b"], 1)

    q1 = conv2d(x1, p["q1_w"], p["q1_b"], 0).reshape(B, C, HW)
    k1 = conv2d(x1, p["k1_w"], p["k1_b"], 0).reshape(B, C, HW)
    q2 = conv2d(x1, p["q2_w"], p["q2_b"], 0).reshape(B, C, HW)
    k2 = conv2d(x1, p["k2_w"], p["k2_b"], 0).reshape(B, C, HW)
    yq = conv2d(x2, p["q3_w"], p["q3_b"], 0).reshape(B, C, HW)
    yk = conv2d(x2, p["k3_w"], p["k3_b"], 0).reshape(B, C, HW)

    x_hw = jax.nn.softmax(jnp.einsum("bcp,bcq->bpq", q1, k2, precision=P), -1)
    x_c = jax.nn.softmax(jnp.einsum("bip,bjp->bij", k1, q2, precision=P), -1)
    xy_hw = jnp.einsum("bcp,bpq->bcq", yq, x_hw, precision=P).reshape(B, C, H, W)
    xy_c = jnp.einsum("bij,bip->bjp", x_c, yk, precision=P).reshape(B, C, H, W)

    out_final = conv2d(jnp.concatenate([xy_hw, xy_c], axis=1),
                       p["conv6_w"], p["conv6_b"], 0)
    x_new = x + out_final
    y_new = y_r + conv2d(x_new, p["score_w"], p["score_b"], 1)
    return y_new


# ----------------------------------------------------------------------------
if __name__ == "__main__":
    # RCU's 1x1 convs are hard-wired 32->32, so channel must be 32; group = 4.
    B, C, H, W = 2, 32, 16, 16
    group = C // 8

    key = jax.random.PRNGKey(0)
    keys = jax.random.split(key, 22)

    def rnd(k, shape, scale=0.1):
        return jax.random.normal(k, shape, dtype=jnp.float32) * scale

    x = jax.random.normal(keys[0], (B, C, H, W), dtype=jnp.float32)
    y = jax.random.normal(keys[1], (B, 1, H, W), dtype=jnp.float32)

    params = {
        "conv_w": rnd(keys[2], (C, C + group, 3, 3)),
        "conv_b": rnd(keys[3], (C,)),
        "conv1_32_w": rnd(keys[4], (32, 1, 3, 3)),
        "conv1_32_b": rnd(keys[5], (32,)),
        "q1_w": rnd(keys[6], (32, 32, 1, 1)), "q1_b": rnd(keys[7], (32,)),
        "k1_w": rnd(keys[8], (32, 32, 1, 1)), "k1_b": rnd(keys[9], (32,)),
        "q2_w": rnd(keys[10], (32, 32, 1, 1)), "q2_b": rnd(keys[11], (32,)),
        "k2_w": rnd(keys[12], (32, 32, 1, 1)), "k2_b": rnd(keys[13], (32,)),
        "q3_w": rnd(keys[14], (32, 32, 1, 1)), "q3_b": rnd(keys[15], (32,)),
        "k3_w": rnd(keys[16], (32, 32, 1, 1)), "k3_b": rnd(keys[17], (32,)),
        "conv6_w": rnd(keys[18], (32, 64, 1, 1)), "conv6_b": rnd(keys[19], (32,)),
        "score_w": rnd(keys[20], (1, 32, 3, 3)), "score_b": rnd(keys[21], (1,)),
    }

    # one-time weight packing (static layout plumbing, kept out of the jit)
    packed = pack_reverse_stage_params(params, C=C)

    fwd = jax.jit(reverse_stage_forward)
    out = jax.block_until_ready(fwd(x, y, packed))

    ref = _reference(x, y, params)
    assert out.shape == (B, 1, H, W), out.shape
    max_err = float(jnp.max(jnp.abs(out - ref)))
    assert max_err < 5e-3, f"max abs err {max_err}"

    print("KERNEL_OK")
</pallas_src>

<mosaic_0001>
module attributes {stable_mosaic.version = 11 : i64} {
  func.func @_rcu_fused_kernel(%arg0: i32, %arg1: memref<1x18x18x33xf32, #tpu.memory_space<vmem>>, %arg2: memref<9x33x64xf32, #tpu.memory_space<vmem>>, %arg3: memref<1x64xf32, #tpu.memory_space<vmem>>, %arg4: memref<32x128xf32, #tpu.memory_space<vmem>>, %arg5: memref<1x128xf32, #tpu.memory_space<vmem>>, %arg6: memref<32x64xf32, #tpu.memory_space<vmem>>, %arg7: memref<1x64xf32, #tpu.memory_space<vmem>>, %arg8: memref<32x32xf32, #tpu.memory_space<vmem>>, %arg9: memref<32x32xf32, #tpu.memory_space<vmem>>, %arg10: memref<1x32xf32, #tpu.memory_space<vmem>>, %arg11: memref<9x32xf32, #tpu.memory_space<vmem>>, %arg12: memref<1x1xf32, #tpu.memory_space<vmem>>, %arg13: memref<1x256x1xf32, #tpu.memory_space<vmem>>, %arg14: memref<18x18x32xf32, #tpu.memory_space<vmem>>) attributes {dimension_semantics = [#tpu.dimension_semantics<parallel>], iteration_bounds = array<i64: 2>, scalar_prefetch = 0 : i64, scratch_operands = 1 : i64, tpu.core_type = #tpu.core_type<tc>, window_params = [{transform_indices = @transform_0, window_bounds = array<i64: 1, 18, 18, 33>}, {pipeline_mode = #tpu.pipeline_mode<synchronous>, transform_indices = @transform_1, window_bounds = array<i64: 9, 33, 64>}, {pipeline_mode = #tpu.pipeline_mode<synchronous>, transform_indices = @transform_2, window_bounds = array<i64: 1, 64>}, {pipeline_mode = #tpu.pipeline_mode<synchronous>, transform_indices = @transform_3, window_bounds = array<i64: 32, 128>}, {pipeline_mode = #tpu.pipeline_mode<synchronous>, transform_indices = @transform_4, window_bounds = array<i64: 1, 128>}, {pipeline_mode = #tpu.pipeline_mode<synchronous>, transform_indices = @transform_5, window_bounds = array<i64: 32, 64>}, {pipeline_mode = #tpu.pipeline_mode<synchronous>, transform_indices = @transform_6, window_bounds = array<i64: 1, 64>}, {pipeline_mode = #tpu.pipeline_mode<synchronous>, transform_indices = @transform_7, window_bounds = array<i64: 32, 32>}, {pipeline_mode = #tpu.pipeline_mode<synchronous>, transform_indices = @transform_8, window_bounds = array<i64: 32, 32>}, {pipeline_mode = #tpu.pipeline_mode<synchronous>, transform_indices = @transform_9, window_bounds = array<i64: 1, 32>}, {pipeline_mode = #tpu.pipeline_mode<synchronous>, transform_indices = @transform_10, window_bounds = array<i64: 9, 32>}, {pipeline_mode = #tpu.pipeline_mode<synchronous>, transform_indices = @transform_11, window_bounds = array<i64: 1, 1>}, {transform_indices = @transform_12, window_bounds = array<i64: 1, 256, 1>}]} {
    %c0 = arith.constant 0 : index
    %c0_0 = arith.constant 0 : index
    %c0_1 = arith.constant 0 : index
    %c0_2 = arith.constant 0 : index
    %0 = vector.load %arg1[%c0, %c0_0, %c0_1, %c0_2] : memref<1x18x18x33xf32, #tpu.memory_space<vmem>>, vector<1x18x16x33xf32>
    %1 = vector.shape_cast %0 : vector<1x18x16x33xf32> to vector<18x16x33xf32>
    %c0_3 = arith.constant 0 : index
    %c0_4 = arith.constant 0 : index
    %c1 = arith.constant 1 : index
    %c0_5 = arith.constant 0 : index
    %2 = vector.load %arg1[%c0_3, %c0_4, %c1, %c0_5] : memref<1x18x18x33xf32, #tpu.memory_space<vmem>>, vector<1x18x16x33xf32>
    %3 = vector.shape_cast %2 : vector<1x18x16x33xf32> to vector<18x16x33xf32>
    %c0_6 = arith.constant 0 : index
    %c0_7 = arith.constant 0 : index
    %c2 = arith.constant 2 : index
    %c0_8 = arith.constant 0 : index
    %4 = vector.load %arg1[%c0_6, %c0_7, %c2, %c0_8] : memref<1x18x18x33xf32, #tpu.memory_space<vmem>>, vector<1x18x16x33xf32>
    %5 = vector.shape_cast %4 : vector<1x18x16x33xf32> to vector<18x16x33xf32>
    %c0_9 = arith.constant 0 : index
    %c0_10 = arith.constant 0 : index
    %6 = vector.load %arg3[%c0_9, %c0_10] : memref<1x64xf32, #tpu.memory_space<vmem>>, vector<1x64xf32>
    %7 = vector.shape_cast %6 : vector<1x64xf32> to vector<1x64xf32>
    %8 = vector.broadcast %7 : vector<1x64xf32> to vector<256x64xf32>
    %9 = vector.extract_strided_slice %1 {offsets = [0, 0, 0], sizes = [16, 16, 33], strides = [1, 1, 1]} : vector<18x16x33xf32> to vector<16x16x33xf32>
    %10 = vector.shape_cast %9 : vector<16x16x33xf32> to vector<256x33xf32>
    %c0_11 = arith.constant 0 : index
    %c0_12 = arith.constant 0 : index
    %c0_13 = arith.constant 0 : index
    %11 = vector.load %arg2[%c0_11, %c0_12, %c0_13] : memref<9x33x64xf32, #tpu.memory_space<vmem>>, vector<1x33x64xf32>
    %12 = vector.shape_cast %11 : vector<1x33x64xf32> to vector<33x64xf32>
    %cst = arith.constant dense<0.000000e+00> : vector<256x64xf32>
    %13 = tpu.matmul %10, %12, %cst {dimension_numbers = #tpu.dot_dimension_numbers<[1], [0], [0], [1], [0, 0, 1, 1], [], []>} : vector<256x33xf32>, vector<33x64xf32>, vector<256x64xf32> -> vector<256x64xf32>
    %14 = arith.addf %8, %13 : vector<256x64xf32>
    %15 = vector.extract_strided_slice %3 {offsets = [0, 0, 0], sizes = [16, 16, 33], strides = [1, 1, 1]} : vector<18x16x33xf32> to vector<16x16x33xf32>
    %16 = vector.shape_cast %15 : vector<16x16x33xf32> to vector<256x33xf32>
    %c1_14 = arith.constant 1 : index
    %c0_15 = arith.constant 0 : index
    %c0_16 = arith.constant 0 : index
    %17 = vector.load %arg2[%c1_14, %c0_15, %c0_16] : memref<9x33x64xf32, #tpu.memory_space<vmem>>, vector<1x33x64xf32>
    %18 = vector.shape_cast %17 : vector<1x33x64xf32> to vector<33x64xf32>
    %cst_17 = arith.constant dense<0.000000e+00> : vector<256x64xf32>
    %19 = tpu.matmul %16, %18, %cst_17 {dimension_numbers = #tpu.dot_dimension_numbers<[1], [0], [0], [1], [0, 0, 1, 1], [], []>} : vector<256x33xf32>, vector<33x64xf32>, vector<256x64xf32> -> vector<256x64xf32>
    %20 = arith.addf %14, %19 : vector<256x64xf32>
    %21 = vector.extract_strided_slice %5 {offsets = [0, 0, 0], sizes = [16, 16, 33], strides = [1, 1, 1]} : vector<18x16x33xf32> to vector<16x16x33xf32>
    %22 = vector.shape_cast %21 : vector<16x16x33xf32> to vector<256x33xf32>
    %c2_18 = arith.constant 2 : index
    %c0_19 = arith.constant 0 : index
    %c0_20 = arith.constant 0 : index
    %23 = vector.load %arg2[%c2_18, %c0_19, %c0_20] : memref<9x33x64xf32, #tpu.memory_space<vmem>>, vector<1x33x64xf32>
    %24 = vector.shape_cast %23 : vector<1x33x64xf32> to vector<33x64xf32>
    %cst_21 = arith.constant dense<0.000000e+00> : vector<256x64xf32>
    %25 = tpu.matmul %22, %24, %cst_21 {dimension_numbers = #tpu.dot_dimension_numbers<[1], [0], [0], [1], [0, 0, 1, 1], [], []>} : vector<256x33xf32>, vector<33x64xf32>, vector<256x64xf32> -> vector<256x64xf32>
    %26 = arith.addf %20, %25 : vector<256x64xf32>
    %27 = vector.extract_strided_slice %1 {offsets = [1, 0, 0], sizes = [16, 16, 33], strides = [1, 1, 1]} : vector<18x16x33xf32> to vector<16x16x33xf32>
    %28 = vector.shape_cast %27 : vector<16x16x33xf32> to vector<256x33xf32>
    %c3 = arith.constant 3 : index
    %c0_22 = arith.constant 0 : index
    %c0_23 = arith.constant 0 : index
    %29 = vector.load %arg2[%c3, %c0_22, %c0_23] : memref<9x33x64xf32, #tpu.memory_space<vmem>>, vector<1x33x64xf32>
    %30 = vector.shape_cast %29 : vector<1x33x64xf32> to vector<33x64xf32>
    %cst_24 = arith.constant dense<0.000000e+00> : vector<256x64xf32>
    %31 = tpu.matmul %28, %30, %cst_24 {dimension_numbers = #tpu.dot_dimension_numbers<[1], [0], [0], [1], [0, 0, 1, 1], [], []>} : vector<256x33xf32>, vector<33x64xf32>, vector<256x64xf32> -> vector<256x64xf32>
    %32 = arith.addf %26, %31 : vector<256x64xf32>
    %33 = vector.extract_strided_slice %3 {offsets = [1, 0, 0], sizes = [16, 16, 33], strides = [1, 1, 1]} : vector<18x16x33xf32> to vector<16x16x33xf32>
    %34 = vector.shape_cast %33 : vector<16x16x33xf32> to vector<256x33xf32>
    %c4 = arith.constant 4 : index
    %c0_25 = arith.constant 0 : index
    %c0_26 = arith.constant 0 : index
    %35 = vector.load %arg2[%c4, %c0_25, %c0_26] : memref<9x33x64xf32, #tpu.memory_space<vmem>>, vector<1x33x64xf32>
    %36 = vector.shape_cast %35 : vector<1x33x64xf32> to vector<33x64xf32>
    %cst_27 = arith.constant dense<0.000000e+00> : vector<256x64xf32>
    %37 = tpu.matmul %34, %36, %cst_27 {dimension_numbers = #tpu.dot_dimension_numbers<[1], [0], [0], [1], [0, 0, 1, 1], [], []>} : vector<256x33xf32>, vector<33x64xf32>, vector<256x64xf32> -> vector<256x64xf32>
    %38 = arith.addf %32, %37 : vector<256x64xf32>
    %39 = vector.extract_strided_slice %5 {offsets = [1, 0, 0], sizes = [16, 16, 33], strides = [1, 1, 1]} : vector<18x16x33xf32> to vector<16x16x33xf32>
    %40 = vector.shape_cast %39 : vector<16x16x33xf32> to vector<256x33xf32>
    %c5 = arith.constant 5 : index
    %c0_28 = arith.constant 0 : index
    %c0_29 = arith.constant 0 : index
    %41 = vector.load %arg2[%c5, %c0_28, %c0_29] : memref<9x33x64xf32, #tpu.memory_space<vmem>>, vector<1x33x64xf32>
    %42 = vector.shape_cast %41 : vector<1x33x64xf32> to vector<33x64xf32>
    %cst_30 = arith.constant dense<0.000000e+00> : vector<256x64xf32>
    %43 = tpu.matmul %40, %42, %cst_30 {dimension_numbers = #tpu.dot_dimension_numbers<[1], [0], [0], [1], [0, 0, 1, 1], [], []>} : vector<256x33xf32>, vector<33x64xf32>, vector<256x64xf32> -> vector<256x64xf32>
    %44 = arith.addf %38, %43 : vector<256x64xf32>
    %45 = vector.extract_strided_slice %1 {offsets = [2, 0, 0], sizes = [16, 16, 33], strides = [1, 1, 1]} : vector<18x16x33xf32> to vector<16x16x33xf32>
    %46 = vector.shape_cast %45 : vector<16x16x33xf32> to vector<256x33xf32>
    %c6 = arith.constant 6 : index
    %c0_31 = arith.constant 0 : index
    %c0_32 = arith.constant 0 : index
    %47 = vector.load %arg2[%c6, %c0_31, %c0_32] : memref<9x33x64xf32, #tpu.memory_space<vmem>>, vector<1x33x64xf32>
    %48 = vector.shape_cast %47 : vector<1x33x64xf32> to vector<33x64xf32>
    %cst_33 = arith.constant dense<0.000000e+00> : vector<256x64xf32>
    %49 = tpu.matmul %46, %48, %cst_33 {dimension_numbers = #tpu.dot_dimension_numbers<[1], [0], [0], [1], [0, 0, 1, 1], [], []>} : vector<256x33xf32>, vector<33x64xf32>, vector<256x64xf32> -> vector<256x64xf32>
    %50 = arith.addf %44, %49 : vector<256x64xf32>
    %51 = vector.extract_strided_slice %3 {offsets = [2, 0, 0], sizes = [16, 16, 33], strides = [1, 1, 1]} : vector<18x16x33xf32> to vector<16x16x33xf32>
    %52 = vector.shape_cast %51 : vector<16x16x33xf32> to vector<256x33xf32>
    %c7 = arith.constant 7 : index
    %c0_34 = arith.constant 0 : index
    %c0_35 = arith.constant 0 : index
    %53 = vector.load %arg2[%c7, %c0_34, %c0_35] : memref<9x33x64xf32, #tpu.memory_space<vmem>>, vector<1x33x64xf32>
    %54 = vector.shape_cast %53 : vector<1x33x64xf32> to vector<33x64xf32>
    %cst_36 = arith.constant dense<0.000000e+00> : vector<256x64xf32>
    %55 = tpu.matmul %52, %54, %cst_36 {dimension_numbers = #tpu.dot_dimension_numbers<[1], [0], [0], [1], [0, 0, 1, 1], [], []>} : vector<256x33xf32>, vector<33x64xf32>, vector<256x64xf32> -> vector<256x64xf32>
    %56 = arith.addf %50, %55 : vector<256x64xf32>
    %57 = vector.extract_strided_slice %5 {offsets = [2, 0, 0], sizes = [16, 16, 33], strides = [1, 1, 1]} : vector<18x16x33xf32> to vector<16x16x33xf32>
    %58 = vector.shape_cast %57 : vector<16x16x33xf32> to vector<256x33xf32>
    %c8 = arith.constant 8 : index
    %c0_37 = arith.constant 0 : index
    %c0_38 = arith.constant 0 : index
    %59 = vector.load %arg2[%c8, %c0_37, %c0_38] : memref<9x33x64xf32, #tpu.memory_space<vmem>>, vector<1x33x64xf32>
    %60 = vector.shape_cast %59 : vector<1x33x64xf32> to vector<33x64xf32>
    %cst_39 = arith.constant dense<0.000000e+00> : vector<256x64xf32>
    %61 = tpu.matmul %58, %60, %cst_39 {dimension_numbers = #tpu.dot_dimension_numbers<[1], [0], [0], [1], [0, 0, 1, 1], [], []>} : vector<256x33xf32>, vector<33x64xf32>, vector<256x64xf32> -> vector<256x64xf32>
    %62 = arith.addf %56, %61 : vector<256x64xf32>
    %63 = vector.extract_strided_slice %62 {offsets = [0, 0], sizes = [256, 32], strides = [1, 1]} : vector<256x64xf32> to vector<256x32xf32>
    %cst_40 = arith.constant 0.000000e+00 : f32
    %64 = vector.broadcast %cst_40 : f32 to vector<256x32xf32>
    %65 = arith.maximumf %63, %64 : vector<256x32xf32>
    %66 = vector.extract_strided_slice %62 {offsets = [0, 32], sizes = [256, 32], strides = [1, 1]} : vector<256x64xf32> to vector<256x32xf32>
    %67 = vector.extract_strided_slice %3 {offsets = [1, 0, 0], sizes = [16, 16, 33], strides = [1, 1, 1]} : vector<18x16x33xf32> to vector<16x16x33xf32>
    %68 = vector.shape_cast %67 : vector<16x16x33xf32> to vector<256x33xf32>
    %69 = vector.extract_strided_slice %68 {offsets = [0, 0], sizes = [256, 32], strides = [1, 1]} : vector<256x33xf32> to vector<256x32xf32>
    %70 = vector.extract_strided_slice %68 {offsets = [0, 32], sizes = [256, 1], strides = [1, 1]} : vector<256x33xf32> to vector<256x1xf32>
    %c0_41 = arith.constant 0 : index
    %c0_42 = arith.constant 0 : index
    %71 = vector.load %arg4[%c0_41, %c0_42] : memref<32x128xf32, #tpu.memory_space<vmem>>, vector<32x128xf32>
    %cst_43 = arith.constant dense<0.000000e+00> : vector<256x128xf32>
    %72 = tpu.matmul %65, %71, %cst_43 {dimension_numbers = #tpu.dot_dimension_numbers<[1], [0], [0], [1], [0, 0, 1, 1], [], []>} : vector<256x32xf32>, vector<32x128xf32>, vector<256x128xf32> -> vector<256x128xf32>
    %c0_44 = arith.constant 0 : index
    %c0_45 = arith.constant 0 : index
    %73 = vector.load %arg5[%c0_44, %c0_45] : memref<1x128xf32, #tpu.memory_space<vmem>>, vector<1x128xf32>
    %74 = vector.broadcast %73 : vector<1x128xf32> to vector<256x128xf32>
    %75 = arith.addf %72, %74 : vector<256x128xf32>
    %c0_46 = arith.constant 0 : index
    %c0_47 = arith.constant 0 : index
    %76 = vector.load %arg6[%c0_46, %c0_47] : memref<32x64xf32, #tpu.memory_space<vmem>>, vector<32x64xf32>
    %cst_48 = arith.constant dense<0.000000e+00> : vector<256x64xf32>
    %77 = tpu.matmul %66, %76, %cst_48 {dimension_numbers = #tpu.dot_dimension_numbers<[1], [0], [0], [1], [0, 0, 1, 1], [], []>} : vector<256x32xf32>, vector<32x64xf32>, vector<256x64xf32> -> vector<256x64xf32>
    %c0_49 = arith.constant 0 : index
    %c0_50 = arith.constant 0 : index
    %78 = vector.load %arg7[%c0_49, %c0_50] : memref<1x64xf32, #tpu.memory_space<vmem>>, vector<1x64xf32>
    %79 = vector.broadcast %78 : vector<1x64xf32> to vector<256x64xf32>
    %80 = arith.addf %77, %79 : vector<256x64xf32>
    %81 = vector.extract_strided_slice %75 {offsets = [0, 0], sizes = [256, 32], strides = [1, 1]} : vector<256x128xf32> to vector<256x32xf32>
    %82 = vector.extract_strided_slice %75 {offsets = [0, 32], sizes = [256, 32], strides = [1, 1]} : vector<256x128xf32> to vector<256x32xf32>
    %83 = vector.extract_strided_slice %75 {offsets = [0, 64], sizes = [256, 32], strides = [1, 1]} : vector<256x128xf32> to vector<256x32xf32>
    %84 = vector.extract_strided_slice %75 {offsets = [0, 96], sizes = [256, 32], strides = [1, 1]} : vector<256x128xf32> to vector<256x32xf32>
    %85 = vector.extract_strided_slice %80 {offsets = [0, 0], sizes = [256, 32], strides = [1, 1]} : vector<256x64xf32> to vector<256x32xf32>
    %86 = vector.extract_strided_slice %80 {offsets = [0, 32], sizes = [256, 32], strides = [1, 1]} : vector<256x64xf32> to vector<256x32xf32>
    %cst_51 = arith.constant dense<0.000000e+00> : vector<256x256xf32>
    %87 = tpu.matmul %81, %84, %cst_51 {dimension_numbers = #tpu.dot_dimension_numbers<[1], [1], [0], [0], [0, 0, 1, 0], [], []>} : vector<256x32xf32>, vector<256x32xf32>, vector<256x256xf32> -> vector<256x256xf32>
    %cst_52 = arith.constant dense<0xFF800000> : vector<256xf32>
    %88 = vector.multi_reduction <maximumf>, %87, %cst_52 [1] : vector<256x256xf32> to vector<256xf32>
    %89 = vector.shape_cast %88 : vector<256xf32> to vector<256x1xf32>
    %90 = vector.broadcast %89 : vector<256x1xf32> to vector<256x256xf32>
    %91 = arith.subf %87, %90 : vector<256x256xf32>
    %92 = math.exp %91 : vector<256x256xf32>
    %cst_53 = arith.constant dense<0.000000e+00> : vector<256xf32>
    %93 = vector.multi_reduction <add>, %92, %cst_53 [1] : vector<256x256xf32> to vector<256xf32>
    %94 = vector.shape_cast %93 : vector<256xf32> to vector<256x1xf32>
    %95 = tpu.reciprocal %94 {approx = true} : vector<256x1xf32> -> vector<256x1xf32>
    %96 = vector.broadcast %95 : vector<256x1xf32> to vector<256x256xf32>
    %97 = arith.mulf %92, %96 : vector<256x256xf32>
    %cst_54 = arith.constant dense<0.000000e+00> : vector<32x32xf32>
    %98 = tpu.matmul %82, %83, %cst_54 {dimension_numbers = #tpu.dot_dimension_numbers<[0], [0], [1], [1], [0, 1, 1, 1], [], []>} : vector<256x32xf32>, vector<256x32xf32>, vector<32x32xf32> -> vector<32x32xf32>
    %cst_55 = arith.constant dense<0xFF800000> : vector<32xf32>
    %99 = vector.multi_reduction <maximumf>, %98, %cst_55 [1] : vector<32x32xf32> to vector<32xf32>
    %100 = vector.shape_cast %99 : vector<32xf32> to vector<32x1xf32>
    %101 = vector.broadcast %100 : vector<32x1xf32> to vector<32x32xf32>
    %102 = arith.subf %98, %101 : vector<32x32xf32>
    %103 = math.exp %102 : vector<32x32xf32>
    %cst_56 = arith.constant dense<0.000000e+00> : vector<32xf32>
    %104 = vector.multi_reduction <add>, %103, %cst_56 [1] : vector<32x32xf32> to vector<32xf32>
    %105 = vector.shape_cast %104 : vector<32xf32> to vector<32x1xf32>
    %106 = tpu.reciprocal %105 {approx = true} : vector<32x1xf32> -> vector<32x1xf32>
    %107 = vector.broadcast %106 : vector<32x1xf32> to vector<32x32xf32>
    %108 = arith.mulf %103, %107 : vector<32x32xf32>
    %cst_57 = arith.constant dense<0.000000e+00> : vector<256x32xf32>
    %109 = tpu.matmul %97, %85, %cst_57 {dimension_numbers = #tpu.dot_dimension_numbers<[0], [0], [1], [1], [0, 1, 1, 1], [], []>} : vector<256x256xf32>, vector<256x32xf32>, vector<256x32xf32> -> vector<256x32xf32>
    %cst_58 = arith.constant dense<0.000000e+00> : vector<256x32xf32>
    %110 = tpu.matmul %86, %108, %cst_58 {dimension_numbers = #tpu.dot_dimension_numbers<[1], [0], [0], [1], [0, 0, 1, 1], [], []>} : vector<256x32xf32>, vector<32x32xf32>, vector<256x32xf32> -> vector<256x32xf32>
    %c0_59 = arith.constant 0 : index
    %c0_60 = arith.constant 0 : index
    %111 = vector.load %arg8[%c0_59, %c0_60] : memref<32x32xf32, #tpu.memory_space<vmem>>, vector<32x32xf32>
    %cst_61 = arith.constant dense<0.000000e+00> : vector<256x32xf32>
    %112 = tpu.matmul %109, %111, %cst_61 {dimension_numbers = #tpu.dot_dimension_numbers<[1], [0], [0], [1], [0, 0, 1, 1], [], []>} : vector<256x32xf32>, vector<32x32xf32>, vector<256x32xf32> -> vector<256x32xf32>
    %113 = arith.addf %69, %112 : vector<256x32xf32>
    %c0_62 = arith.constant 0 : index
    %c0_63 = arith.constant 0 : index
    %114 = vector.load %arg9[%c0_62, %c0_63] : memref<32x32xf32, #tpu.memory_space<vmem>>, vector<32x32xf32>
    %cst_64 = arith.constant dense<0.000000e+00> : vector<256x32xf32>
    %115 = tpu.matmul %110, %114, %cst_64 {dimension_numbers = #tpu.dot_dimension_numbers<[1], [0], [0], [1], [0, 0, 1, 1], [], []>} : vector<256x32xf32>, vector<32x32xf32>, vector<256x32xf32> -> vector<256x32xf32>
    %116 = arith.addf %113, %115 : vector<256x32xf32>
    %c0_65 = arith.constant 0 : index
    %c0_66 = arith.constant 0 : index
    %117 = vector.load %arg10[%c0_65, %c0_66] : memref<1x32xf32, #tpu.memory_space<vmem>>, vector<1x32xf32>
    %118 = vector.broadcast %117 : vector<1x32xf32> to vector<256x32xf32>
    %119 = arith.addf %116, %118 : vector<256x32xf32>
    %cst_67 = arith.constant 0.000000e+00 : f32
    %120 = vector.broadcast %cst_67 : f32 to vector<18x18x32xf32>
    %c0_68 = arith.constant 0 : index
    %c0_69 = arith.constant 0 : index
    %c0_70 = arith.constant 0 : index
    %121 = vector.load %arg14[%c0_68, %c0_69, %c0_70] : memref<18x18x32xf32, #tpu.memory_space<vmem>>, vector<18x18x32xf32>
    tpu.vector_store %arg14[%c0_68, %c0_69, %c0_70], %120 {strides = array<i32>} : memref<18x18x32xf32, #tpu.memory_space<vmem>>, vector<18x18x32xf32>,
    %122 = vector.shape_cast %119 : vector<256x32xf32> to vector<16x16x32xf32>
    %c1_71 = arith.constant 1 : index
    %c1_72 = arith.constant 1 : index
    %c0_73 = arith.constant 0 : index
    %123 = vector.load %arg14[%c1_71, %c1_72, %c0_73] : memref<18x18x32xf32, #tpu.memory_space<vmem>>, vector<16x16x32xf32>
    tpu.vector_store %arg14[%c1_71, %c1_72, %c0_73], %122 {strides = array<i32>} : memref<18x18x32xf32, #tpu.memory_space<vmem>>, vector<16x16x32xf32>,
    %c0_74 = arith.constant 0 : index
    %c0_75 = arith.constant 0 : index
    %c0_76 = arith.constant 0 : index
    %124 = vector.load %arg14[%c0_74, %c0_75, %c0_76] : memref<18x18x32xf32, #tpu.memory_space<vmem>>, vector<18x16x32xf32>
    %c0_77 = arith.constant 0 : index
    %c1_78 = arith.constant 1 : index
    %c0_79 = arith.constant 0 : index
    %125 = vector.load %arg14[%c0_77, %c1_78, %c0_79] : memref<18x18x32xf32, #tpu.memory_space<vmem>>, vector<18x16x32xf32>
    %c0_80 = arith.constant 0 : index
    %c2_81 = arith.constant 2 : index
    %c0_82 = arith.constant 0 : index
    %126 = vector.load %arg14[%c0_80, %c2_81, %c0_82] : memref<18x18x32xf32, #tpu.memory_space<vmem>>, vector<18x16x32xf32>
    %c0_83 = arith.constant 0 : index
    %c0_84 = arith.constant 0 : index
    %127 = vector.load %arg12[%c0_83, %c0_84] : memref<1x1xf32, #tpu.memory_space<vmem>>, vector<1x1xf32>
    %128 = vector.shape_cast %127 : vector<1x1xf32> to vector<1x1xf32>
    %129 = vector.broadcast %128 : vector<1x1xf32> to vector<256x1xf32>
    %130 = vector.extract_strided_slice %124 {offsets = [0, 0, 0], sizes = [16, 16, 32], strides = [1, 1, 1]} : vector<18x16x32xf32> to vector<16x16x32xf32>
    %131 = vector.shape_cast %130 : vector<16x16x32xf32> to vector<256x32xf32>
    %c0_85 = arith.constant 0 : index
    %c0_86 = arith.constant 0 : index
    %132 = vector.load %arg11[%c0_85, %c0_86] : memref<9x32xf32, #tpu.memory_space<vmem>>, vector<1x32xf32>
    %133 = vector.shape_cast %132 : vector<1x32xf32> to vector<32xf32>
    %134 = vector.shape_cast %133 : vector<32xf32> to vector<1x32xf32>
    %135 = vector.broadcast %134 : vector<1x32xf32> to vector<256x32xf32>
    %136 = arith.mulf %131, %135 : vector<256x32xf32>
    %cst_87 = arith.constant dense<0.000000e+00> : vector<256xf32>
    %137 = vector.multi_reduction <add>, %136, %cst_87 [1] : vector<256x32xf32> to vector<256xf32>
    %138 = vector.shape_cast %137 : vector<256xf32> to vector<256x1xf32>
    %139 = arith.addf %129, %138 : vector<256x1xf32>
    %140 = vector.extract_strided_slice %125 {offsets = [0, 0, 0], sizes = [16, 16, 32], strides = [1, 1, 1]} : vector<18x16x32xf32> to vector<16x16x32xf32>
    %141 = vector.shape_cast %140 : vector<16x16x32xf32> to vector<256x32xf32>
    %c1_88 = arith.constant 1 : index
    %c0_89 = arith.constant 0 : index
    %142 = vector.load %arg11[%c1_88, %c0_89] : memref<9x32xf32, #tpu.memory_space<vmem>>, vector<1x32xf32>
    %143 = vector.shape_cast %142 : vector<1x32xf32> to vector<32xf32>
    %144 = vector.shape_cast %143 : vector<32xf32> to vector<1x32xf32>
    %145 = vector.broadcast %144 : vector<1x32xf32> to vector<256x32xf32>
    %146 = arith.mulf %141, %145 : vector<256x32xf32>
    %cst_90 = arith.constant dense<0.000000e+00> : vector<256xf32>
    %147 = vector.multi_reduction <add>, %146, %cst_90 [1] : vector<256x32xf32> to vector<256xf32>
    %148 = vector.shape_cast %147 : vector<256xf32> to vector<256x1xf32>
    %149 = arith.addf %139, %148 : vector<256x1xf32>
    %150 = vector.extract_strided_slice %126 {offsets = [0, 0, 0], sizes = [16, 16, 32], strides = [1, 1, 1]} : vector<18x16x32xf32> to vector<16x16x32xf32>
    %151 = vector.shape_cast %150 : vector<16x16x32xf32> to vector<256x32xf32>
    %c2_91 = arith.constant 2 : index
    %c0_92 = arith.constant 0 : index
    %152 = vector.load %arg11[%c2_91, %c0_92] : memref<9x32xf32, #tpu.memory_space<vmem>>, vector<1x32xf32>
    %153 = vector.shape_cast %152 : vector<1x32xf32> to vector<32xf32>
    %154 = vector.shape_cast %153 : vector<32xf32> to vector<1x32xf32>
    %155 = vector.broadcast %154 : vector<1x32xf32> to vector<256x32xf32>
    %156 = arith.mulf %151, %155 : vector<256x32xf32>
    %cst_93 = arith.constant dense<0.000000e+00> : vector<256xf32>
    %157 = vector.multi_reduction <add>, %156, %cst_93 [1] : vector<256x32xf32> to vector<256xf32>
    %158 = vector.shape_cast %157 : vector<256xf32> to vector<256x1xf32>
    %159 = arith.addf %149, %158 : vector<256x1xf32>
    %160 = vector.extract_strided_slice %124 {offsets = [1, 0, 0], sizes = [16, 16, 32], strides = [1, 1, 1]} : vector<18x16x32xf32> to vector<16x16x32xf32>
    %161 = vector.shape_cast %160 : vector<16x16x32xf32> to vector<256x32xf32>
    %c3_94 = arith.constant 3 : index
    %c0_95 = arith.constant 0 : index
    %162 = vector.load %arg11[%c3_94, %c0_95] : memref<9x32xf32, #tpu.memory_space<vmem>>, vector<1x32xf32>
    %163 = vector.shape_cast %162 : vector<1x32xf32> to vector<32xf32>
    %164 = vector.shape_cast %163 : vector<32xf32> to vector<1x32xf32>
    %165 = vector.broadcast %164 : vector<1x32xf32> to vector<256x32xf32>
    %166 = arith.mulf %161, %165 : vector<256x32xf32>
    %cst_96 = arith.constant dense<0.000000e+00> : vector<256xf32>
    %167 = vector.multi_reduction <add>, %166, %cst_96 [1] : vector<256x32xf32> to vector<256xf32>
    %168 = vector.shape_cast %167 : vector<256xf32> to vector<256x1xf32>
    %169 = arith.addf %159, %168 : vector<256x1xf32>
    %170 = vector.extract_strided_slice %125 {offsets = [1, 0, 0], sizes = [16, 16, 32], strides = [1, 1, 1]} : vector<18x16x32xf32> to vector<16x16x32xf32>
    %171 = vector.shape_cast %170 : vector<16x16x32xf32> to vector<256x32xf32>
    %c4_97 = arith.constant 4 : index
    %c0_98 = arith.constant 0 : index
    %172 = vector.load %arg11[%c4_97, %c0_98] : memref<9x32xf32, #tpu.memory_space<vmem>>, vector<1x32xf32>
    %173 = vector.shape_cast %172 : vector<1x32xf32> to vector<32xf32>
    %174 = vector.shape_cast %173 : vector<32xf32> to vector<1x32xf32>
    %175 = vector.broadcast %174 : vector<1x32xf32> to vector<256x32xf32>
    %176 = arith.mulf %171, %175 : vector<256x32xf32>
    %cst_99 = arith.constant dense<0.000000e+00> : vector<256xf32>
    %177 = vector.multi_reduction <add>, %176, %cst_99 [1] : vector<256x32xf32> to vector<256xf32>
    %178 = vector.shape_cast %177 : vector<256xf32> to vector<256x1xf32>
    %179 = arith.addf %169, %178 : vector<256x1xf32>
    %180 = vector.extract_strided_slice %126 {offsets = [1, 0, 0], sizes = [16, 16, 32], strides = [1, 1, 1]} : vector<18x16x32xf32> to vector<16x16x32xf32>
    %181 = vector.shape_cast %180 : vector<16x16x32xf32> to vector<256x32xf32>
    %c5_100 = arith.constant 5 : index
    %c0_101 = arith.constant 0 : index
    %182 = vector.load %arg11[%c5_100, %c0_101] : memref<9x32xf32, #tpu.memory_space<vmem>>, vector<1x32xf32>
    %183 = vector.shape_cast %182 : vector<1x32xf32> to vector<32xf32>
    %184 = vector.shape_cast %183 : vector<32xf32> to vector<1x32xf32>
    %185 = vector.broadcast %184 : vector<1x32xf32> to vector<256x32xf32>
    %186 = arith.mulf %181, %185 : vector<256x32xf32>
    %cst_102 = arith.constant dense<0.000000e+00> : vector<256xf32>
    %187 = vector.multi_reduction <add>, %186, %cst_102 [1] : vector<256x32xf32> to vector<256xf32>
    %188 = vector.shape_cast %187 : vector<256xf32> to vector<256x1xf32>
    %189 = arith.addf %179, %188 : vector<256x1xf32>
    %190 = vector.extract_strided_slice %124 {offsets = [2, 0, 0], sizes = [16, 16, 32], strides = [1, 1, 1]} : vector<18x16x32xf32> to vector<16x16x32xf32>
    %191 = vector.shape_cast %190 : vector<16x16x32xf32> to vector<256x32xf32>
    %c6_103 = arith.constant 6 : index
    %c0_104 = arith.constant 0 : index
    %192 = vector.load %arg11[%c6_103, %c0_104] : memref<9x32xf32, #tpu.memory_space<vmem>>, vector<1x32xf32>
    %193 = vector.shape_cast %192 : vector<1x32xf32> to vector<32xf32>
    %194 = vector.shape_cast %193 : vector<32xf32> to vector<1x32xf32>
    %195 = vector.broadcast %194 : vector<1x32xf32> to vector<256x32xf32>
    %196 = arith.mulf %191, %195 : vector<256x32xf32>
    %cst_105 = arith.constant dense<0.000000e+00> : vector<256xf32>
    %197 = vector.multi_reduction <add>, %196, %cst_105 [1] : vector<256x32xf32> to vector<256xf32>
    %198 = vector.shape_cast %197 : vector<256xf32> to vector<256x1xf32>
    %199 = arith.addf %189, %198 : vector<256x1xf32>
    %200 = vector.extract_strided_slice %125 {offsets = [2, 0, 0], sizes = [16, 16, 32], strides = [1, 1, 1]} : vector<18x16x32xf32> to vector<16x16x32xf32>
    %201 = vector.shape_cast %200 : vector<16x16x32xf32> to vector<256x32xf32>
    %c7_106 = arith.constant 7 : index
    %c0_107 = arith.constant 0 : index
    %202 = vector.load %arg11[%c7_106, %c0_107] : memref<9x32xf32, #tpu.memory_space<vmem>>, vector<1x32xf32>
    %203 = vector.shape_cast %202 : vector<1x32xf32> to vector<32xf32>
    %204 = vector.shape_cast %203 : vector<32xf32> to vector<1x32xf32>
    %205 = vector.broadcast %204 : vector<1x32xf32> to vector<256x32xf32>
    %206 = arith.mulf %201, %205 : vector<256x32xf32>
    %cst_108 = arith.constant dense<0.000000e+00> : vector<256xf32>
    %207 = vector.multi_reduction <add>, %206, %cst_108 [1] : vector<256x32xf32> to vector<256xf32>
    %208 = vector.shape_cast %207 : vector<256xf32> to vector<256x1xf32>
    %209 = arith.addf %199, %208 : vector<256x1xf32>
    %210 = vector.extract_strided_slice %126 {offsets = [2, 0, 0], sizes = [16, 16, 32], strides = [1, 1, 1]} : vector<18x16x32xf32> to vector<16x16x32xf32>
    %211 = vector.shape_cast %210 : vector<16x16x32xf32> to vector<256x32xf32>
    %c8_109 = arith.constant 8 : index
    %c0_110 = arith.constant 0 : index
    %212 = vector.load %arg11[%c8_109, %c0_110] : memref<9x32xf32, #tpu.memory_space<vmem>>, vector<1x32xf32>
    %213 = vector.shape_cast %212 : vector<1x32xf32> to vector<32xf32>
    %214 = vector.shape_cast %213 : vector<32xf32> to vector<1x32xf32>
    %215 = vector.broadcast %214 : vector<1x32xf32> to vector<256x32xf32>
    %216 = arith.mulf %211, %215 : vector<256x32xf32>
    %cst_111 = arith.constant dense<0.000000e+00> : vector<256xf32>
    %217 = vector.multi_reduction <add>, %216, %cst_111 [1] : vector<256x32xf32> to vector<256xf32>
    %218 = vector.shape_cast %217 : vector<256xf32> to vector<256x1xf32>
    %219 = arith.addf %209, %218 : vector<256x1xf32>
    %220 = arith.addf %70, %219 : vector<256x1xf32>
    %c0_112 = arith.constant 0 : index
    %c0_113 = arith.constant 0 : index
    %c0_114 = arith.constant 0 : index
    %221 = vector.load %arg13[%c0_112, %c0_113, %c0_114] : memref<1x256x1xf32, #tpu.memory_space<vmem>>, vector<1x256x1xf32>
    %222 = vector.shape_cast %221 : vector<1x256x1xf32> to vector<256x1xf32>
    %223 = vector.shape_cast %220 : vector<256x1xf32> to vector<1x256x1xf32>
    tpu.vector_store %arg13[%c0_112, %c0_113, %c0_114], %223 {strides = array<i32>} : memref<1x256x1xf32, #tpu.memory_space<vmem>>, vector<1x256x1xf32>,
    return
  }
  func.func @transform_0(%arg0: i32) -> (i32, i32, i32, i32) {
    %c0_i32 = arith.constant 0 : i32
    %c0_i32_0 = arith.constant 0 : i32
    %c0_i32_1 = arith.constant 0 : i32
    %c0_i32_2 = arith.constant 0 : i32
    return %arg0, %c0_i32, %c0_i32_0, %c0_i32_1 : i32, i32, i32, i32
  }
  func.func @transform_1(%arg0: i32) -> (i32, i32, i32) {
    %c0_i32 = arith.constant 0 : i32
    %c0_i32_0 = arith.constant 0 : i32
    %c0_i32_1 = arith.constant 0 : i32
    %c0_i32_2 = arith.constant 0 : i32
    return %c0_i32, %c0_i32_0, %c0_i32_1 : i32, i32, i32
  }
  func.func @transform_2(%arg0: i32) -> (i32, i32) {
    %c0_i32 = arith.constant 0 : i32
    %c0_i32_0 = arith.constant 0 : i32
    %c0_i32_1 = arith.constant 0 : i32
    return %c0_i32, %c0_i32_0 : i32, i32
  }
  func.func @transform_3(%arg0: i32) -> (i32, i32) {
    %c0_i32 = arith.constant 0 : i32
    %c0_i32_0 = arith.constant 0 : i32
    %c0_i32_1 = arith.constant 0 : i32
    return %c0_i32, %c0_i32_0 : i32, i32
  }
  func.func @transform_4(%arg0: i32) -> (i32, i32) {
    %c0_i32 = arith.constant 0 : i32
    %c0_i32_0 = arith.constant 0 : i32
    %c0_i32_1 = arith.constant 0 : i32
    return %c0_i32, %c0_i32_0 : i32, i32
  }
  func.func @transform_5(%arg0: i32) -> (i32, i32) {
    %c0_i32 = arith.constant 0 : i32
    %c0_i32_0 = arith.constant 0 : i32
    %c0_i32_1 = arith.constant 0 : i32
    return %c0_i32, %c0_i32_0 : i32, i32
  }
  func.func @transform_6(%arg0: i32) -> (i32, i32) {
    %c0_i32 = arith.constant 0 : i32
    %c0_i32_0 = arith.constant 0 : i32
    %c0_i32_1 = arith.constant 0 : i32
    return %c0_i32, %c0_i32_0 : i32, i32
  }
  func.func @transform_7(%arg0: i32) -> (i32, i32) {
    %c0_i32 = arith.constant 0 : i32
    %c0_i32_0 = arith.constant 0 : i32
    %c0_i32_1 = arith.constant 0 : i32
    return %c0_i32, %c0_i32_0 : i32, i32
  }
  func.func @transform_8(%arg0: i32) -> (i32, i32) {
    %c0_i32 = arith.constant 0 : i32
    %c0_i32_0 = arith.constant 0 : i32
    %c0_i32_1 = arith.constant 0 : i32
    return %c0_i32, %c0_i32_0 : i32, i32
  }
  func.func @transform_9(%arg0: i32) -> (i32, i32) {
    %c0_i32 = arith.constant 0 : i32
    %c0_i32_0 = arith.constant 0 : i32
    %c0_i32_1 = arith.constant 0 : i32
    return %c0_i32, %c0_i32_0 : i32, i32
  }
  func.func @transform_10(%arg0: i32) -> (i32, i32) {
    %c0_i32 = arith.constant 0 : i32
    %c0_i32_0 = arith.constant 0 : i32
    %c0_i32_1 = arith.constant 0 : i32
    return %c0_i32, %c0_i32_0 : i32, i32
  }
  func.func @transform_11(%arg0: i32) -> (i32, i32) {
    %c0_i32 = arith.constant 0 : i32
    %c0_i32_0 = arith.constant 0 : i32
    %c0_i32_1 = arith.constant 0 : i32
    return %c0_i32, %c0_i32_0 : i32, i32
  }
  func.func @transform_12(%arg0: i32) -> (i32, i32, i32) {
    %c0_i32 = arith.constant 0 : i32
    %c0_i32_0 = arith.constant 0 : i32
    %c0_i32_1 = arith.constant 0 : i32
    return %arg0, %c0_i32, %c0_i32_0 : i32, i32, i32
  }
}

</mosaic_0001>

<llo_original>
// kernel: reverse_stage_forward.1
$region0: #{reverse_stage_forward.1}
  #allocation0 [shape = 'u32[]', space=smem, size = 0x4, offset = 0x4, fixed_abs, tag = 'smem constant byte address 0x4 - core index']
  #allocation1 [shape = 'u32[144,128]{1,0:T(1,128)}', space=vmem, size = 0x12000, scoped, tag = 'internal scratch']
  #allocation2 [shape = 'f32[18,18,32]{2,1,0:T(8,128)}', space=vmem, size = 0x36000, scoped, tag = 'scratch operand']
  #allocation3 [shape = 'f32[1,1]{1,0:T(1,128)S(1)}', space=vmem, size = 0x200, scoped, tag = 'scoped memory for reverse_stage_forward.1']
  %s0 = inlined_call_operand.vmem [shape: f32[2,18,18,33], index: 0, kind: input, shape index: {}]
  %s1 = inlined_call_operand.vmem [shape: f32[9,33,64], index: 1, kind: input, shape index: {}]
  %s2 = inlined_call_operand.vmem [shape: f32[1,64], index: 2, kind: input, shape index: {}]
  %s3 = inlined_call_operand.vmem [shape: f32[32,128], index: 3, kind: input, shape index: {}]
  %s4 = inlined_call_operand.vmem [shape: f32[1,128], index: 4, kind: input, shape index: {}]
  %s5 = inlined_call_operand.vmem [shape: f32[32,64], index: 5, kind: input, shape index: {}]
  %s6 = inlined_call_operand.vmem [shape: f32[1,64], index: 6, kind: input, shape index: {}]
  %s7 = inlined_call_operand.vmem [shape: f32[32,32], index: 7, kind: input, shape index: {}]
  %s8 = inlined_call_operand.vmem [shape: f32[32,32], index: 8, kind: input, shape index: {}]
  %s9 = inlined_call_operand.vmem [shape: f32[1,32], index: 9, kind: input, shape index: {}]
  %s10 = inlined_call_operand.vmem [shape: f32[9,32], index: 10, kind: input, shape index: {}]
  %s11 = inlined_call_operand.<no memory space> [shape: f32[1,1], index: 11, kind: input, shape index: {}]
  %s12 = inlined_call_operand.vmem [shape: f32[2,256,1], index: 12, kind: output, shape index: {}]
  %s13 = sld [smem:[#allocation0]]
  $region81: #{reverse_stage_forward.1} parent=0
    _
  %s15 = ssub.s32 1, %s13
  %s16 = scalar_select 0, %s15, %s13
  %v17 = vstv %s11
  %18 = vst [vmem:[#allocation3] sm:$0x1] %v17
  loop: start=0, step=1, limit=4
  $region2: #{reverse_stage_forward.1} parent=0 // loop_pre_header
    _
  $region3: #{reverse_stage_forward.1} parent=0 // loop_header
    %s20 = sphi 0, %s24
    %p21 = scmp.ge.s32.totalorder %s20, 4
    %s30 = sphi 0, %s32
    %s33 = sphi 0, %s30
    %s34 = sphi 0, %s33
    %s50 = sphi 0, %s34
    %s54 = sphi 0, %s54
    %s56 = sphi 0, %s54
    %s57 = sphi 0, %s56
    %s71 = sphi 0, %s57
    %s75 = sphi 0, %s75
    %s77 = sphi 0, %s75
    %s78 = sphi 0, %s77
    %s92 = sphi 0, %s78
    %s96 = sphi 0, %s96
    %s98 = sphi 0, %s96
    %s99 = sphi 0, %s98
    %s113 = sphi 0, %s99
    %s117 = sphi 0, %s117
    %s119 = sphi 0, %s117
    %s120 = sphi 0, %s119
    %s134 = sphi 0, %s120
    %s138 = sphi 0, %s138
    %s140 = sphi 0, %s138
    %s141 = sphi 0, %s140
    %s155 = sphi 0, %s141
    %s159 = sphi 0, %s159
    %s161 = sphi 0, %s159
    %s162 = sphi 0, %s161
    %s176 = sphi 0, %s162
    %s180 = sphi 0, %s180
    %s182 = sphi 0, %s180
    %s183 = sphi 0, %s182
    %s197 = sphi 0, %s183
    %s201 = sphi 0, %s201
    %s203 = sphi 0, %s201
    %s204 = sphi 0, %s203
    %s218 = sphi 0, %s204
    %s222 = sphi 0, %s222
    %s224 = sphi 0, %s222
    %s225 = sphi 0, %s224
    %s239 = sphi 0, %s225
    %s243 = sphi 0, %s243
    %s245 = sphi 0, %s243
    %s246 = sphi 0, %s245
    %s260 = sphi 0, %s246
    %s264 = sphi 0, %s264
    %s266 = sphi 0, %s264
    %s267 = sphi 0, %s266
    %s281 = sphi 0, %s267
    %s287 = sphi 0, %s289
    %s290 = sphi 0, %s287
    %s291 = sphi 0, %s290
    %s307 = sphi 0, %s291
  $region4: #{reverse_stage_forward.1} parent=0 // loop_header_branch
    %23 = sbr.rel (%p21) target = $region8
  $region5: #{reverse_stage_forward.1} parent=0 // loop_body
    %s25 = ssub.s32 %s20, 1
    %s26 = ssub.s32 %s20, 2
    %s27 = sadd.s32 %s20, 1
    %s28 = ssub.s32 %s20, %s27
    %p29 = scmp.eq.s32.totalorder %s28, 0
    %s31 = sadd.s32 %s30, 1
    %s32 = scalar_select %p29, %s30, %s31
    %p35 = pneg %p29
    %p36 = scmp.eq.s32.totalorder %s20, 1
    %p37 = por %p35, %p36
    %p38 = scmp.ne.s32.totalorder %s30, %s33
    %p39 = scmp.eq.s32.totalorder %s20, 0
    %p40 = por %p38, %p39
    %p41 = scmp.ne.s32.totalorder %s30, %s33
    %p42 = scmp.eq.s32.totalorder %s25, 1
    %p43 = por %p41, %p42
    %p44 = scmp.ne.s32.totalorder %s33, %s34
    %p45 = scmp.eq.s32.totalorder %s25, 0
    %p46 = por %p44, %p45
    %p47 = scmp.ne.s32.totalorder %s33, %s34
    %p48 = scmp.eq.s32.totalorder %s26, 1
    %p49 = por %p47, %p48
    %p51 = scmp.ne.s32.totalorder %s34, %s50
    %p52 = scmp.eq.s32.totalorder %s26, 0
    %p53 = por %p51, %p52
    %s55 = sadd.s32 %s54, 1
    %p58 = scmp.eq.s32.totalorder %s20, 1
    %p59 = scmp.ne.s32.totalorder %s54, %s56
    %p60 = scmp.eq.s32.totalorder %s20, 0
    %p61 = por %p59, %p60
    %p62 = scmp.ne.s32.totalorder %s54, %s56
    %p63 = scmp.eq.s32.totalorder %s25, 1
    %p64 = por %p62, %p63
    %p65 = scmp.ne.s32.totalorder %s56, %s57
    %p66 = scmp.eq.s32.totalorder %s25, 0
    %p67 = por %p65, %p66
    %p68 = scmp.ne.s32.totalorder %s56, %s57
    %p69 = scmp.eq.s32.totalorder %s26, 1
    %p70 = por %p68, %p69
    %p72 = scmp.ne.s32.totalorder %s57, %s71
    %p73 = scmp.eq.s32.totalorder %s26, 0
    %p74 = por %p72, %p73
    %s76 = sadd.s32 %s75, 1
    %p79 = scmp.eq.s32.totalorder %s20, 1
    %p80 = scmp.ne.s32.totalorder %s75, %s77
    %p81 = scmp.eq.s32.totalorder %s20, 0
    %p82 = por %p80, %p81
    %p83 = scmp.ne.s32.totalorder %s75, %s77
    %p84 = scmp.eq.s32.totalorder %s25, 1
    %p85 = por %p83, %p84
    %p86 = scmp.ne.s32.totalorder %s77, %s78
    %p87 = scmp.eq.s32.totalorder %s25, 0
    %p88 = por %p86, %p87
    %p89 = scmp.ne.s32.totalorder %s77, %s78
    %p90 = scmp.eq.s32.totalorder %s26, 1
    %p91 = por %p89, %p90
    %p93 = scmp.ne.s32.totalorder %s78, %s92
    %p94 = scmp.eq.s32.totalorder %s26, 0
    %p95 = por %p93, %p94
    %s97 = sadd.s32 %s96, 1
    %p100 = scmp.eq.s32.totalorder %s20, 1
    %p101 = scmp.ne.s32.totalorder %s96, %s98
    %p102 = scmp.eq.s32.totalorder %s20, 0
    %p103 = por %p101, %p102
    %p104 = scmp.ne.s32.totalorder %s96, %s98
    %p105 = scmp.eq.s32.totalorder %s25, 1
    %p106 = por %p104, %p105
    %p107 = scmp.ne.s32.totalorder %s98, %s99
    %p108 = scmp.eq.s32.totalorder %s25, 0
    %p109 = por %p107, %p108
    %p110 = scmp.ne.s32.totalorder %s98, %s99
    %p111 = scmp.eq.s32.totalorder %s26, 1
    %p112 = por %p110, %p111
    %p114 = scmp.ne.s32.totalorder %s99, %s113
    %p115 = scmp.eq.s32.totalorder %s26, 0
    %p116 = por %p114, %p115
    %s118 = sadd.s32 %s117, 1
    %p121 = scmp.eq.s32.totalorder %s20, 1
    %p122 = scmp.ne.s32.totalorder %s117, %s119
    %p123 = scmp.eq.s32.totalorder %s20, 0
    %p124 = por %p122, %p123
    %p125 = scmp.ne.s32.totalorder %s117, %s119
    %p126 = scmp.eq.s32.totalorder %s25, 1
    %p127 = por %p125, %p126
    %p128 = scmp.ne.s32.totalorder %s119, %s120
    %p129 = scmp.eq.s32.totalorder %s25, 0
    %p130 = por %p128, %p129
    %p131 = scmp.ne.s32.totalorder %s119, %s120
    %p132 = scmp.eq.s32.totalorder %s26, 1
    %p133 = por %p131, %p132
    %p135 = scmp.ne.s32.totalorder %s120, %s134
    %p136 = scmp.eq.s32.totalorder %s26, 0
    %p137 = por %p135, %p136
    %s139 = sadd.s32 %s138, 1
    %p142 = scmp.eq.s32.totalorder %s20, 1
    %p143 = scmp.ne.s32.totalorder %s138, %s140
    %p144 = scmp.eq.s32.totalorder %s20, 0
    %p145 = por %p143, %p144
    %p146 = scmp.ne.s32.totalorder %s138, %s140
    %p147 = scmp.eq.s32.totalorder %s25, 1
    %p148 = por %p146, %p147
    %p149 = scmp.ne.s32.totalorder %s140, %s141
    %p150 = scmp.eq.s32.totalorder %s25, 0
    %p151 = por %p149, %p150
    %p152 = scmp.ne.s32.totalorder %s140, %s141
    %p153 = scmp.eq.s32.totalorder %s26, 1
    %p154 = por %p152, %p153
    %p156 = scmp.ne.s32.totalorder %s141, %s155
    %p157 = scmp.eq.s32.totalorder %s26, 0
    %p158 = por %p156, %p157
    %s160 = sadd.s32 %s159, 1
    %p163 = scmp.eq.s32.totalorder %s20, 1
    %p164 = scmp.ne.s32.totalorder %s159, %s161
    %p165 = scmp.eq.s32.totalorder %s20, 0
    %p166 = por %p164, %p165
    %p167 = scmp.ne.s32.totalorder %s159, %s161
    %p168 = scmp.eq.s32.totalorder %s25, 1
    %p169 = por %p167, %p168
    %p170 = scmp.ne.s32.totalorder %s161, %s162
    %p171 = scmp.eq.s32.totalorder %s25, 0
    %p172 = por %p170, %p171
    %p173 = scmp.ne.s32.totalorder %s161, %s162
    %p174 = scmp.eq.s32.totalorder %s26, 1
    %p175 = por %p173, %p174
    %p177 = scmp.ne.s32.totalorder %s162, %s176
    %p178 = scmp.eq.s32.totalorder %s26, 0
    %p179 = por %p177, %p178
    %s181 = sadd.s32 %s180, 1
    %p184 = scmp.eq.s32.totalorder %s20, 1
    %p185 = scmp.ne.s32.totalorder %s180, %s182
    %p186 = scmp.eq.s32.totalorder %s20, 0
    %p187 = por %p185, %p186
    %p188 = scmp.ne.s32.totalorder %s180, %s182
    %p189 = scmp.eq.s32.totalorder %s25, 1
    %p190 = por %p188, %p189
    %p191 = scmp.ne.s32.totalorder %s182, %s183
    %p192 = scmp.eq.s32.totalorder %s25, 0
    %p193 = por %p191, %p192
    %p194 = scmp.ne.s32.totalorder %s182, %s183
    %p195 = scmp.eq.s32.totalorder %s26, 1
    %p196 = por %p194, %p195
    %p198 = scmp.ne.s32.totalorder %s183, %s197
    %p199 = scmp.eq.s32.totalorder %s26, 0
    %p200 = por %p198, %p199
    %s202 = sadd.s32 %s201, 1
    %p205 = scmp.eq.s32.totalorder %s20, 1
    %p206 = scmp.ne.s32.totalorder %s201, %s203
    %p207 = scmp.eq.s32.totalorder %s20, 0
    %p208 = por %p206, %p207
    %p209 = scmp.ne.s32.totalorder %s201, %s203
    %p210 = scmp.eq.s32.totalorder %s25, 1
    %p211 = por %p209, %p210
    %p212 = scmp.ne.s32.totalorder %s203, %s204
    %p213 = scmp.eq.s32.totalorder %s25, 0
    %p214 = por %p212, %p213
    %p215 = scmp.ne.s32.totalorder %s203, %s204
    %p216 = scmp.eq.s32.totalorder %s26, 1
    %p217 = por %p215, %p216
    %p219 = scmp.ne.s32.totalorder %s204, %s218
    %p220 = scmp.eq.s32.totalorder %s26, 0
    %p221 = por %p219, %p220
    %s223 = sadd.s32 %s222, 1
    %p226 = scmp.eq.s32.totalorder %s20, 1
    %p227 = scmp.ne.s32.totalorder %s222, %s224
    %p228 = scmp.eq.s32.totalorder %s20, 0
    %p229 = por %p227, %p228
    %p230 = scmp.ne.s32.totalorder %s222, %s224
    %p231 = scmp.eq.s32.totalorder %s25, 1
    %p232 = por %p230, %p231
    %p233 = scmp.ne.s32.totalorder %s224, %s225
    %p234 = scmp.eq.s32.totalorder %s25, 0
    %p235 = por %p233, %p234
    %p236 = scmp.ne.s32.totalorder %s224, %s225
    %p237 = scmp.eq.s32.totalorder %s26, 1
    %p238 = por %p236, %p237
    %p240 = scmp.ne.s32.totalorder %s225, %s239
    %p241 = scmp.eq.s32.totalorder %s26, 0
    %p242 = por %p240, %p241
    %s244 = sadd.s32 %s243, 1
    %p247 = scmp.eq.s32.totalorder %s20, 1
    %p248 = scmp.ne.s32.totalorder %s243, %s245
    %p249 = scmp.eq.s32.totalorder %s20, 0
    %p250 = por %p248, %p249
    %p251 = scmp.ne.s32.totalorder %s243, %s245
    %p252 = scmp.eq.s32.totalorder %s25, 1
    %p253 = por %p251, %p252
    %p254 = scmp.ne.s32.totalorder %s245, %s246
    %p255 = scmp.eq.s32.totalorder %s25, 0
    %p256 = por %p254, %p255
    %p257 = scmp.ne.s32.totalorder %s245, %s246
    %p258 = scmp.eq.s32.totalorder %s26, 1
    %p259 = por %p257, %p258
    %p261 = scmp.ne.s32.totalorder %s246, %s260
    %p262 = scmp.eq.s32.totalorder %s26, 0
    %p263 = por %p261, %p262
    %s265 = sadd.s32 %s264, 1
    %p268 = scmp.eq.s32.totalorder %s20, 1
    %p269 = scmp.ne.s32.totalorder %s264, %s266
    %p270 = scmp.eq.s32.totalorder %s20, 0
    %p271 = por %p269, %p270
    %p272 = scmp.ne.s32.totalorder %s264, %s266
    %p273 = scmp.eq.s32.totalorder %s25, 1
    %p274 = por %p272, %p273
    %p275 = scmp.ne.s32.totalorder %s266, %s267
    %p276 = scmp.eq.s32.totalorder %s25, 0
    %p277 = por %p275, %p276
    %p278 = scmp.ne.s32.totalorder %s266, %s267
    %p279 = scmp.eq.s32.totalorder %s26, 1
    %p280 = por %p278, %p279
    %p282 = scmp.ne.s32.totalorder %s267, %s281
    %p283 = scmp.eq.s32.totalorder %s26, 0
    %p284 = por %p282, %p283
    %s285 = ssub.s32 %s20, %s27
    %p286 = scmp.eq.s32.totalorder %s285, 0
    %s288 = sadd.s32 %s287, 1
    %s289 = scalar_select %p286, %s287, %s288
    %p292 = pneg %p286
    %p293 = scmp.eq.s32.totalorder %s20, 1
    %p294 = por %p292, %p293
    %p295 = scmp.ne.s32.totalorder %s287, %s290
    %p296 = scmp.eq.s32.totalorder %s20, 0
    %p297 = por %p295, %p296
    %p298 = scmp.ne.s32.totalorder %s287, %s290
    %p299 = scmp.eq.s32.totalorder %s25, 1
    %p300 = por %p298, %p299
    %p301 = scmp.ne.s32.totalorder %s290, %s291
    %p302 = scmp.eq.s32.totalorder %s25, 0
    %p303 = por %p301, %p302
    %p304 = scmp.ne.s32.totalorder %s290, %s291
    %p305 = scmp.eq.s32.totalorder %s26, 1
    %p306 = por %p304, %p305
    %p308 = scmp.ne.s32.totalorder %s291, %s307
    %p309 = scmp.eq.s32.totalorder %s26, 0
    %p310 = por %p308, %p309
    %p311 = scmp.le.s32.totalorder 1, %s20
    %p312 = scmp.lt.s32.totalorder %s20, 3
    %p313 = pnand %p311, %p312
    %p314 = pneg %p313
    // Predicated region
    $region9: #{reverse_stage_forward.1} parent=5 // pred_check
      _
    $region10: #{reverse_stage_forward.1} parent=5 // pred_check_branch
      %316 = sbr.rel (%p313) target = $region12
    $region11: #{reverse_stage_forward.1} parent=5 // pred_region
      %s317 = ssub.s32 %s20, 1
      // Predicated region
      $region13: #{reverse_stage_forward.1} parent=11 // pred_check
        %p318 = pneg %p67
      $region14: #{reverse_stage_forward.1} parent=11 // pred_check_branch
        %320 = sbr.rel (%p318) target = $region16
      $region15: #{reverse_stage_forward.1} parent=11 // pred_region
        _
      $region16: #{reverse_stage_forward.1} parent=11 // pred_fallthru
        _
      // Predicated region
      $region17: #{reverse_stage_forward.1} parent=11 // pred_check
        %p321 = pneg %p88
      $region18: #{reverse_stage_forward.1} parent=11 // pred_check_branch
        %323 = sbr.rel (%p321) target = $region20
      $region19: #{reverse_stage_forward.1} parent=11 // pred_region
        _
      $region20: #{reverse_stage_forward.1} parent=11 // pred_fallthru
        _
      // Predicated region
      $region21: #{reverse_stage_forward.1} parent=11 // pred_check
        %p324 = pneg %p109
      $region22: #{reverse_stage_forward.1} parent=11 // pred_check_branch
        %326 = sbr.rel (%p324) target = $region24
      $region23: #{reverse_stage_forward.1} parent=11 // pred_region
        _
      $region24: #{reverse_stage_forward.1} parent=11 // pred_fallthru
        _
      // Predicated region
      $region25: #{reverse_stage_forward.1} parent=11 // pred_check
        %p327 = pneg %p130
      $region26: #{reverse_stage_forward.1} parent=11 // pred_check_branch
        %329 = sbr.rel (%p327) target = $region28
      $region27: #{reverse_stage_forward.1} parent=11 // pred_region
        _
      $region28: #{reverse_stage_forward.1} parent=11 // pred_fallthru
        _
      // Predicated region
      $region29: #{reverse_stage_forward.1} parent=11 // pred_check
        %p330 = pneg %p151
      $region30: #{reverse_stage_forward.1} parent=11 // pred_check_branch
        %332 = sbr.rel (%p330) target = $region32
      $region31: #{reverse_stage_forward.1} parent=11 // pred_region
        _
      $region32: #{reverse_stage_forward.1} parent=11 // pred_fallthru
        _
      // Predicated region
      $region33: #{reverse_stage_forward.1} parent=11 // pred_check
        %p333 = pneg %p172
      $region34: #{reverse_stage_forward.1} parent=11 // pred_check_branch
        %335 = sbr.rel (%p333) target = $region36
      $region35: #{reverse_stage_forward.1} parent=11 // pred_region
        _
      $region36: #{reverse_stage_forward.1} parent=11 // pred_fallthru
        _
      // Predicated region
      $region37: #{reverse_stage_forward.1} parent=11 // pred_check
        %p336 = pneg %p193
      $region38: #{reverse_stage_forward.1} parent=11 // pred_check_branch
        %338 = sbr.rel (%p336) target = $region40
      $region39: #{reverse_stage_forward.1} parent=11 // pred_region
        _
      $region40: #{reverse_stage_forward.1} parent=11 // pred_fallthru
        _
      // Predicated region
      $region41: #{reverse_stage_forward.1} parent=11 // pred_check
        %p339 = pneg %p214
      $region42: #{reverse_stage_forward.1} parent=11 // pred_check_branch
        %341 = sbr.rel (%p339) target = $region44
      $region43: #{reverse_stage_forward.1} parent=11 // pred_region
        _
      $region44: #{reverse_stage_forward.1} parent=11 // pred_fallthru
        _
      // Predicated region
      $region45: #{reverse_stage_forward.1} parent=11 // pred_check
        %p342 = pneg %p235
      $region46: #{reverse_stage_forward.1} parent=11 // pred_check_branch
        %344 = sbr.rel (%p342) target = $region48
      $region47: #{reverse_stage_forward.1} parent=11 // pred_region
        _
      $region48: #{reverse_stage_forward.1} parent=11 // pred_fallthru
        _
      // Predicated region
      $region49: #{reverse_stage_forward.1} parent=11 // pred_check
        %p345 = pneg %p256
      $region50: #{reverse_stage_forward.1} parent=11 // pred_check_branch
        %347 = sbr.rel (%p345) target = $region52
      $region51: #{reverse_stage_forward.1} parent=11 // pred_region
        _
      $region52: #{reverse_stage_forward.1} parent=11 // pred_fallthru
        _
      // Predicated region
      $region53: #{reverse_stage_forward.1} parent=11 // pred_check
        %p348 = pneg %p277
      $region54: #{reverse_stage_forward.1} parent=11 // pred_check_branch
        %350 = sbr.rel (%p348) target = $region56
      $region55: #{reverse_stage_forward.1} parent=11 // pred_region
        _
      $region56: #{reverse_stage_forward.1} parent=11 // pred_fallthru
        _
    $region12: #{reverse_stage_forward.1} parent=5 // pred_fallthru
      _
    %p351 = scmp.lt.s32.totalorder %s20, 2
    // Predicated region
    $region57: #{reverse_stage_forward.1} parent=5 // pred_check
      %p352 = pneg %p351
    $region58: #{reverse_stage_forward.1} parent=5 // pred_check_branch
      %354 = sbr.rel (%p352) target = $region60
    $region59: #{reverse_stage_forward.1} parent=5 // pred_region
      // Predicated region
      $region61: #{reverse_stage_forward.1} parent=59 // pred_check
        %p355 = pneg %p40
      $region62: #{reverse_stage_forward.1} parent=59 // pred_check_branch
        %357 = sbr.rel (%p355) target = $region64
      $region63: #{reverse_stage_forward.1} parent=59 // pred_region
        %p358 = scmp.lt.s32.totalorder %s20, 1
        %s359 = scalar_select %p358, %s20, 1
        %s360 = smul.addr %s359, 54
        %s361 = smul.addr %s360, 8
        %s362 = scalar_lea.vmem %s0, %s361
      $region64: #{reverse_stage_forward.1} parent=59 // pred_fallthru
        _
    $region60: #{reverse_stage_forward.1} parent=5 // pred_fallthru
      _
    %p363 = scmp.le.s32.totalorder 1, %s20
    %p364 = scmp.lt.s32.totalorder %s20, 3
    %p365 = pnand %p363, %p364
    %p366 = pneg %p365
    // Predicated region
    $region65: #{reverse_stage_forward.1} parent=5 // pred_check
      _
    $region66: #{reverse_stage_forward.1} parent=5 // pred_check_branch
      %368 = sbr.rel (%p365) target = $region68
    $region67: #{reverse_stage_forward.1} parent=5 // pred_region
      %s369 = ssub.s32 %s20, 1
      %p370 = scmp.lt.s32.totalorder %s25, 1
      %s371 = scalar_select %p370, %s25, 1
      %s372 = smul.addr %s371, 54
      %s373 = smul.addr %s372, 8
      %s374 = scalar_lea.vmem %s0, %s373
      %p375 = pneg %p46
      %p376 = pneg %p43
      %p377 = pneg %p67
      %p378 = pneg %p64
      %p379 = pneg %p88
      %p380 = pneg %p85
      %p381 = pneg %p109
      %p382 = pneg %p106
      %p383 = pneg %p130
      %p384 = pneg %p127
      %p385 = pneg %p151
      %p386 = pneg %p148
      %p387 = pneg %p172
      %p388 = pneg %p169
      %p389 = pneg %p193
      %p390 = pneg %p190
      %p391 = pneg %p214
      %p392 = pneg %p211
      %p393 = pneg %p235
      %p394 = pneg %p232
      %p395 = pneg %p256
      %p396 = pneg %p253
      %p397 = pneg %p277
      %p398 = pneg %p274
      %p399 = pneg %p303
      %p400 = pneg %p300
      %p401 = scmp.lt.s32.totalorder %s25, 1
      %s402 = scalar_select %p401, %s25, 1
      %s403 = smul.addr %s402, 32
      %s404 = smul.addr %s403, 8
      %s405 = scalar_lea.vmem %s12, %s404
      %p406 = scmp.lt.s32.totalorder %s25, 1
      %s407 = scalar_select %p406, %s25, 1
      %s408 = smul.addr %s407, 54
      %s409 = smul.addr %s408, 8
      %s410 = scalar_lea.vmem %s0, %s409
      %p411 = scmp.lt.s32.totalorder %s25, 1
      %s412 = scalar_select %p411, %s25, 1
      %s413 = smul.addr %s412, 32
      %s414 = smul.addr %s413, 8
      %s415 = scalar_lea.vmem %s12, %s414
      %v416 = vld [vmem:[%s410] sm:$0xff]
      %v417 = vld [vmem:[%s410 + $0x8] sm:$0xff]
      %v418 = vld [vmem:[%s410 + $0x18] sm:$0xff]
      %v419 = vld [vmem:[%s410 + $0x20] sm:$0xff]
      %v420 = vld [vmem:[%s410 + $0x30] sm:$0xff]
      %v421 = vld [vmem:[%s410 + $0x38] sm:$0xff]
      %v422 = vld [vmem:[%s410 + $0x48] sm:$0xff]
      %v423 = vld [vmem:[%s410 + $0x50] sm:$0xff]
      %v424 = vld [vmem:[%s410 + $0x60] sm:$0xff]
      %v425 = vld [vmem:[%s410 + $0x68] sm:$0xff]
      %v426 = vld [vmem:[%s410 + $0x78] sm:$0xff]
      %v427 = vld [vmem:[%s410 + $0x80] sm:$0xff]
      %v428 = vld [vmem:[%s410 + $0x90] sm:$0xff]
      %v429 = vld [vmem:[%s410 + $0x98] sm:$0xff]
      %v430 = vld [vmem:[%s410 + $0xa8] sm:$0xff]
      %v431 = vld [vmem:[%s410 + $0xb0] sm:$0xff]
      %v432 = vld [vmem:[%s410 + $0xc0] sm:$0xff]
      %v433 = vld [vmem:[%s410 + $0xc8] sm:$0xff]
      %v434 = vld [vmem:[%s410 + $0xd8] sm:$0xff]
      %v435 = vld [vmem:[%s410 + $0xe0] sm:$0xff]
      %v436 = vld [vmem:[%s410 + $0xf0] sm:$0xff]
      %v437 = vld [vmem:[%s410 + $0xf8] sm:$0xff]
      %v438 = vld [vmem:[%s410 + $0x108] sm:$0xff]
      %v439 = vld [vmem:[%s410 + $0x110] sm:$0xff]
      %v440 = vld [vmem:[%s410 + $0x120] sm:$0xff]
      %v441 = vld [vmem:[%s410 + $0x128] sm:$0xff]
      %v442 = vld [vmem:[%s410 + $0x138] sm:$0xff]
      %v443 = vld [vmem:[%s410 + $0x140] sm:$0xff]
      %v444 = vld [vmem:[%s410 + $0x150] sm:$0xff]
      %v445 = vld [vmem:[%s410 + $0x158] sm:$0xff]
      %v446 = vld [vmem:[%s410 + $0x168] sm:$0xff]
      %v447 = vld [vmem:[%s410 + $0x170] sm:$0xff]
      %v448 = vld [vmem:[%s410 + $0x180] sm:$0xff]
      %v449 = vld [vmem:[%s410 + $0x188] sm:$0xff]
      %v450 = vld [vmem:[%s410 + $0x198] sm:$0xff]
      %v451 = vld [vmem:[%s410 + $0x1a0] sm:$0xff]
      %v452 = vld [vmem:[%s410 + $0x1] sm:$0xff]
      %v453 = vld [vmem:[%s410 + $0x9] sm:$0xff]
      %v454 = vld [vmem:[%s410 + $0x19] sm:$0xff]
      %v455 = vld [vmem:[%s410 + $0x21] sm:$0xff]
      %v456 = vld [vmem:[%s410 + $0x31] sm:$0xff]
      %v457 = vld [vmem:[%s410 + $0x39] sm:$0xff]
      %v458 = vld [vmem:[%s410 + $0x49] sm:$0xff]
      %v459 = vld [vmem:[%s410 + $0x51] sm:$0xff]
      %v460 = vld [vmem:[%s410 + $0x61] sm:$0xff]
      %v461 = vld [vmem:[%s410 + $0x69] sm:$0xff]
      %v462 = vld [vmem:[%s410 + $0x79] sm:$0xff]
      %v463 = vld [vmem:[%s410 + $0x81] sm:$0xff]
      %v464 = vld [vmem:[%s410 + $0x91] sm:$0xff]
      %v465 = vld [vmem:[%s410 + $0x99] sm:$0xff]
      %v466 = vld [vmem:[%s410 + $0xa9] sm:$0xff]
      %v467 = vld [vmem:[%s410 + $0xb1] sm:$0xff]
      %v468 = vld [vmem:[%s410 + $0xc1] sm:$0xff]
      %v469 = vld [vmem:[%s410 + $0xc9] sm:$0xff]
      %v470 = vld [vmem:[%s410 + $0xd9] sm:$0xff]
      %v471 = vld [vmem:[%s410 + $0xe1] sm:$0xff]
      %v472 = vld [vmem:[%s410 + $0xf1] sm:$0xff]
      %v473 = vld [vmem:[%s410 + $0xf9] sm:$0xff]
      %v474 = vld [vmem:[%s410 + $0x109] sm:$0xff]
      %v475 = vld [vmem:[%s410 + $0x111] sm:$0xff]
      %v476 = vld [vmem:[%s410 + $0x121] sm:$0xff]
      %v477 = vld [vmem:[%s410 + $0x129] sm:$0xff]
      %v478 = vld [vmem:[%s410 + $0x139] sm:$0xff]
      %v479 = vld [vmem:[%s410 + $0x141] sm:$0xff]
      %v480 = vld [vmem:[%s410 + $0x151] sm:$0xff]
      %v481 = vld [vmem:[%s410 + $0x159] sm:$0xff]
      %v482 = vld [vmem:[%s410 + $0x169] sm:$0xff]
      %v483 = vld [vmem:[%s410 + $0x171] sm:$0xff]
      %v484 = vld [vmem:[%s410 + $0x181] sm:$0xff]
      %v485 = vld [vmem:[%s410 + $0x189] sm:$0xff]
      %v486 = vld [vmem:[%s410 + $0x199] sm:$0xff]
      %v487 = vld [vmem:[%s410 + $0x1a1] sm:$0xff]
      %v488 = vld [vmem:[%s410 + $0x2] sm:$0xff]
      %v489 = vld [vmem:[%s410 + $0xa] sm:$0xff]
      %v490 = vld [vmem:[%s410 + $0x1a] sm:$0xff]
      %v491 = vld [vmem:[%s410 + $0x22] sm:$0xff]
      %v492 = vld [vmem:[%s410 + $0x32] sm:$0xff]
      %v493 = vld [vmem:[%s410 + $0x3a] sm:$0xff]
      %v494 = vld [vmem:[%s410 + $0x4a] sm:$0xff]
      %v495 = vld [vmem:[%s410 + $0x52] sm:$0xff]
      %v496 = vld [vmem:[%s410 + $0x62] sm:$0xff]
      %v497 = vld [vmem:[%s410 + $0x6a] sm:$0xff]
      %v498 = vld [vmem:[%s410 + $0x7a] sm:$0xff]
      %v499 = vld [vmem:[%s410 + $0x82] sm:$0xff]
      %v500 = vld [vmem:[%s410 + $0x92] sm:$0xff]
      %v501 = vld [vmem:[%s410 + $0x9a] sm:$0xff]
      %v502 = vld [vmem:[%s410 + $0xaa] sm:$0xff]
      %v503 = vld [vmem:[%s410 + $0xb2] sm:$0xff]
      %v504 = vld [vmem:[%s410 + $0xc2] sm:$0xff]
      %v505 = vld [vmem:[%s410 + $0xca] sm:$0xff]
      %v506 = vld [vmem:[%s410 + $0xda] sm:$0xff]
      %v507 = vld [vmem:[%s410 + $0xe2] sm:$0xff]
      %v508 = vld [vmem:[%s410 + $0xf2] sm:$0xff]
      %v509 = vld [vmem:[%s410 + $0xfa] sm:$0xff]
      %v510 = vld [vmem:[%s410 + $0x10a] sm:$0xff]
      %v511 = vld [vmem:[%s410 + $0x112] sm:$0xff]
      %v512 = vld [vmem:[%s410 + $0x122] sm:$0xff]
      %v513 = vld [vmem:[%s410 + $0x12a] sm:$0xff]
      %v514 = vld [vmem:[%s410 + $0x13a] sm:$0xff]
      %v515 = vld [vmem:[%s410 + $0x142] sm:$0xff]
      %v516 = vld [vmem:[%s410 + $0x152] sm:$0xff]
      %v517 = vld [vmem:[%s410 + $0x15a] sm:$0xff]
      %v518 = vld [vmem:[%s410 + $0x16a] sm:$0xff]
      %v519 = vld [vmem:[%s410 + $0x172] sm:$0xff]
      %v520 = vld [vmem:[%s410 + $0x182] sm:$0xff]
      %v521 = vld [vmem:[%s410 + $0x18a] sm:$0xff]
      %v522 = vld [vmem:[%s410 + $0x19a] sm:$0xff]
      %v523 = vld [vmem:[%s410 + $0x1a2] sm:$0xff]
      %v524 = vld [vmem:[%s2] sm:$0x1]
      %v526 = vlaneseq
      %v527 = vshrl.u32 %v526, 7
      %v528 = vsub.s32 0, %v527
      %v529 = vrot.slane %v524, %v528
      %v531 = vld [vmem:[%s1] sm:$0xff]
      %v532 = vld [vmem:[%s1 + $0x8] sm:$0xff]
      %v533 = vld [vmem:[%s1 + $0x10] sm:$0xff]
      %v534 = vld [vmem:[%s1 + $0x18] sm:$0xff]
      %v535 = vld [vmem:[%s1 + $0x20] sm:$0x1]
      %vm536 = vcmask 269312
      %v538 = vsel %vm536, %v416, 0
      %v541 = vsel %vm536, %v417, 0
      %v544 = vsel %vm536, %v418, 0
      %v547 = vsel %vm536, %v419, 0
      %v550 = vsel %vm536, %v420, 0
      %v553 = vsel %vm536, %v421, 0
      %v556 = vsel %vm536, %v422, 0
      %v559 = vsel %vm536, %v423, 0
      %v562 = vsel %vm536, %v424, 0
      %v565 = vsel %vm536, %v425, 0
      %v568 = vsel %vm536, %v426, 0
      %v571 = vsel %vm536, %v427, 0
      %v574 = vsel %vm536, %v428, 0
      %v577 = vsel %vm536, %v429, 0
      %v580 = vsel %vm536, %v430, 0
      %v583 = vsel %vm536, %v431, 0
      %v586 = vsel %vm536, %v432, 0
      %v589 = vsel %vm536, %v433, 0
      %v592 = vsel %vm536, %v434, 0
      %v595 = vsel %vm536, %v435, 0
      %v598 = vsel %vm536, %v436, 0
      %v601 = vsel %vm536, %v437, 0
      %v604 = vsel %vm536, %v438, 0
      %v607 = vsel %vm536, %v439, 0
      %v610 = vsel %vm536, %v440, 0
      %v613 = vsel %vm536, %v441, 0
      %v616 = vsel %vm536, %v442, 0
      %v619 = vsel %vm536, %v443, 0
      %v622 = vsel %vm536, %v444, 0
      %v625 = vsel %vm536, %v445, 0
      %v628 = vsel %vm536, %v446, 0
      %v631 = vsel %vm536, %v447, 0
      %vm633 = vcmask 1040384
      %v635 = vsel %vm633, %v535, 0
      %637 = vmatprep.subr.mxu0 0.0
      %638 = vmatpush1.msra.mxu0 %v531
      %639 = vmatprep.subr.mxu0 0.0
      %640 = vmatpush1.msra.mxu0 %v532
      %641 = vmatprep.subr.mxu0 0.0
      %642 = vmatpush1.msra.mxu0 %v533
      %643 = vmatprep.subr.mxu0 0.0
      %644 = vmatpush1.msra.mxu0 %v534
      %645 = vmatprep.subr.mxu0 0.0
      %646 = vmatpush1.msra.mxu0 %v635
      %647 = vmatprep.subr.mxu0 0.0
      %648 = vmatpush1.msra.mxu0 0.0
      %649 = vmatprep.subr.mxu0 0.0
      %650 = vmatpush1.msra.mxu0 0.0
      %651 = vmatprep.subr.mxu0 0.0
      %652 = vmatpush1.msra.mxu0 0.0
      %653 = vmatprep.subr.mxu0 0.0
      %654 = vmatpush1.msra.mxu0 0.0
      %655 = vmatprep.subr.mxu0 0.0
      %656 = vmatpush1.msra.mxu0 0.0
      %657 = vmatprep.subr.mxu0 0.0
      %658 = vmatpush1.msra.mxu0 0.0
      %659 = vmatprep.subr.mxu0 0.0
      %660 = vmatpush1.msra.mxu0 0.0
      %661 = vmatprep.subr.mxu0 0.0
      %662 = vmatpush1.msra.mxu0 0.0
      %663 = vmatprep.subr.mxu0 0.0
      %664 = vmatpush1.msra.mxu0 0.0
      %665 = vmatprep.subr.mxu0 0.0
      %666 = vmatpush1.msra.mxu0 0.0
      %667 = vmatprep.subr.mxu0 0.0
      %668 = vmatpush1.msra.mxu0 0.0
      %669 = vmatprep.subr.mxu0 0.0
      %670 = vmatpush1.msra.mxu0 0.0
      %671 = vmatprep.subr.mxu0 0.0
      %672 = vmatpush1.msra.mxu0 0.0
      %673 = vmatprep.subr.mxu0 0.0
      %674 = vmatpush1.msra.mxu0 0.0
      %675 = vmatprep.subr.mxu0 0.0
      %676 = vmatpush1.msra.mxu0 0.0
      %677 = vmatprep.subr.mxu0 0.0
      %678 = vmatpush1.msra.mxu0 0.0
      %679 = vmatprep.subr.mxu0 0.0
      %680 = vmatpush1.msra.mxu0 0.0
      %681 = vmatprep.subr.mxu0 0.0
      %682 = vmatpush1.msra.mxu0 0.0
      %683 = vmatprep.subr.mxu0 0.0
      %684 = vmatpush1.msra.mxu0 0.0
      %685 = vmatprep.subr.mxu0 0.0
      %686 = vmatpush1.msra.mxu0 0.0
      %687 = vmatprep.subr.mxu0 0.0
      %688 = vmatpush1.msra.mxu0 0.0
      %689 = vmatprep.subr.mxu0 0.0
      %690 = vmatpush1.msra.mxu0 0.0
      %691 = vmatprep.subr.mxu0 0.0
      %692 = vmatpush1.msra.mxu0 0.0
      %693 = vmatprep.subr.mxu0 0.0
      %694 = vmatpush1.msra.mxu0 0.0
      %695 = vmatprep.subr.mxu0 0.0
      %696 = vmatpush1.msra.mxu0 0.0
      %697 = vmatprep.subr.mxu0 0.0
      %698 = vmatpush1.msra.mxu0 0.0
      %699 = vmatprep.subr.mxu0 0.0
      %700 = vmatpush1.msra.mxu0 0.0
      %701 = vmatprep.mubr.f32.mxu0 0.0
      %702 = vmatmul.mubr.f32.gmra.mrb[0].mxu0 %v538
      %v703 = vpop.f32.mrb[0].mxu0
      %v704 = vadd.f32 0.0, %v703
      %v705 = vpop.f32.mrb[0].mxu0
      %706 = vmatprep.mubr.f32.mxu0 0.0
      %707 = vmatmul.mubr.f32.gmra.mrb[0].mxu0 %v541
      %v708 = vpop.f32.mrb[0].mxu0
      %v709 = vadd.f32 0.0, %v708
      %v710 = vpop.f32.mrb[0].mxu0
      %711 = vmatprep.mubr.f32.mxu0 0.0
      %712 = vmatmul.mubr.f32.gmra.mrb[0].mxu0 %v544
      %v713 = vpop.f32.mrb[0].mxu0
      %v714 = vadd.f32 0.0, %v713
      %v715 = vpop.f32.mrb[0].mxu0
      %716 = vmatprep.mubr.f32.mxu0 0.0
      %717 = vmatmul.mubr.f32.gmra.mrb[0].mxu0 %v547
      %v718 = vpop.f32.mrb[0].mxu0
      %v719 = vadd.f32 0.0, %v718
      %v720 = vpop.f32.mrb[0].mxu0
      %721 = vmatprep.mubr.f32.mxu0 0.0
      %722 = vmatmul.mubr.f32.gmra.mrb[0].mxu0 %v550
      %v723 = vpop.f32.mrb[0].mxu0
      %v724 = vadd.f32 0.0, %v723
      %v725 = vpop.f32.mrb[0].mxu0
      %726 = vmatprep.mubr.f32.mxu0 0.0
      %727 = vmatmul.mubr.f32.gmra.mrb[0].mxu0 %v553
      %v728 = vpop.f32.mrb[0].mxu0
      %v729 = vadd.f32 0.0, %v728
      %v730 = vpop.f32.mrb[0].mxu0
      %731 = vmatprep.mubr.f32.mxu0 0.0
      %732 = vmatmul.mubr.f32.gmra.mrb[0].mxu0 %v556
      %v733 = vpop.f32.mrb[0].mxu0
      %v734 = vadd.f32 0.0, %v733
      %v735 = vpop.f32.mrb[0].mxu0
      %736 = vmatprep.mubr.f32.mxu0 0.0
      %737 = vmatmul.mubr.f32.gmra.mrb[0].mxu0 %v559
      %v738 = vpop.f32.mrb[0].mxu0
      %v739 = vadd.f32 0.0, %v738
      %v740 = vpop.f32.mrb[0].mxu0
      %741 = vmatprep.mubr.f32.mxu0 0.0
      %742 = vmatmul.mubr.f32.gmra.mrb[0].mxu0 %v562
      %v743 = vpop.f32.mrb[0].mxu0
      %v744 = vadd.f32 0.0, %v743
      %v745 = vpop.f32.mrb[0].mxu0
      %746 = vmatprep.mubr.f32.mxu0 0.0
      %747 = vmatmul.mubr.f32.gmra.mrb[0].mxu0 %v565
      %v748 = vpop.f32.mrb[0].mxu0
      %v749 = vadd.f32 0.0, %v748
      %v750 = vpop.f32.mrb[0].mxu0
      %751 = vmatprep.mubr.f32.mxu0 0.0
      %752 = vmatmul.mubr.f32.gmra.mrb[0].mxu0 %v568
      %v753 = vpop.f32.mrb[0].mxu0
      %v754 = vadd.f32 0.0, %v753
      %v755 = vpop.f32.mrb[0].mxu0
      %756 = vmatprep.mubr.f32.mxu0 0.0
      %757 = vmatmul.mubr.f32.gmra.mrb[0].mxu0 %v571
      %v758 = vpop.f32.mrb[0].mxu0
      %v759 = vadd.f32 0.0, %v758
      %v760 = vpop.f32.mrb[0].mxu0
      %761 = vmatprep.mubr.f32.mxu0 0.0
      %762 = vmatmul.mubr.f32.gmra.mrb[0].mxu0 %v574
      %v763 = vpop.f32.mrb[0].mxu0
      %v764 = vadd.f32 0.0, %v763
      %v765 = vpop.f32.mrb[0].mxu0
      %766 = vmatprep.mubr.f32.mxu0 0.0
      %767 = vmatmul.mubr.f32.gmra.mrb[0].mxu0 %v577
      %v768 = vpop.f32.mrb[0].mxu0
      %v769 = vadd.f32 0.0, %v768
      %v770 = vpop.f32.mrb[0].mxu0
      %771 = vmatprep.mubr.f32.mxu0 0.0
      %772 = vmatmul.mubr.f32.gmra.mrb[0].mxu0 %v580
      %v773 = vpop.f32.mrb[0].mxu0
      %v774 = vadd.f32 0.0, %v773
      %v775 = vpop.f32.mrb[0].mxu0
      %776 = vmatprep.mubr.f32.mxu0 0.0
      %777 = vmatmul.mubr.f32.gmra.mrb[0].mxu0 %v583
      %v778 = vpop.f32.mrb[0].mxu0
      %v779 = vadd.f32 0.0, %v778
      %v780 = vpop.f32.mrb[0].mxu0
      %781 = vmatprep.mubr.f32.mxu0 0.0
      %782 = vmatmul.mubr.f32.gmra.mrb[0].mxu0 %v586
      %v783 = vpop.f32.mrb[0].mxu0
      %v784 = vadd.f32 0.0, %v783
      %v785 = vpop.f32.mrb[0].mxu0
      %786 = vmatprep.mubr.f32.mxu0 0.0
      %787 = vmatmul.mubr.f32.gmra.mrb[0].mxu0 %v589
      %v788 = vpop.f32.mrb[0].mxu0
      %v789 = vadd.f32 0.0, %v788
      %v790 = vpop.f32.mrb[0].mxu0
      %791 = vmatprep.mubr.f32.mxu0 0.0
      %792 = vmatmul.mubr.f32.gmra.mrb[0].mxu0 %v592
      %v793 = vpop.f32.mrb[0].mxu0
      %v794 = vadd.f32 0.0, %v793
      %v795 = vpop.f32.mrb[0].mxu0
      %796 = vmatprep.mubr.f32.mxu0 0.0
      %797 = vmatmul.mubr.f32.gmra.mrb[0].mxu0 %v595
      %v798 = vpop.f32.mrb[0].mxu0
      %v799 = vadd.f32 0.0, %v798
      %v800 = vpop.f32.mrb[0].mxu0
      %801 = vmatprep.mubr.f32.mxu0 0.0
      %802 = vmatmul.mubr.f32.gmra.mrb[0].mxu0 %v598
      %v803 = vpop.f32.mrb[0].mxu0
      %v804 = vadd.f32 0.0, %v803
      %v805 = vpop.f32.mrb[0].mxu0
      %806 = vmatprep.mubr.f32.mxu0 0.0
      %807 = vmatmul.mubr.f32.gmra.mrb[0].mxu0 %v601
      %v808 = vpop.f32.mrb[0].mxu0
      %v809 = vadd.f32 0.0, %v808
      %v810 = vpop.f32.mrb[0].mxu0
      %811 = vmatprep.mubr.f32.mxu0 0.0
      %812 = vmatmul.mubr.f32.gmra.mrb[0].mxu0 %v604
      %v813 = vpop.f32.mrb[0].mxu0
      %v814 = vadd.f32 0.0, %v813
      %v815 = vpop.f32.mrb[0].mxu0
      %816 = vmatprep.mubr.f32.mxu0 0.0
      %817 = vmatmul.mubr.f32.gmra.mrb[0].mxu0 %v607
      %v818 = vpop.f32.mrb[0].mxu0
      %v819 = vadd.f32 0.0, %v818
      %v820 = vpop.f32.mrb[0].mxu0
      %821 = vmatprep.mubr.f32.mxu0 0.0
      %822 = vmatmul.mubr.f32.gmra.mrb[0].mxu0 %v610
      %v823 = vpop.f32.mrb[0].mxu0
      %v824 = vadd.f32 0.0, %v823
      %v825 = vpop.f32.mrb[0].mxu0
      %826 = vmatprep.mubr.f32.mxu0 0.0
      %827 = vmatmul.mubr.f32.gmra.mrb[0].mxu0 %v613
      %v828 = vpop.f32.mrb[0].mxu0
      %v829 = vadd.f32 0.0, %v828
      %v830 = vpop.f32.mrb[0].mxu0
      %831 = vmatprep.mubr.f32.mxu0 0.0
      %832 = vmatmul.mubr.f32.gmra.mrb[0].mxu0 %v616
      %v833 = vpop.f32.mrb[0].mxu0
      %v834 = vadd.f32 0.0, %v833
      %v835 = vpop.f32.mrb[0].mxu0
      %836 = vmatprep.mubr.f32.mxu0 0.0
      %837 = vmatmul.mubr.f32.gmra.mrb[0].mxu0 %v619
      %v838 = vpop.f32.mrb[0].mxu0
      %v839 = vadd.f32 0.0, %v838
      %v840 = vpop.f32.mrb[0].mxu0
      %841 = vmatprep.mubr.f32.mxu0 0.0
      %842 = vmatmul.mubr.f32.gmra.mrb[0].mxu0 %v622
      %v843 = vpop.f32.mrb[0].mxu0
      %v844 = vadd.f32 0.0, %v843
      %v845 = vpop.f32.mrb[0].mxu0
      %846 = vmatprep.mubr.f32.mxu0 0.0
      %847 = vmatmul.mubr.f32.gmra.mrb[0].mxu0 %v625
      %v848 = vpop.f32.mrb[0].mxu0
      %v849 = vadd.f32 0.0, %v848
      %v850 = vpop.f32.mrb[0].mxu0
      %851 = vmatprep.mubr.f32.mxu0 0.0
      %852 = vmatmul.mubr.f32.gmra.mrb[0].mxu0 %v628
      %v853 = vpop.f32.mrb[0].mxu0
      %v854 = vadd.f32 0.0, %v853
      %v855 = vpop.f32.mrb[0].mxu0
      %856 = vmatprep.mubr.f32.mxu0 0.0
      %857 = vmatmul.mubr.f32.gmra.mrb[0].mxu0 %v631
      %v858 = vpop.f32.mrb[0].mxu0
      %v859 = vadd.f32 0.0, %v858
      %v860 = vpop.f32.mrb[0].mxu0
      %861 = vdwg.mxu0
      %v862 = vadd.f32 %v529, %v704
      %v863 = vadd.f32 %v529, %v709
      %v864 = vadd.f32 %v529, %v714
      %v865 = vadd.f32 %v529, %v719
      %v866 = vadd.f32 %v529, %v724
      %v867 = vadd.f32 %v529, %v729
      %v868 = vadd.f32 %v529, %v734
      %v869 = vadd.f32 %v529, %v739
      %v870 = vadd.f32 %v529, %v744
      %v871 = vadd.f32 %v529, %v749
      %v872 = vadd.f32 %v529, %v754
      %v873 = vadd.f32 %v529, %v759
      %v874 = vadd.f32 %v529, %v764
      %v875 = vadd.f32 %v529, %v769
      %v876 = vadd.f32 %v529, %v774
      %v877 = vadd.f32 %v529, %v779
      %v878 = vadd.f32 %v529, %v784
      %v879 = vadd.f32 %v529, %v789
      %v880 = vadd.f32 %v529, %v794
      %v881 = vadd.f32 %v529, %v799
      %v882 = vadd.f32 %v529, %v804
      %v883 = vadd.f32 %v529, %v809
      %v884 = vadd.f32 %v529, %v814
      %v885 = vadd.f32 %v529, %v819
      %v886 = vadd.f32 %v529, %v824
      %v887 = vadd.f32 %v529, %v829
      %v888 = vadd.f32 %v529, %v834
      %v889 = vadd.f32 %v529, %v839
      %v890 = vadd.f32 %v529, %v844
      %v891 = vadd.f32 %v529, %v849
      %v892 = vadd.f32 %v529, %v854
      %v893 = vadd.f32 %v529, %v859
      %s894 = scalar_lea.vmem %s1, 40
      %v895 = vld [vmem:[%s894] sm:$0xff]
      %v896 = vld [vmem:[%s894 + $0x8] sm:$0xff]
      %v897 = vld [vmem:[%s894 + $0x10] sm:$0xff]
      %v898 = vld [vmem:[%s894 + $0x18] sm:$0xff]
      %v899 = vld [vmem:[%s894 + $0x20] sm:$0x1]
      %v901 = vsel %vm536, %v452, 0
      %v904 = vsel %vm536, %v453, 0
      %v907 = vsel %vm536, %v454, 0
      %v910 = vsel %vm536, %v455, 0
      %v913 = vsel %vm536, %v456, 0
      %v916 = vsel %vm536, %v457, 0
      %v919 = vsel %vm536, %v458, 0
      %v922 = vsel %vm536, %v459, 0
      %v925 = vsel %vm536, %v460, 0
      %v928 = vsel %vm536, %v461, 0
      %v931 = vsel %vm536, %v462, 0
      %v934 = vsel %vm536, %v463, 0
      %v937 = vsel %vm536, %v464, 0
      %v940 = vsel %vm536, %v465, 0
      %v943 = vsel %vm536, %v466, 0
      %v946 = vsel %vm536, %v467, 0
      %v949 = vsel %vm536, %v468, 0
      %v952 = vsel %vm536, %v469, 0
      %v955 = vsel %vm536, %v470, 0
      %v958 = vsel %vm536, %v471, 0
      %v961 = vsel %vm536, %v472, 0
      %v964 = vsel %vm536, %v473, 0
      %v967 = vsel %vm536, %v474, 0
      %v970 = vsel %vm536, %v475, 0
      %v973 = vsel %vm536, %v476, 0
      %v976 = vsel %vm536, %v477, 0
      %v979 = vsel %vm536, %v478, 0
      %v982 = vsel %vm536, %v479, 0
      %v985 = vsel %vm536, %v480, 0
      %v988 = vsel %vm536, %v481, 0
      %v991 = vsel %vm536, %v482, 0
      %v994 = vsel %vm536, %v483, 0
      %v997 = vsel %vm633, %v899, 0
      %999 = vmatprep.subr.mxu0 0.0
      %1000 = vmatpush1.msra.mxu0 %v895
      %1001 = vmatprep.subr.mxu0 0.0
      %1002 = vmatpush1.msra.mxu0 %v896
      %1003 = vmatprep.subr.mxu0 0.0
      %1004 = vmatpush1.msra.mxu0 %v897
      %1005 = vmatprep.subr.mxu0 0.0
      %1006 = vmatpush1.msra.mxu0 %v898
      %1007 = vmatprep.subr.mxu0 0.0
      %1008 = vmatpush1.msra.mxu0 %v997
      %1009 = vmatprep.subr.mxu0 0.0
      %1010 = vmatpush1.msra.mxu0 0.0
      %1011 = vmatprep.subr.mxu0 0.0
      %1012 = vmatpush1.msra.mxu0 0.0
      %1013 = vmatprep.subr.mxu0 0.0
      %1014 = vmatpush1.msra.mxu0 0.0
      %1015 = vmatprep.subr.mxu0 0.0
      %1016 = vmatpush1.msra.mxu0 0.0
      %1017 = vmatprep.subr.mxu0 0.0
      %1018 = vmatpush1.msra.mxu0 0.0
      %1019 = vmatprep.subr.mxu0 0.0
      %1020 = vmatpush1.msra.mxu0 0.0
      %1021 = vmatprep.subr.mxu0 0.0
      %1022 = vmatpush1.msra.mxu0 0.0
      %1023 = vmatprep.subr.mxu0 0.0
      %1024 = vmatpush1.msra.mxu0 0.0
      %1025 = vmatprep.subr.mxu0 0.0
      %1026 = vmatpush1.msra.mxu0 0.0
      %1027 = vmatprep.subr.mxu0 0.0
      %1028 = vmatpush1.msra.mxu0 0.0
      %1029 = vmatprep.subr.mxu0 0.0
      %1030 = vmatpush1.msra.mxu0 0.0
      %1031 = vmatprep.subr.mxu0 0.0
      %1032 = vmatpush1.msra.mxu0 0.0
      %1033 = vmatprep.subr.mxu0 0.0
      %1034 = vmatpush1.msra.mxu0 0.0
      %1035 = vmatprep.subr.mxu0 0.0
      %1036 = vmatpush1.msra.mxu0 0.0
      %1037 = vmatprep.subr.mxu0 0.0
      %1038 = vmatpush1.msra.mxu0 0.0
      %1039 = vmatprep.subr.mxu0 0.0
      %1040 = vmatpush1.msra.mxu0 0.0
      %1041 = vmatprep.subr.mxu0 0.0
      %1042 = vmatpush1.msra.mxu0 0.0
      %1043 = vmatprep.subr.mxu0 0.0
      %1044 = vmatpush1.msra.mxu0 0.0
      %1045 = vmatprep.subr.mxu0 0.0
      %1046 = vmatpush1.msra.mxu0 0.0
      %1047 = vmatprep.subr.mxu0 0.0
      %1048 = vmatpush1.msra.mxu0 0.0
      %1049 = vmatprep.subr.mxu0 0.0
      %1050 = vmatpush1.msra.mxu0 0.0
      %1051 = vmatprep.subr.mxu0 0.0
      %1052 = vmatpush1.msra.mxu0 0.0
      %1053 = vmatprep.subr.mxu0 0.0
      %1054 = vmatpush1.msra.mxu0 0.0
      %1055 = vmatprep.subr.mxu0 0.0
      %1056 = vmatpush1.msra.mxu0 0.0
      %1057 = vmatprep.subr.mxu0 0.0
      %1058 = vmatpush1.msra.mxu0 0.0
      %1059 = vmatprep.subr.mxu0 0.0
      %1060 = vmatpush1.msra.mxu0 0.0
      %1061 = vmatprep.subr.mxu0 0.0
      %1062 = vmatpush1.msra.mxu0 0.0
      %1063 = vmatprep.mubr.f32.mxu0 0.0
      %1064 = vmatmul.mubr.f32.gmra.mrb[0].mxu0 %v901
      %v1065 = vpop.f32.mrb[0].mxu0
      %v1066 = vadd.f32 0.0, %v1065
      %v1067 = vpop.f32.mrb[0].mxu0
      %1068 = vmatprep.mubr.f32.mxu0 0.0
      %1069 = vmatmul.mubr.f32.gmra.mrb[0].mxu0 %v904
      %v1070 = vpop.f32.mrb[0].mxu0
      %v1071 = vadd.f32 0.0, %v1070
      %v1072 = vpop.f32.mrb[0].mxu0
      %1073 = vmatprep.mubr.f32.mxu0 0.0
      %1074 = vmatmul.mubr.f32.gmra.mrb[0].mxu0 %v907
      %v1075 = vpop.f32.mrb[0].mxu0
      %v1076 = vadd.f32 0.0, %v1075
      %v1077 = vpop.f32.mrb[0].mxu0
      %1078 = vmatprep.mubr.f32.mxu0 0.0
      %1079 = vmatmul.mubr.f32.gmra.mrb[0].mxu0 %v910
      %v1080 = vpop.f32.mrb[0].mxu0
      %v1081 = vadd.f32 0.0, %v1080
      %v1082 = vpop.f32.mrb[0].mxu0
      %1083 = vmatprep.mubr.f32.mxu0 0.0
      %1084 = vmatmul.mubr.f32.gmra.mrb[0].mxu0 %v913
      %v1085 = vpop.f32.mrb[0].mxu0
      %v1086 = vadd.f32 0.0, %v1085
      %v1087 = vpop.f32.mrb[0].mxu0
      %1088 = vmatprep.mubr.f32.mxu0 0.0
      %1089 = vmatmul.mubr.f32.gmra.mrb[0].mxu0 %v916
      %v1090 = vpop.f32.mrb[0].mxu0
      %v1091 = vadd.f32 0.0, %v1090
      %v1092 = vpop.f32.mrb[0].mxu0
      %1093 = vmatprep.mubr.f32.mxu0 0.0
      %1094 = vmatmul.mubr.f32.gmra.mrb[0].mxu0 %v919
      %v1095 = vpop.f32.mrb[0].mxu0
      %v1096 = vadd.f32 0.0, %v1095
      %v1097 = vpop.f32.mrb[0].mxu0
      %1098 = vmatprep.mubr.f32.mxu0 0.0
      %1099 = vmatmul.mubr.f32.gmra.mrb[0].mxu0 %v922
      %v1100 = vpop.f32.mrb[0].mxu0
      %v1101 = vadd.f32 0.0, %v1100
      %v1102 = vpop.f32.mrb[0].mxu0
      %1103 = vmatprep.mubr.f32.mxu0 0.0
      %1104 = vmatmul.mubr.f32.gmra.mrb[0].mxu0 %v925
      %v1105 = vpop.f32.mrb[0].mxu0
      %v1106 = vadd.f32 0.0, %v1105
      %v1107 = vpop.f32.mrb[0].mxu0
      %1108 = vmatprep.mubr.f32.mxu0 0.0
      %1109 = vmatmul.mubr.f32.gmra.mrb[0].mxu0 %v928
      %v1110 = vpop.f32.mrb[0].mxu0
      %v1111 = vadd.f32 0.0, %v1110
      %v1112 = vpop.f32.mrb[0].mxu0
      %1113 = vmatprep.mubr.f32.mxu0 0.0
      %1114 = vmatmul.mubr.f32.gmra.mrb[0].mxu0 %v931
      %v1115 = vpop.f32.mrb[0].mxu0
      %v1116 = vadd.f32 0.0, %v1115
      %v1117 = vpop.f32.mrb[0].mxu0
      %1118 = vmatprep.mubr.f32.mxu0 0.0
      %1119 = vmatmul.mubr.f32.gmra.mrb[0].mxu0 %v934
      %v1120 = vpop.f32.mrb[0].mxu0
      %v1121 = vadd.f32 0.0, %v1120
      %v1122 = vpop.f32.mrb[0].mxu0
      %1123 = vmatprep.mubr.f32.mxu0 0.0
      %1124 = vmatmul.mubr.f32.gmra.mrb[0].mxu0 %v937
      %v1125 = vpop.f32.mrb[0].mxu0
      %v1126 = vadd.f32 0.0, %v1125
      %v1127 = vpop.f32.mrb[0].mxu0
      %1128 = vmatprep.mubr.f32.mxu0 0.0
      %1129 = vmatmul.mubr.f32.gmra.mrb[0].mxu0 %v940
      %v1130 = vpop.f32.mrb[0].mxu0
      %v1131 = vadd.f32 0.0, %v1130
      %v1132 = vpop.f32.mrb[0].mxu0
      %1133 = vmatprep.mubr.f32.mxu0 0.0
      %1134 = vmatmul.mubr.f32.gmra.mrb[0].mxu0 %v943
      %v1135 = vpop.f32.mrb[0].mxu0
      %v1136 = vadd.f32 0.0, %v1135
      %v1137 = vpop.f32.mrb[0].mxu0
      %1138 = vmatprep.mubr.f32.mxu0 0.0
      %1139 = vmatmul.mubr.f32.gmra.mrb[0].mxu0 %v946
      %v1140 = vpop.f32.mrb[0].mxu0
      %v1141 = vadd.f32 0.0, %v1140
      %v1142 = vpop.f32.mrb[0].mxu0
      %1143 = vmatprep.mubr.f32.mxu0 0.0
      %1144 = vmatmul.mubr.f32.gmra.mrb[0].mxu0 %v949
      %v1145 = vpop.f32.mrb[0].mxu0
      %v1146 = vadd.f32 0.0, %v1145
      %v1147 = vpop.f32.mrb[0].mxu0
      %1148 = vmatprep.mubr.f32.mxu0 0.0
      %1149 = vmatmul.mubr.f32.gmra.mrb[0].mxu0 %v952
      %v1150 = vpop.f32.mrb[0].mxu0
      %v1151 = vadd.f32 0.0, %v1150
      %v1152 = vpop.f32.mrb[0].mxu0
      %1153 = vmatprep.mubr.f32.mxu0 0.0
      %1154 = vmatmul.mubr.f32.gmra.mrb[0].mxu0 %v955
      %v1155 = vpop.f32.mrb[0].mxu0
      %v1156 = vadd.f32 0.0, %v1155
      %v1157 = vpop.f32.mrb[0].mxu0
      %1158 = vmatprep.mubr.f32.mxu0 0.0
      %1159 = vmatmul.mubr.f32.gmra.mrb[0].mxu0 %v958
      %v1160 = vpop.f32.mrb[0].mxu0
      %v1161 = vadd.f32 0.0, %v1160
      %v1162 = vpop.f32.mrb[0].mxu0
      %1163 = vmatprep.mubr.f32.mxu0 0.0
      %1164 = vmatmul.mubr.f32.gmra.mrb[0].mxu0 %v961
      %v1165 = vpop.f32.mrb[0].mxu0
      %v1166 = vadd.f32 0.0, %v1165
      %v1167 = vpop.f32.mrb[0].mxu0
      %1168 = vmatprep.mubr.f32.mxu0 0.0
      %1169 = vmatmul.mubr.f32.gmra.mrb[0].mxu0 %v964
      %v1170 = vpop.f32.mrb[0].mxu0
      %v1171 = vadd.f32 0.0, %v1170
      %v1172 = vpop.f32.mrb[0].mxu0
      %1173 = vmatprep.mubr.f32.mxu0 0.0
      %1174 = vmatmul.mubr.f32.gmra.mrb[0].mxu0 %v967
      %v1175 = vpop.f32.mrb[0].mxu0
      %v1176 = vadd.f32 0.0, %v1175
      %v1177 = vpop.f32.mrb[0].mxu0
      %1178 = vmatprep.mubr.f32.mxu0 0.0
      %1179 = vmatmul.mubr.f32.gmra.mrb[0].mxu0 %v970
      %v1180 = vpop.f32.mrb[0].mxu0
      %v1181 = vadd.f32 0.0, %v1180
      %v1182 = vpop.f32.mrb[0].mxu0
      %1183 = vmatprep.mubr.f32.mxu0 0.0
      %1184 = vmatmul.mubr.f32.gmra.mrb[0].mxu0 %v973
      %v1185 = vpop.f32.mrb[0].mxu0
      %v1186 = vadd.f32 0.0, %v1185
      %v1187 = vpop.f32.mrb[0].mxu0
      %1188 = vmatprep.mubr.f32.mxu0 0.0
      %1189 = vmatmul.mubr.f32.gmra.mrb[0].mxu0 %v976
      %v1190 = vpop.f32.mrb[0].mxu0
      %v1191 = vadd.f32 0.0, %v1190
      %v1192 = vpop.f32.mrb[0].mxu0
      %1193 = vmatprep.mubr.f32.mxu0 0.0
      %1194 = vmatmul.mubr.f32.gmra.mrb[0].mxu0 %v979
      %v1195 = vpop.f32.mrb[0].mxu0
      %v1196 = vadd.f32 0.0, %v1195
      %v1197 = vpop.f32.mrb[0].mxu0
      %1198 = vmatprep.mubr.f32.mxu0 0.0
      %1199 = vmatmul.mubr.f32.gmra.mrb[0].mxu0 %v982
      %v1200 = vpop.f32.mrb[0].mxu0
      %v1201 = vadd.f32 0.0, %v1200
      %v1202 = vpop.f32.mrb[0].mxu0
      %1203 = vmatprep.mubr.f32.mxu0 0.0
      %1204 = vmatmul.mubr.f32.gmra.mrb[0].mxu0 %v985
      %v1205 = vpop.f32.mrb[0].mxu0
      %v1206 = vadd.f32 0.0, %v1205
      %v1207 = vpop.f32.mrb[0].mxu0
      %1208 = vmatprep.mubr.f32.mxu0 0.0
      %1209 = vmatmul.mubr.f32.gmra.mrb[0].mxu0 %v988
      %v1210 = vpop.f32.mrb[0].mxu0
      %v1211 = vadd.f32 0.0, %v1210
      %v1212 = vpop.f32.mrb[0].mxu0
      %1213 = vmatprep.mubr.f32.mxu0 0.0
      %1214 = vmatmul.mubr.f32.gmra.mrb[0].mxu0 %v991
      %v1215 = vpop.f32.mrb[0].mxu0
      %v1216 = vadd.f32 0.0, %v1215
      %v1217 = vpop.f32.mrb[0].mxu0
      %1218 = vmatprep.mubr.f32.mxu0 0.0
      %1219 = vmatmul.mubr.f32.gmra.mrb[0].mxu0 %v994
      %v1220 = vpop.f32.mrb[0].mxu0
      %v1221 = vadd.f32 0.0, %v1220
      %v1222 = vpop.f32.mrb[0].mxu0
      %1223 = vdwg.mxu0
      %v1224 = vadd.f32 %v862, %v1066
      %v1225 = vadd.f32 %v863, %v1071
      %v1226 = vadd.f32 %v864, %v1076
      %v1227 = vadd.f32 %v865, %v1081
      %v1228 = vadd.f32 %v866, %v1086
      %v1229 = vadd.f32 %v867, %v1091
      %v1230 = vadd.f32 %v868, %v1096
      %v1231 = vadd.f32 %v869, %v1101
      %v1232 = vadd.f32 %v870, %v1106
      %v1233 = vadd.f32 %v871, %v1111
      %v1234 = vadd.f32 %v872, %v1116
      %v1235 = vadd.f32 %v873, %v1121
      %v1236 = vadd.f32 %v874, %v1126
      %v1237 = vadd.f32 %v875, %v1131
      %v1238 = vadd.f32 %v876, %v1136
      %v1239 = vadd.f32 %v877, %v1141
      %v1240 = vadd.f32 %v878, %v1146
      %v1241 = vadd.f32 %v879, %v1151
      %v1242 = vadd.f32 %v880, %v1156
      %v1243 = vadd.f32 %v881, %v1161
      %v1244 = vadd.f32 %v882, %v1166
      %v1245 = vadd.f32 %v883, %v1171
      %v1246 = vadd.f32 %v884, %v1176
      %v1247 = vadd.f32 %v885, %v1181
      %v1248 = vadd.f32 %v886, %v1186
      %v1249 = vadd.f32 %v887, %v1191
      %v1250 = vadd.f32 %v888, %v1196
      %v1251 = vadd.f32 %v889, %v1201
      %v1252 = vadd.f32 %v890, %v1206
      %v1253 = vadd.f32 %v891, %v1211
      %v1254 = vadd.f32 %v892, %v1216
      %v1255 = vadd.f32 %v893, %v1221
      %s1256 = scalar_lea.vmem %s1, 80
      %v1257 = vld [vmem:[%s1256] sm:$0xff]
      %v1258 = vld [vmem:[%s1256 + $0x8] sm:$0xff]
      %v1259 = vld [vmem:[%s1256 + $0x10] sm:$0xff]
      %v1260 = vld [vmem:[%s1256 + $0x18] sm:$0xff]
      %v1261 = vld [vmem:[%s1256 + $0x20] sm:$0x1]
      %v1263 = vsel %vm536, %v488, 0
      %v1266 = vsel %vm536, %v489, 0
      %v1269 = vsel %vm536, %v490, 0
      %v1272 = vsel %vm536, %v491, 0
      %v1275 = vsel %vm536, %v492, 0
      %v1278 = vsel %vm536, %v493, 0
      %v1281 = vsel %vm536, %v494, 0
      %v1284 = vsel %vm536, %v495, 0
      %v1287 = vsel %vm536, %v496, 0
      %v1290 = vsel %vm536, %v497, 0
      %v1293 = vsel %vm536, %v498, 0
      %v1296 = vsel %vm536, %v499, 0
      %v1299 = vsel %vm536, %v500, 0
      %v1302 = vsel %vm536, %v501, 0
      %v1305 = vsel %vm536, %v502, 0
      %v1308 = vsel %vm536, %v503, 0
      %v1311 = vsel %vm536, %v504, 0
      %v1314 = vsel %vm536, %v505, 0
      %v1317 = vsel %vm536, %v506, 0
      %v1320 = vsel %vm536, %v507, 0
      %v1323 = vsel %vm536, %v508, 0
      %v1326 = vsel %vm536, %v509, 0
      %v1329 = vsel %vm536, %v510, 0
      %v1332 = vsel %vm536, %v511, 0
      %v1335 = vsel %vm536, %v512, 0
      %v1338 = vsel %vm536, %v513, 0
      %v1341 = vsel %vm536, %v514, 0
      %v1344 = vsel %vm536, %v515, 0
      %v1347 = vsel %vm536, %v516, 0
      %v1350 = vsel %vm536, %v517, 0
      %v1353 = vsel %vm536, %v518, 0
      %v1356 = vsel %vm536, %v519, 0
      %v1359 = vsel %vm633, %v1261, 0
      %1361 = vmatprep.subr.mxu0 0.0
      %1362 = vmatpush1.msra.mxu0 %v1257
      %1363 = vmatprep.subr.mxu0 0.0
      %1364 = vmatpush1.msra.mxu0 %v1258
      %1365 = vmatprep.subr.mxu0 0.0
      %1366 = vmatpush1.msra.mxu0 %v1259
      %1367 = vmatprep.subr.mxu0 0.0
      %1368 = vmatpush1.msra.mxu0 %v1260
      %1369 = vmatprep.subr.mxu0 0.0
      %1370 = vmatpush1.msra.mxu0 %v1359
      %1371 = vmatprep.subr.mxu0 0.0
      %1372 = vmatpush1.msra.mxu0 0.0
      %1373 = vmatprep.subr.mxu0 0.0
      %1374 = vmatpush1.msra.mxu0 0.0
      %1375 = vmatprep.subr.mxu0 0.0
      %1376 = vmatpush1.msra.mxu0 0.0
      %1377 = vmatprep.subr.mxu0 0.0
      %1378 = vmatpush1.msra.mxu0 0.0
      %1379 = vmatprep.subr.mxu0 0.0
      %1380 = vmatpush1.msra.mxu0 0.0
      %1381 = vmatprep.subr.mxu0 0.0
      %1382 = vmatpush1.msra.mxu0 0.0
      %1383 = vmatprep.subr.mxu0 0.0
      %1384 = vmatpush1.msra.mxu0 0.0
      %1385 = vmatprep.subr.mxu0 0.0
      %1386 = vmatpush1.msra.mxu0 0.0
      %1387 = vmatprep.subr.mxu0 0.0
      %1388 = vmatpush1.msra.mxu0 0.0
      %1389 = vmatprep.subr.mxu0 0.0
      %1390 = vmatpush1.msra.mxu0 0.0
      %1391 = vmatprep.subr.mxu0 0.0
      %1392 = vmatpush1.msra.mxu0 0.0
      %1393 = vmatprep.subr.mxu0 0.0
      %1394 = vmatpush1.msra.mxu0 0.0
      %1395 = vmatprep.subr.mxu0 0.0
      %1396 = vmatpush1.msra.mxu0 0.0
      %1397 = vmatprep.subr.mxu0 0.0
      %1398 = vmatpush1.msra.mxu0 0.0
      %1399 = vmatprep.subr.mxu0 0.0
      %1400 = vmatpush1.msra.mxu0 0.0
      %1401 = vmatprep.subr.mxu0 0.0
      %1402 = vmatpush1.msra.mxu0 0.0
      %1403 = vmatprep.subr.mxu0 0.0
      %1404 = vmatpush1.msra.mxu0 0.0
      %1405 = vmatprep.subr.mxu0 0.0
      %1406 = vmatpush1.msra.mxu0 0.0
      %1407 = vmatprep.subr.mxu0 0.0
      %1408 = vmatpush1.msra.mxu0 0.0
      %1409 = vmatprep.subr.mxu0 0.0
      %1410 = vmatpush1.msra.mxu0 0.0
      %1411 = vmatprep.subr.mxu0 0.0
      %1412 = vmatpush1.msra.mxu0 0.0
      %1413 = vmatprep.subr.mxu0 0.0
      %1414 = vmatpush1.msra.mxu0 0.0
      %1415 = vmatprep.subr.mxu0 0.0
      %1416 = vmatpush1.msra.mxu0 0.0
      %1417 = vmatprep.subr.mxu0 0.0
      %1418 = vmatpush1.msra.mxu0 0.0
      %1419 = vmatprep.subr.mxu0 0.0
      %1420 = vmatpush1.msra.mxu0 0.0
      %1421 = vmatprep.subr.mxu0 0.0
      %1422 = vmatpush1.msra.mxu0 0.0
      %1423 = vmatprep.subr.mxu0 0.0
      %1424 = vmatpush1.msra.mxu0 0.0
      %1425 = vmatprep.mubr.f32.mxu0 0.0
      %1426 = vmatmul.mubr.f32.gmra.mrb[0].mxu0 %v1263
      %v1427 = vpop.f32.mrb[0].mxu0
      %v1428 = vadd.f32 0.0, %v1427
      %v1429 = vpop.f32.mrb[0].mxu0
      %1430 = vmatprep.mubr.f32.mxu0 0.0
      %1431 = vmatmul.mubr.f32.gmra.mrb[0].mxu0 %v1266
      %v1432 = vpop.f32.mrb[0].mxu0
      %v1433 = vadd.f32 0.0, %v1432
      %v1434 = vpop.f32.mrb[0].mxu0
      %1435 = vmatprep.mubr.f32.mxu0 0.0
      %1436 = vmatmul.mubr.f32.gmra.mrb[0].mxu0 %v1269
      %v1437 = vpop.f32.mrb[0].mxu0
      %v1438 = vadd.f32 0.0, %v1437
      %v1439 = vpop.f32.mrb[0].mxu0
      %1440 = vmatprep.mubr.f32.mxu0 0.0
      %1441 = vmatmul.mubr.f32.gmra.mrb[0].mxu0 %v1272
      %v1442 = vpop.f32.mrb[0].mxu0
      %v1443 = vadd.f32 0.0, %v1442
      %v1444 = vpop.f32.mrb[0].mxu0
      %1445 = vmatprep.mubr.f32.mxu0 0.0
      %1446 = vmatmul.mubr.f32.gmra.mrb[0].mxu0 %v1275
      %v1447 = vpop.f32.mrb[0].mxu0
      %v1448 = vadd.f32 0.0, %v1447
      %v1449 = vpop.f32.mrb[0].mxu0
      %1450 = vmatprep.mubr.f32.mxu0 0.0
      %1451 = vmatmul.mubr.f32.gmra.mrb[0].mxu0 %v1278
      %v1452 = vpop.f32.mrb[0].mxu0
      %v1453 = vadd.f32 0.0, %v1452
      %v1454 = vpop.f32.mrb[0].mxu0
      %1455 = vmatprep.mubr.f32.mxu0 0.0
      %1456 = vmatmul.mubr.f32.gmra.mrb[0].mxu0 %v1281
      %v1457 = vpop.f32.mrb[0].mxu0
      %v1458 = vadd.f32 0.0, %v1457
      %v1459 = vpop.f32.mrb[0].mxu0
      %1460 = vmatprep.mubr.f32.mxu0 0.0
      %1461 = vmatmul.mubr.f32.gmra.mrb[0].mxu0 %v1284
      %v1462 = vpop.f32.mrb[0].mxu0
      %v1463 = vadd.f32 0.0, %v1462
      %v1464 = vpop.f32.mrb[0].mxu0
      %1465 = vmatprep.mubr.f32.mxu0 0.0
      %1466 = vmatmul.mubr.f32.gmra.mrb[0].mxu0 %v1287
      %v1467 = vpop.f32.mrb[0].mxu0
      %v1468 = vadd.f32 0.0, %v1467
      %v1469 = vpop.f32.mrb[0].mxu0
      %1470 = vmatprep.mubr.f32.mxu0 0.0
      %1471 = vmatmul.mubr.f32.gmra.mrb[0].mxu0 %v1290
      %v1472 = vpop.f32.mrb[0].mxu0
      %v1473 = vadd.f32 0.0, %v1472
      %v1474 = vpop.f32.mrb[0].mxu0
      %1475 = vmatprep.mubr.f32.mxu0 0.0
      %1476 = vmatmul.mubr.f32.gmra.mrb[0].mxu0 %v1293
      %v1477 = vpop.f32.mrb[0].mxu0
      %v1478 = vadd.f32 0.0, %v1477
      %v1479 = vpop.f32.mrb[0].mxu0
      %1480 = vmatprep.mubr.f32.mxu0 0.0
      %1481 = vmatmul.mubr.f32.gmra.mrb[0].mxu0 %v1296
      %v1482 = vpop.f32.mrb[0].mxu0
      %v1483 = vadd.f32 0.0, %v1482
      %v1484 = vpop.f32.mrb[0].mxu0
      %1485 = vmatprep.mubr.f32.mxu0 0.0
      %1486 = vmatmul.mubr.f32.gmra.mrb[0].mxu0 %v1299
      %v1487 = vpop.f32.mrb[0].mxu0
      %v1488 = vadd.f32 0.0, %v1487
      %v1489 = vpop.f32.mrb[0].mxu0
      %1490 = vmatprep.mubr.f32.mxu0 0.0
      %1491 = vmatmul.mubr.f32.gmra.mrb[0].mxu0 %v1302
      %v1492 = vpop.f32.mrb[0].mxu0
      %v1493 = vadd.f32 0.0, %v1492
      %v1494 = vpop.f32.mrb[0].mxu0
      %1495 = vmatprep.mubr.f32.mxu0 0.0
      %1496 = vmatmul.mubr.f32.gmra.mrb[0].mxu0 %v1305
      %v1497 = vpop.f32.mrb[0].mxu0
      %v1498 = vadd.f32 0.0, %v1497
      %v1499 = vpop.f32.mrb[0].mxu0
      %1500 = vmatprep.mubr.f32.mxu0 0.0
      %1501 = vmatmul.mubr.f32.gmra.mrb[0].mxu0 %v1308
      %v1502 = vpop.f32.mrb[0].mxu0
      %v1503 = vadd.f32 0.0, %v1502
      %v1504 = vpop.f32.mrb[0].mxu0
      %1505 = vmatprep.mubr.f32.mxu0 0.0
      %1506 = vmatmul.mubr.f32.gmra.mrb[0].mxu0 %v1311
      %v1507 = vpop.f32.mrb[0].mxu0
      %v1508 = vadd.f32 0.0, %v1507
      %v1509 = vpop.f32.mrb[0].mxu0
      %1510 = vmatprep.mubr.f32.mxu0 0.0
      %1511 = vmatmul.mubr.f32.gmra.mrb[0].mxu0 %v1314
      %v1512 = vpop.f32.mrb[0].mxu0
      %v1513 = vadd.f32 0.0, %v1512
      %v1514 = vpop.f32.mrb[0].mxu0
      %1515 = vmatprep.mubr.f32.mxu0 0.0
      %1516 = vmatmul.mubr.f32.gmra.mrb[0].mxu0 %v1317
      %v1517 = vpop.f32.mrb[0].mxu0
      %v1518 = vadd.f32 0.0, %v1517
      %v1519 = vpop.f32.mrb[0].mxu0
      %1520 = vmatprep.mubr.f32.mxu0 0.0
      %1521 = vmatmul.mubr.f32.gmra.mrb[0].mxu0 %v1320
      %v1522 = vpop.f32.mrb[0].mxu0
      %v1523 = vadd.f32 0.0, %v1522
      %v1524 = vpop.f32.mrb[0].mxu0
      %1525 = vmatprep.mubr.f32.mxu0 0.0
      %1526 = vmatmul.mubr.f32.gmra.mrb[0].mxu0 %v1323
      %v1527 = vpop.f32.mrb[0].mxu0
      %v1528 = vadd.f32 0.0, %v1527
      %v1529 = vpop.f32.mrb[0].mxu0
      %1530 = vmatprep.mubr.f32.mxu0 0.0
      %1531 = vmatmul.mubr.f32.gmra.mrb[0].mxu0 %v1326
      %v1532 = vpop.f32.mrb[0].mxu0
      %v1533 = vadd.f32 0.0, %v1532
      %v1534 = vpop.f32.mrb[0].mxu0
      %1535 = vmatprep.mubr.f32.mxu0 0.0
      %1536 = vmatmul.mubr.f32.gmra.mrb[0].mxu0 %v1329
      %v1537 = vpop.f32.mrb[0].mxu0
      %v1538 = vadd.f32 0.0, %v1537
      %v1539 = vpop.f32.mrb[0].mxu0
      %1540 = vmatprep.mubr.f32.mxu0 0.0
      %1541 = vmatmul.mubr.f32.gmra.mrb[0].mxu0 %v1332
      %v1542 = vpop.f32.mrb[0].mxu0
      %v1543 = vadd.f32 0.0, %v1542
      %v1544 = vpop.f32.mrb[0].mxu0
      %1545 = vmatprep.mubr.f32.mxu0 0.0
      %1546 = vmatmul.mubr.f32.gmra.mrb[0].mxu0 %v1335
      %v1547 = vpop.f32.mrb[0].mxu0
      %v1548 = vadd.f32 0.0, %v1547
      %v1549 = vpop.f32.mrb[0].mxu0
      %1550 = vmatprep.mubr.f32.mxu0 0.0
      %1551 = vmatmul.mubr.f32.gmra.mrb[0].mxu0 %v1338
      %v1552 = vpop.f32.mrb[0].mxu0
      %v1553 = vadd.f32 0.0, %v1552
      %v1554 = vpop.f32.mrb[0].mxu0
      %1555 = vmatprep.mubr.f32.mxu0 0.0
      %1556 = vmatmul.mubr.f32.gmra.mrb[0].mxu0 %v1341
      %v1557 = vpop.f32.mrb[0].mxu0
      %v1558 = vadd.f32 0.0, %v1557
      %v1559 = vpop.f32.mrb[0].mxu0
      %1560 = vmatprep.mubr.f32.mxu0 0.0
      %1561 = vmatmul.mubr.f32.gmra.mrb[0].mxu0 %v1344
      %v1562 = vpop.f32.mrb[0].mxu0
      %v1563 = vadd.f32 0.0, %v1562
      %v1564 = vpop.f32.mrb[0].mxu0
      %1565 = vmatprep.mubr.f32.mxu0 0.0
      %1566 = vmatmul.mubr.f32.gmra.mrb[0].mxu0 %v1347
      %v1567 = vpop.f32.mrb[0].mxu0
      %v1568 = vadd.f32 0.0, %v1567
      %v1569 = vpop.f32.mrb[0].mxu0
      %1570 = vmatprep.mubr.f32.mxu0 0.0
      %1571 = vmatmul.mubr.f32.gmra.mrb[0].mxu0 %v1350
      %v1572 = vpop.f32.mrb[0].mxu0
      %v1573 = vadd.f32 0.0, %v1572
      %v1574 = vpop.f32.mrb[0].mxu0
      %1575 = vmatprep.mubr.f32.mxu0 0.0
      %1576 = vmatmul.mubr.f32.gmra.mrb[0].mxu0 %v1353
      %v1577 = vpop.f32.mrb[0].mxu0
      %v1578 = vadd.f32 0.0, %v1577
      %v1579 = vpop.f32.mrb[0].mxu0
      %1580 = vmatprep.mubr.f32.mxu0 0.0
      %1581 = vmatmul.mubr.f32.gmra.mrb[0].mxu0 %v1356
      %v1582 = vpop.f32.mrb[0].mxu0
      %v1583 = vadd.f32 0.0, %v1582
      %v1584 = vpop.f32.mrb[0].mxu0
      %1585 = vdwg.mxu0
      %v1586 = vadd.f32 %v1224, %v1428
      %v1587 = vadd.f32 %v1225, %v1433
      %v1588 = vadd.f32 %v1226, %v1438
      %v1589 = vadd.f32 %v1227, %v1443
      %v1590 = vadd.f32 %v1228, %v1448
      %v1591 = vadd.f32 %v1229, %v1453
      %v1592 = vadd.f32 %v1230, %v1458
      %v1593 = vadd.f32 %v1231, %v1463
      %v1594 = vadd.f32 %v1232, %v1468
      %v1595 = vadd.f32 %v1233, %v1473
      %v1596 = vadd.f32 %v1234, %v1478
      %v1597 = vadd.f32 %v1235, %v1483
      %v1598 = vadd.f32 %v1236, %v1488
      %v1599 = vadd.f32 %v1237, %v1493
      %v1600 = vadd.f32 %v1238, %v1498
      %v1601 = vadd.f32 %v1239, %v1503
      %v1602 = vadd.f32 %v1240, %v1508
      %v1603 = vadd.f32 %v1241, %v1513
      %v1604 = vadd.f32 %v1242, %v1518
      %v1605 = vadd.f32 %v1243, %v1523
      %v1606 = vadd.f32 %v1244, %v1528
      %v1607 = vadd.f32 %v1245, %v1533
      %v1608 = vadd.f32 %v1246, %v1538
      %v1609 = vadd.f32 %v1247, %v1543
      %v1610 = vadd.f32 %v1248, %v1548
      %v1611 = vadd.f32 %v1249, %v1553
      %v1612 = vadd.f32 %v1250, %v1558
      %v1613 = vadd.f32 %v1251, %v1563
      %v1614 = vadd.f32 %v1252, %v1568
      %v1615 = vadd.f32 %v1253, %v1573
      %v1616 = vadd.f32 %v1254, %v1578
      %v1617 = vadd.f32 %v1255, %v1583
      %s1618 = scalar_lea.vmem %s1, 120
      %v1619 = vld [vmem:[%s1618] sm:$0xff]
      %v1620 = vld [vmem:[%s1618 + $0x8] sm:$0xff]
      %v1621 = vld [vmem:[%s1618 + $0x10] sm:$0xff]
      %v1622 = vld [vmem:[%s1618 + $0x18] sm:$0xff]
      %v1623 = vld [vmem:[%s1618 + $0x20] sm:$0x1]
      %v1625 = vsel %vm536, %v448, 0
      %v1628 = vsel %vm536, %v449, 0
      %v1631 = vsel %vm633, %v1623, 0
      %1633 = vmatprep.subr.mxu0 0.0
      %1634 = vmatpush1.msra.mxu0 %v1619
      %1635 = vmatprep.subr.mxu0 0.0
      %1636 = vmatpush1.msra.mxu0 %v1620
      %1637 = vmatprep.subr.mxu0 0.0
      %1638 = vmatpush1.msra.mxu0 %v1621
      %1639 = vmatprep.subr.mxu0 0.0
      %1640 = vmatpush1.msra.mxu0 %v1622
      %1641 = vmatprep.subr.mxu0 0.0
      %1642 = vmatpush1.msra.mxu0 %v1631
      %1643 = vmatprep.subr.mxu0 0.0
      %1644 = vmatpush1.msra.mxu0 0.0
      %1645 = vmatprep.subr.mxu0 0.0
      %1646 = vmatpush1.msra.mxu0 0.0
      %1647 = vmatprep.subr.mxu0 0.0
      %1648 = vmatpush1.msra.mxu0 0.0
      %1649 = vmatprep.subr.mxu0 0.0
      %1650 = vmatpush1.msra.mxu0 0.0
      %1651 = vmatprep.subr.mxu0 0.0
      %1652 = vmatpush1.msra.mxu0 0.0
      %1653 = vmatprep.subr.mxu0 0.0
      %1654 = vmatpush1.msra.mxu0 0.0
      %1655 = vmatprep.subr.mxu0 0.0
      %1656 = vmatpush1.msra.mxu0 0.0
      %1657 = vmatprep.subr.mxu0 0.0
      %1658 = vmatpush1.msra.mxu0 0.0
      %1659 = vmatprep.subr.mxu0 0.0
      %1660 = vmatpush1.msra.mxu0 0.0
      %1661 = vmatprep.subr.mxu0 0.0
      %1662 = vmatpush1.msra.mxu0 0.0
      %1663 = vmatprep.subr.mxu0 0.0
      %1664 = vmatpush1.msra.mxu0 0.0
      %1665 = vmatprep.subr.mxu0 0.0
      %1666 = vmatpush1.msra.mxu0 0.0
      %1667 = vmatprep.subr.mxu0 0.0
      %1668 = vmatpush1.msra.mxu0 0.0
      %1669 = vmatprep.subr.mxu0 0.0
      %1670 = vmatpush1.msra.mxu0 0.0
      %1671 = vmatprep.subr.mxu0 0.0
      %1672 = vmatpush1.msra.mxu0 0.0
      %1673 = vmatprep.subr.mxu0 0.0
      %1674 = vmatpush1.msra.mxu0 0.0
      %1675 = vmatprep.subr.mxu0 0.0
      %1676 = vmatpush1.msra.mxu0 0.0
      %1677 = vmatprep.subr.mxu0 0.0
      %1678 = vmatpush1.msra.mxu0 0.0
      %1679 = vmatprep.subr.mxu0 0.0
      %1680 = vmatpush1.msra.mxu0 0.0
      %1681 = vmatprep.subr.mxu0 0.0
      %1682 = vmatpush1.msra.mxu0 0.0
      %1683 = vmatprep.subr.mxu0 0.0
      %1684 = vmatpush1.msra.mxu0 0.0
      %1685 = vmatprep.subr.mxu0 0.0
      %1686 = vmatpush1.msra.mxu0 0.0
      %1687 = vmatprep.subr.mxu0 0.0
      %1688 = vmatpush1.msra.mxu0 0.0
      %1689 = vmatprep.subr.mxu0 0.0
      %1690 = vmatpush1.msra.mxu0 0.0
      %1691 = vmatprep.subr.mxu0 0.0
      %1692 = vmatpush1.msra.mxu0 0.0
      %1693 = vmatprep.subr.mxu0 0.0
      %1694 = vmatpush1.msra.mxu0 0.0
      %1695 = vmatprep.subr.mxu0 0.0
      %1696 = vmatpush1.msra.mxu0 0.0
      %1697 = vmatprep.mubr.f32.mxu0 0.0
      %1698 = vmatmul.mubr.f32.gmra.mrb[0].mxu0 %v544
      %v1699 = vpop.f32.mrb[0].mxu0
      %v1700 = vadd.f32 0.0, %v1699
      %v1701 = vpop.f32.mrb[0].mxu0
      %1702 = vmatprep.mubr.f32.mxu0 0.0
      %1703 = vmatmul.mubr.f32.gmra.mrb[0].mxu0 %v547
      %v1704 = vpop.f32.mrb[0].mxu0
      %v1705 = vadd.f32 0.0, %v1704
      %v1706 = vpop.f32.mrb[0].mxu0
      %1707 = vmatprep.mubr.f32.mxu0 0.0
      %1708 = vmatmul.mubr.f32.gmra.mrb[0].mxu0 %v550
      %v1709 = vpop.f32.mrb[0].mxu0
      %v1710 = vadd.f32 0.0, %v1709
      %v1711 = vpop.f32.mrb[0].mxu0
      %1712 = vmatprep.mubr.f32.mxu0 0.0
      %1713 = vmatmul.mubr.f32.gmra.mrb[0].mxu0 %v553
      %v1714 = vpop.f32.mrb[0].mxu0
      %v1715 = vadd.f32 0.0, %v1714
      %v1716 = vpop.f32.mrb[0].mxu0
      %1717 = vmatprep.mubr.f32.mxu0 0.0
      %1718 = vmatmul.mubr.f32.gmra.mrb[0].mxu0 %v556
      %v1719 = vpop.f32.mrb[0].mxu0
      %v1720 = vadd.f32 0.0, %v1719
      %v1721 = vpop.f32.mrb[0].mxu0
      %1722 = vmatprep.mubr.f32.mxu0 0.0
      %1723 = vmatmul.mubr.f32.gmra.mrb[0].mxu0 %v559
      %v1724 = vpop.f32.mrb[0].mxu0
      %v1725 = vadd.f32 0.0, %v1724
      %v1726 = vpop.f32.mrb[0].mxu0
      %1727 = vmatprep.mubr.f32.mxu0 0.0
      %1728 = vmatmul.mubr.f32.gmra.mrb[0].mxu0 %v562
      %v1729 = vpop.f32.mrb[0].mxu0
      %v1730 = vadd.f32 0.0, %v1729
      %v1731 = vpop.f32.mrb[0].mxu0
      %1732 = vmatprep.mubr.f32.mxu0 0.0
      %1733 = vmatmul.mubr.f32.gmra.mrb[0].mxu0 %v565
      %v1734 = vpop.f32.mrb[0].mxu0
      %v1735 = vadd.f32 0.0, %v1734
      %v1736 = vpop.f32.mrb[0].mxu0
      %1737 = vmatprep.mubr.f32.mxu0 0.0
      %1738 = vmatmul.mubr.f32.gmra.mrb[0].mxu0 %v568
      %v1739 = vpop.f32.mrb[0].mxu0
      %v1740 = vadd.f32 0.0, %v1739
      %v1741 = vpop.f32.mrb[0].mxu0
      %1742 = vmatprep.mubr.f32.mxu0 0.0
      %1743 = vmatmul.mubr.f32.gmra.mrb[0].mxu0 %v571
      %v1744 = vpop.f32.mrb[0].mxu0
      %v1745 = vadd.f32 0.0, %v1744
      %v1746 = vpop.f32.mrb[0].mxu0
      %1747 = vmatprep.mubr.f32.mxu0 0.0
      %1748 = vmatmul.mubr.f32.gmra.mrb[0].mxu0 %v574
      %v1749 = vpop.f32.mrb[0].mxu0
      %v1750 = vadd.f32 0.0, %v1749
      %v1751 = vpop.f32.mrb[0].mxu0
      %1752 = vmatprep.mubr.f32.mxu0 0.0
      %1753 = vmatmul.mubr.f32.gmra.mrb[0].mxu0 %v577
      %v1754 = vpop.f32.mrb[0].mxu0
      %v1755 = vadd.f32 0.0, %v1754
      %v1756 = vpop.f32.mrb[0].mxu0
      %1757 = vmatprep.mubr.f32.mxu0 0.0
      %1758 = vmatmul.mubr.f32.gmra.mrb[0].mxu0 %v580
      %v1759 = vpop.f32.mrb[0].mxu0
      %v1760 = vadd.f32 0.0, %v1759
      %v1761 = vpop.f32.mrb[0].mxu0
      %1762 = vmatprep.mubr.f32.mxu0 0.0
      %1763 = vmatmul.mubr.f32.gmra.mrb[0].mxu0 %v583
      %v1764 = vpop.f32.mrb[0].mxu0
      %v1765 = vadd.f32 0.0, %v1764
      %v1766 = vpop.f32.mrb[0].mxu0
      %1767 = vmatprep.mubr.f32.mxu0 0.0
      %1768 = vmatmul.mubr.f32.gmra.mrb[0].mxu0 %v586
      %v1769 = vpop.f32.mrb[0].mxu0
      %v1770 = vadd.f32 0.0, %v1769
      %v1771 = vpop.f32.mrb[0].mxu0
      %1772 = vmatprep.mubr.f32.mxu0 0.0
      %1773 = vmatmul.mubr.f32.gmra.mrb[0].mxu0 %v589
      %v1774 = vpop.f32.mrb[0].mxu0
      %v1775 = vadd.f32 0.0, %v1774
      %v1776 = vpop.f32.mrb[0].mxu0
      %1777 = vmatprep.mubr.f32.mxu0 0.0
      %1778 = vmatmul.mubr.f32.gmra.mrb[0].mxu0 %v592
      %v1779 = vpop.f32.mrb[0].mxu0
      %v1780 = vadd.f32 0.0, %v1779
      %v1781 = vpop.f32.mrb[0].mxu0
      %1782 = vmatprep.mubr.f32.mxu0 0.0
      %1783 = vmatmul.mubr.f32.gmra.mrb[0].mxu0 %v595
      %v1784 = vpop.f32.mrb[0].mxu0
      %v1785 = vadd.f32 0.0, %v1784
      %v1786 = vpop.f32.mrb[0].mxu0
      %1787 = vmatprep.mubr.f32.mxu0 0.0
      %1788 = vmatmul.mubr.f32.gmra.mrb[0].mxu0 %v598
      %v1789 = vpop.f32.mrb[0].mxu0
      %v1790 = vadd.f32 0.0, %v1789
      %v1791 = vpop.f32.mrb[0].mxu0
      %1792 = vmatprep.mubr.f32.mxu0 0.0
      %1793 = vmatmul.mubr.f32.gmra.mrb[0].mxu0 %v601
      %v1794 = vpop.f32.mrb[0].mxu0
      %v1795 = vadd.f32 0.0, %v1794
      %v1796 = vpop.f32.mrb[0].mxu0
      %1797 = vmatprep.mubr.f32.mxu0 0.0
      %1798 = vmatmul.mubr.f32.gmra.mrb[0].mxu0 %v604
      %v1799 = vpop.f32.mrb[0].mxu0
      %v1800 = vadd.f32 0.0, %v1799
      %v1801 = vpop.f32.mrb[0].mxu0
      %1802 = vmatprep.mubr.f32.mxu0 0.0
      %1803 = vmatmul.mubr.f32.gmra.mrb[0].mxu0 %v607
      %v1804 = vpop.f32.mrb[0].mxu0
      %v1805 = vadd.f32 0.0, %v1804
      %v1806 = vpop.f32.mrb[0].mxu0
      %1807 = vmatprep.mubr.f32.mxu0 0.0
      %1808 = vmatmul.mubr.f32.gmra.mrb[0].mxu0 %v610
      %v1809 = vpop.f32.mrb[0].mxu0
      %v1810 = vadd.f32 0.0, %v1809
      %v1811 = vpop.f32.mrb[0].mxu0
      %1812 = vmatprep.mubr.f32.mxu0 0.0
      %1813 = vmatmul.mubr.f32.gmra.mrb[0].mxu0 %v613
      %v1814 = vpop.f32.mrb[0].mxu0
      %v1815 = vadd.f32 0.0, %v1814
      %v1816 = vpop.f32.mrb[0].mxu0
      %1817 = vmatprep.mubr.f32.mxu0 0.0
      %1818 = vmatmul.mubr.f32.gmra.mrb[0].mxu0 %v616
      %v1819 = vpop.f32.mrb[0].mxu0
      %v1820 = vadd.f32 0.0, %v1819
      %v1821 = vpop.f32.mrb[0].mxu0
      %1822 = vmatprep.mubr.f32.mxu0 0.0
      %1823 = vmatmul.mubr.f32.gmra.mrb[0].mxu0 %v619
      %v1824 = vpop.f32.mrb[0].mxu0
      %v1825 = vadd.f32 0.0, %v1824
      %v1826 = vpop.f32.mrb[0].mxu0
      %1827 = vmatprep.mubr.f32.mxu0 0.0
      %1828 = vmatmul.mubr.f32.gmra.mrb[0].mxu0 %v622
      %v1829 = vpop.f32.mrb[0].mxu0
      %v1830 = vadd.f32 0.0, %v1829
      %v1831 = vpop.f32.mrb[0].mxu0
      %1832 = vmatprep.mubr.f32.mxu0 0.0
      %1833 = vmatmul.mubr.f32.gmra.mrb[0].mxu0 %v625
      %v1834 = vpop.f32.mrb[0].mxu0
      %v1835 = vadd.f32 0.0, %v1834
      %v1836 = vpop.f32.mrb[0].mxu0
      %1837 = vmatprep.mubr.f32.mxu0 0.0
      %1838 = vmatmul.mubr.f32.gmra.mrb[0].mxu0 %v628
      %v1839 = vpop.f32.mrb[0].mxu0
      %v1840 = vadd.f32 0.0, %v1839
      %v1841 = vpop.f32.mrb[0].mxu0
      %1842 = vmatprep.mubr.f32.mxu0 0.0
      %1843 = vmatmul.mubr.f32.gmra.mrb[0].mxu0 %v631
      %v1844 = vpop.f32.mrb[0].mxu0
      %v1845 = vadd.f32 0.0, %v1844
      %v1846 = vpop.f32.mrb[0].mxu0
      %1847 = vmatprep.mubr.f32.mxu0 0.0
      %1848 = vmatmul.mubr.f32.gmra.mrb[0].mxu0 %v1625
      %v1849 = vpop.f32.mrb[0].mxu0
      %v1850 = vadd.f32 0.0, %v1849
      %v1851 = vpop.f32.mrb[0].mxu0
      %1852 = vmatprep.mubr.f32.mxu0 0.0
      %1853 = vmatmul.mubr.f32.gmra.mrb[0].mxu0 %v1628
      %v1854 = vpop.f32.mrb[0].mxu0
      %v1855 = vadd.f32 0.0, %v1854
      %v1856 = vpop.f32.mrb[0].mxu0
      %1857 = vdwg.mxu0
      %v1858 = vadd.f32 %v1586, %v1700
      %v1859 = vadd.f32 %v1587, %v1705
      %v1860 = vadd.f32 %v1588, %v1710
      %v1861 = vadd.f32 %v1589, %v1715
      %v1862 = vadd.f32 %v1590, %v1720
      %v1863 = vadd.f32 %v1591, %v1725
      %v1864 = vadd.f32 %v1592, %v1730
      %v1865 = vadd.f32 %v1593, %v1735
      %v1866 = vadd.f32 %v1594, %v1740
      %v1867 = vadd.f32 %v1595, %v1745
      %v1868 = vadd.f32 %v1596, %v1750
      %v1869 = vadd.f32 %v1597, %v1755
      %v1870 = vadd.f32 %v1598, %v1760
      %v1871 = vadd.f32 %v1599, %v1765
      %v1872 = vadd.f32 %v1600, %v1770
      %v1873 = vadd.f32 %v1601, %v1775
      %v1874 = vadd.f32 %v1602, %v1780
      %v1875 = vadd.f32 %v1603, %v1785
      %v1876 = vadd.f32 %v1604, %v1790
      %v1877 = vadd.f32 %v1605, %v1795
      %v1878 = vadd.f32 %v1606, %v1800
      %v1879 = vadd.f32 %v1607, %v1805
      %v1880 = vadd.f32 %v1608, %v1810
      %v1881 = vadd.f32 %v1609, %v1815
      %v1882 = vadd.f32 %v1610, %v1820
      %v1883 = vadd.f32 %v1611, %v1825
      %v1884 = vadd.f32 %v1612, %v1830
      %v1885 = vadd.f32 %v1613, %v1835
      %v1886 = vadd.f32 %v1614, %v1840
      %v1887 = vadd.f32 %v1615, %v1845
      %v1888 = vadd.f32 %v1616, %v1850
      %v1889 = vadd.f32 %v1617, %v1855
      %s1890 = scalar_lea.vmem %s1, 160
      %v1891 = vld [vmem:[%s1890] sm:$0xff]
      %v1892 = vld [vmem:[%s1890 + $0x8] sm:$0xff]
      %v1893 = vld [vmem:[%s1890 + $0x10] sm:$0xff]
      %v1894 = vld [vmem:[%s1890 + $0x18] sm:$0xff]
      %v1895 = vld [vmem:[%s1890 + $0x20] sm:$0x1]
      %v1897 = vsel %vm536, %v484, 0
      %v1900 = vsel %vm536, %v485, 0
      %v1903 = vsel %vm633, %v1895, 0
      %1905 = vmatprep.subr.mxu0 0.0
      %1906 = vmatpush1.msra.mxu0 %v1891
      %1907 = vmatprep.subr.mxu0 0.0
      %1908 = vmatpush1.msra.mxu0 %v1892
      %1909 = vmatprep.subr.mxu0 0.0
      %1910 = vmatpush1.msra.mxu0 %v1893
      %1911 = vmatprep.subr.mxu0 0.0
      %1912 = vmatpush1.msra.mxu0 %v1894
      %1913 = vmatprep.subr.mxu0 0.0
      %1914 = vmatpush1.msra.mxu0 %v1903
      %1915 = vmatprep.subr.mxu0 0.0
      %1916 = vmatpush1.msra.mxu0 0.0
      %1917 = vmatprep.subr.mxu0 0.0
      %1918 = vmatpush1.msra.mxu0 0.0
      %1919 = vmatprep.subr.mxu0 0.0
      %1920 = vmatpush1.msra.mxu0 0.0
      %1921 = vmatprep.subr.mxu0 0.0
      %1922 = vmatpush1.msra.mxu0 0.0
      %1923 = vmatprep.subr.mxu0 0.0
      %1924 = vmatpush1.msra.mxu0 0.0
      %1925 = vmatprep.subr.mxu0 0.0
      %1926 = vmatpush1.msra.mxu0 0.0
      %1927 = vmatprep.subr.mxu0 0.0
      %1928 = vmatpush1.msra.mxu0 0.0
      %1929 = vmatprep.subr.mxu0 0.0
      %1930 = vmatpush1.msra.mxu0 0.0
      %1931 = vmatprep.subr.mxu0 0.0
      %1932 = vmatpush1.msra.mxu0 0.0
      %1933 = vmatprep.subr.mxu0 0.0
      %1934 = vmatpush1.msra.mxu0 0.0
      %1935 = vmatprep.subr.mxu0 0.0
      %1936 = vmatpush1.msra.mxu0 0.0
      %1937 = vmatprep.subr.mxu0 0.0
      %1938 = vmatpush1.msra.mxu0 0.0
      %1939 = vmatprep.subr.mxu0 0.0
      %1940 = vmatpush1.msra.mxu0 0.0
      %1941 = vmatprep.subr.mxu0 0.0
      %1942 = vmatpush1.msra.mxu0 0.0
      %1943 = vmatprep.subr.mxu0 0.0
      %1944 = vmatpush1.msra.mxu0 0.0
      %1945 = vmatprep.subr.mxu0 0.0
      %1946 = vmatpush1.msra.mxu0 0.0
      %1947 = vmatprep.subr.mxu0 0.0
      %1948 = vmatpush1.msra.mxu0 0.0
      %1949 = vmatprep.subr.mxu0 0.0
      %1950 = vmatpush1.msra.mxu0 0.0
      %1951 = vmatprep.subr.mxu0 0.0
      %1952 = vmatpush1.msra.mxu0 0.0
      %1953 = vmatprep.subr.mxu0 0.0
      %1954 = vmatpush1.msra.mxu0 0.0
      %1955 = vmatprep.subr.mxu0 0.0
      %1956 = vmatpush1.msra.mxu0 0.0
      %1957 = vmatprep.subr.mxu0 0.0
      %1958 = vmatpush1.msra.mxu0 0.0
      %1959 = vmatprep.subr.mxu0 0.0
      %1960 = vmatpush1.msra.mxu0 0.0
      %1961 = vmatprep.subr.mxu0 0.0
      %1962 = vmatpush1.msra.mxu0 0.0
      %1963 = vmatprep.subr.mxu0 0.0
      %1964 = vmatpush1.msra.mxu0 0.0
      %1965 = vmatprep.subr.mxu0 0.0
      %1966 = vmatpush1.msra.mxu0 0.0
      %1967 = vmatprep.subr.mxu0 0.0
      %1968 = vmatpush1.msra.mxu0 0.0
      %1969 = vmatprep.mubr.f32.mxu0 0.0
      %1970 = vmatmul.mubr.f32.gmra.mrb[0].mxu0 %v907
      %v1971 = vpop.f32.mrb[0].mxu0
      %v1972 = vadd.f32 0.0, %v1971
      %v1973 = vpop.f32.mrb[0].mxu0
      %1974 = vmatprep.mubr.f32.mxu0 0.0
      %1975 = vmatmul.mubr.f32.gmra.mrb[0].mxu0 %v910
      %v1976 = vpop.f32.mrb[0].mxu0
      %v1977 = vadd.f32 0.0, %v1976
      %v1978 = vpop.f32.mrb[0].mxu0
      %1979 = vmatprep.mubr.f32.mxu0 0.0
      %1980 = vmatmul.mubr.f32.gmra.mrb[0].mxu0 %v913
      %v1981 = vpop.f32.mrb[0].mxu0
      %v1982 = vadd.f32 0.0, %v1981
      %v1983 = vpop.f32.mrb[0].mxu0
      %1984 = vmatprep.mubr.f32.mxu0 0.0
      %1985 = vmatmul.mubr.f32.gmra.mrb[0].mxu0 %v916
      %v1986 = vpop.f32.mrb[0].mxu0
      %v1987 = vadd.f32 0.0, %v1986
      %v1988 = vpop.f32.mrb[0].mxu0
      %1989 = vmatprep.mubr.f32.mxu0 0.0
      %1990 = vmatmul.mubr.f32.gmra.mrb[0].mxu0 %v919
      %v1991 = vpop.f32.mrb[0].mxu0
      %v1992 = vadd.f32 0.0, %v1991
      %v1993 = vpop.f32.mrb[0].mxu0
      %1994 = vmatprep.mubr.f32.mxu0 0.0
      %1995 = vmatmul.mubr.f32.gmra.mrb[0].mxu0 %v922
      %v1996 = vpop.f32.mrb[0].mxu0
      %v1997 = vadd.f32 0.0, %v1996
      %v1998 = vpop.f32.mrb[0].mxu0
      %1999 = vmatprep.mubr.f32.mxu0 0.0
      %2000 = vmatmul.mubr.f32.gmra.mrb[0].mxu0 %v925
      %v2001 = vpop.f32.mrb[0].mxu0
      %v2002 = vadd.f32 0.0, %v2001
      %v2003 = vpop.f32.mrb[0].mxu0
      %2004 = vmatprep.mubr.f32.mxu0 0.0
      %2005 = vmatmul.mubr.f32.gmra.mrb[0].mxu0 %v928
      %v2006 = vpop.f32.mrb[0].mxu0
      %v2007 = vadd.f32 0.0, %v2006
      %v2008 = vpop.f32.mrb[0].mxu0
      %2009 = vmatprep.mubr.f32.mxu0 0.0
      %2010 = vmatmul.mubr.f32.gmra.mrb[0].mxu0 %v931
      %v2011 = vpop.f32.mrb[0].mxu0
      %v2012 = vadd.f32 0.0, %v2011
      %v2013 = vpop.f32.mrb[0].mxu0
      %2014 = vmatprep.mubr.f32.mxu0 0.0
      %2015 = vmatmul.mubr.f32.gmra.mrb[0].mxu0 %v934
      %v2016 = vpop.f32.mrb[0].mxu0
      %v2017 = vadd.f32 0.0, %v2016
      %v2018 = vpop.f32.mrb[0].mxu0
      %2019 = vmatprep.mubr.f32.mxu0 0.0
      %2020 = vmatmul.mubr.f32.gmra.mrb[0].mxu0 %v937
      %v2021 = vpop.f32.mrb[0].mxu0
      %v2022 = vadd.f32 0.0, %v2021
      %v2023 = vpop.f32.mrb[0].mxu0
      %2024 = vmatprep.mubr.f32.mxu0 0.0
      %2025 = vmatmul.mubr.f32.gmra.mrb[0].mxu0 %v940
      %v2026 = vpop.f32.mrb[0].mxu0
      %v2027 = vadd.f32 0.0, %v2026
      %v2028 = vpop.f32.mrb[0].mxu0
      %2029 = vmatprep.mubr.f32.mxu0 0.0
      %2030 = vmatmul.mubr.f32.gmra.mrb[0].mxu0 %v943
      %v2031 = vpop.f32.mrb[0].mxu0
      %v2032 = vadd.f32 0.0, %v2031
      %v2033 = vpop.f32.mrb[0].mxu0
      %2034 = vmatprep.mubr.f32.mxu0 0.0
      %2035 = vmatmul.mubr.f32.gmra.mrb[0].mxu0 %v946
      %v2036 = vpop.f32.mrb[0].mxu0
      %v2037 = vadd.f32 0.0, %v2036
      %v2038 = vpop.f32.mrb[0].mxu0
      %2039 = vmatprep.mubr.f32.mxu0 0.0
      %2040 = vmatmul.mubr.f32.gmra.mrb[0].mxu0 %v949
      %v2041 = vpop.f32.mrb[0].mxu0
      %v2042 = vadd.f32 0.0, %v2041
      %v2043 = vpop.f32.mrb[0].mxu0
      %2044 = vmatprep.mubr.f32.mxu0 0.0
      %2045 = vmatmul.mubr.f32.gmra.mrb[0].mxu0 %v952
      %v2046 = vpop.f32.mrb[0].mxu0
      %v2047 = vadd.f32 0.0, %v2046
      %v2048 = vpop.f32.mrb[0].mxu0
      %2049 = vmatprep.mubr.f32.mxu0 0.0
      %2050 = vmatmul.mubr.f32.gmra.mrb[0].mxu0 %v955
      %v2051 = vpop.f32.mrb[0].mxu0
      %v2052 = vadd.f32 0.0, %v2051
      %v2053 = vpop.f32.mrb[0].mxu0
      %2054 = vmatprep.mubr.f32.mxu0 0.0
      %2055 = vmatmul.mubr.f32.gmra.mrb[0].mxu0 %v958
      %v2056 = vpop.f32.mrb[0].mxu0
      %v2057 = vadd.f32 0.0, %v2056
      %v2058 = vpop.f32.mrb[0].mxu0
      %2059 = vmatprep.mubr.f32.mxu0 0.0
      %2060 = vmatmul.mubr.f32.gmra.mrb[0].mxu0 %v961
      %v2061 = vpop.f32.mrb[0].mxu0
      %v2062 = vadd.f32 0.0, %v2061
      %v2063 = vpop.f32.mrb[0].mxu0
      %2064 = vmatprep.mubr.f32.mxu0 0.0
      %2065 = vmatmul.mubr.f32.gmra.mrb[0].mxu0 %v964
      %v2066 = vpop.f32.mrb[0].mxu0
      %v2067 = vadd.f32 0.0, %v2066
      %v2068 = vpop.f32.mrb[0].mxu0
      %2069 = vmatprep.mubr.f32.mxu0 0.0
      %2070 = vmatmul.mubr.f32.gmra.mrb[0].mxu0 %v967
      %v2071 = vpop.f32.mrb[0].mxu0
      %v2072 = vadd.f32 0.0, %v2071
      %v2073 = vpop.f32.mrb[0].mxu0
      %2074 = vmatprep.mubr.f32.mxu0 0.0
      %2075 = vmatmul.mubr.f32.gmra.mrb[0].mxu0 %v970
      %v2076 = vpop.f32.mrb[0].mxu0
      %v2077 = vadd.f32 0.0, %v2076
      %v2078 = vpop.f32.mrb[0].mxu0
      %2079 = vmatprep.mubr.f32.mxu0 0.0
      %2080 = vmatmul.mubr.f32.gmra.mrb[0].mxu0 %v973
      %v2081 = vpop.f32.mrb[0].mxu0
      %v2082 = vadd.f32 0.0, %v2081
      %v2083 = vpop.f32.mrb[0].mxu0
      %2084 = vmatprep.mubr.f32.mxu0 0.0
      %2085 = vmatmul.mubr.f32.gmra.mrb[0].mxu0 %v976
      %v2086 = vpop.f32.mrb[0].mxu0
      %v2087 = vadd.f32 0.0, %v2086
      %v2088 = vpop.f32.mrb[0].mxu0
      %2089 = vmatprep.mubr.f32.mxu0 0.0
      %2090 = vmatmul.mubr.f32.gmra.mrb[0].mxu0 %v979
      %v2091 = vpop.f32.mrb[0].mxu0
      %v2092 = vadd.f32 0.0, %v2091
      %v2093 = vpop.f32.mrb[0].mxu0
      %2094 = vmatprep.mubr.f32.mxu0 0.0
      %2095 = vmatmul.mubr.f32.gmra.mrb[0].mxu0 %v982
      %v2096 = vpop.f32.mrb[0].mxu0
      %v2097 = vadd.f32 0.0, %v2096
      %v2098 = vpop.f32.mrb[0].mxu0
      %2099 = vmatprep.mubr.f32.mxu0 0.0
      %2100 = vmatmul.mubr.f32.gmra.mrb[0].mxu0 %v985
      %v2101 = vpop.f32.mrb[0].mxu0
      %v2102 = vadd.f32 0.0, %v2101
      %v2103 = vpop.f32.mrb[0].mxu0
      %2104 = vmatprep.mubr.f32.mxu0 0.0
      %2105 = vmatmul.mubr.f32.gmra.mrb[0].mxu0 %v988
      %v2106 = vpop.f32.mrb[0].mxu0
      %v2107 = vadd.f32 0.0, %v2106
      %v2108 = vpop.f32.mrb[0].mxu0
      %2109 = vmatprep.mubr.f32.mxu0 0.0
      %2110 = vmatmul.mubr.f32.gmra.mrb[0].mxu0 %v991
      %v2111 = vpop.f32.mrb[0].mxu0
      %v2112 = vadd.f32 0.0, %v2111
      %v2113 = vpop.f32.mrb[0].mxu0
      %2114 = vmatprep.mubr.f32.mxu0 0.0
      %2115 = vmatmul.mubr.f32.gmra.mrb[0].mxu0 %v994
      %v2116 = vpop.f32.mrb[0].mxu0
      %v2117 = vadd.f32 0.0, %v2116
      %v2118 = vpop.f32.mrb[0].mxu0
      %2119 = vmatprep.mubr.f32.mxu0 0.0
      %2120 = vmatmul.mubr.f32.gmra.mrb[0].mxu0 %v1897
      %v2121 = vpop.f32.mrb[0].mxu0
      %v2122 = vadd.f32 0.0, %v2121
      %v2123 = vpop.f32.mrb[0].mxu0
      %2124 = vmatprep.mubr.f32.mxu0 0.0
      %2125 = vmatmul.mubr.f32.gmra.mrb[0].mxu0 %v1900
      %v2126 = vpop.f32.mrb[0].mxu0
      %v2127 = vadd.f32 0.0, %v2126
      %v2128 = vpop.f32.mrb[0].mxu0
      %2129 = vdwg.mxu0
      %v2130 = vadd.f32 %v1858, %v1972
      %v2131 = vadd.f32 %v1859, %v1977
      %v2132 = vadd.f32 %v1860, %v1982
      %v2133 = vadd.f32 %v1861, %v1987
      %v2134 = vadd.f32 %v1862, %v1992
      %v2135 = vadd.f32 %v1863, %v1997
      %v2136 = vadd.f32 %v1864, %v2002
      %v2137 = vadd.f32 %v1865, %v2007
      %v2138 = vadd.f32 %v1866, %v2012
      %v2139 = vadd.f32 %v1867, %v2017
      %v2140 = vadd.f32 %v1868, %v2022
      %v2141 = vadd.f32 %v1869, %v2027
      %v2142 = vadd.f32 %v1870, %v2032
      %v2143 = vadd.f32 %v1871, %v2037
      %v2144 = vadd.f32 %v1872, %v2042
      %v2145 = vadd.f32 %v1873, %v2047
      %v2146 = vadd.f32 %v1874, %v2052
      %v2147 = vadd.f32 %v1875, %v2057
      %v2148 = vadd.f32 %v1876, %v2062
      %v2149 = vadd.f32 %v1877, %v2067
      %v2150 = vadd.f32 %v1878, %v2072
      %v2151 = vadd.f32 %v1879, %v2077
      %v2152 = vadd.f32 %v1880, %v2082
      %v2153 = vadd.f32 %v1881, %v2087
      %v2154 = vadd.f32 %v1882, %v2092
      %v2155 = vadd.f32 %v1883, %v2097
      %v2156 = vadd.f32 %v1884, %v2102
      %v2157 = vadd.f32 %v1885, %v2107
      %v2158 = vadd.f32 %v1886, %v2112
      %v2159 = vadd.f32 %v1887, %v2117
      %v2160 = vadd.f32 %v1888, %v2122
      %v2161 = vadd.f32 %v1889, %v2127
      %s2162 = scalar_lea.vmem %s1, 200
      %v2163 = vld [vmem:[%s2162] sm:$0xff]
      %v2164 = vld [vmem:[%s2162 + $0x8] sm:$0xff]
      %v2165 = vld [vmem:[%s2162 + $0x10] sm:$0xff]
      %v2166 = vld [vmem:[%s2162 + $0x18] sm:$0xff]
      %v2167 = vld [vmem:[%s2162 + $0x20] sm:$0x1]
      %v2169 = vsel %vm536, %v520, 0
      %v2172 = vsel %vm536, %v521, 0
      %v2175 = vsel %vm633, %v2167, 0
      %2177 = vmatprep.subr.mxu0 0.0
      %2178 = vmatpush1.msra.mxu0 %v2163
      %2179 = vmatprep.subr.mxu0 0.0
      %2180 = vmatpush1.msra.mxu0 %v2164
      %2181 = vmatprep.subr.mxu0 0.0
      %2182 = vmatpush1.msra.mxu0 %v2165
      %2183 = vmatprep.subr.mxu0 0.0
      %2184 = vmatpush1.msra.mxu0 %v2166
      %2185 = vmatprep.subr.mxu0 0.0
      %2186 = vmatpush1.msra.mxu0 %v2175
      %2187 = vmatprep.subr.mxu0 0.0
      %2188 = vmatpush1.msra.mxu0 0.0
      %2189 = vmatprep.subr.mxu0 0.0
      %2190 = vmatpush1.msra.mxu0 0.0
      %2191 = vmatprep.subr.mxu0 0.0
      %2192 = vmatpush1.msra.mxu0 0.0
      %2193 = vmatprep.subr.mxu0 0.0
      %2194 = vmatpush1.msra.mxu0 0.0
      %2195 = vmatprep.subr.mxu0 0.0
      %2196 = vmatpush1.msra.mxu0 0.0
      %2197 = vmatprep.subr.mxu0 0.0
      %2198 = vmatpush1.msra.mxu0 0.0
      %2199 = vmatprep.subr.mxu0 0.0
      %2200 = vmatpush1.msra.mxu0 0.0
      %2201 = vmatprep.subr.mxu0 0.0
      %2202 = vmatpush1.msra.mxu0 0.0
      %2203 = vmatprep.subr.mxu0 0.0
      %2204 = vmatpush1.msra.mxu0 0.0
      %2205 = vmatprep.subr.mxu0 0.0
      %2206 = vmatpush1.msra.mxu0 0.0
      %2207 = vmatprep.subr.mxu0 0.0
      %2208 = vmatpush1.msra.mxu0 0.0
      %2209 = vmatprep.subr.mxu0 0.0
      %2210 = vmatpush1.msra.mxu0 0.0
      %2211 = vmatprep.subr.mxu0 0.0
      %2212 = vmatpush1.msra.mxu0 0.0
      %2213 = vmatprep.subr.mxu0 0.0
      %2214 = vmatpush1.msra.mxu0 0.0
      %2215 = vmatprep.subr.mxu0 0.0
      %2216 = vmatpush1.msra.mxu0 0.0
      %2217 = vmatprep.subr.mxu0 0.0
      %2218 = vmatpush1.msra.mxu0 0.0
      %2219 = vmatprep.subr.mxu0 0.0
      %2220 = vmatpush1.msra.mxu0 0.0
      %2221 = vmatprep.subr.mxu0 0.0
      %2222 = vmatpush1.msra.mxu0 0.0
      %2223 = vmatprep.subr.mxu0 0.0
      %2224 = vmatpush1.msra.mxu0 0.0
      %2225 = vmatprep.subr.mxu0 0.0
      %2226 = vmatpush1.msra.mxu0 0.0
      %2227 = vmatprep.subr.mxu0 0.0
      %2228 = vmatpush1.msra.mxu0 0.0
      %2229 = vmatprep.subr.mxu0 0.0
      %2230 = vmatpush1.msra.mxu0 0.0
      %2231 = vmatprep.subr.mxu0 0.0
      %2232 = vmatpush1.msra.mxu0 0.0
      %2233 = vmatprep.subr.mxu0 0.0
      %2234 = vmatpush1.msra.mxu0 0.0
      %2235 = vmatprep.subr.mxu0 0.0
      %2236 = vmatpush1.msra.mxu0 0.0
      %2237 = vmatprep.subr.mxu0 0.0
      %2238 = vmatpush1.msra.mxu0 0.0
      %2239 = vmatprep.subr.mxu0 0.0
      %2240 = vmatpush1.msra.mxu0 0.0
      %2241 = vmatprep.mubr.f32.mxu0 0.0
      %2242 = vmatmul.mubr.f32.gmra.mrb[0].mxu0 %v1269
      %v2243 = vpop.f32.mrb[0].mxu0
      %v2244 = vadd.f32 0.0, %v2243
      %v2245 = vpop.f32.mrb[0].mxu0
      %2246 = vmatprep.mubr.f32.mxu0 0.0
      %2247 = vmatmul.mubr.f32.gmra.mrb[0].mxu0 %v1272
      %v2248 = vpop.f32.mrb[0].mxu0
      %v2249 = vadd.f32 0.0, %v2248
      %v2250 = vpop.f32.mrb[0].mxu0
      %2251 = vmatprep.mubr.f32.mxu0 0.0
      %2252 = vmatmul.mubr.f32.gmra.mrb[0].mxu0 %v1275
      %v2253 = vpop.f32.mrb[0].mxu0
      %v2254 = vadd.f32 0.0, %v2253
      %v2255 = vpop.f32.mrb[0].mxu0
      %2256 = vmatprep.mubr.f32.mxu0 0.0
      %2257 = vmatmul.mubr.f32.gmra.mrb[0].mxu0 %v1278
      %v2258 = vpop.f32.mrb[0].mxu0
      %v2259 = vadd.f32 0.0, %v2258
      %v2260 = vpop.f32.mrb[0].mxu0
      %2261 = vmatprep.mubr.f32.mxu0 0.0
      %2262 = vmatmul.mubr.f32.gmra.mrb[0].mxu0 %v1281
      %v2263 = vpop.f32.mrb[0].mxu0
      %v2264 = vadd.f32 0.0, %v2263
      %v2265 = vpop.f32.mrb[0].mxu0
      %2266 = vmatprep.mubr.f32.mxu0 0.0
      %2267 = vmatmul.mubr.f32.gmra.mrb[0].mxu0 %v1284
      %v2268 = vpop.f32.mrb[0].mxu0
      %v2269 = vadd.f32 0.0, %v2268
      %v2270 = vpop.f32.mrb[0].mxu0
      %2271 = vmatprep.mubr.f32.mxu0 0.0
      %2272 = vmatmul.mubr.f32.gmra.mrb[0].mxu0 %v1287
      %v2273 = vpop.f32.mrb[0].mxu0
      %v2274 = vadd.f32 0.0, %v2273
      %v2275 = vpop.f32.mrb[0].mxu0
      %2276 = vmatprep.mubr.f32.mxu0 0.0
      %2277 = vmatmul.mubr.f32.gmra.mrb[0].mxu0 %v1290
      %v2278 = vpop.f32.mrb[0].mxu0
      %v2279 = vadd.f32 0.0, %v2278
      %v2280 = vpop.f32.mrb[0].mxu0
      %2281 = vmatprep.mubr.f32.mxu0 0.0
      %2282 = vmatmul.mubr.f32.gmra.mrb[0].mxu0 %v1293
      %v2283 = vpop.f32.mrb[0].mxu0
      %v2284 = vadd.f32 0.0, %v2283
      %v2285 = vpop.f32.mrb[0].mxu0
      %2286 = vmatprep.mubr.f32.mxu0 0.0
      %2287 = vmatmul.mubr.f32.gmra.mrb[0].mxu0 %v1296
      %v2288 = vpop.f32.mrb[0].mxu0
      %v2289 = vadd.f32 0.0, %v2288
      %v2290 = vpop.f32.mrb[0].mxu0
      %2291 = vmatprep.mubr.f32.mxu0 0.0
      %2292 = vmatmul.mubr.f32.gmra.mrb[0].mxu0 %v1299
      %v2293 = vpop.f32.mrb[0].mxu0
      %v2294 = vadd.f32 0.0, %v2293
      %v2295 = vpop.f32.mrb[0].mxu0
      %2296 = vmatprep.mubr.f32.mxu0 0.0
      %2297 = vmatmul.mubr.f32.gmra.mrb[0].mxu0 %v1302
      %v2298 = vpop.f32.mrb[0].mxu0
      %v2299 = vadd.f32 0.0, %v2298
      %v2300 = vpop.f32.mrb[0].mxu0
      %2301 = vmatprep.mubr.f32.mxu0 0.0
      %2302 = vmatmul.mubr.f32.gmra.mrb[0].mxu0 %v1305
      %v2303 = vpop.f32.mrb[0].mxu0
      %v2304 = vadd.f32 0.0, %v2303
      %v2305 = vpop.f32.mrb[0].mxu0
      %2306 = vmatprep.mubr.f32.mxu0 0.0
      %2307 = vmatmul.mubr.f32.gmra.mrb[0].mxu0 %v1308
      %v2308 = vpop.f32.mrb[0].mxu0
      %v2309 = vadd.f32 0.0, %v2308
      %v2310 = vpop.f32.mrb[0].mxu0
      %2311 = vmatprep.mubr.f32.mxu0 0.0
      %2312 = vmatmul.mubr.f32.gmra.mrb[0].mxu0 %v1311
      %v2313 = vpop.f32.mrb[0].mxu0
      %v2314 = vadd.f32 0.0, %v2313
      %v2315 = vpop.f32.mrb[0].mxu0
      %2316 = vmatprep.mubr.f32.mxu0 0.0
      %2317 = vmatmul.mubr.f32.gmra.mrb[0].mxu0 %v1314
      %v2318 = vpop.f32.mrb[0].mxu0
      %v2319 = vadd.f32 0.0, %v2318
      %v2320 = vpop.f32.mrb[0].mxu0
      %2321 = vmatprep.mubr.f32.mxu0 0.0
      %2322 = vmatmul.mubr.f32.gmra.mrb[0].mxu0 %v1317
      %v2323 = vpop.f32.mrb[0].mxu0
      %v2324 = vadd.f32 0.0, %v2323
      %v2325 = vpop.f32.mrb[0].mxu0
      %2326 = vmatprep.mubr.f32.mxu0 0.0
      %2327 = vmatmul.mubr.f32.gmra.mrb[0].mxu0 %v1320
      %v2328 = vpop.f32.mrb[0].mxu0
      %v2329 = vadd.f32 0.0, %v2328
      %v2330 = vpop.f32.mrb[0].mxu0
      %2331 = vmatprep.mubr.f32.mxu0 0.0
      %2332 = vmatmul.mubr.f32.gmra.mrb[0].mxu0 %v1323
      %v2333 = vpop.f32.mrb[0].mxu0
      %v2334 = vadd.f32 0.0, %v2333
      %v2335 = vpop.f32.mrb[0].mxu0
      %2336 = vmatprep.mubr.f32.mxu0 0.0
      %2337 = vmatmul.mubr.f32.gmra.mrb[0].mxu0 %v1326
      %v2338 = vpop.f32.mrb[0].mxu0
      %v2339 = vadd.f32 0.0, %v2338
      %v2340 = vpop.f32.mrb[0].mxu0
      %2341 = vmatprep.mubr.f32.mxu0 0.0
      %2342 = vmatmul.mubr.f32.gmra.mrb[0].mxu0 %v1329
      %v2343 = vpop.f32.mrb[0].mxu0
      %v2344 = vadd.f32 0.0, %v2343
      %v2345 = vpop.f32.mrb[0].mxu0
      %2346 = vmatprep.mubr.f32.mxu0 0.0
      %2347 = vmatmul.mubr.f32.gmra.mrb[0].mxu0 %v1332
      %v2348 = vpop.f32.mrb[0].mxu0
      %v2349 = vadd.f32 0.0, %v2348
      %v2350 = vpop.f32.mrb[0].mxu0
      %2351 = vmatprep.mubr.f32.mxu0 0.0
      %2352 = vmatmul.mubr.f32.gmra.mrb[0].mxu0 %v1335
      %v2353 = vpop.f32.mrb[0].mxu0
      %v2354 = vadd.f32 0.0, %v2353
      %v2355 = vpop.f32.mrb[0].mxu0
      %2356 = vmatprep.mubr.f32.mxu0 0.0
      %2357 = vmatmul.mubr.f32.gmra.mrb[0].mxu0 %v1338
      %v2358 = vpop.f32.mrb[0].mxu0
      %v2359 = vadd.f32 0.0, %v2358
      %v2360 = vpop.f32.mrb[0].mxu0
      %2361 = vmatprep.mubr.f32.mxu0 0.0
      %2362 = vmatmul.mubr.f32.gmra.mrb[0].mxu0 %v1341
      %v2363 = vpop.f32.mrb[0].mxu0
      %v2364 = vadd.f32 0.0, %v2363
      %v2365 = vpop.f32.mrb[0].mxu0
      %2366 = vmatprep.mubr.f32.mxu0 0.0
      %2367 = vmatmul.mubr.f32.gmra.mrb[0].mxu0 %v1344
      %v2368 = vpop.f32.mrb[0].mxu0
      %v2369 = vadd.f32 0.0, %v2368
      %v2370 = vpop.f32.mrb[0].mxu0
      %2371 = vmatprep.mubr.f32.mxu0 0.0
      %2372 = vmatmul.mubr.f32.gmra.mrb[0].mxu0 %v1347
      %v2373 = vpop.f32.mrb[0].mxu0
      %v2374 = vadd.f32 0.0, %v2373
      %v2375 = vpop.f32.mrb[0].mxu0
      %2376 = vmatprep.mubr.f32.mxu0 0.0
      %2377 = vmatmul.mubr.f32.gmra.mrb[0].mxu0 %v1350
      %v2378 = vpop.f32.mrb[0].mxu0
      %v2379 = vadd.f32 0.0, %v2378
      %v2380 = vpop.f32.mrb[0].mxu0
      %2381 = vmatprep.mubr.f32.mxu0 0.0
      %2382 = vmatmul.mubr.f32.gmra.mrb[0].mxu0 %v1353
      %v2383 = vpop.f32.mrb[0].mxu0
      %v2384 = vadd.f32 0.0, %v2383
      %v2385 = vpop.f32.mrb[0].mxu0
      %2386 = vmatprep.mubr.f32.mxu0 0.0
      %2387 = vmatmul.mubr.f32.gmra.mrb[0].mxu0 %v1356
      %v2388 = vpop.f32.mrb[0].mxu0
      %v2389 = vadd.f32 0.0, %v2388
      %v2390 = vpop.f32.mrb[0].mxu0
      %2391 = vmatprep.mubr.f32.mxu0 0.0
      %2392 = vmatmul.mubr.f32.gmra.mrb[0].mxu0 %v2169
      %v2393 = vpop.f32.mrb[0].mxu0
      %v2394 = vadd.f32 0.0, %v2393
      %v2395 = vpop.f32.mrb[0].mxu0
      %2396 = vmatprep.mubr.f32.mxu0 0.0
      %2397 = vmatmul.mubr.f32.gmra.mrb[0].mxu0 %v2172
      %v2398 = vpop.f32.mrb[0].mxu0
      %v2399 = vadd.f32 0.0, %v2398
      %v2400 = vpop.f32.mrb[0].mxu0
      %2401 = vdwg.mxu0
      %v2402 = vadd.f32 %v2130, %v2244
      %v2403 = vadd.f32 %v2131, %v2249
      %v2404 = vadd.f32 %v2132, %v2254
      %v2405 = vadd.f32 %v2133, %v2259
      %v2406 = vadd.f32 %v2134, %v2264
      %v2407 = vadd.f32 %v2135, %v2269
      %v2408 = vadd.f32 %v2136, %v2274
      %v2409 = vadd.f32 %v2137, %v2279
      %v2410 = vadd.f32 %v2138, %v2284
      %v2411 = vadd.f32 %v2139, %v2289
      %v2412 = vadd.f32 %v2140, %v2294
      %v2413 = vadd.f32 %v2141, %v2299
      %v2414 = vadd.f32 %v2142, %v2304
      %v2415 = vadd.f32 %v2143, %v2309
      %v2416 = vadd.f32 %v2144, %v2314
      %v2417 = vadd.f32 %v2145, %v2319
      %v2418 = vadd.f32 %v2146, %v2324
      %v2419 = vadd.f32 %v2147, %v2329
      %v2420 = vadd.f32 %v2148, %v2334
      %v2421 = vadd.f32 %v2149, %v2339
      %v2422 = vadd.f32 %v2150, %v2344
      %v2423 = vadd.f32 %v2151, %v2349
      %v2424 = vadd.f32 %v2152, %v2354
      %v2425 = vadd.f32 %v2153, %v2359
      %v2426 = vadd.f32 %v2154, %v2364
      %v2427 = vadd.f32 %v2155, %v2369
      %v2428 = vadd.f32 %v2156, %v2374
      %v2429 = vadd.f32 %v2157, %v2379
      %v2430 = vadd.f32 %v2158, %v2384
      %v2431 = vadd.f32 %v2159, %v2389
      %v2432 = vadd.f32 %v2160, %v2394
      %v2433 = vadd.f32 %v2161, %v2399
      %s2434 = scalar_lea.vmem %s1, 240
      %v2435 = vld [vmem:[%s2434] sm:$0xff]
      %v2436 = vld [vmem:[%s2434 + $0x8] sm:$0xff]
      %v2437 = vld [vmem:[%s2434 + $0x10] sm:$0xff]
      %v2438 = vld [vmem:[%s2434 + $0x18] sm:$0xff]
      %v2439 = vld [vmem:[%s2434 + $0x20] sm:$0x1]
      %v2441 = vsel %vm536, %v450, 0
      %v2444 = vsel %vm536, %v451, 0
      %v2447 = vsel %vm633, %v2439, 0
      %2449 = vmatprep.subr.mxu0 0.0
      %2450 = vmatpush1.msra.mxu0 %v2435
      %2451 = vmatprep.subr.mxu0 0.0
      %2452 = vmatpush1.msra.mxu0 %v2436
      %2453 = vmatprep.subr.mxu0 0.0
      %2454 = vmatpush1.msra.mxu0 %v2437
      %2455 = vmatprep.subr.mxu0 0.0
      %2456 = vmatpush1.msra.mxu0 %v2438
      %2457 = vmatprep.subr.mxu0 0.0
      %2458 = vmatpush1.msra.mxu0 %v2447
      %2459 = vmatprep.subr.mxu0 0.0
      %2460 = vmatpush1.msra.mxu0 0.0
      %2461 = vmatprep.subr.mxu0 0.0
      %2462 = vmatpush1.msra.mxu0 0.0
      %2463 = vmatprep.subr.mxu0 0.0
      %2464 = vmatpush1.msra.mxu0 0.0
      %2465 = vmatprep.subr.mxu0 0.0
      %2466 = vmatpush1.msra.mxu0 0.0
      %2467 = vmatprep.subr.mxu0 0.0
      %2468 = vmatpush1.msra.mxu0 0.0
      %2469 = vmatprep.subr.mxu0 0.0
      %2470 = vmatpush1.msra.mxu0 0.0
      %2471 = vmatprep.subr.mxu0 0.0
      %2472 = vmatpush1.msra.mxu0 0.0
      %2473 = vmatprep.subr.mxu0 0.0
      %2474 = vmatpush1.msra.mxu0 0.0
      %2475 = vmatprep.subr.mxu0 0.0
      %2476 = vmatpush1.msra.mxu0 0.0
      %2477 = vmatprep.subr.mxu0 0.0
      %2478 = vmatpush1.msra.mxu0 0.0
      %2479 = vmatprep.subr.mxu0 0.0
      %2480 = vmatpush1.msra.mxu0 0.0
      %2481 = vmatprep.subr.mxu0 0.0
      %2482 = vmatpush1.msra.mxu0 0.0
      %2483 = vmatprep.subr.mxu0 0.0
      %2484 = vmatpush1.msra.mxu0 0.0
      %2485 = vmatprep.subr.mxu0 0.0
      %2486 = vmatpush1.msra.mxu0 0.0
      %2487 = vmatprep.subr.mxu0 0.0
      %2488 = vmatpush1.msra.mxu0 0.0
      %2489 = vmatprep.subr.mxu0 0.0
      %2490 = vmatpush1.msra.mxu0 0.0
      %2491 = vmatprep.subr.mxu0 0.0
      %2492 = vmatpush1.msra.mxu0 0.0
      %2493 = vmatprep.subr.mxu0 0.0
      %2494 = vmatpush1.msra.mxu0 0.0
      %2495 = vmatprep.subr.mxu0 0.0
      %2496 = vmatpush1.msra.mxu0 0.0
      %2497 = vmatprep.subr.mxu0 0.0
      %2498 = vmatpush1.msra.mxu0 0.0
      %2499 = vmatprep.subr.mxu0 0.0
      %2500 = vmatpush1.msra.mxu0 0.0
      %2501 = vmatprep.subr.mxu0 0.0
      %2502 = vmatpush1.msra.mxu0 0.0
      %2503 = vmatprep.subr.mxu0 0.0
      %2504 = vmatpush1.msra.mxu0 0.0
      %2505 = vmatprep.subr.mxu0 0.0
      %2506 = vmatpush1.msra.mxu0 0.0
      %2507 = vmatprep.subr.mxu0 0.0
      %2508 = vmatpush1.msra.mxu0 0.0
      %2509 = vmatprep.subr.mxu0 0.0
      %2510 = vmatpush1.msra.mxu0 0.0
      %2511 = vmatprep.subr.mxu0 0.0
      %2512 = vmatpush1.msra.mxu0 0.0
      %2513 = vmatprep.mubr.f32.mxu0 0.0
      %2514 = vmatmul.mubr.f32.gmra.mrb[0].mxu0 %v550
      %v2515 = vpop.f32.mrb[0].mxu0
      %v2516 = vadd.f32 0.0, %v2515
      %v2517 = vpop.f32.mrb[0].mxu0
      %2518 = vmatprep.mubr.f32.mxu0 0.0
      %2519 = vmatmul.mubr.f32.gmra.mrb[0].mxu0 %v553
      %v2520 = vpop.f32.mrb[0].mxu0
      %v2521 = vadd.f32 0.0, %v2520
      %v2522 = vpop.f32.mrb[0].mxu0
      %2523 = vmatprep.mubr.f32.mxu0 0.0
      %2524 = vmatmul.mubr.f32.gmra.mrb[0].mxu0 %v556
      %v2525 = vpop.f32.mrb[0].mxu0
      %v2526 = vadd.f32 0.0, %v2525
      %v2527 = vpop.f32.mrb[0].mxu0
      %2528 = vmatprep.mubr.f32.mxu0 0.0
      %2529 = vmatmul.mubr.f32.gmra.mrb[0].mxu0 %v559
      %v2530 = vpop.f32.mrb[0].mxu0
      %v2531 = vadd.f32 0.0, %v2530
      %v2532 = vpop.f32.mrb[0].mxu0
      %2533 = vmatprep.mubr.f32.mxu0 0.0
      %2534 = vmatmul.mubr.f32.gmra.mrb[0].mxu0 %v562
      %v2535 = vpop.f32.mrb[0].mxu0
      %v2536 = vadd.f32 0.0, %v2535
      %v2537 = vpop.f32.mrb[0].mxu0
      %2538 = vmatprep.mubr.f32.mxu0 0.0
      %2539 = vmatmul.mubr.f32.gmra.mrb[0].mxu0 %v565
      %v2540 = vpop.f32.mrb[0].mxu0
      %v2541 = vadd.f32 0.0, %v2540
      %v2542 = vpop.f32.mrb[0].mxu0
      %2543 = vmatprep.mubr.f32.mxu0 0.0
      %2544 = vmatmul.mubr.f32.gmra.mrb[0].mxu0 %v568
      %v2545 = vpop.f32.mrb[0].mxu0
      %v2546 = vadd.f32 0.0, %v2545
      %v2547 = vpop.f32.mrb[0].mxu0
      %2548 = vmatprep.mubr.f32.mxu0 0.0
      %2549 = vmatmul.mubr.f32.gmra.mrb[0].mxu0 %v571
      %v2550 = vpop.f32.mrb[0].mxu0
      %v2551 = vadd.f32 0.0, %v2550
      %v2552 = vpop.f32.mrb[0].mxu0
      %2553 = vmatprep.mubr.f32.mxu0 0.0
      %2554 = vmatmul.mubr.f32.gmra.mrb[0].mxu0 %v574
      %v2555 = vpop.f32.mrb[0].mxu0
      %v2556 = vadd.f32 0.0, %v2555
      %v2557 = vpop.f32.mrb[0].mxu0
      %2558 = vmatprep.mubr.f32.mxu0 0.0
      %2559 = vmatmul.mubr.f32.gmra.mrb[0].mxu0 %v577
      %v2560 = vpop.f32.mrb[0].mxu0
      %v2561 = vadd.f32 0.0, %v2560
      %v2562 = vpop.f32.mrb[0].mxu0
      %2563 = vmatprep.mubr.f32.mxu0 0.0
      %2564 = vmatmul.mubr.f32.gmra.mrb[0].mxu0 %v580
      %v2565 = vpop.f32.mrb[0].mxu0
      %v2566 = vadd.f32 0.0, %v2565
      %v2567 = vpop.f32.mrb[0].mxu0
      %2568 = vmatprep.mubr.f32.mxu0 0.0
      %2569 = vmatmul.mubr.f32.gmra.mrb[0].mxu0 %v583
      %v2570 = vpop.f32.mrb[0].mxu0
      %v2571 = vadd.f32 0.0, %v2570
      %v2572 = vpop.f32.mrb[0].mxu0
      %2573 = vmatprep.mubr.f32.mxu0 0.0
      %2574 = vmatmul.mubr.f32.gmra.mrb[0].mxu0 %v586
      %v2575 = vpop.f32.mrb[0].mxu0
      %v2576 = vadd.f32 0.0, %v2575
      %v2577 = vpop.f32.mrb[0].mxu0
      %2578 = vmatprep.mubr.f32.mxu0 0.0
      %2579 = vmatmul.mubr.f32.gmra.mrb[0].mxu0 %v589
      %v2580 = vpop.f32.mrb[0].mxu0
      %v2581 = vadd.f32 0.0, %v2580
      %v2582 = vpop.f32.mrb[0].mxu0
      %2583 = vmatprep.mubr.f32.mxu0 0.0
      %2584 = vmatmul.mubr.f32.gmra.mrb[0].mxu0 %v592
      %v2585 = vpop.f32.mrb[0].mxu0
      %v2586 = vadd.f32 0.0, %v2585
      %v2587 = vpop.f32.mrb[0].mxu0
      %2588 = vmatprep.mubr.f32.mxu0 0.0
      %2589 = vmatmul.mubr.f32.gmra.mrb[0].mxu0 %v595
      %v2590 = vpop.f32.mrb[0].mxu0
      %v2591 = vadd.f32 0.0, %v2590
      %v2592 = vpop.f32.mrb[0].mxu0
      %2593 = vmatprep.mubr.f32.mxu0 0.0
      %2594 = vmatmul.mubr.f32.gmra.mrb[0].mxu0 %v598
      %v2595 = vpop.f32.mrb[0].mxu0
      %v2596 = vadd.f32 0.0, %v2595
      %v2597 = vpop.f32.mrb[0].mxu0
      %2598 = vmatprep.mubr.f32.mxu0 0.0
      %2599 = vmatmul.mubr.f32.gmra.mrb[0].mxu0 %v601
      %v2600 = vpop.f32.mrb[0].mxu0
      %v2601 = vadd.f32 0.0, %v2600
      %v2602 = vpop.f32.mrb[0].mxu0
      %2603 = vmatprep.mubr.f32.mxu0 0.0
      %2604 = vmatmul.mubr.f32.gmra.mrb[0].mxu0 %v604
      %v2605 = vpop.f32.mrb[0].mxu0
      %v2606 = vadd.f32 0.0, %v2605
      %v2607 = vpop.f32.mrb[0].mxu0
      %2608 = vmatprep.mubr.f32.mxu0 0.0
      %2609 = vmatmul.mubr.f32.gmra.mrb[0].mxu0 %v607
      %v2610 = vpop.f32.mrb[0].mxu0
      %v2611 = vadd.f32 0.0, %v2610
      %v2612 = vpop.f32.mrb[0].mxu0
      %2613 = vmatprep.mubr.f32.mxu0 0.0
      %2614 = vmatmul.mubr.f32.gmra.mrb[0].mxu0 %v610
      %v2615 = vpop.f32.mrb[0].mxu0
      %v2616 = vadd.f32 0.0, %v2615
      %v2617 = vpop.f32.mrb[0].mxu0
      %2618 = vmatprep.mubr.f32.mxu0 0.0
      %2619 = vmatmul.mubr.f32.gmra.mrb[0].mxu0 %v613
      %v2620 = vpop.f32.mrb[0].mxu0
      %v2621 = vadd.f32 0.0, %v2620
      %v2622 = vpop.f32.mrb[0].mxu0
      %2623 = vmatprep.mubr.f32.mxu0 0.0
      %2624 = vmatmul.mubr.f32.gmra.mrb[0].mxu0 %v616
      %v2625 = vpop.f32.mrb[0].mxu0
      %v2626 = vadd.f32 0.0, %v2625
      %v2627 = vpop.f32.mrb[0].mxu0
      %2628 = vmatprep.mubr.f32.mxu0 0.0
      %2629 = vmatmul.mubr.f32.gmra.mrb[0].mxu0 %v619
      %v2630 = vpop.f32.mrb[0].mxu0
      %v2631 = vadd.f32 0.0, %v2630
      %v2632 = vpop.f32.mrb[0].mxu0
      %2633 = vmatprep.mubr.f32.mxu0 0.0
      %2634 = vmatmul.mubr.f32.gmra.mrb[0].mxu0 %v622
      %v2635 = vpop.f32.mrb[0].mxu0
      %v2636 = vadd.f32 0.0, %v2635
      %v2637 = vpop.f32.mrb[0].mxu0
      %2638 = vmatprep.mubr.f32.mxu0 0.0
      %2639 = vmatmul.mubr.f32.gmra.mrb[0].mxu0 %v625
      %v2640 = vpop.f32.mrb[0].mxu0
      %v2641 = vadd.f32 0.0, %v2640
      %v2642 = vpop.f32.mrb[0].mxu0
      %2643 = vmatprep.mubr.f32.mxu0 0.0
      %2644 = vmatmul.mubr.f32.gmra.mrb[0].mxu0 %v628
      %v2645 = vpop.f32.mrb[0].mxu0
      %v2646 = vadd.f32 0.0, %v2645
      %v2647 = vpop.f32.mrb[0].mxu0
      %2648 = vmatprep.mubr.f32.mxu0 0.0
      %2649 = vmatmul.mubr.f32.gmra.mrb[0].mxu0 %v631
      %v2650 = vpop.f32.mrb[0].mxu0
      %v2651 = vadd.f32 0.0, %v2650
      %v2652 = vpop.f32.mrb[0].mxu0
      %2653 = vmatprep.mubr.f32.mxu0 0.0
      %2654 = vmatmul.mubr.f32.gmra.mrb[0].mxu0 %v1625
      %v2655 = vpop.f32.mrb[0].mxu0
      %v2656 = vadd.f32 0.0, %v2655
      %v2657 = vpop.f32.mrb[0].mxu0
      %2658 = vmatprep.mubr.f32.mxu0 0.0
      %2659 = vmatmul.mubr.f32.gmra.mrb[0].mxu0 %v1628
      %v2660 = vpop.f32.mrb[0].mxu0
      %v2661 = vadd.f32 0.0, %v2660
      %v2662 = vpop.f32.mrb[0].mxu0
      %2663 = vmatprep.mubr.f32.mxu0 0.0
      %2664 = vmatmul.mubr.f32.gmra.mrb[0].mxu0 %v2441
      %v2665 = vpop.f32.mrb[0].mxu0
      %v2666 = vadd.f32 0.0, %v2665
      %v2667 = vpop.f32.mrb[0].mxu0
      %2668 = vmatprep.mubr.f32.mxu0 0.0
      %2669 = vmatmul.mubr.f32.gmra.mrb[0].mxu0 %v2444
      %v2670 = vpop.f32.mrb[0].mxu0
      %v2671 = vadd.f32 0.0, %v2670
      %v2672 = vpop.f32.mrb[0].mxu0
      %2673 = vdwg.mxu0
      %v2674 = vadd.f32 %v2402, %v2516
      %v2675 = vadd.f32 %v2403, %v2521
      %v2676 = vadd.f32 %v2404, %v2526
      %v2677 = vadd.f32 %v2405, %v2531
      %v2678 = vadd.f32 %v2406, %v2536
      %v2679 = vadd.f32 %v2407, %v2541
      %v2680 = vadd.f32 %v2408, %v2546
      %v2681 = vadd.f32 %v2409, %v2551
      %v2682 = vadd.f32 %v2410, %v2556
      %v2683 = vadd.f32 %v2411, %v2561
      %v2684 = vadd.f32 %v2412, %v2566
      %v2685 = vadd.f32 %v2413, %v2571
      %v2686 = vadd.f32 %v2414, %v2576
      %v2687 = vadd.f32 %v2415, %v2581
      %v2688 = vadd.f32 %v2416, %v2586
      %v2689 = vadd.f32 %v2417, %v2591
      %v2690 = vadd.f32 %v2418, %v2596
      %v2691 = vadd.f32 %v2419, %v2601
      %v2692 = vadd.f32 %v2420, %v2606
      %v2693 = vadd.f32 %v2421, %v2611
      %v2694 = vadd.f32 %v2422, %v2616
      %v2695 = vadd.f32 %v2423, %v2621
      %v2696 = vadd.f32 %v2424, %v2626
      %v2697 = vadd.f32 %v2425, %v2631
      %v2698 = vadd.f32 %v2426, %v2636
      %v2699 = vadd.f32 %v2427, %v2641
      %v2700 = vadd.f32 %v2428, %v2646
      %v2701 = vadd.f32 %v2429, %v2651
      %v2702 = vadd.f32 %v2430, %v2656
      %v2703 = vadd.f32 %v2431, %v2661
      %v2704 = vadd.f32 %v2432, %v2666
      %v2705 = vadd.f32 %v2433, %v2671
      %s2706 = scalar_lea.vmem %s1, 280
      %v2707 = vld [vmem:[%s2706] sm:$0xff]
      %v2708 = vld [vmem:[%s2706 + $0x8] sm:$0xff]
      %v2709 = vld [vmem:[%s2706 + $0x10] sm:$0xff]
      %v2710 = vld [vmem:[%s2706 + $0x18] sm:$0xff]
      %v2711 = vld [vmem:[%s2706 + $0x20] sm:$0x1]
      %v2713 = vsel %vm536, %v486, 0
      %v2716 = vsel %vm536, %v487, 0
      %v2719 = vsel %vm633, %v2711, 0
      %2721 = vmatprep.subr.mxu0 0.0
      %2722 = vmatpush1.msra.mxu0 %v2707
      %2723 = vmatprep.subr.mxu0 0.0
      %2724 = vmatpush1.msra.mxu0 %v2708
      %2725 = vmatprep.subr.mxu0 0.0
      %2726 = vmatpush1.msra.mxu0 %v2709
      %2727 = vmatprep.subr.mxu0 0.0
      %2728 = vmatpush1.msra.mxu0 %v2710
      %2729 = vmatprep.subr.mxu0 0.0
      %2730 = vmatpush1.msra.mxu0 %v2719
      %2731 = vmatprep.subr.mxu0 0.0
      %2732 = vmatpush1.msra.mxu0 0.0
      %2733 = vmatprep.subr.mxu0 0.0
      %2734 = vmatpush1.msra.mxu0 0.0
      %2735 = vmatprep.subr.mxu0 0.0
      %2736 = vmatpush1.msra.mxu0 0.0
      %2737 = vmatprep.subr.mxu0 0.0
      %2738 = vmatpush1.msra.mxu0 0.0
      %2739 = vmatprep.subr.mxu0 0.0
      %2740 = vmatpush1.msra.mxu0 0.0
      %2741 = vmatprep.subr.mxu0 0.0
      %2742 = vmatpush1.msra.mxu0 0.0
      %2743 = vmatprep.subr.mxu0 0.0
      %2744 = vmatpush1.msra.mxu0 0.0
      %2745 = vmatprep.subr.mxu0 0.0
      %2746 = vmatpush1.msra.mxu0 0.0
      %2747 = vmatprep.subr.mxu0 0.0
      %2748 = vmatpush1.msra.mxu0 0.0
      %2749 = vmatprep.subr.mxu0 0.0
      %2750 = vmatpush1.msra.mxu0 0.0
      %2751 = vmatprep.subr.mxu0 0.0
      %2752 = vmatpush1.msra.mxu0 0.0
      %2753 = vmatprep.subr.mxu0 0.0
      %2754 = vmatpush1.msra.mxu0 0.0
      %2755 = vmatprep.subr.mxu0 0.0
      %2756 = vmatpush1.msra.mxu0 0.0
      %2757 = vmatprep.subr.mxu0 0.0
      %2758 = vmatpush1.msra.mxu0 0.0
      %2759 = vmatprep.subr.mxu0 0.0
      %2760 = vmatpush1.msra.mxu0 0.0
      %2761 = vmatprep.subr.mxu0 0.0
      %2762 = vmatpush1.msra.mxu0 0.0
      %2763 = vmatprep.subr.mxu0 0.0
      %2764 = vmatpush1.msra.mxu0 0.0
      %2765 = vmatprep.subr.mxu0 0.0
      %2766 = vmatpush1.msra.mxu0 0.0
      %2767 = vmatprep.subr.mxu0 0.0
      %2768 = vmatpush1.msra.mxu0 0.0
      %2769 = vmatprep.subr.mxu0 0.0
      %2770 = vmatpush1.msra.mxu0 0.0
      %2771 = vmatprep.subr.mxu0 0.0
      %2772 = vmatpush1.msra.mxu0 0.0
      %2773 = vmatprep.subr.mxu0 0.0
      %2774 = vmatpush1.msra.mxu0 0.0
      %2775 = vmatprep.subr.mxu0 0.0
      %2776 = vmatpush1.msra.mxu0 0.0
      %2777 = vmatprep.subr.mxu0 0.0
      %2778 = vmatpush1.msra.mxu0 0.0
      %2779 = vmatprep.subr.mxu0 0.0
      %2780 = vmatpush1.msra.mxu0 0.0
      %2781 = vmatprep.subr.mxu0 0.0
      %2782 = vmatpush1.msra.mxu0 0.0
      %2783 = vmatprep.subr.mxu0 0.0
      %2784 = vmatpush1.msra.mxu0 0.0
      %2785 = vmatprep.mubr.f32.mxu0 0.0
      %2786 = vmatmul.mubr.f32.gmra.mrb[0].mxu0 %v913
      %v2787 = vpop.f32.mrb[0].mxu0
      %v2788 = vadd.f32 0.0, %v2787
      %v2789 = vpop.f32.mrb[0].mxu0
      %2790 = vmatprep.mubr.f32.mxu0 0.0
      %2791 = vmatmul.mubr.f32.gmra.mrb[0].mxu0 %v916
      %v2792 = vpop.f32.mrb[0].mxu0
      %v2793 = vadd.f32 0.0, %v2792
      %v2794 = vpop.f32.mrb[0].mxu0
      %2795 = vmatprep.mubr.f32.mxu0 0.0
      %2796 = vmatmul.mubr.f32.gmra.mrb[0].mxu0 %v919
      %v2797 = vpop.f32.mrb[0].mxu0
      %v2798 = vadd.f32 0.0, %v2797
      %v2799 = vpop.f32.mrb[0].mxu0
      %2800 = vmatprep.mubr.f32.mxu0 0.0
      %2801 = vmatmul.mubr.f32.gmra.mrb[0].mxu0 %v922
      %v2802 = vpop.f32.mrb[0].mxu0
      %v2803 = vadd.f32 0.0, %v2802
      %v2804 = vpop.f32.mrb[0].mxu0
      %2805 = vmatprep.mubr.f32.mxu0 0.0
      %2806 = vmatmul.mubr.f32.gmra.mrb[0].mxu0 %v925
      %v2807 = vpop.f32.mrb[0].mxu0
      %v2808 = vadd.f32 0.0, %v2807
      %v2809 = vpop.f32.mrb[0].mxu0
      %2810 = vmatprep.mubr.f32.mxu0 0.0
      %2811 = vmatmul.mubr.f32.gmra.mrb[0].mxu0 %v928
      %v2812 = vpop.f32.mrb[0].mxu0
      %v2813 = vadd.f32 0.0, %v2812
      %v2814 = vpop.f32.mrb[0].mxu0
      %2815 = vmatprep.mubr.f32.mxu0 0.0
      %2816 = vmatmul.mubr.f32.gmra.mrb[0].mxu0 %v931
      %v2817 = vpop.f32.mrb[0].mxu0
      %v2818 = vadd.f32 0.0, %v2817
      %v2819 = vpop.f32.mrb[0].mxu0
      %2820 = vmatprep.mubr.f32.mxu0 0.0
      %2821 = vmatmul.mubr.f32.gmra.mrb[0].mxu0 %v934
      %v2822 = vpop.f32.mrb[0].mxu0
      %v2823 = vadd.f32 0.0, %v2822
      %v2824 = vpop.f32.mrb[0].mxu0
      %2825 = vmatprep.mubr.f32.mxu0 0.0
      %2826 = vmatmul.mubr.f32.gmra.mrb[0].mxu0 %v937
      %v2827 = vpop.f32.mrb[0].mxu0
      %v2828 = vadd.f32 0.0, %v2827
      %v2829 = vpop.f32.mrb[0].mxu0
      %2830 = vmatprep.mubr.f32.mxu0 0.0
      %2831 = vmatmul.mubr.f32.gmra.mrb[0].mxu0 %v940
      %v2832 = vpop.f32.mrb[0].mxu0
      %v2833 = vadd.f32 0.0, %v2832
      %v2834 = vpop.f32.mrb[0].mxu0
      %2835 = vmatprep.mubr.f32.mxu0 0.0
      %2836 = vmatmul.mubr.f32.gmra.mrb[0].mxu0 %v943
      %v2837 = vpop.f32.mrb[0].mxu0
      %v2838 = vadd.f32 0.0, %v2837
      %v2839 = vpop.f32.mrb[0].mxu0
      %2840 = vmatprep.mubr.f32.mxu0 0.0
      %2841 = vmatmul.mubr.f32.gmra.mrb[0].mxu0 %v946
      %v2842 = vpop.f32.mrb[0].mxu0
      %v2843 = vadd.f32 0.0, %v2842
      %v2844 = vpop.f32.mrb[0].mxu0
      %2845 = vmatprep.mubr.f32.mxu0 0.0
      %2846 = vmatmul.mubr.f32.gmra.mrb[0].mxu0 %v949
      %v2847 = vpop.f32.mrb[0].mxu0
      %v2848 = vadd.f32 0.0, %v2847
      %v2849 = vpop.f32.mrb[0].mxu0
      %2850 = vmatprep.mubr.f32.mxu0 0.0
      %2851 = vmatmul.mubr.f32.gmra.mrb[0].mxu0 %v952
      %v2852 = vpop.f32.mrb[0].mxu0
      %v2853 = vadd.f32 0.0, %v2852
      %v2854 = vpop.f32.mrb[0].mxu0
      %2855 = vmatprep.mubr.f32.mxu0 0.0
      %2856 = vmatmul.mubr.f32.gmra.mrb[0].mxu0 %v955
      %v2857 = vpop.f32.mrb[0].mxu0
      %v2858 = vadd.f32 0.0, %v2857
      %v2859 = vpop.f32.mrb[0].mxu0
      %2860 = vmatprep.mubr.f32.mxu0 0.0
      %2861 = vmatmul.mubr.f32.gmra.mrb[0].mxu0 %v958
      %v2862 = vpop.f32.mrb[0].mxu0
      %v2863 = vadd.f32 0.0, %v2862
      %v2864 = vpop.f32.mrb[0].mxu0
      %2865 = vmatprep.mubr.f32.mxu0 0.0
      %2866 = vmatmul.mubr.f32.gmra.mrb[0].mxu0 %v961
      %v2867 = vpop.f32.mrb[0].mxu0
      %v2868 = vadd.f32 0.0, %v2867
      %v2869 = vpop.f32.mrb[0].mxu0
      %2870 = vmatprep.mubr.f32.mxu0 0.0
      %2871 = vmatmul.mubr.f32.gmra.mrb[0].mxu0 %v964
      %v2872 = vpop.f32.mrb[0].mxu0
      %v2873 = vadd.f32 0.0, %v2872
      %v2874 = vpop.f32.mrb[0].mxu0
      %2875 = vmatprep.mubr.f32.mxu0 0.0
      %2876 = vmatmul.mubr.f32.gmra.mrb[0].mxu0 %v967
      %v2877 = vpop.f32.mrb[0].mxu0
      %v2878 = vadd.f32 0.0, %v2877
      %v2879 = vpop.f32.mrb[0].mxu0
      %2880 = vmatprep.mubr.f32.mxu0 0.0
      %2881 = vmatmul.mubr.f32.gmra.mrb[0].mxu0 %v970
      %v2882 = vpop.f32.mrb[0].mxu0
      %v2883 = vadd.f32 0.0, %v2882
      %v2884 = vpop.f32.mrb[0].mxu0
      %2885 = vmatprep.mubr.f32.mxu0 0.0
      %2886 = vmatmul.mubr.f32.gmra.mrb[0].mxu0 %v973
      %v2887 = vpop.f32.mrb[0].mxu0
      %v2888 = vadd.f32 0.0, %v2887
      %v2889 = vpop.f32.mrb[0].mxu0
      %2890 = vmatprep.mubr.f32.mxu0 0.0
      %2891 = vmatmul.mubr.f32.gmra.mrb[0].mxu0 %v976
      %v2892 = vpop.f32.mrb[0].mxu0
      %v2893 = vadd.f32 0.0, %v2892
      %v2894 = vpop.f32.mrb[0].mxu0
      %2895 = vmatprep.mubr.f32.mxu0 0.0
      %2896 = vmatmul.mubr.f32.gmra.mrb[0].mxu0 %v979
      %v2897 = vpop.f32.mrb[0].mxu0
      %v2898 = vadd.f32 0.0, %v2897
      %v2899 = vpop.f32.mrb[0].mxu0
      %2900 = vmatprep.mubr.f32.mxu0 0.0
      %2901 = vmatmul.mubr.f32.gmra.mrb[0].mxu0 %v982
      %v2902 = vpop.f32.mrb[0].mxu0
      %v2903 = vadd.f32 0.0, %v2902
      %v2904 = vpop.f32.mrb[0].mxu0
      %2905 = vmatprep.mubr.f32.mxu0 0.0
      %2906 = vmatmul.mubr.f32.gmra.mrb[0].mxu0 %v985
      %v2907 = vpop.f32.mrb[0].mxu0
      %v2908 = vadd.f32 0.0, %v2907
      %v2909 = vpop.f32.mrb[0].mxu0
      %2910 = vmatprep.mubr.f32.mxu0 0.0
      %2911 = vmatmul.mubr.f32.gmra.mrb[0].mxu0 %v988
      %v2912 = vpop.f32.mrb[0].mxu0
      %v2913 = vadd.f32 0.0, %v2912
      %v2914 = vpop.f32.mrb[0].mxu0
      %2915 = vmatprep.mubr.f32.mxu0 0.0
      %2916 = vmatmul.mubr.f32.gmra.mrb[0].mxu0 %v991
      %v2917 = vpop.f32.mrb[0].mxu0
      %v2918 = vadd.f32 0.0, %v2917
      %v2919 = vpop.f32.mrb[0].mxu0
      %2920 = vmatprep.mubr.f32.mxu0 0.0
      %2921 = vmatmul.mubr.f32.gmra.mrb[0].mxu0 %v994
      %v2922 = vpop.f32.mrb[0].mxu0
      %v2923 = vadd.f32 0.0, %v2922
      %v2924 = vpop.f32.mrb[0].mxu0
      %2925 = vmatprep.mubr.f32.mxu0 0.0
      %2926 = vmatmul.mubr.f32.gmra.mrb[0].mxu0 %v1897
      %v2927 = vpop.f32.mrb[0].mxu0
      %v2928 = vadd.f32 0.0, %v2927
      %v2929 = vpop.f32.mrb[0].mxu0
      %2930 = vmatprep.mubr.f32.mxu0 0.0
      %2931 = vmatmul.mubr.f32.gmra.mrb[0].mxu0 %v1900
      %v2932 = vpop.f32.mrb[0].mxu0
      %v2933 = vadd.f32 0.0, %v2932
      %v2934 = vpop.f32.mrb[0].mxu0
      %2935 = vmatprep.mubr.f32.mxu0 0.0
      %2936 = vmatmul.mubr.f32.gmra.mrb[0].mxu0 %v2713
      %v2937 = vpop.f32.mrb[0].mxu0
      %v2938 = vadd.f32 0.0, %v2937
      %v2939 = vpop.f32.mrb[0].mxu0
      %2940 = vmatprep.mubr.f32.mxu0 0.0
      %2941 = vmatmul.mubr.f32.gmra.mrb[0].mxu0 %v2716
      %v2942 = vpop.f32.mrb[0].mxu0
      %v2943 = vadd.f32 0.0, %v2942
      %v2944 = vpop.f32.mrb[0].mxu0
      %2945 = vdwg.mxu0
      %v2946 = vadd.f32 %v2674, %v2788
      %v2947 = vadd.f32 %v2675, %v2793
      %v2948 = vadd.f32 %v2676, %v2798
      %v2949 = vadd.f32 %v2677, %v2803
      %v2950 = vadd.f32 %v2678, %v2808
      %v2951 = vadd.f32 %v2679, %v2813
      %v2952 = vadd.f32 %v2680, %v2818
      %v2953 = vadd.f32 %v2681, %v2823
      %v2954 = vadd.f32 %v2682, %v2828
      %v2955 = vadd.f32 %v2683, %v2833
      %v2956 = vadd.f32 %v2684, %v2838
      %v2957 = vadd.f32 %v2685, %v2843
      %v2958 = vadd.f32 %v2686, %v2848
      %v2959 = vadd.f32 %v2687, %v2853
      %v2960 = vadd.f32 %v2688, %v2858
      %v2961 = vadd.f32 %v2689, %v2863
      %v2962 = vadd.f32 %v2690, %v2868
      %v2963 = vadd.f32 %v2691, %v2873
      %v2964 = vadd.f32 %v2692, %v2878
      %v2965 = vadd.f32 %v2693, %v2883
      %v2966 = vadd.f32 %v2694, %v2888
      %v2967 = vadd.f32 %v2695, %v2893
      %v2968 = vadd.f32 %v2696, %v2898
      %v2969 = vadd.f32 %v2697, %v2903
      %v2970 = vadd.f32 %v2698, %v2908
      %v2971 = vadd.f32 %v2699, %v2913
      %v2972 = vadd.f32 %v2700, %v2918
      %v2973 = vadd.f32 %v2701, %v2923
      %v2974 = vadd.f32 %v2702, %v2928
      %v2975 = vadd.f32 %v2703, %v2933
      %v2976 = vadd.f32 %v2704, %v2938
      %v2977 = vadd.f32 %v2705, %v2943
      %s2978 = scalar_lea.vmem %s1, 320
      %v2979 = vld [vmem:[%s2978] sm:$0xff]
      %v2980 = vld [vmem:[%s2978 + $0x8] sm:$0xff]
      %v2981 = vld [vmem:[%s2978 + $0x10] sm:$0xff]
      %v2982 = vld [vmem:[%s2978 + $0x18] sm:$0xff]
      %v2983 = vld [vmem:[%s2978 + $0x20] sm:$0x1]
      %v2985 = vsel %vm536, %v522, 0
      %v2988 = vsel %vm536, %v523, 0
      %v2991 = vsel %vm633, %v2983, 0
      %2993 = vmatprep.subr.mxu0 0.0
      %2994 = vmatpush1.msra.mxu0 %v2979
      %2995 = vmatprep.subr.mxu0 0.0
      %2996 = vmatpush1.msra.mxu0 %v2980
      %2997 = vmatprep.subr.mxu0 0.0
      %2998 = vmatpush1.msra.mxu0 %v2981
      %2999 = vmatprep.subr.mxu0 0.0
      %3000 = vmatpush1.msra.mxu0 %v2982
      %3001 = vmatprep.subr.mxu0 0.0
      %3002 = vmatpush1.msra.mxu0 %v2991
      %3003 = vmatprep.subr.mxu0 0.0
      %3004 = vmatpush1.msra.mxu0 0.0
      %3005 = vmatprep.subr.mxu0 0.0
      %3006 = vmatpush1.msra.mxu0 0.0
      %3007 = vmatprep.subr.mxu0 0.0
      %3008 = vmatpush1.msra.mxu0 0.0
      %3009 = vmatprep.subr.mxu0 0.0
      %3010 = vmatpush1.msra.mxu0 0.0
      %3011 = vmatprep.subr.mxu0 0.0
      %3012 = vmatpush1.msra.mxu0 0.0
      %3013 = vmatprep.subr.mxu0 0.0
      %3014 = vmatpush1.msra.mxu0 0.0
      %3015 = vmatprep.subr.mxu0 0.0
      %3016 = vmatpush1.msra.mxu0 0.0
      %3017 = vmatprep.subr.mxu0 0.0
      %3018 = vmatpush1.msra.mxu0 0.0
      %3019 = vmatprep.subr.mxu0 0.0
      %3020 = vmatpush1.msra.mxu0 0.0
      %3021 = vmatprep.subr.mxu0 0.0
      %3022 = vmatpush1.msra.mxu0 0.0
      %3023 = vmatprep.subr.mxu0 0.0
      %3024 = vmatpush1.msra.mxu0 0.0
      %3025 = vmatprep.subr.mxu0 0.0
      %3026 = vmatpush1.msra.mxu0 0.0
      %3027 = vmatprep.subr.mxu0 0.0
      %3028 = vmatpush1.msra.mxu0 0.0
      %3029 = vmatprep.subr.mxu0 0.0
      %3030 = vmatpush1.msra.mxu0 0.0
      %3031 = vmatprep.subr.mxu0 0.0
      %3032 = vmatpush1.msra.mxu0 0.0
      %3033 = vmatprep.subr.mxu0 0.0
      %3034 = vmatpush1.msra.mxu0 0.0
      %3035 = vmatprep.subr.mxu0 0.0
      %3036 = vmatpush1.msra.mxu0 0.0
      %3037 = vmatprep.subr.mxu0 0.0
      %3038 = vmatpush1.msra.mxu0 0.0
      %3039 = vmatprep.subr.mxu0 0.0
      %3040 = vmatpush1.msra.mxu0 0.0
      %3041 = vmatprep.subr.mxu0 0.0
      %3042 = vmatpush1.msra.mxu0 0.0
      %3043 = vmatprep.subr.mxu0 0.0
      %3044 = vmatpush1.msra.mxu0 0.0
      %3045 = vmatprep.subr.mxu0 0.0
      %3046 = vmatpush1.msra.mxu0 0.0
      %3047 = vmatprep.subr.mxu0 0.0
      %3048 = vmatpush1.msra.mxu0 0.0
      %3049 = vmatprep.subr.mxu0 0.0
      %3050 = vmatpush1.msra.mxu0 0.0
      %3051 = vmatprep.subr.mxu0 0.0
      %3052 = vmatpush1.msra.mxu0 0.0
      %3053 = vmatprep.subr.mxu0 0.0
      %3054 = vmatpush1.msra.mxu0 0.0
      %3055 = vmatprep.subr.mxu0 0.0
      %3056 = vmatpush1.msra.mxu0 0.0
      %3057 = vmatprep.mubr.f32.mxu0 0.0
      %3058 = vmatmul.mubr.f32.gmra.mrb[0].mxu0 %v1275
      %v3059 = vpop.f32.mrb[0].mxu0
      %v3060 = vadd.f32 0.0, %v3059
      %v3061 = vpop.f32.mrb[0].mxu0
      %3062 = vmatprep.mubr.f32.mxu0 0.0
      %3063 = vmatmul.mubr.f32.gmra.mrb[0].mxu0 %v1278
      %v3064 = vpop.f32.mrb[0].mxu0
      %v3065 = vadd.f32 0.0, %v3064
      %v3066 = vpop.f32.mrb[0].mxu0
      %3067 = vmatprep.mubr.f32.mxu0 0.0
      %3068 = vmatmul.mubr.f32.gmra.mrb[0].mxu0 %v1281
      %v3069 = vpop.f32.mrb[0].mxu0
      %v3070 = vadd.f32 0.0, %v3069
      %v3071 = vpop.f32.mrb[0].mxu0
      %3072 = vmatprep.mubr.f32.mxu0 0.0
      %3073 = vmatmul.mubr.f32.gmra.mrb[0].mxu0 %v1284
      %v3074 = vpop.f32.mrb[0].mxu0
      %v3075 = vadd.f32 0.0, %v3074
      %v3076 = vpop.f32.mrb[0].mxu0
      %3077 = vmatprep.mubr.f32.mxu0 0.0
      %3078 = vmatmul.mubr.f32.gmra.mrb[0].mxu0 %v1287
      %v3079 = vpop.f32.mrb[0].mxu0
      %v3080 = vadd.f32 0.0, %v3079
      %v3081 = vpop.f32.mrb[0].mxu0
      %3082 = vmatprep.mubr.f32.mxu0 0.0
      %3083 = vmatmul.mubr.f32.gmra.mrb[0].mxu0 %v1290
      %v3084 = vpop.f32.mrb[0].mxu0
      %v3085 = vadd.f32 0.0, %v3084
      %v3086 = vpop.f32.mrb[0].mxu0
      %3087 = vmatprep.mubr.f32.mxu0 0.0
      %3088 = vmatmul.mubr.f32.gmra.mrb[0].mxu0 %v1293
      %v3089 = vpop.f32.mrb[0].mxu0
      %v3090 = vadd.f32 0.0, %v3089
      %v3091 = vpop.f32.mrb[0].mxu0
      %3092 = vmatprep.mubr.f32.mxu0 0.0
      %3093 = vmatmul.mubr.f32.gmra.mrb[0].mxu0 %v1296
      %v3094 = vpop.f32.mrb[0].mxu0
      %v3095 = vadd.f32 0.0, %v3094
      %v3096 = vpop.f32.mrb[0].mxu0
      %3097 = vmatprep.mubr.f32.mxu0 0.0
      %3098 = vmatmul.mubr.f32.gmra.mrb[0].mxu0 %v1299
      %v3099 = vpop.f32.mrb[0].mxu0
      %v3100 = vadd.f32 0.0, %v3099
      %v3101 = vpop.f32.mrb[0].mxu0
      %3102 = vmatprep.mubr.f32.mxu0 0.0
      %3103 = vmatmul.mubr.f32.gmra.mrb[0].mxu0 %v1302
      %v3104 = vpop.f32.mrb[0].mxu0
      %v3105 = vadd.f32 0.0, %v3104
      %v3106 = vpop.f32.mrb[0].mxu0
      %3107 = vmatprep.mubr.f32.mxu0 0.0
      %3108 = vmatmul.mubr.f32.gmra.mrb[0].mxu0 %v1305
      %v3109 = vpop.f32.mrb[0].mxu0
      %v3110 = vadd.f32 0.0, %v3109
      %v3111 = vpop.f32.mrb[0].mxu0
      %3112 = vmatprep.mubr.f32.mxu0 0.0
      %3113 = vmatmul.mubr.f32.gmra.mrb[0].mxu0 %v1308
      %v3114 = vpop.f32.mrb[0].mxu0
      %v3115 = vadd.f32 0.0, %v3114
      %v3116 = vpop.f32.mrb[0].mxu0
      %3117 = vmatprep.mubr.f32.mxu0 0.0
      %3118 = vmatmul.mubr.f32.gmra.mrb[0].mxu0 %v1311
      %v3119 = vpop.f32.mrb[0].mxu0
      %v3120 = vadd.f32 0.0, %v3119
      %v3121 = vpop.f32.mrb[0].mxu0
      %3122 = vmatprep.mubr.f32.mxu0 0.0
      %3123 = vmatmul.mubr.f32.gmra.mrb[0].mxu0 %v1314
      %v3124 = vpop.f32.mrb[0].mxu0
      %v3125 = vadd.f32 0.0, %v3124
      %v3126 = vpop.f32.mrb[0].mxu0
      %3127 = vmatprep.mubr.f32.mxu0 0.0
      %3128 = vmatmul.mubr.f32.gmra.mrb[0].mxu0 %v1317
      %v3129 = vpop.f32.mrb[0].mxu0
      %v3130 = vadd.f32 0.0, %v3129
      %v3131 = vpop.f32.mrb[0].mxu0
      %3132 = vmatprep.mubr.f32.mxu0 0.0
      %3133 = vmatmul.mubr.f32.gmra.mrb[0].mxu0 %v1320
      %v3134 = vpop.f32.mrb[0].mxu0
      %v3135 = vadd.f32 0.0, %v3134
      %v3136 = vpop.f32.mrb[0].mxu0
      %3137 = vmatprep.mubr.f32.mxu0 0.0
      %3138 = vmatmul.mubr.f32.gmra.mrb[0].mxu0 %v1323
      %v3139 = vpop.f32.mrb[0].mxu0
      %v3140 = vadd.f32 0.0, %v3139
      %v3141 = vpop.f32.mrb[0].mxu0
      %3142 = vmatprep.mubr.f32.mxu0 0.0
      %3143 = vmatmul.mubr.f32.gmra.mrb[0].mxu0 %v1326
      %v3144 = vpop.f32.mrb[0].mxu0
      %v3145 = vadd.f32 0.0, %v3144
      %v3146 = vpop.f32.mrb[0].mxu0
      %3147 = vmatprep.mubr.f32.mxu0 0.0
      %3148 = vmatmul.mubr.f32.gmra.mrb[0].mxu0 %v1329
      %v3149 = vpop.f32.mrb[0].mxu0
      %v3150 = vadd.f32 0.0, %v3149
      %v3151 = vpop.f32.mrb[0].mxu0
      %3152 = vmatprep.mubr.f32.mxu0 0.0
      %3153 = vmatmul.mubr.f32.gmra.mrb[0].mxu0 %v1332
      %v3154 = vpop.f32.mrb[0].mxu0
      %v3155 = vadd.f32 0.0, %v3154
      %v3156 = vpop.f32.mrb[0].mxu0
      %3157 = vmatprep.mubr.f32.mxu0 0.0
      %3158 = vmatmul.mubr.f32.gmra.mrb[0].mxu0 %v1335
      %v3159 = vpop.f32.mrb[0].mxu0
      %v3160 = vadd.f32 0.0, %v3159
      %v3161 = vpop.f32.mrb[0].mxu0
      %3162 = vmatprep.mubr.f32.mxu0 0.0
      %3163 = vmatmul.mubr.f32.gmra.mrb[0].mxu0 %v1338
      %v3164 = vpop.f32.mrb[0].mxu0
      %v3165 = vadd.f32 0.0, %v3164
      %v3166 = vpop.f32.mrb[0].mxu0
      %3167 = vmatprep.mubr.f32.mxu0 0.0
      %3168 = vmatmul.mubr.f32.gmra.mrb[0].mxu0 %v1341
      %v3169 = vpop.f32.mrb[0].mxu0
      %v3170 = vadd.f32 0.0, %v3169
      %v3171 = vpop.f32.mrb[0].mxu0
      %3172 = vmatprep.mubr.f32.mxu0 0.0
      %3173 = vmatmul.mubr.f32.gmra.mrb[0].mxu0 %v1344
      %v3174 = vpop.f32.mrb[0].mxu0
      %v3175 = vadd.f32 0.0, %v3174
      %v3176 = vpop.f32.mrb[0].mxu0
      %3177 = vmatprep.mubr.f32.mxu0 0.0
      %3178 = vmatmul.mubr.f32.gmra.mrb[0].mxu0 %v1347
      %v3179 = vpop.f32.mrb[0].mxu0
      %v3180 = vadd.f32 0.0, %v3179
      %v3181 = vpop.f32.mrb[0].mxu0
      %3182 = vmatprep.mubr.f32.mxu0 0.0
      %3183 = vmatmul.mubr.f32.gmra.mrb[0].mxu0 %v1350
      %v3184 = vpop.f32.mrb[0].mxu0
      %v3185 = vadd.f32 0.0, %v3184
      %v3186 = vpop.f32.mrb[0].mxu0
      %3187 = vmatprep.mubr.f32.mxu0 0.0
      %3188 = vmatmul.mubr.f32.gmra.mrb[0].mxu0 %v1353
      %v3189 = vpop.f32.mrb[0].mxu0
      %v3190 = vadd.f32 0.0, %v3189
      %v3191 = vpop.f32.mrb[0].mxu0
      %3192 = vmatprep.mubr.f32.mxu0 0.0
      %3193 = vmatmul.mubr.f32.gmra.mrb[0].mxu0 %v1356
      %v3194 = vpop.f32.mrb[0].mxu0
      %v3195 = vadd.f32 0.0, %v3194
      %v3196 = vpop.f32.mrb[0].mxu0
      %3197 = vmatprep.mubr.f32.mxu0 0.0
      %3198 = vmatmul.mubr.f32.gmra.mrb[0].mxu0 %v2169
      %v3199 = vpop.f32.mrb[0].mxu0
      %v3200 = vadd.f32 0.0, %v3199
      %v3201 = vpop.f32.mrb[0].mxu0
      %3202 = vmatprep.mubr.f32.mxu0 0.0
      %3203 = vmatmul.mubr.f32.gmra.mrb[0].mxu0 %v2172
      %v3204 = vpop.f32.mrb[0].mxu0
      %v3205 = vadd.f32 0.0, %v3204
      %v3206 = vpop.f32.mrb[0].mxu0
      %3207 = vmatprep.mubr.f32.mxu0 0.0
      %3208 = vmatmul.mubr.f32.gmra.mrb[0].mxu0 %v2985
      %v3209 = vpop.f32.mrb[0].mxu0
      %v3210 = vadd.f32 0.0, %v3209
      %v3211 = vpop.f32.mrb[0].mxu0
      %3212 = vmatprep.mubr.f32.mxu0 0.0
      %3213 = vmatmul.mubr.f32.gmra.mrb[0].mxu0 %v2988
      %v3214 = vpop.f32.mrb[0].mxu0
      %v3215 = vadd.f32 0.0, %v3214
      %v3216 = vpop.f32.mrb[0].mxu0
      %3217 = vdwg.mxu0
      %v3218 = vadd.f32 %v2946, %v3060
      %v3219 = vadd.f32 %v2947, %v3065
      %v3220 = vadd.f32 %v2948, %v3070
      %v3221 = vadd.f32 %v2949, %v3075
      %v3222 = vadd.f32 %v2950, %v3080
      %v3223 = vadd.f32 %v2951, %v3085
      %v3224 = vadd.f32 %v2952, %v3090
      %v3225 = vadd.f32 %v2953, %v3095
      %v3226 = vadd.f32 %v2954, %v3100
      %v3227 = vadd.f32 %v2955, %v3105
      %v3228 = vadd.f32 %v2956, %v3110
      %v3229 = vadd.f32 %v2957, %v3115
      %v3230 = vadd.f32 %v2958, %v3120
      %v3231 = vadd.f32 %v2959, %v3125
      %v3232 = vadd.f32 %v2960, %v3130
      %v3233 = vadd.f32 %v2961, %v3135
      %v3234 = vadd.f32 %v2962, %v3140
      %v3235 = vadd.f32 %v2963, %v3145
      %v3236 = vadd.f32 %v2964, %v3150
      %v3237 = vadd.f32 %v2965, %v3155
      %v3238 = vadd.f32 %v2966, %v3160
      %v3239 = vadd.f32 %v2967, %v3165
      %v3240 = vadd.f32 %v2968, %v3170
      %v3241 = vadd.f32 %v2969, %v3175
      %v3242 = vadd.f32 %v2970, %v3180
      %v3243 = vadd.f32 %v2971, %v3185
      %v3244 = vadd.f32 %v2972, %v3190
      %v3245 = vadd.f32 %v2973, %v3195
      %v3246 = vadd.f32 %v2974, %v3200
      %v3247 = vadd.f32 %v2975, %v3205
      %v3248 = vadd.f32 %v2976, %v3210
      %v3249 = vadd.f32 %v2977, %v3215
      %v3250 = vmax.f32 %v3218, 0.0
      %v3251 = vmax.f32 %v3219, 0.0
      %v3252 = vmax.f32 %v3220, 0.0
      %v3253 = vmax.f32 %v3221, 0.0
      %v3254 = vmax.f32 %v3222, 0.0
      %v3255 = vmax.f32 %v3223, 0.0
      %v3256 = vmax.f32 %v3224, 0.0
      %v3257 = vmax.f32 %v3225, 0.0
      %v3258 = vmax.f32 %v3226, 0.0
      %v3259 = vmax.f32 %v3227, 0.0
      %v3260 = vmax.f32 %v3228, 0.0
      %v3261 = vmax.f32 %v3229, 0.0
      %v3262 = vmax.f32 %v3230, 0.0
      %v3263 = vmax.f32 %v3231, 0.0
      %v3264 = vmax.f32 %v3232, 0.0
      %v3265 = vmax.f32 %v3233, 0.0
      %v3266 = vmax.f32 %v3234, 0.0
      %v3267 = vmax.f32 %v3235, 0.0
      %v3268 = vmax.f32 %v3236, 0.0
      %v3269 = vmax.f32 %v3237, 0.0
      %v3270 = vmax.f32 %v3238, 0.0
      %v3271 = vmax.f32 %v3239, 0.0
      %v3272 = vmax.f32 %v3240, 0.0
      %v3273 = vmax.f32 %v3241, 0.0
      %v3274 = vmax.f32 %v3242, 0.0
      %v3275 = vmax.f32 %v3243, 0.0
      %v3276 = vmax.f32 %v3244, 0.0
      %v3277 = vmax.f32 %v3245, 0.0
      %v3278 = vmax.f32 %v3246, 0.0
      %v3279 = vmax.f32 %v3247, 0.0
      %v3280 = vmax.f32 %v3248, 0.0
      %v3281 = vmax.f32 %v3249, 0.0
      %v3282 = vld [vmem:[%s3] sm:$0xff]
      %v3283 = vld [vmem:[%s3 + $0x8] sm:$0xff]
      %v3284 = vld [vmem:[%s3 + $0x10] sm:$0xff]
      %v3285 = vld [vmem:[%s3 + $0x18] sm:$0xff]
      %v3286 = vld [vmem:[%s4] sm:$0x1]
      %v3288 = vlaneseq
      %v3289 = vshrl.u32 %v3288, 7
      %v3290 = vsub.s32 0, %v3289
      %v3291 = vrot.slane %v3286, %v3290
      %vm3293 = vcmask 261120
      %v3295 = vsel %vm3293, %v3250, 0
      %v3298 = vsel %vm3293, %v3251, 0
      %v3301 = vsel %vm3293, %v3252, 0
      %v3304 = vsel %vm3293, %v3253, 0
      %v3307 = vsel %vm3293, %v3254, 0
      %v3310 = vsel %vm3293, %v3255, 0
      %v3313 = vsel %vm3293, %v3256, 0
      %v3316 = vsel %vm3293, %v3257, 0
      %v3319 = vsel %vm3293, %v3258, 0
      %v3322 = vsel %vm3293, %v3259, 0
      %v3325 = vsel %vm3293, %v3260, 0
      %v3328 = vsel %vm3293, %v3261, 0
      %v3331 = vsel %vm3293, %v3262, 0
      %v3334 = vsel %vm3293, %v3263, 0
      %v3337 = vsel %vm3293, %v3264, 0
      %v3340 = vsel %vm3293, %v3265, 0
      %v3343 = vsel %vm3293, %v3266, 0
      %v3346 = vsel %vm3293, %v3267, 0
      %v3349 = vsel %vm3293, %v3268, 0
      %v3352 = vsel %vm3293, %v3269, 0
      %v3355 = vsel %vm3293, %v3270, 0
      %v3358 = vsel %vm3293, %v3271, 0
      %v3361 = vsel %vm3293, %v3272, 0
      %v3364 = vsel %vm3293, %v3273, 0
      %v3367 = vsel %vm3293, %v3274, 0
      %v3370 = vsel %vm3293, %v3275, 0
      %v3373 = vsel %vm3293, %v3276, 0
      %v3376 = vsel %vm3293, %v3277, 0
      %v3379 = vsel %vm3293, %v3278, 0
      %v3382 = vsel %vm3293, %v3279, 0
      %v3385 = vsel %vm3293, %v3280, 0
      %v3388 = vsel %vm3293, %v3281, 0
      %3390 = vmatprep.subr.mxu0 0.0
      %3391 = vmatpush1.msra.mxu0 %v3282
      %3392 = vmatprep.subr.mxu0 0.0
      %3393 = vmatpush1.msra.mxu0 %v3283
      %3394 = vmatprep.subr.mxu0 0.0
      %3395 = vmatpush1.msra.mxu0 %v3284
      %3396 = vmatprep.subr.mxu0 0.0
      %3397 = vmatpush1.msra.mxu0 %v3285
      %3398 = vmatprep.subr.mxu0 0.0
      %3399 = vmatpush1.msra.mxu0 0.0
      %3400 = vmatprep.subr.mxu0 0.0
      %3401 = vmatpush1.msra.mxu0 0.0
      %3402 = vmatprep.subr.mxu0 0.0
      %3403 = vmatpush1.msra.mxu0 0.0
      %3404 = vmatprep.subr.mxu0 0.0
      %3405 = vmatpush1.msra.mxu0 0.0
      %3406 = vmatprep.subr.mxu0 0.0
      %3407 = vmatpush1.msra.mxu0 0.0
      %3408 = vmatprep.subr.mxu0 0.0
      %3409 = vmatpush1.msra.mxu0 0.0
      %3410 = vmatprep.subr.mxu0 0.0
      %3411 = vmatpush1.msra.mxu0 0.0
      %3412 = vmatprep.subr.mxu0 0.0
      %3413 = vmatpush1.msra.mxu0 0.0
      %3414 = vmatprep.subr.mxu0 0.0
      %3415 = vmatpush1.msra.mxu0 0.0
      %3416 = vmatprep.subr.mxu0 0.0
      %3417 = vmatpush1.msra.mxu0 0.0
      %3418 = vmatprep.subr.mxu0 0.0
      %3419 = vmatpush1.msra.mxu0 0.0
      %3420 = vmatprep.subr.mxu0 0.0
      %3421 = vmatpush1.msra.mxu0 0.0
      %3422 = vmatprep.subr.mxu0 0.0
      %3423 = vmatpush1.msra.mxu0 0.0
      %3424 = vmatprep.subr.mxu0 0.0
      %3425 = vmatpush1.msra.mxu0 0.0
      %3426 = vmatprep.subr.mxu0 0.0
      %3427 = vmatpush1.msra.mxu0 0.0
      %3428 = vmatprep.subr.mxu0 0.0
      %3429 = vmatpush1.msra.mxu0 0.0
      %3430 = vmatprep.subr.mxu0 0.0
      %3431 = vmatpush1.msra.mxu0 0.0
      %3432 = vmatprep.subr.mxu0 0.0
      %3433 = vmatpush1.msra.mxu0 0.0
      %3434 = vmatprep.subr.mxu0 0.0
      %3435 = vmatpush1.msra.mxu0 0.0
      %3436 = vmatprep.subr.mxu0 0.0
      %3437 = vmatpush1.msra.mxu0 0.0
      %3438 = vmatprep.subr.mxu0 0.0
      %3439 = vmatpush1.msra.mxu0 0.0
      %3440 = vmatprep.subr.mxu0 0.0
      %3441 = vmatpush1.msra.mxu0 0.0
      %3442 = vmatprep.subr.mxu0 0.0
      %3443 = vmatpush1.msra.mxu0 0.0
      %3444 = vmatprep.subr.mxu0 0.0
      %3445 = vmatpush1.msra.mxu0 0.0
      %3446 = vmatprep.subr.mxu0 0.0
      %3447 = vmatpush1.msra.mxu0 0.0
      %3448 = vmatprep.subr.mxu0 0.0
      %3449 = vmatpush1.msra.mxu0 0.0
      %3450 = vmatprep.subr.mxu0 0.0
      %3451 = vmatpush1.msra.mxu0 0.0
      %3452 = vmatprep.subr.mxu0 0.0
      %3453 = vmatpush1.msra.mxu0 0.0
      %3454 = vmatprep.mubr.f32.mxu0 0.0
      %3455 = vmatmul.mubr.f32.gmra.mrb[0].mxu0 %v3295
      %v3456 = vpop.f32.mrb[0].mxu0
      %v3457 = vadd.f32 %v3291, %v3456
      %v3458 = vpop.f32.mrb[0].mxu0
      %3459 = vmatprep.mubr.f32.mxu0 0.0
      %3460 = vmatmul.mubr.f32.gmra.mrb[0].mxu0 %v3298
      %v3461 = vpop.f32.mrb[0].mxu0
      %v3462 = vadd.f32 %v3291, %v3461
      %v3463 = vpop.f32.mrb[0].mxu0
      %3464 = vmatprep.mubr.f32.mxu0 0.0
      %3465 = vmatmul.mubr.f32.gmra.mrb[0].mxu0 %v3301
      %v3466 = vpop.f32.mrb[0].mxu0
      %v3467 = vadd.f32 %v3291, %v3466
      %v3468 = vpop.f32.mrb[0].mxu0
      %3469 = vmatprep.mubr.f32.mxu0 0.0
      %3470 = vmatmul.mubr.f32.gmra.mrb[0].mxu0 %v3304
      %v3471 = vpop.f32.mrb[0].mxu0
      %v3472 = vadd.f32 %v3291, %v3471
      %v3473 = vpop.f32.mrb[0].mxu0
      %3474 = vmatprep.mubr.f32.mxu0 0.0
      %3475 = vmatmul.mubr.f32.gmra.mrb[0].mxu0 %v3307
      %v3476 = vpop.f32.mrb[0].mxu0
      %v3477 = vadd.f32 %v3291, %v3476
      %v3478 = vpop.f32.mrb[0].mxu0
      %3479 = vmatprep.mubr.f32.mxu0 0.0
      %3480 = vmatmul.mubr.f32.gmra.mrb[0].mxu0 %v3310
      %v3481 = vpop.f32.mrb[0].mxu0
      %v3482 = vadd.f32 %v3291, %v3481
      %v3483 = vpop.f32.mrb[0].mxu0
      %3484 = vmatprep.mubr.f32.mxu0 0.0
      %3485 = vmatmul.mubr.f32.gmra.mrb[0].mxu0 %v3313
      %v3486 = vpop.f32.mrb[0].mxu0
      %v3487 = vadd.f32 %v3291, %v3486
      %v3488 = vpop.f32.mrb[0].mxu0
      %3489 = vmatprep.mubr.f32.mxu0 0.0
      %3490 = vmatmul.mubr.f32.gmra.mrb[0].mxu0 %v3316
      %v3491 = vpop.f32.mrb[0].mxu0
      %v3492 = vadd.f32 %v3291, %v3491
      %v3493 = vpop.f32.mrb[0].mxu0
      %3494 = vmatprep.mubr.f32.mxu0 0.0
      %3495 = vmatmul.mubr.f32.gmra.mrb[0].mxu0 %v3319
      %v3496 = vpop.f32.mrb[0].mxu0
      %v3497 = vadd.f32 %v3291, %v3496
      %v3498 = vpop.f32.mrb[0].mxu0
      %3499 = vmatprep.mubr.f32.mxu0 0.0
      %3500 = vmatmul.mubr.f32.gmra.mrb[0].mxu0 %v3322
      %v3501 = vpop.f32.mrb[0].mxu0
      %v3502 = vadd.f32 %v3291, %v3501
      %v3503 = vpop.f32.mrb[0].mxu0
      %3504 = vmatprep.mubr.f32.mxu0 0.0
      %3505 = vmatmul.mubr.f32.gmra.mrb[0].mxu0 %v3325
      %v3506 = vpop.f32.mrb[0].mxu0
      %v3507 = vadd.f32 %v3291, %v3506
      %v3508 = vpop.f32.mrb[0].mxu0
      %3509 = vmatprep.mubr.f32.mxu0 0.0
      %3510 = vmatmul.mubr.f32.gmra.mrb[0].mxu0 %v3328
      %v3511 = vpop.f32.mrb[0].mxu0
      %v3512 = vadd.f32 %v3291, %v3511
      %v3513 = vpop.f32.mrb[0].mxu0
      %3514 = vmatprep.mubr.f32.mxu0 0.0
      %3515 = vmatmul.mubr.f32.gmra.mrb[0].mxu0 %v3331
      %v3516 = vpop.f32.mrb[0].mxu0
      %v3517 = vadd.f32 %v3291, %v3516
      %v3518 = vpop.f32.mrb[0].mxu0
      %3519 = vmatprep.mubr.f32.mxu0 0.0
      %3520 = vmatmul.mubr.f32.gmra.mrb[0].mxu0 %v3334
      %v3521 = vpop.f32.mrb[0].mxu0
      %v3522 = vadd.f32 %v3291, %v3521
      %v3523 = vpop.f32.mrb[0].mxu0
      %3524 = vmatprep.mubr.f32.mxu0 0.0
      %3525 = vmatmul.mubr.f32.gmra.mrb[0].mxu0 %v3337
      %v3526 = vpop.f32.mrb[0].mxu0
      %v3527 = vadd.f32 %v3291, %v3526
      %v3528 = vpop.f32.mrb[0].mxu0
      %3529 = vmatprep.mubr.f32.mxu0 0.0
      %3530 = vmatmul.mubr.f32.gmra.mrb[0].mxu0 %v3340
      %v3531 = vpop.f32.mrb[0].mxu0
      %v3532 = vadd.f32 %v3291, %v3531
      %v3533 = vpop.f32.mrb[0].mxu0
      %3534 = vmatprep.mubr.f32.mxu0 0.0
      %3535 = vmatmul.mubr.f32.gmra.mrb[0].mxu0 %v3343
      %v3536 = vpop.f32.mrb[0].mxu0
      %v3537 = vadd.f32 %v3291, %v3536
      %v3538 = vpop.f32.mrb[0].mxu0
      %3539 = vmatprep.mubr.f32.mxu0 0.0
      %3540 = vmatmul.mubr.f32.gmra.mrb[0].mxu0 %v3346
      %v3541 = vpop.f32.mrb[0].mxu0
      %v3542 = vadd.f32 %v3291, %v3541
      %v3543 = vpop.f32.mrb[0].mxu0
      %3544 = vmatprep.mubr.f32.mxu0 0.0
      %3545 = vmatmul.mubr.f32.gmra.mrb[0].mxu0 %v3349
      %v3546 = vpop.f32.mrb[0].mxu0
      %v3547 = vadd.f32 %v3291, %v3546
      %v3548 = vpop.f32.mrb[0].mxu0
      %3549 = vmatprep.mubr.f32.mxu0 0.0
      %3550 = vmatmul.mubr.f32.gmra.mrb[0].mxu0 %v3352
      %v3551 = vpop.f32.mrb[0].mxu0
      %v3552 = vadd.f32 %v3291, %v3551
      %v3553 = vpop.f32.mrb[0].mxu0
      %3554 = vmatprep.mubr.f32.mxu0 0.0
      %3555 = vmatmul.mubr.f32.gmra.mrb[0].mxu0 %v3355
      %v3556 = vpop.f32.mrb[0].mxu0
      %v3557 = vadd.f32 %v3291, %v3556
      %v3558 = vpop.f32.mrb[0].mxu0
      %3559 = vmatprep.mubr.f32.mxu0 0.0
      %3560 = vmatmul.mubr.f32.gmra.mrb[0].mxu0 %v3358
      %v3561 = vpop.f32.mrb[0].mxu0
      %v3562 = vadd.f32 %v3291, %v3561
      %v3563 = vpop.f32.mrb[0].mxu0
      %3564 = vmatprep.mubr.f32.mxu0 0.0
      %3565 = vmatmul.mubr.f32.gmra.mrb[0].mxu0 %v3361
      %v3566 = vpop.f32.mrb[0].mxu0
      %v3567 = vadd.f32 %v3291, %v3566
      %v3568 = vpop.f32.mrb[0].mxu0
      %3569 = vmatprep.mubr.f32.mxu0 0.0
      %3570 = vmatmul.mubr.f32.gmra.mrb[0].mxu0 %v3364
      %v3571 = vpop.f32.mrb[0].mxu0
      %v3572 = vadd.f32 %v3291, %v3571
      %v3573 = vpop.f32.mrb[0].mxu0
      %3574 = vmatprep.mubr.f32.mxu0 0.0
      %3575 = vmatmul.mubr.f32.gmra.mrb[0].mxu0 %v3367
      %v3576 = vpop.f32.mrb[0].mxu0
      %v3577 = vadd.f32 %v3291, %v3576
      %v3578 = vpop.f32.mrb[0].mxu0
      %3579 = vmatprep.mubr.f32.mxu0 0.0
      %3580 = vmatmul.mubr.f32.gmra.mrb[0].mxu0 %v3370
      %v3581 = vpop.f32.mrb[0].mxu0
      %v3582 = vadd.f32 %v3291, %v3581
      %v3583 = vpop.f32.mrb[0].mxu0
      %3584 = vmatprep.mubr.f32.mxu0 0.0
      %3585 = vmatmul.mubr.f32.gmra.mrb[0].mxu0 %v3373
      %v3586 = vpop.f32.mrb[0].mxu0
      %v3587 = vadd.f32 %v3291, %v3586
      %v3588 = vpop.f32.mrb[0].mxu0
      %3589 = vmatprep.mubr.f32.mxu0 0.0
      %3590 = vmatmul.mubr.f32.gmra.mrb[0].mxu0 %v3376
      %v3591 = vpop.f32.mrb[0].mxu0
      %v3592 = vadd.f32 %v3291, %v3591
      %v3593 = vpop.f32.mrb[0].mxu0
      %3594 = vmatprep.mubr.f32.mxu0 0.0
      %3595 = vmatmul.mubr.f32.gmra.mrb[0].mxu0 %v3379
      %v3596 = vpop.f32.mrb[0].mxu0
      %v3597 = vadd.f32 %v3291, %v3596
      %v3598 = vpop.f32.mrb[0].mxu0
      %3599 = vmatprep.mubr.f32.mxu0 0.0
      %3600 = vmatmul.mubr.f32.gmra.mrb[0].mxu0 %v3382
      %v3601 = vpop.f32.mrb[0].mxu0
      %v3602 = vadd.f32 %v3291, %v3601
      %v3603 = vpop.f32.mrb[0].mxu0
      %3604 = vmatprep.mubr.f32.mxu0 0.0
      %3605 = vmatmul.mubr.f32.gmra.mrb[0].mxu0 %v3385
      %v3606 = vpop.f32.mrb[0].mxu0
      %v3607 = vadd.f32 %v3291, %v3606
      %v3608 = vpop.f32.mrb[0].mxu0
      %3609 = vmatprep.mubr.f32.mxu0 0.0
      %3610 = vmatmul.mubr.f32.gmra.mrb[0].mxu0 %v3388
      %v3611 = vpop.f32.mrb[0].mxu0
      %v3612 = vadd.f32 %v3291, %v3611
      %v3613 = vpop.f32.mrb[0].mxu0
      %3614 = vdwg.mxu0
      %v3615 = vld [vmem:[%s5] sm:$0xff]
      %v3616 = vld [vmem:[%s5 + $0x8] sm:$0xff]
      %v3617 = vld [vmem:[%s5 + $0x10] sm:$0xff]
      %v3618 = vld [vmem:[%s5 + $0x18] sm:$0xff]
      %v3619 = vld [vmem:[%s6] sm:$0x1]
      %v3621 = vlaneseq
      %v3622 = vshrl.u32 %v3621, 7
      %v3623 = vsub.s32 0, %v3622
      %v3624 = vrot.slane %v3619, %v3623
      %3658 = vrot.lane.b32.xlu0 %v3218, 96
      %v3659 = vpop.permute.xlu0 %3658
      %3660 = vrot.lane.b32.xlu0 %v3219, 96
      %v3661 = vpop.permute.xlu0 %3660
      %3662 = vrot.lane.b32.xlu0 %v3220, 96
      %v3663 = vpop.permute.xlu0 %3662
      %3664 = vrot.lane.b32.xlu0 %v3221, 96
      %v3665 = vpop.permute.xlu0 %3664
      %3666 = vrot.lane.b32.xlu0 %v3222, 96
      %v3667 = vpop.permute.xlu0 %3666
      %3668 = vrot.lane.b32.xlu0 %v3223, 96
      %v3669 = vpop.permute.xlu0 %3668
      %3670 = vrot.lane.b32.xlu0 %v3224, 96
      %v3671 = vpop.permute.xlu0 %3670
      %3672 = vrot.lane.b32.xlu0 %v3225, 96
      %v3673 = vpop.permute.xlu0 %3672
      %3674 = vrot.lane.b32.xlu0 %v3226, 96
      %v3675 = vpop.permute.xlu0 %3674
      %3676 = vrot.lane.b32.xlu0 %v3227, 96
      %v3677 = vpop.permute.xlu0 %3676
      %3678 = vrot.lane.b32.xlu0 %v3228, 96
      %v3679 = vpop.permute.xlu0 %3678
      %3680 = vrot.lane.b32.xlu0 %v3229, 96
      %v3681 = vpop.permute.xlu0 %3680
      %3682 = vrot.lane.b32.xlu0 %v3230, 96
      %v3683 = vpop.permute.xlu0 %3682
      %3684 = vrot.lane.b32.xlu0 %v3231, 96
      %v3685 = vpop.permute.xlu0 %3684
      %3686 = vrot.lane.b32.xlu0 %v3232, 96
      %v3687 = vpop.permute.xlu0 %3686
      %3688 = vrot.lane.b32.xlu0 %v3233, 96
      %v3689 = vpop.permute.xlu0 %3688
      %3690 = vrot.lane.b32.xlu0 %v3234, 96
      %v3691 = vpop.permute.xlu0 %3690
      %3692 = vrot.lane.b32.xlu0 %v3235, 96
      %v3693 = vpop.permute.xlu0 %3692
      %3694 = vrot.lane.b32.xlu0 %v3236, 96
      %v3695 = vpop.permute.xlu0 %3694
      %3696 = vrot.lane.b32.xlu0 %v3237, 96
      %v3697 = vpop.permute.xlu0 %3696
      %3698 = vrot.lane.b32.xlu0 %v3238, 96
      %v3699 = vpop.permute.xlu0 %3698
      %3700 = vrot.lane.b32.xlu0 %v3239, 96
      %v3701 = vpop.permute.xlu0 %3700
      %3702 = vrot.lane.b32.xlu0 %v3240, 96
      %v3703 = vpop.permute.xlu0 %3702
      %3704 = vrot.lane.b32.xlu0 %v3241, 96
      %v3705 = vpop.permute.xlu0 %3704
      %3706 = vrot.lane.b32.xlu0 %v3242, 96
      %v3707 = vpop.permute.xlu0 %3706
      %3708 = vrot.lane.b32.xlu0 %v3243, 96
      %v3709 = vpop.permute.xlu0 %3708
      %3710 = vrot.lane.b32.xlu0 %v3244, 96
      %v3711 = vpop.permute.xlu0 %3710
      %3712 = vrot.lane.b32.xlu0 %v3245, 96
      %v3713 = vpop.permute.xlu0 %3712
      %3714 = vrot.lane.b32.xlu0 %v3246, 96
      %v3715 = vpop.permute.xlu0 %3714
      %3716 = vrot.lane.b32.xlu0 %v3247, 96
      %v3717 = vpop.permute.xlu0 %3716
      %3718 = vrot.lane.b32.xlu0 %v3248, 96
      %v3719 = vpop.permute.xlu0 %3718
      %3720 = vrot.lane.b32.xlu0 %v3249, 96
      %v3721 = vpop.permute.xlu0 %3720
      %v3722 = vsel %vm3293, %v3659, 0
      %v3724 = vsel %vm3293, %v3661, 0
      %v3726 = vsel %vm3293, %v3663, 0
      %v3728 = vsel %vm3293, %v3665, 0
      %v3730 = vsel %vm3293, %v3667, 0
      %v3732 = vsel %vm3293, %v3669, 0
      %v3734 = vsel %vm3293, %v3671, 0
      %v3736 = vsel %vm3293, %v3673, 0
      %v3738 = vsel %vm3293, %v3675, 0
      %v3740 = vsel %vm3293, %v3677, 0
      %v3742 = vsel %vm3293, %v3679, 0
      %v3744 = vsel %vm3293, %v3681, 0
      %v3746 = vsel %vm3293, %v3683, 0
      %v3748 = vsel %vm3293, %v3685, 0
      %v3750 = vsel %vm3293, %v3687, 0
      %v3752 = vsel %vm3293, %v3689, 0
      %v3754 = vsel %vm3293, %v3691, 0
      %v3756 = vsel %vm3293, %v3693, 0
      %v3758 = vsel %vm3293, %v3695, 0
      %v3760 = vsel %vm3293, %v3697, 0
      %v3762 = vsel %vm3293, %v3699, 0
      %v3764 = vsel %vm3293, %v3701, 0
      %v3766 = vsel %vm3293, %v3703, 0
      %v3768 = vsel %vm3293, %v3705, 0
      %v3770 = vsel %vm3293, %v3707, 0
      %v3772 = vsel %vm3293, %v3709, 0
      %v3774 = vsel %vm3293, %v3711, 0
      %v3776 = vsel %vm3293, %v3713, 0
      %v3778 = vsel %vm3293, %v3715, 0
      %v3780 = vsel %vm3293, %v3717, 0
      %v3782 = vsel %vm3293, %v3719, 0
      %v3784 = vsel %vm3293, %v3721, 0
      %3786 = vmatprep.subr.mxu0 0.0
      %3787 = vmatpush1.msra.mxu0 %v3615
      %3788 = vmatprep.subr.mxu0 0.0
      %3789 = vmatpush1.msra.mxu0 %v3616
      %3790 = vmatprep.subr.mxu0 0.0
      %3791 = vmatpush1.msra.mxu0 %v3617
      %3792 = vmatprep.subr.mxu0 0.0
      %3793 = vmatpush1.msra.mxu0 %v3618
      %3794 = vmatprep.subr.mxu0 0.0
      %3795 = vmatpush1.msra.mxu0 0.0
      %3796 = vmatprep.subr.mxu0 0.0
      %3797 = vmatpush1.msra.mxu0 0.0
      %3798 = vmatprep.subr.mxu0 0.0
      %3799 = vmatpush1.msra.mxu0 0.0
      %3800 = vmatprep.subr.mxu0 0.0
      %3801 = vmatpush1.msra.mxu0 0.0
      %3802 = vmatprep.subr.mxu0 0.0
      %3803 = vmatpush1.msra.mxu0 0.0
      %3804 = vmatprep.subr.mxu0 0.0
      %3805 = vmatpush1.msra.mxu0 0.0
      %3806 = vmatprep.subr.mxu0 0.0
      %3807 = vmatpush1.msra.mxu0 0.0
      %3808 = vmatprep.subr.mxu0 0.0
      %3809 = vmatpush1.msra.mxu0 0.0
      %3810 = vmatprep.subr.mxu0 0.0
      %3811 = vmatpush1.msra.mxu0 0.0
      %3812 = vmatprep.subr.mxu0 0.0
      %3813 = vmatpush1.msra.mxu0 0.0
      %3814 = vmatprep.subr.mxu0 0.0
      %3815 = vmatpush1.msra.mxu0 0.0
      %3816 = vmatprep.subr.mxu0 0.0
      %3817 = vmatpush1.msra.mxu0 0.0
      %3818 = vmatprep.subr.mxu0 0.0
      %3819 = vmatpush1.msra.mxu0 0.0
      %3820 = vmatprep.subr.mxu0 0.0
      %3821 = vmatpush1.msra.mxu0 0.0
      %3822 = vmatprep.subr.mxu0 0.0
      %3823 = vmatpush1.msra.mxu0 0.0
      %3824 = vmatprep.subr.mxu0 0.0
      %3825 = vmatpush1.msra.mxu0 0.0
      %3826 = vmatprep.subr.mxu0 0.0
      %3827 = vmatpush1.msra.mxu0 0.0
      %3828 = vmatprep.subr.mxu0 0.0
      %3829 = vmatpush1.msra.mxu0 0.0
      %3830 = vmatprep.subr.mxu0 0.0
      %3831 = vmatpush1.msra.mxu0 0.0
      %3832 = vmatprep.subr.mxu0 0.0
      %3833 = vmatpush1.msra.mxu0 0.0
      %3834 = vmatprep.subr.mxu0 0.0
      %3835 = vmatpush1.msra.mxu0 0.0
      %3836 = vmatprep.subr.mxu0 0.0
      %3837 = vmatpush1.msra.mxu0 0.0
      %3838 = vmatprep.subr.mxu0 0.0
      %3839 = vmatpush1.msra.mxu0 0.0
      %3840 = vmatprep.subr.mxu0 0.0
      %3841 = vmatpush1.msra.mxu0 0.0
      %3842 = vmatprep.subr.mxu0 0.0
      %3843 = vmatpush1.msra.mxu0 0.0
      %3844 = vmatprep.subr.mxu0 0.0
      %3845 = vmatpush1.msra.mxu0 0.0
      %3846 = vmatprep.subr.mxu0 0.0
      %3847 = vmatpush1.msra.mxu0 0.0
      %3848 = vmatprep.subr.mxu0 0.0
      %3849 = vmatpush1.msra.mxu0 0.0
      %3850 = vmatprep.mubr.f32.mxu0 0.0
      %3851 = vmatmul.mubr.f32.gmra.mrb[0].mxu0 %v3722
      %v3852 = vpop.f32.mrb[0].mxu0
      %v3853 = vadd.f32 %v3624, %v3852
      %v3854 = vpop.f32.mrb[0].mxu0
      %3855 = vmatprep.mubr.f32.mxu0 0.0
      %3856 = vmatmul.mubr.f32.gmra.mrb[0].mxu0 %v3724
      %v3857 = vpop.f32.mrb[0].mxu0
      %v3858 = vadd.f32 %v3624, %v3857
      %v3859 = vpop.f32.mrb[0].mxu0
      %3860 = vmatprep.mubr.f32.mxu0 0.0
      %3861 = vmatmul.mubr.f32.gmra.mrb[0].mxu0 %v3726
      %v3862 = vpop.f32.mrb[0].mxu0
      %v3863 = vadd.f32 %v3624, %v3862
      %v3864 = vpop.f32.mrb[0].mxu0
      %3865 = vmatprep.mubr.f32.mxu0 0.0
      %3866 = vmatmul.mubr.f32.gmra.mrb[0].mxu0 %v3728
      %v3867 = vpop.f32.mrb[0].mxu0
      %v3868 = vadd.f32 %v3624, %v3867
      %v3869 = vpop.f32.mrb[0].mxu0
      %3870 = vmatprep.mubr.f32.mxu0 0.0
      %3871 = vmatmul.mubr.f32.gmra.mrb[0].mxu0 %v3730
      %v3872 = vpop.f32.mrb[0].mxu0
      %v3873 = vadd.f32 %v3624, %v3872
      %v3874 = vpop.f32.mrb[0].mxu0
      %3875 = vmatprep.mubr.f32.mxu0 0.0
      %3876 = vmatmul.mubr.f32.gmra.mrb[0].mxu0 %v3732
      %v3877 = vpop.f32.mrb[0].mxu0
      %v3878 = vadd.f32 %v3624, %v3877
      %v3879 = vpop.f32.mrb[0].mxu0
      %3880 = vmatprep.mubr.f32.mxu0 0.0
      %3881 = vmatmul.mubr.f32.gmra.mrb[0].mxu0 %v3734
      %v3882 = vpop.f32.mrb[0].mxu0
      %v3883 = vadd.f32 %v3624, %v3882
      %v3884 = vpop.f32.mrb[0].mxu0
      %3885 = vmatprep.mubr.f32.mxu0 0.0
      %3886 = vmatmul.mubr.f32.gmra.mrb[0].mxu0 %v3736
      %v3887 = vpop.f32.mrb[0].mxu0
      %v3888 = vadd.f32 %v3624, %v3887
      %v3889 = vpop.f32.mrb[0].mxu0
      %3890 = vmatprep.mubr.f32.mxu0 0.0
      %3891 = vmatmul.mubr.f32.gmra.mrb[0].mxu0 %v3738
      %v3892 = vpop.f32.mrb[0].mxu0
      %v3893 = vadd.f32 %v3624, %v3892
      %v3894 = vpop.f32.mrb[0].mxu0
      %3895 = vmatprep.mubr.f32.mxu0 0.0
      %3896 = vmatmul.mubr.f32.gmra.mrb[0].mxu0 %v3740
      %v3897 = vpop.f32.mrb[0].mxu0
      %v3898 = vadd.f32 %v3624, %v3897
      %v3899 = vpop.f32.mrb[0].mxu0
      %3900 = vmatprep.mubr.f32.mxu0 0.0
      %3901 = vmatmul.mubr.f32.gmra.mrb[0].mxu0 %v3742
      %v3902 = vpop.f32.mrb[0].mxu0
      %v3903 = vadd.f32 %v3624, %v3902
      %v3904 = vpop.f32.mrb[0].mxu0
      %3905 = vmatprep.mubr.f32.mxu0 0.0
      %3906 = vmatmul.mubr.f32.gmra.mrb[0].mxu0 %v3744
      %v3907 = vpop.f32.mrb[0].mxu0
      %v3908 = vadd.f32 %v3624, %v3907
      %v3909 = vpop.f32.mrb[0].mxu0
      %3910 = vmatprep.mubr.f32.mxu0 0.0
      %3911 = vmatmul.mubr.f32.gmra.mrb[0].mxu0 %v3746
      %v3912 = vpop.f32.mrb[0].mxu0
      %v3913 = vadd.f32 %v3624, %v3912
      %v3914 = vpop.f32.mrb[0].mxu0
      %3915 = vmatprep.mubr.f32.mxu0 0.0
      %3916 = vmatmul.mubr.f32.gmra.mrb[0].mxu0 %v3748
      %v3917 = vpop.f32.mrb[0].mxu0
      %v3918 = vadd.f32 %v3624, %v3917
      %v3919 = vpop.f32.mrb[0].mxu0
      %3920 = vmatprep.mubr.f32.mxu0 0.0
      %3921 = vmatmul.mubr.f32.gmra.mrb[0].mxu0 %v3750
      %v3922 = vpop.f32.mrb[0].mxu0
      %v3923 = vadd.f32 %v3624, %v3922
      %v3924 = vpop.f32.mrb[0].mxu0
      %3925 = vmatprep.mubr.f32.mxu0 0.0
      %3926 = vmatmul.mubr.f32.gmra.mrb[0].mxu0 %v3752
      %v3927 = vpop.f32.mrb[0].mxu0
      %v3928 = vadd.f32 %v3624, %v3927
      %v3929 = vpop.f32.mrb[0].mxu0
      %3930 = vmatprep.mubr.f32.mxu0 0.0
      %3931 = vmatmul.mubr.f32.gmra.mrb[0].mxu0 %v3754
      %v3932 = vpop.f32.mrb[0].mxu0
      %v3933 = vadd.f32 %v3624, %v3932
      %v3934 = vpop.f32.mrb[0].mxu0
      %3935 = vmatprep.mubr.f32.mxu0 0.0
      %3936 = vmatmul.mubr.f32.gmra.mrb[0].mxu0 %v3756
      %v3937 = vpop.f32.mrb[0].mxu0
      %v3938 = vadd.f32 %v3624, %v3937
      %v3939 = vpop.f32.mrb[0].mxu0
      %3940 = vmatprep.mubr.f32.mxu0 0.0
      %3941 = vmatmul.mubr.f32.gmra.mrb[0].mxu0 %v3758
      %v3942 = vpop.f32.mrb[0].mxu0
      %v3943 = vadd.f32 %v3624, %v3942
      %v3944 = vpop.f32.mrb[0].mxu0
      %3945 = vmatprep.mubr.f32.mxu0 0.0
      %3946 = vmatmul.mubr.f32.gmra.mrb[0].mxu0 %v3760
      %v3947 = vpop.f32.mrb[0].mxu0
      %v3948 = vadd.f32 %v3624, %v3947
      %v3949 = vpop.f32.mrb[0].mxu0
      %3950 = vmatprep.mubr.f32.mxu0 0.0
      %3951 = vmatmul.mubr.f32.gmra.mrb[0].mxu0 %v3762
      %v3952 = vpop.f32.mrb[0].mxu0
      %v3953 = vadd.f32 %v3624, %v3952
      %v3954 = vpop.f32.mrb[0].mxu0
      %3955 = vmatprep.mubr.f32.mxu0 0.0
      %3956 = vmatmul.mubr.f32.gmra.mrb[0].mxu0 %v3764
      %v3957 = vpop.f32.mrb[0].mxu0
      %v3958 = vadd.f32 %v3624, %v3957
      %v3959 = vpop.f32.mrb[0].mxu0
      %3960 = vmatprep.mubr.f32.mxu0 0.0
      %3961 = vmatmul.mubr.f32.gmra.mrb[0].mxu0 %v3766
      %v3962 = vpop.f32.mrb[0].mxu0
      %v3963 = vadd.f32 %v3624, %v3962
      %v3964 = vpop.f32.mrb[0].mxu0
      %3965 = vmatprep.mubr.f32.mxu0 0.0
      %3966 = vmatmul.mubr.f32.gmra.mrb[0].mxu0 %v3768
      %v3967 = vpop.f32.mrb[0].mxu0
      %v3968 = vadd.f32 %v3624, %v3967
      %v3969 = vpop.f32.mrb[0].mxu0
      %3970 = vmatprep.mubr.f32.mxu0 0.0
      %3971 = vmatmul.mubr.f32.gmra.mrb[0].mxu0 %v3770
      %v3972 = vpop.f32.mrb[0].mxu0
      %v3973 = vadd.f32 %v3624, %v3972
      %v3974 = vpop.f32.mrb[0].mxu0
      %3975 = vmatprep.mubr.f32.mxu0 0.0
      %3976 = vmatmul.mubr.f32.gmra.mrb[0].mxu0 %v3772
      %v3977 = vpop.f32.mrb[0].mxu0
      %v3978 = vadd.f32 %v3624, %v3977
      %v3979 = vpop.f32.mrb[0].mxu0
      %3980 = vmatprep.mubr.f32.mxu0 0.0
      %3981 = vmatmul.mubr.f32.gmra.mrb[0].mxu0 %v3774
      %v3982 = vpop.f32.mrb[0].mxu0
      %v3983 = vadd.f32 %v3624, %v3982
      %v3984 = vpop.f32.mrb[0].mxu0
      %3985 = vmatprep.mubr.f32.mxu0 0.0
      %3986 = vmatmul.mubr.f32.gmra.mrb[0].mxu0 %v3776
      %v3987 = vpop.f32.mrb[0].mxu0
      %v3988 = vadd.f32 %v3624, %v3987
      %v3989 = vpop.f32.mrb[0].mxu0
      %3990 = vmatprep.mubr.f32.mxu0 0.0
      %3991 = vmatmul.mubr.f32.gmra.mrb[0].mxu0 %v3778
      %v3992 = vpop.f32.mrb[0].mxu0
      %v3993 = vadd.f32 %v3624, %v3992
      %v3994 = vpop.f32.mrb[0].mxu0
      %3995 = vmatprep.mubr.f32.mxu0 0.0
      %3996 = vmatmul.mubr.f32.gmra.mrb[0].mxu0 %v3780
      %v3997 = vpop.f32.mrb[0].mxu0
      %v3998 = vadd.f32 %v3624, %v3997
      %v3999 = vpop.f32.mrb[0].mxu0
      %4000 = vmatprep.mubr.f32.mxu0 0.0
      %4001 = vmatmul.mubr.f32.gmra.mrb[0].mxu0 %v3782
      %v4002 = vpop.f32.mrb[0].mxu0
      %v4003 = vadd.f32 %v3624, %v4002
      %v4004 = vpop.f32.mrb[0].mxu0
      %4005 = vmatprep.mubr.f32.mxu0 0.0
      %4006 = vmatmul.mubr.f32.gmra.mrb[0].mxu0 %v3784
      %v4007 = vpop.f32.mrb[0].mxu0
      %v4008 = vadd.f32 %v3624, %v4007
      %v4009 = vpop.f32.mrb[0].mxu0
      %4010 = vdwg.mxu0
      %4043 = vrot.lane.b32.xlu0 %v3457, 32
      %v4044 = vpop.permute.xlu0 %4043
      %4045 = vrot.lane.b32.xlu0 %v3462, 32
      %v4046 = vpop.permute.xlu0 %4045
      %4047 = vrot.lane.b32.xlu0 %v3467, 32
      %v4048 = vpop.permute.xlu0 %4047
      %4049 = vrot.lane.b32.xlu0 %v3472, 32
      %v4050 = vpop.permute.xlu0 %4049
      %4051 = vrot.lane.b32.xlu0 %v3477, 32
      %v4052 = vpop.permute.xlu0 %4051
      %4053 = vrot.lane.b32.xlu0 %v3482, 32
      %v4054 = vpop.permute.xlu0 %4053
      %4055 = vrot.lane.b32.xlu0 %v3487, 32
      %v4056 = vpop.permute.xlu0 %4055
      %4057 = vrot.lane.b32.xlu0 %v3492, 32
      %v4058 = vpop.permute.xlu0 %4057
      %4059 = vrot.lane.b32.xlu0 %v3497, 32
      %v4060 = vpop.permute.xlu0 %4059
      %4061 = vrot.lane.b32.xlu0 %v3502, 32
      %v4062 = vpop.permute.xlu0 %4061
      %4063 = vrot.lane.b32.xlu0 %v3507, 32
      %v4064 = vpop.permute.xlu0 %4063
      %4065 = vrot.lane.b32.xlu0 %v3512, 32
      %v4066 = vpop.permute.xlu0 %4065
      %4067 = vrot.lane.b32.xlu0 %v3517, 32
      %v4068 = vpop.permute.xlu0 %4067
      %4069 = vrot.lane.b32.xlu0 %v3522, 32
      %v4070 = vpop.permute.xlu0 %4069
      %4071 = vrot.lane.b32.xlu0 %v3527, 32
      %v4072 = vpop.permute.xlu0 %4071
      %4073 = vrot.lane.b32.xlu0 %v3532, 32
      %v4074 = vpop.permute.xlu0 %4073
      %4075 = vrot.lane.b32.xlu0 %v3537, 32
      %v4076 = vpop.permute.xlu0 %4075
      %4077 = vrot.lane.b32.xlu0 %v3542, 32
      %v4078 = vpop.permute.xlu0 %4077
      %4079 = vrot.lane.b32.xlu0 %v3547, 32
      %v4080 = vpop.permute.xlu0 %4079
      %4081 = vrot.lane.b32.xlu0 %v3552, 32
      %v4082 = vpop.permute.xlu0 %4081
      %4083 = vrot.lane.b32.xlu0 %v3557, 32
      %v4084 = vpop.permute.xlu0 %4083
      %4085 = vrot.lane.b32.xlu0 %v3562, 32
      %v4086 = vpop.permute.xlu0 %4085
      %4087 = vrot.lane.b32.xlu0 %v3567, 32
      %v4088 = vpop.permute.xlu0 %4087
      %4089 = vrot.lane.b32.xlu0 %v3572, 32
      %v4090 = vpop.permute.xlu0 %4089
      %4091 = vrot.lane.b32.xlu0 %v3577, 32
      %v4092 = vpop.permute.xlu0 %4091
      %4093 = vrot.lane.b32.xlu0 %v3582, 32
      %v4094 = vpop.permute.xlu0 %4093
      %4095 = vrot.lane.b32.xlu0 %v3587, 32
      %v4096 = vpop.permute.xlu0 %4095
      %4097 = vrot.lane.b32.xlu0 %v3592, 32
      %v4098 = vpop.permute.xlu0 %4097
      %4099 = vrot.lane.b32.xlu0 %v3597, 32
      %v4100 = vpop.permute.xlu0 %4099
      %4101 = vrot.lane.b32.xlu0 %v3602, 32
      %v4102 = vpop.permute.xlu0 %4101
      %4103 = vrot.lane.b32.xlu0 %v3607, 32
      %v4104 = vpop.permute.xlu0 %4103
      %4105 = vrot.lane.b32.xlu0 %v3612, 32
      %v4106 = vpop.permute.xlu0 %4105
      %v4107 = vsel %vm3293, %v3457, 0
      %v4109 = vsel %vm3293, %v3462, 0
      %v4111 = vsel %vm3293, %v3467, 0
      %v4113 = vsel %vm3293, %v3472, 0
      %v4115 = vsel %vm3293, %v3477, 0
      %v4117 = vsel %vm3293, %v3482, 0
      %v4119 = vsel %vm3293, %v3487, 0
      %v4121 = vsel %vm3293, %v3492, 0
      %v4123 = vsel %vm3293, %v3497, 0
      %v4125 = vsel %vm3293, %v3502, 0
      %v4127 = vsel %vm3293, %v3507, 0
      %v4129 = vsel %vm3293, %v3512, 0
      %v4131 = vsel %vm3293, %v3517, 0
      %v4133 = vsel %vm3293, %v3522, 0
      %v4135 = vsel %vm3293, %v3527, 0
      %v4137 = vsel %vm3293, %v3532, 0
      %v4139 = vsel %vm3293, %v3537, 0
      %v4141 = vsel %vm3293, %v3542, 0
      %v4143 = vsel %vm3293, %v3547, 0
      %v4145 = vsel %vm3293, %v3552, 0
      %v4147 = vsel %vm3293, %v3557, 0
      %v4149 = vsel %vm3293, %v3562, 0
      %v4151 = vsel %vm3293, %v3567, 0
      %v4153 = vsel %vm3293, %v3572, 0
      %v4155 = vsel %vm3293, %v3577, 0
      %v4157 = vsel %vm3293, %v3582, 0
      %v4159 = vsel %vm3293, %v3587, 0
      %v4161 = vsel %vm3293, %v3592, 0
      %v4163 = vsel %vm3293, %v3597, 0
      %v4165 = vsel %vm3293, %v3602, 0
      %v4167 = vsel %vm3293, %v3607, 0
      %v4169 = vsel %vm3293, %v3612, 0
      %v4171 = vsel %vm3293, %v4044, 0
      %v4173 = vsel %vm3293, %v4046, 0
      %v4175 = vsel %vm3293, %v4048, 0
      %v4177 = vsel %vm3293, %v4050, 0
      %v4179 = vsel %vm3293, %v4052, 0
      %v4181 = vsel %vm3293, %v4054, 0
      %v4183 = vsel %vm3293, %v4056, 0
      %v4185 = vsel %vm3293, %v4058, 0
      %v4187 = vsel %vm3293, %v4060, 0
      %v4189 = vsel %vm3293, %v4062, 0
      %v4191 = vsel %vm3293, %v4064, 0
      %v4193 = vsel %vm3293, %v4066, 0
      %v4195 = vsel %vm3293, %v4068, 0
      %v4197 = vsel %vm3293, %v4070, 0
      %v4199 = vsel %vm3293, %v4072, 0
      %v4201 = vsel %vm3293, %v4074, 0
      %v4203 = vsel %vm3293, %v4076, 0
      %v4205 = vsel %vm3293, %v4078, 0
      %v4207 = vsel %vm3293, %v4080, 0
      %v4209 = vsel %vm3293, %v4082, 0
      %v4211 = vsel %vm3293, %v4084, 0
      %v4213 = vsel %vm3293, %v4086, 0
      %v4215 = vsel %vm3293, %v4088, 0
      %v4217 = vsel %vm3293, %v4090, 0
      %v4219 = vsel %vm3293, %v4092, 0
      %v4221 = vsel %vm3293, %v4094, 0
      %v4223 = vsel %vm3293, %v4096, 0
      %v4225 = vsel %vm3293, %v4098, 0
      %v4227 = vsel %vm3293, %v4100, 0
      %v4229 = vsel %vm3293, %v4102, 0
      %v4231 = vsel %vm3293, %v4104, 0
      %v4233 = vsel %vm3293, %v4106, 0
      %4235 = vmatprep.subr.mxu0 0.0
      %4236 = vmatpush1.xpose.msra.mxu0 %v4171
      %4237 = vmatprep.subr.mxu0 0.0
      %4238 = vmatpush1.xpose.msra.mxu0 %v4173
      %4239 = vmatprep.subr.mxu0 0.0
      %4240 = vmatpush1.xpose.msra.mxu0 %v4175
      %4241 = vmatprep.subr.mxu0 0.0
      %4242 = vmatpush1.xpose.msra.mxu0 %v4177
      %4243 = vmatprep.subr.mxu0 0.0
      %4244 = vmatpush1.xpose.msra.mxu0 %v4179
      %4245 = vmatprep.subr.mxu0 0.0
      %4246 = vmatpush1.xpose.msra.mxu0 %v4181
      %4247 = vmatprep.subr.mxu0 0.0
      %4248 = vmatpush1.xpose.msra.mxu0 %v4183
      %4249 = vmatprep.subr.mxu0 0.0
      %4250 = vmatpush1.xpose.msra.mxu0 %v4185
      %4251 = vmatprep.subr.mxu0 0.0
      %4252 = vmatpush1.xpose.msra.mxu0 %v4187
      %4253 = vmatprep.subr.mxu0 0.0
      %4254 = vmatpush1.xpose.msra.mxu0 %v4189
      %4255 = vmatprep.subr.mxu0 0.0
      %4256 = vmatpush1.xpose.msra.mxu0 %v4191
      %4257 = vmatprep.subr.mxu0 0.0
      %4258 = vmatpush1.xpose.msra.mxu0 %v4193
      %4259 = vmatprep.subr.mxu0 0.0
      %4260 = vmatpush1.xpose.msra.mxu0 %v4195
      %4261 = vmatprep.subr.mxu0 0.0
      %4262 = vmatpush1.xpose.msra.mxu0 %v4197
      %4263 = vmatprep.subr.mxu0 0.0
      %4264 = vmatpush1.xpose.msra.mxu0 %v4199
      %4265 = vmatprep.subr.mxu0 0.0
      %4266 = vmatpush1.xpose.msra.mxu0 %v4201
      %4267 = vmatprep.subr.mxu0 0.0
      %4268 = vmatpush1.xpose.msra.mxu0 %v4203
      %4269 = vmatprep.subr.mxu0 0.0
      %4270 = vmatpush1.xpose.msra.mxu0 %v4205
      %4271 = vmatprep.subr.mxu0 0.0
      %4272 = vmatpush1.xpose.msra.mxu0 %v4207
      %4273 = vmatprep.subr.mxu0 0.0
      %4274 = vmatpush1.xpose.msra.mxu0 %v4209
      %4275 = vmatprep.subr.mxu0 0.0
      %4276 = vmatpush1.xpose.msra.mxu0 %v4211
      %4277 = vmatprep.subr.mxu0 0.0
      %4278 = vmatpush1.xpose.msra.mxu0 %v4213
      %4279 = vmatprep.subr.mxu0 0.0
      %4280 = vmatpush1.xpose.msra.mxu0 %v4215
      %4281 = vmatprep.subr.mxu0 0.0
      %4282 = vmatpush1.xpose.msra.mxu0 %v4217
      %4283 = vmatprep.subr.mxu0 0.0
      %4284 = vmatpush1.xpose.msra.mxu0 %v4219
      %4285 = vmatprep.subr.mxu0 0.0
      %4286 = vmatpush1.xpose.msra.mxu0 %v4221
      %4287 = vmatprep.subr.mxu0 0.0
      %4288 = vmatpush1.xpose.msra.mxu0 %v4223
      %4289 = vmatprep.subr.mxu0 0.0
      %4290 = vmatpush1.xpose.msra.mxu0 %v4225
      %4291 = vmatprep.subr.mxu0 0.0
      %4292 = vmatpush1.xpose.msra.mxu0 %v4227
      %4293 = vmatprep.subr.mxu0 0.0
      %4294 = vmatpush1.xpose.msra.mxu0 %v4229
      %4295 = vmatprep.subr.mxu0 0.0
      %4296 = vmatpush1.xpose.msra.mxu0 %v4231
      %4297 = vmatprep.subr.mxu0 0.0
      %4298 = vmatpush1.xpose.msra.mxu0 %v4233
      %4299 = vmatprep.mubr.f32.mxu0 0.0
      %4300 = vmatmul.mubr.f32.gmra.mrb[0].mxu0 %v4107
      %v4301 = vpop.f32.mrb[0].mxu0
      %v4302 = vadd.f32 0.0, %v4301
      %v4303 = vpop.f32.mrb[0].mxu0
      %v4304 = vadd.f32 0.0, %v4303
      %4305 = vmatprep.mubr.f32.mxu0 0.0
      %4306 = vmatmul.mubr.f32.gmra.mrb[0].mxu0 %v4109
      %v4307 = vpop.f32.mrb[0].mxu0
      %v4308 = vadd.f32 0.0, %v4307
      %v4309 = vpop.f32.mrb[0].mxu0
      %v4310 = vadd.f32 0.0, %v4309
      %4311 = vmatprep.mubr.f32.mxu0 0.0
      %4312 = vmatmul.mubr.f32.gmra.mrb[0].mxu0 %v4111
      %v4313 = vpop.f32.mrb[0].mxu0
      %v4314 = vadd.f32 0.0, %v4313
      %v4315 = vpop.f32.mrb[0].mxu0
      %v4316 = vadd.f32 0.0, %v4315
      %4317 = vmatprep.mubr.f32.mxu0 0.0
      %4318 = vmatmul.mubr.f32.gmra.mrb[0].mxu0 %v4113
      %v4319 = vpop.f32.mrb[0].mxu0
      %v4320 = vadd.f32 0.0, %v4319
      %v4321 = vpop.f32.mrb[0].mxu0
      %v4322 = vadd.f32 0.0, %v4321
      %4323 = vmatprep.mubr.f32.mxu0 0.0
      %4324 = vmatmul.mubr.f32.gmra.mrb[0].mxu0 %v4115
      %v4325 = vpop.f32.mrb[0].mxu0
      %v4326 = vadd.f32 0.0, %v4325
      %v4327 = vpop.f32.mrb[0].mxu0
      %v4328 = vadd.f32 0.0, %v4327
      %4329 = vmatprep.mubr.f32.mxu0 0.0
      %4330 = vmatmul.mubr.f32.gmra.mrb[0].mxu0 %v4117
      %v4331 = vpop.f32.mrb[0].mxu0
      %v4332 = vadd.f32 0.0, %v4331
      %v4333 = vpop.f32.mrb[0].mxu0
      %v4334 = vadd.f32 0.0, %v4333
      %4335 = vmatprep.mubr.f32.mxu0 0.0
      %4336 = vmatmul.mubr.f32.gmra.mrb[0].mxu0 %v4119
      %v4337 = vpop.f32.mrb[0].mxu0
      %v4338 = vadd.f32 0.0, %v4337
      %v4339 = vpop.f32.mrb[0].mxu0
      %v4340 = vadd.f32 0.0, %v4339
      %4341 = vmatprep.mubr.f32.mxu0 0.0
      %4342 = vmatmul.mubr.f32.gmra.mrb[0].mxu0 %v4121
      %v4343 = vpop.f32.mrb[0].mxu0
      %v4344 = vadd.f32 0.0, %v4343
      %v4345 = vpop.f32.mrb[0].mxu0
      %v4346 = vadd.f32 0.0, %v4345
      %4347 = vmatprep.mubr.f32.mxu0 0.0
      %4348 = vmatmul.mubr.f32.gmra.mrb[0].mxu0 %v4123
      %v4349 = vpop.f32.mrb[0].mxu0
      %v4350 = vadd.f32 0.0, %v4349
      %v4351 = vpop.f32.mrb[0].mxu0
      %v4352 = vadd.f32 0.0, %v4351
      %4353 = vmatprep.mubr.f32.mxu0 0.0
      %4354 = vmatmul.mubr.f32.gmra.mrb[0].mxu0 %v4125
      %v4355 = vpop.f32.mrb[0].mxu0
      %v4356 = vadd.f32 0.0, %v4355
      %v4357 = vpop.f32.mrb[0].mxu0
      %v4358 = vadd.f32 0.0, %v4357
      %4359 = vmatprep.mubr.f32.mxu0 0.0
      %4360 = vmatmul.mubr.f32.gmra.mrb[0].mxu0 %v4127
      %v4361 = vpop.f32.mrb[0].mxu0
      %v4362 = vadd.f32 0.0, %v4361
      %v4363 = vpop.f32.mrb[0].mxu0
      %v4364 = vadd.f32 0.0, %v4363
      %4365 = vmatprep.mubr.f32.mxu0 0.0
      %4366 = vmatmul.mubr.f32.gmra.mrb[0].mxu0 %v4129
      %v4367 = vpop.f32.mrb[0].mxu0
      %v4368 = vadd.f32 0.0, %v4367
      %v4369 = vpop.f32.mrb[0].mxu0
      %v4370 = vadd.f32 0.0, %v4369
      %4371 = vmatprep.mubr.f32.mxu0 0.0
      %4372 = vmatmul.mubr.f32.gmra.mrb[0].mxu0 %v4131
      %v4373 = vpop.f32.mrb[0].mxu0
      %v4374 = vadd.f32 0.0, %v4373
      %v4375 = vpop.f32.mrb[0].mxu0
      %v4376 = vadd.f32 0.0, %v4375
      %4377 = vmatprep.mubr.f32.mxu0 0.0
      %4378 = vmatmul.mubr.f32.gmra.mrb[0].mxu0 %v4133
      %v4379 = vpop.f32.mrb[0].mxu0
      %v4380 = vadd.f32 0.0, %v4379
      %v4381 = vpop.f32.mrb[0].mxu0
      %v4382 = vadd.f32 0.0, %v4381
      %4383 = vmatprep.mubr.f32.mxu0 0.0
      %4384 = vmatmul.mubr.f32.gmra.mrb[0].mxu0 %v4135
      %v4385 = vpop.f32.mrb[0].mxu0
      %v4386 = vadd.f32 0.0, %v4385
      %v4387 = vpop.f32.mrb[0].mxu0
      %v4388 = vadd.f32 0.0, %v4387
      %4389 = vmatprep.mubr.f32.mxu0 0.0
      %4390 = vmatmul.mubr.f32.gmra.mrb[0].mxu0 %v4137
      %v4391 = vpop.f32.mrb[0].mxu0
      %v4392 = vadd.f32 0.0, %v4391
      %v4393 = vpop.f32.mrb[0].mxu0
      %v4394 = vadd.f32 0.0, %v4393
      %4395 = vmatprep.mubr.f32.mxu0 0.0
      %4396 = vmatmul.mubr.f32.gmra.mrb[0].mxu0 %v4139
      %v4397 = vpop.f32.mrb[0].mxu0
      %v4398 = vadd.f32 0.0, %v4397
      %v4399 = vpop.f32.mrb[0].mxu0
      %v4400 = vadd.f32 0.0, %v4399
      %4401 = vmatprep.mubr.f32.mxu0 0.0
      %4402 = vmatmul.mubr.f32.gmra.mrb[0].mxu0 %v4141
      %v4403 = vpop.f32.mrb[0].mxu0
      %v4404 = vadd.f32 0.0, %v4403
      %v4405 = vpop.f32.mrb[0].mxu0
      %v4406 = vadd.f32 0.0, %v4405
      %4407 = vmatprep.mubr.f32.mxu0 0.0
      %4408 = vmatmul.mubr.f32.gmra.mrb[0].mxu0 %v4143
      %v4409 = vpop.f32.mrb[0].mxu0
      %v4410 = vadd.f32 0.0, %v4409
      %v4411 = vpop.f32.mrb[0].mxu0
      %v4412 = vadd.f32 0.0, %v4411
      %4413 = vmatprep.mubr.f32.mxu0 0.0
      %4414 = vmatmul.mubr.f32.gmra.mrb[0].mxu0 %v4145
      %v4415 = vpop.f32.mrb[0].mxu0
      %v4416 = vadd.f32 0.0, %v4415
      %v4417 = vpop.f32.mrb[0].mxu0
      %v4418 = vadd.f32 0.0, %v4417
      %4419 = vmatprep.mubr.f32.mxu0 0.0
      %4420 = vmatmul.mubr.f32.gmra.mrb[0].mxu0 %v4147
      %v4421 = vpop.f32.mrb[0].mxu0
      %v4422 = vadd.f32 0.0, %v4421
      %v4423 = vpop.f32.mrb[0].mxu0
      %v4424 = vadd.f32 0.0, %v4423
      %4425 = vmatprep.mubr.f32.mxu0 0.0
      %4426 = vmatmul.mubr.f32.gmra.mrb[0].mxu0 %v4149
      %v4427 = vpop.f32.mrb[0].mxu0
      %v4428 = vadd.f32 0.0, %v4427
      %v4429 = vpop.f32.mrb[0].mxu0
      %v4430 = vadd.f32 0.0, %v4429
      %4431 = vmatprep.mubr.f32.mxu0 0.0
      %4432 = vmatmul.mubr.f32.gmra.mrb[0].mxu0 %v4151
      %v4433 = vpop.f32.mrb[0].mxu0
      %v4434 = vadd.f32 0.0, %v4433
      %v4435 = vpop.f32.mrb[0].mxu0
      %v4436 = vadd.f32 0.0, %v4435
      %4437 = vmatprep.mubr.f32.mxu0 0.0
      %4438 = vmatmul.mubr.f32.gmra.mrb[0].mxu0 %v4153
      %v4439 = vpop.f32.mrb[0].mxu0
      %v4440 = vadd.f32 0.0, %v4439
      %v4441 = vpop.f32.mrb[0].mxu0
      %v4442 = vadd.f32 0.0, %v4441
      %4443 = vmatprep.mubr.f32.mxu0 0.0
      %4444 = vmatmul.mubr.f32.gmra.mrb[0].mxu0 %v4155
      %v4445 = vpop.f32.mrb[0].mxu0
      %v4446 = vadd.f32 0.0, %v4445
      %v4447 = vpop.f32.mrb[0].mxu0
      %v4448 = vadd.f32 0.0, %v4447
      %4449 = vmatprep.mubr.f32.mxu0 0.0
      %4450 = vmatmul.mubr.f32.gmra.mrb[0].mxu0 %v4157
      %v4451 = vpop.f32.mrb[0].mxu0
      %v4452 = vadd.f32 0.0, %v4451
      %v4453 = vpop.f32.mrb[0].mxu0
      %v4454 = vadd.f32 0.0, %v4453
      %4455 = vmatprep.mubr.f32.mxu0 0.0
      %4456 = vmatmul.mubr.f32.gmra.mrb[0].mxu0 %v4159
      %v4457 = vpop.f32.mrb[0].mxu0
      %v4458 = vadd.f32 0.0, %v4457
      %v4459 = vpop.f32.mrb[0].mxu0
      %v4460 = vadd.f32 0.0, %v4459
      %4461 = vmatprep.mubr.f32.mxu0 0.0
      %4462 = vmatmul.mubr.f32.gmra.mrb[0].mxu0 %v4161
      %v4463 = vpop.f32.mrb[0].mxu0
      %v4464 = vadd.f32 0.0, %v4463
      %v4465 = vpop.f32.mrb[0].mxu0
      %v4466 = vadd.f32 0.0, %v4465
      %4467 = vmatprep.mubr.f32.mxu0 0.0
      %4468 = vmatmul.mubr.f32.gmra.mrb[0].mxu0 %v4163
      %v4469 = vpop.f32.mrb[0].mxu0
      %v4470 = vadd.f32 0.0, %v4469
      %v4471 = vpop.f32.mrb[0].mxu0
      %v4472 = vadd.f32 0.0, %v4471
      %4473 = vmatprep.mubr.f32.mxu0 0.0
      %4474 = vmatmul.mubr.f32.gmra.mrb[0].mxu0 %v4165
      %v4475 = vpop.f32.mrb[0].mxu0
      %v4476 = vadd.f32 0.0, %v4475
      %v4477 = vpop.f32.mrb[0].mxu0
      %v4478 = vadd.f32 0.0, %v4477
      %4479 = vmatprep.mubr.f32.mxu0 0.0
      %4480 = vmatmul.mubr.f32.gmra.mrb[0].mxu0 %v4167
      %v4481 = vpop.f32.mrb[0].mxu0
      %v4482 = vadd.f32 0.0, %v4481
      %v4483 = vpop.f32.mrb[0].mxu0
      %v4484 = vadd.f32 0.0, %v4483
      %4485 = vmatprep.mubr.f32.mxu0 0.0
      %4486 = vmatmul.mubr.f32.gmra.mrb[0].mxu0 %v4169
      %v4487 = vpop.f32.mrb[0].mxu0
      %v4488 = vadd.f32 0.0, %v4487
      %v4489 = vpop.f32.mrb[0].mxu0
      %v4490 = vadd.f32 0.0, %v4489
      %4491 = vdwg.mxu0
      %v4492 = vmax.f32 %v4302, %v4304
      %4493 = vmax.xlane.f32.xlu0 %v4492
      %v4494 = vpop.xlane.xlu0 %4493
      %v4495 = vmax.f32 %v4308, %v4310
      %4496 = vmax.xlane.f32.xlu0 %v4495
      %v4497 = vpop.xlane.xlu0 %4496
      %v4498 = vmax.f32 %v4314, %v4316
      %4499 = vmax.xlane.f32.xlu0 %v4498
      %v4500 = vpop.xlane.xlu0 %4499
      %v4501 = vmax.f32 %v4320, %v4322
      %4502 = vmax.xlane.f32.xlu0 %v4501
      %v4503 = vpop.xlane.xlu0 %4502
      %v4504 = vmax.f32 %v4326, %v4328
      %4505 = vmax.xlane.f32.xlu0 %v4504
      %v4506 = vpop.xlane.xlu0 %4505
      %v4507 = vmax.f32 %v4332, %v4334
      %4508 = vmax.xlane.f32.xlu0 %v4507
      %v4509 = vpop.xlane.xlu0 %4508
      %v4510 = vmax.f32 %v4338, %v4340
      %4511 = vmax.xlane.f32.xlu0 %v4510
      %v4512 = vpop.xlane.xlu0 %4511
      %v4513 = vmax.f32 %v4344, %v4346
      %4514 = vmax.xlane.f32.xlu0 %v4513
      %v4515 = vpop.xlane.xlu0 %4514
      %v4516 = vmax.f32 %v4350, %v4352
      %4517 = vmax.xlane.f32.xlu0 %v4516
      %v4518 = vpop.xlane.xlu0 %4517
      %v4519 = vmax.f32 %v4356, %v4358
      %4520 = vmax.xlane.f32.xlu0 %v4519
      %v4521 = vpop.xlane.xlu0 %4520
      %v4522 = vmax.f32 %v4362, %v4364
      %4523 = vmax.xlane.f32.xlu0 %v4522
      %v4524 = vpop.xlane.xlu0 %4523
      %v4525 = vmax.f32 %v4368, %v4370
      %4526 = vmax.xlane.f32.xlu0 %v4525
      %v4527 = vpop.xlane.xlu0 %4526
      %v4528 = vmax.f32 %v4374, %v4376
      %4529 = vmax.xlane.f32.xlu0 %v4528
      %v4530 = vpop.xlane.xlu0 %4529
      %v4531 = vmax.f32 %v4380, %v4382
      %4532 = vmax.xlane.f32.xlu0 %v4531
      %v4533 = vpop.xlane.xlu0 %4532
      %v4534 = vmax.f32 %v4386, %v4388
      %4535 = vmax.xlane.f32.xlu0 %v4534
      %v4536 = vpop.xlane.xlu0 %4535
      %v4537 = vmax.f32 %v4392, %v4394
      %4538 = vmax.xlane.f32.xlu0 %v4537
      %v4539 = vpop.xlane.xlu0 %4538
      %v4540 = vmax.f32 %v4398, %v4400
      %4541 = vmax.xlane.f32.xlu0 %v4540
      %v4542 = vpop.xlane.xlu0 %4541
      %v4543 = vmax.f32 %v4404, %v4406
      %4544 = vmax.xlane.f32.xlu0 %v4543
      %v4545 = vpop.xlane.xlu0 %4544
      %v4546 = vmax.f32 %v4410, %v4412
      %4547 = vmax.xlane.f32.xlu0 %v4546
      %v4548 = vpop.xlane.xlu0 %4547
      %v4549 = vmax.f32 %v4416, %v4418
      %4550 = vmax.xlane.f32.xlu0 %v4549
      %v4551 = vpop.xlane.xlu0 %4550
      %v4552 = vmax.f32 %v4422, %v4424
      %4553 = vmax.xlane.f32.xlu0 %v4552
      %v4554 = vpop.xlane.xlu0 %4553
      %v4555 = vmax.f32 %v4428, %v4430
      %4556 = vmax.xlane.f32.xlu0 %v4555
      %v4557 = vpop.xlane.xlu0 %4556
      %v4558 = vmax.f32 %v4434, %v4436
      %4559 = vmax.xlane.f32.xlu0 %v4558
      %v4560 = vpop.xlane.xlu0 %4559
      %v4561 = vmax.f32 %v4440, %v4442
      %4562 = vmax.xlane.f32.xlu0 %v4561
      %v4563 = vpop.xlane.xlu0 %4562
      %v4564 = vmax.f32 %v4446, %v4448
      %4565 = vmax.xlane.f32.xlu0 %v4564
      %v4566 = vpop.xlane.xlu0 %4565
      %v4567 = vmax.f32 %v4452, %v4454
      %4568 = vmax.xlane.f32.xlu0 %v4567
      %v4569 = vpop.xlane.xlu0 %4568
      %v4570 = vmax.f32 %v4458, %v4460
      %4571 = vmax.xlane.f32.xlu0 %v4570
      %v4572 = vpop.xlane.xlu0 %4571
      %v4573 = vmax.f32 %v4464, %v4466
      %4574 = vmax.xlane.f32.xlu0 %v4573
      %v4575 = vpop.xlane.xlu0 %4574
      %v4576 = vmax.f32 %v4470, %v4472
      %4577 = vmax.xlane.f32.xlu0 %v4576
      %v4578 = vpop.xlane.xlu0 %4577
      %v4579 = vmax.f32 %v4476, %v4478
      %4580 = vmax.xlane.f32.xlu0 %v4579
      %v4581 = vpop.xlane.xlu0 %4580
      %v4582 = vmax.f32 %v4482, %v4484
      %4583 = vmax.xlane.f32.xlu0 %v4582
      %v4584 = vpop.xlane.xlu0 %4583
      %v4585 = vmax.f32 %v4488, %v4490
      %4586 = vmax.xlane.f32.xlu0 %v4585
      %v4587 = vpop.xlane.xlu0 %4586
      %v4588 = vsub.f32 %v4302, %v4494
      %v4589 = vsub.f32 %v4304, %v4494
      %v4590 = vsub.f32 %v4308, %v4497
      %v4591 = vsub.f32 %v4310, %v4497
      %v4592 = vsub.f32 %v4314, %v4500
      %v4593 = vsub.f32 %v4316, %v4500
      %v4594 = vsub.f32 %v4320, %v4503
      %v4595 = vsub.f32 %v4322, %v4503
      %v4596 = vsub.f32 %v4326, %v4506
      %v4597 = vsub.f32 %v4328, %v4506
      %v4598 = vsub.f32 %v4332, %v4509
      %v4599 = vsub.f32 %v4334, %v4509
      %v4600 = vsub.f32 %v4338, %v4512
      %v4601 = vsub.f32 %v4340, %v4512
      %v4602 = vsub.f32 %v4344, %v4515
      %v4603 = vsub.f32 %v4346, %v4515
      %v4604 = vsub.f32 %v4350, %v4518
      %v4605 = vsub.f32 %v4352, %v4518
      %v4606 = vsub.f32 %v4356, %v4521
      %v4607 = vsub.f32 %v4358, %v4521
      %v4608 = vsub.f32 %v4362, %v4524
      %v4609 = vsub.f32 %v4364, %v4524
      %v4610 = vsub.f32 %v4368, %v4527
      %v4611 = vsub.f32 %v4370, %v4527
      %v4612 = vsub.f32 %v4374, %v4530
      %v4613 = vsub.f32 %v4376, %v4530
      %v4614 = vsub.f32 %v4380, %v4533
      %v4615 = vsub.f32 %v4382, %v4533
      %v4616 = vsub.f32 %v4386, %v4536
      %v4617 = vsub.f32 %v4388, %v4536
      %v4618 = vsub.f32 %v4392, %v4539
      %v4619 = vsub.f32 %v4394, %v4539
      %v4620 = vsub.f32 %v4398, %v4542
      %v4621 = vsub.f32 %v4400, %v4542
      %v4622 = vsub.f32 %v4404, %v4545
      %v4623 = vsub.f32 %v4406, %v4545
      %v4624 = vsub.f32 %v4410, %v4548
      %v4625 = vsub.f32 %v4412, %v4548
      %v4626 = vsub.f32 %v4416, %v4551
      %v4627 = vsub.f32 %v4418, %v4551
      %v4628 = vsub.f32 %v4422, %v4554
      %v4629 = vsub.f32 %v4424, %v4554
      %v4630 = vsub.f32 %v4428, %v4557
      %v4631 = vsub.f32 %v4430, %v4557
      %v4632 = vsub.f32 %v4434, %v4560
      %v4633 = vsub.f32 %v4436, %v4560
      %v4634 = vsub.f32 %v4440, %v4563
      %v4635 = vsub.f32 %v4442, %v4563
      %v4636 = vsub.f32 %v4446, %v4566
      %v4637 = vsub.f32 %v4448, %v4566
      %v4638 = vsub.f32 %v4452, %v4569
      %v4639 = vsub.f32 %v4454, %v4569
      %v4640 = vsub.f32 %v4458, %v4572
      %v4641 = vsub.f32 %v4460, %v4572
      %v4642 = vsub.f32 %v4464, %v4575
      %v4643 = vsub.f32 %v4466, %v4575
      %v4644 = vsub.f32 %v4470, %v4578
      %v4645 = vsub.f32 %v4472, %v4578
      %v4646 = vsub.f32 %v4476, %v4581
      %v4647 = vsub.f32 %v4478, %v4581
      %v4648 = vsub.f32 %v4482, %v4584
      %v4649 = vsub.f32 %v4484, %v4584
      %v4650 = vsub.f32 %v4488, %v4587
      %v4651 = vsub.f32 %v4490, %v4587
      %v4652 = vmul.f32 %v4588, 1.442695
      %v4653 = vpow.pop %v4652
      %v4654 = vmul.f32 %v4589, 1.442695
      %v4655 = vpow.pop %v4654
      %v4656 = vmul.f32 %v4590, 1.442695
      %v4657 = vpow.pop %v4656
      %v4658 = vmul.f32 %v4591, 1.442695
      %v4659 = vpow.pop %v4658
      %v4660 = vmul.f32 %v4592, 1.442695
      %v4661 = vpow.pop %v4660
      %v4662 = vmul.f32 %v4593, 1.442695
      %v4663 = vpow.pop %v4662
      %v4664 = vmul.f32 %v4594, 1.442695
      %v4665 = vpow.pop %v4664
      %v4666 = vmul.f32 %v4595, 1.442695
      %v4667 = vpow.pop %v4666
      %v4668 = vmul.f32 %v4596, 1.442695
      %v4669 = vpow.pop %v4668
      %v4670 = vmul.f32 %v4597, 1.442695
      %v4671 = vpow.pop %v4670
      %v4672 = vmul.f32 %v4598, 1.442695
      %v4673 = vpow.pop %v4672
      %v4674 = vmul.f32 %v4599, 1.442695
      %v4675 = vpow.pop %v4674
      %v4676 = vmul.f32 %v4600, 1.442695
      %v4677 = vpow.pop %v4676
      %v4678 = vmul.f32 %v4601, 1.442695
      %v4679 = vpow.pop %v4678
      %v4680 = vmul.f32 %v4602, 1.442695
      %v4681 = vpow.pop %v4680
      %v4682 = vmul.f32 %v4603, 1.442695
      %v4683 = vpow.pop %v4682
      %v4684 = vmul.f32 %v4604, 1.442695
      %v4685 = vpow.pop %v4684
      %v4686 = vmul.f32 %v4605, 1.442695
      %v4687 = vpow.pop %v4686
      %v4688 = vmul.f32 %v4606, 1.442695
      %v4689 = vpow.pop %v4688
      %v4690 = vmul.f32 %v4607, 1.442695
      %v4691 = vpow.pop %v4690
      %v4692 = vmul.f32 %v4608, 1.442695
      %v4693 = vpow.pop %v4692
      %v4694 = vmul.f32 %v4609, 1.442695
      %v4695 = vpow.pop %v4694
      %v4696 = vmul.f32 %v4610, 1.442695
      %v4697 = vpow.pop %v4696
      %v4698 = vmul.f32 %v4611, 1.442695
      %v4699 = vpow.pop %v4698
      %v4700 = vmul.f32 %v4612, 1.442695
      %v4701 = vpow.pop %v4700
      %v4702 = vmul.f32 %v4613, 1.442695
      %v4703 = vpow.pop %v4702
      %v4704 = vmul.f32 %v4614, 1.442695
      %v4705 = vpow.pop %v4704
      %v4706 = vmul.f32 %v4615, 1.442695
      %v4707 = vpow.pop %v4706
      %v4708 = vmul.f32 %v4616, 1.442695
      %v4709 = vpow.pop %v4708
      %v4710 = vmul.f32 %v4617, 1.442695
      %v4711 = vpow.pop %v4710
      %v4712 = vmul.f32 %v4618, 1.442695
      %v4713 = vpow.pop %v4712
      %v4714 = vmul.f32 %v4619, 1.442695
      %v4715 = vpow.pop %v4714
      %v4716 = vmul.f32 %v4620, 1.442695
      %v4717 = vpow.pop %v4716
      %v4718 = vmul.f32 %v4621, 1.442695
      %v4719 = vpow.pop %v4718
      %v4720 = vmul.f32 %v4622, 1.442695
      %v4721 = vpow.pop %v4720
      %v4722 = vmul.f32 %v4623, 1.442695
      %v4723 = vpow.pop %v4722
      %v4724 = vmul.f32 %v4624, 1.442695
      %v4725 = vpow.pop %v4724
      %v4726 = vmul.f32 %v4625, 1.442695
      %v4727 = vpow.pop %v4726
      %v4728 = vmul.f32 %v4626, 1.442695
      %v4729 = vpow.pop %v4728
      %v4730 = vmul.f32 %v4627, 1.442695
      %v4731 = vpow.pop %v4730
      %v4732 = vmul.f32 %v4628, 1.442695
      %v4733 = vpow.pop %v4732
      %v4734 = vmul.f32 %v4629, 1.442695
      %v4735 = vpow.pop %v4734
      %v4736 = vmul.f32 %v4630, 1.442695
      %v4737 = vpow.pop %v4736
      %v4738 = vmul.f32 %v4631, 1.442695
      %v4739 = vpow.pop %v4738
      %v4740 = vmul.f32 %v4632, 1.442695
      %v4741 = vpow.pop %v4740
      %v4742 = vmul.f32 %v4633, 1.442695
      %v4743 = vpow.pop %v4742
      %v4744 = vmul.f32 %v4634, 1.442695
      %v4745 = vpow.pop %v4744
      %v4746 = vmul.f32 %v4635, 1.442695
      %v4747 = vpow.pop %v4746
      %v4748 = vmul.f32 %v4636, 1.442695
      %v4749 = vpow.pop %v4748
      %v4750 = vmul.f32 %v4637, 1.442695
      %v4751 = vpow.pop %v4750
      %v4752 = vmul.f32 %v4638, 1.442695
      %v4753 = vpow.pop %v4752
      %v4754 = vmul.f32 %v4639, 1.442695
      %v4755 = vpow.pop %v4754
      %v4756 = vmul.f32 %v4640, 1.442695
      %v4757 = vpow.pop %v4756
      %v4758 = vmul.f32 %v4641, 1.442695
      %v4759 = vpow.pop %v4758
      %v4760 = vmul.f32 %v4642, 1.442695
      %v4761 = vpow.pop %v4760
      %v4762 = vmul.f32 %v4643, 1.442695
      %v4763 = vpow.pop %v4762
      %v4764 = vmul.f32 %v4644, 1.442695
      %v4765 = vpow.pop %v4764
      %v4766 = vmul.f32 %v4645, 1.442695
      %v4767 = vpow.pop %v4766
      %v4768 = vmul.f32 %v4646, 1.442695
      %v4769 = vpow.pop %v4768
      %v4770 = vmul.f32 %v4647, 1.442695
      %v4771 = vpow.pop %v4770
      %v4772 = vmul.f32 %v4648, 1.442695
      %v4773 = vpow.pop %v4772
      %v4774 = vmul.f32 %v4649, 1.442695
      %v4775 = vpow.pop %v4774
      %v4776 = vmul.f32 %v4650, 1.442695
      %v4777 = vpow.pop %v4776
      %v4778 = vmul.f32 %v4651, 1.442695
      %v4779 = vpow.pop %v4778
      %v4780 = vadd.f32 %v4653, %v4655
      %4781 = vadd.xlane.f32.xlu0 %v4780
      %v4782 = vpop.xlane.xlu0 %4781
      %v4783 = vadd.f32 %v4657, %v4659
      %4784 = vadd.xlane.f32.xlu0 %v4783
      %v4785 = vpop.xlane.xlu0 %4784
      %v4786 = vadd.f32 %v4661, %v4663
      %4787 = vadd.xlane.f32.xlu0 %v4786
      %v4788 = vpop.xlane.xlu0 %4787
      %v4789 = vadd.f32 %v4665, %v4667
      %4790 = vadd.xlane.f32.xlu0 %v4789
      %v4791 = vpop.xlane.xlu0 %4790
      %v4792 = vadd.f32 %v4669, %v4671
      %4793 = vadd.xlane.f32.xlu0 %v4792
      %v4794 = vpop.xlane.xlu0 %4793
      %v4795 = vadd.f32 %v4673, %v4675
      %4796 = vadd.xlane.f32.xlu0 %v4795
      %v4797 = vpop.xlane.xlu0 %4796
      %v4798 = vadd.f32 %v4677, %v4679
      %4799 = vadd.xlane.f32.xlu0 %v4798
      %v4800 = vpop.xlane.xlu0 %4799
      %v4801 = vadd.f32 %v4681, %v4683
      %4802 = vadd.xlane.f32.xlu0 %v4801
      %v4803 = vpop.xlane.xlu0 %4802
      %v4804 = vadd.f32 %v4685, %v4687
      %4805 = vadd.xlane.f32.xlu0 %v4804
      %v4806 = vpop.xlane.xlu0 %4805
      %v4807 = vadd.f32 %v4689, %v4691
      %4808 = vadd.xlane.f32.xlu0 %v4807
      %v4809 = vpop.xlane.xlu0 %4808
      %v4810 = vadd.f32 %v4693, %v4695
      %4811 = vadd.xlane.f32.xlu0 %v4810
      %v4812 = vpop.xlane.xlu0 %4811
      %v4813 = vadd.f32 %v4697, %v4699
      %4814 = vadd.xlane.f32.xlu0 %v4813
      %v4815 = vpop.xlane.xlu0 %4814
      %v4816 = vadd.f32 %v4701, %v4703
      %4817 = vadd.xlane.f32.xlu0 %v4816
      %v4818 = vpop.xlane.xlu0 %4817
      %v4819 = vadd.f32 %v4705, %v4707
      %4820 = vadd.xlane.f32.xlu0 %v4819
      %v4821 = vpop.xlane.xlu0 %4820
      %v4822 = vadd.f32 %v4709, %v4711
      %4823 = vadd.xlane.f32.xlu0 %v4822
      %v4824 = vpop.xlane.xlu0 %4823
      %v4825 = vadd.f32 %v4713, %v4715
      %4826 = vadd.xlane.f32.xlu0 %v4825
      %v4827 = vpop.xlane.xlu0 %4826
      %v4828 = vadd.f32 %v4717, %v4719
      %4829 = vadd.xlane.f32.xlu0 %v4828
      %v4830 = vpop.xlane.xlu0 %4829
      %v4831 = vadd.f32 %v4721, %v4723
      %4832 = vadd.xlane.f32.xlu0 %v4831
      %v4833 = vpop.xlane.xlu0 %4832
      %v4834 = vadd.f32 %v4725, %v4727
      %4835 = vadd.xlane.f32.xlu0 %v4834
      %v4836 = vpop.xlane.xlu0 %4835
      %v4837 = vadd.f32 %v4729, %v4731
      %4838 = vadd.xlane.f32.xlu0 %v4837
      %v4839 = vpop.xlane.xlu0 %4838
      %v4840 = vadd.f32 %v4733, %v4735
      %4841 = vadd.xlane.f32.xlu0 %v4840
      %v4842 = vpop.xlane.xlu0 %4841
      %v4843 = vadd.f32 %v4737, %v4739
      %4844 = vadd.xlane.f32.xlu0 %v4843
      %v4845 = vpop.xlane.xlu0 %4844
      %v4846 = vadd.f32 %v4741, %v4743
      %4847 = vadd.xlane.f32.xlu0 %v4846
      %v4848 = vpop.xlane.xlu0 %4847
      %v4849 = vadd.f32 %v4745, %v4747
      %4850 = vadd.xlane.f32.xlu0 %v4849
      %v4851 = vpop.xlane.xlu0 %4850
      %v4852 = vadd.f32 %v4749, %v4751
      %4853 = vadd.xlane.f32.xlu0 %v4852
      %v4854 = vpop.xlane.xlu0 %4853
      %v4855 = vadd.f32 %v4753, %v4755
      %4856 = vadd.xlane.f32.xlu0 %v4855
      %v4857 = vpop.xlane.xlu0 %4856
      %v4858 = vadd.f32 %v4757, %v4759
      %4859 = vadd.xlane.f32.xlu0 %v4858
      %v4860 = vpop.xlane.xlu0 %4859
      %v4861 = vadd.f32 %v4761, %v4763
      %4862 = vadd.xlane.f32.xlu0 %v4861
      %v4863 = vpop.xlane.xlu0 %4862
      %v4864 = vadd.f32 %v4765, %v4767
      %4865 = vadd.xlane.f32.xlu0 %v4864
      %v4866 = vpop.xlane.xlu0 %4865
      %v4867 = vadd.f32 %v4769, %v4771
      %4868 = vadd.xlane.f32.xlu0 %v4867
      %v4869 = vpop.xlane.xlu0 %4868
      %v4870 = vadd.f32 %v4773, %v4775
      %4871 = vadd.xlane.f32.xlu0 %v4870
      %v4872 = vpop.xlane.xlu0 %4871
      %v4873 = vadd.f32 %v4777, %v4779
      %4874 = vadd.xlane.f32.xlu0 %v4873
      %v4875 = vpop.xlane.xlu0 %4874
      %v4876 = vrcp.pop %v4782
      %v4877 = vrcp.pop %v4785
      %v4878 = vrcp.pop %v4788
      %v4879 = vrcp.pop %v4791
      %v4880 = vrcp.pop %v4794
      %v4881 = vrcp.pop %v4797
      %v4882 = vrcp.pop %v4800
      %v4883 = vrcp.pop %v4803
      %v4884 = vrcp.pop %v4806
      %v4885 = vrcp.pop %v4809
      %v4886 = vrcp.pop %v4812
      %v4887 = vrcp.pop %v4815
      %v4888 = vrcp.pop %v4818
      %v4889 = vrcp.pop %v4821
      %v4890 = vrcp.pop %v4824
      %v4891 = vrcp.pop %v4827
      %v4892 = vrcp.pop %v4830
      %v4893 = vrcp.pop %v4833
      %v4894 = vrcp.pop %v4836
      %v4895 = vrcp.pop %v4839
      %v4896 = vrcp.pop %v4842
      %v4897 = vrcp.pop %v4845
      %v4898 = vrcp.pop %v4848
      %v4899 = vrcp.pop %v4851
      %v4900 = vrcp.pop %v4854
      %v4901 = vrcp.pop %v4857
      %v4902 = vrcp.pop %v4860
      %v4903 = vrcp.pop %v4863
      %v4904 = vrcp.pop %v4866
      %v4905 = vrcp.pop %v4869
      %v4906 = vrcp.pop %v4872
      %v4907 = vrcp.pop %v4875
      %v4908 = vmul.f32 %v4653, %v4876
      %v4909 = vmul.f32 %v4655, %v4876
      %v4910 = vmul.f32 %v4657, %v4877
      %v4911 = vmul.f32 %v4659, %v4877
      %v4912 = vmul.f32 %v4661, %v4878
      %v4913 = vmul.f32 %v4663, %v4878
      %v4914 = vmul.f32 %v4665, %v4879
      %v4915 = vmul.f32 %v4667, %v4879
      %v4916 = vmul.f32 %v4669, %v4880
      %v4917 = vmul.f32 %v4671, %v4880
      %v4918 = vmul.f32 %v4673, %v4881
      %v4919 = vmul.f32 %v4675, %v4881
      %v4920 = vmul.f32 %v4677, %v4882
      %v4921 = vmul.f32 %v4679, %v4882
      %v4922 = vmul.f32 %v4681, %v4883
      %v4923 = vmul.f32 %v4683, %v4883
      %v4924 = vmul.f32 %v4685, %v4884
      %v4925 = vmul.f32 %v4687, %v4884
      %v4926 = vmul.f32 %v4689, %v4885
      %v4927 = vmul.f32 %v4691, %v4885
      %v4928 = vmul.f32 %v4693, %v4886
      %v4929 = vmul.f32 %v4695, %v4886
      %v4930 = vmul.f32 %v4697, %v4887
      %v4931 = vmul.f32 %v4699, %v4887
      %v4932 = vmul.f32 %v4701, %v4888
      %v4933 = vmul.f32 %v4703, %v4888
      %v4934 = vmul.f32 %v4705, %v4889
      %v4935 = vmul.f32 %v4707, %v4889
      %v4936 = vmul.f32 %v4709, %v4890
      %v4937 = vmul.f32 %v4711, %v4890
      %v4938 = vmul.f32 %v4713, %v4891
      %v4939 = vmul.f32 %v4715, %v4891
      %v4940 = vmul.f32 %v4717, %v4892
      %v4941 = vmul.f32 %v4719, %v4892
      %v4942 = vmul.f32 %v4721, %v4893
      %v4943 = vmul.f32 %v4723, %v4893
      %v4944 = vmul.f32 %v4725, %v4894
      %v4945 = vmul.f32 %v4727, %v4894
      %v4946 = vmul.f32 %v4729, %v4895
      %v4947 = vmul.f32 %v4731, %v4895
      %v4948 = vmul.f32 %v4733, %v4896
      %v4949 = vmul.f32 %v4735, %v4896
      %v4950 = vmul.f32 %v4737, %v4897
      %v4951 = vmul.f32 %v4739, %v4897
      %v4952 = vmul.f32 %v4741, %v4898
      %v4953 = vmul.f32 %v4743, %v4898
      %v4954 = vmul.f32 %v4745, %v4899
      %v4955 = vmul.f32 %v4747, %v4899
      %v4956 = vmul.f32 %v4749, %v4900
      %v4957 = vmul.f32 %v4751, %v4900
      %v4958 = vmul.f32 %v4753, %v4901
      %v4959 = vmul.f32 %v4755, %v4901
      %v4960 = vmul.f32 %v4757, %v4902
      %v4961 = vmul.f32 %v4759, %v4902
      %v4962 = vmul.f32 %v4761, %v4903
      %v4963 = vmul.f32 %v4763, %v4903
      %v4964 = vmul.f32 %v4765, %v4904
      %v4965 = vmul.f32 %v4767, %v4904
      %v4966 = vmul.f32 %v4769, %v4905
      %v4967 = vmul.f32 %v4771, %v4905
      %v4968 = vmul.f32 %v4773, %v4906
      %v4969 = vmul.f32 %v4775, %v4906
      %v4970 = vmul.f32 %v4777, %v4907
      %v4971 = vmul.f32 %v4779, %v4907
      %4972 = vrot.lane.b32.xlu0 %v3457, 96
      %v4973 = vpop.permute.xlu0 %4972
      %4974 = vrot.lane.b32.xlu0 %v3462, 96
      %v4975 = vpop.permute.xlu0 %4974
      %4976 = vrot.lane.b32.xlu0 %v3467, 96
      %v4977 = vpop.permute.xlu0 %4976
      %4978 = vrot.lane.b32.xlu0 %v3472, 96
      %v4979 = vpop.permute.xlu0 %4978
      %4980 = vrot.lane.b32.xlu0 %v3477, 96
      %v4981 = vpop.permute.xlu0 %4980
      %4982 = vrot.lane.b32.xlu0 %v3482, 96
      %v4983 = vpop.permute.xlu0 %4982
      %4984 = vrot.lane.b32.xlu0 %v3487, 96
      %v4985 = vpop.permute.xlu0 %4984
      %4986 = vrot.lane.b32.xlu0 %v3492, 96
      %v4987 = vpop.permute.xlu0 %4986
      %4988 = vrot.lane.b32.xlu0 %v3497, 96
      %v4989 = vpop.permute.xlu0 %4988
      %4990 = vrot.lane.b32.xlu0 %v3502, 96
      %v4991 = vpop.permute.xlu0 %4990
      %4992 = vrot.lane.b32.xlu0 %v3507, 96
      %v4993 = vpop.permute.xlu0 %4992
      %4994 = vrot.lane.b32.xlu0 %v3512, 96
      %v4995 = vpop.permute.xlu0 %4994
      %4996 = vrot.lane.b32.xlu0 %v3517, 96
      %v4997 = vpop.permute.xlu0 %4996
      %4998 = vrot.lane.b32.xlu0 %v3522, 96
      %v4999 = vpop.permute.xlu0 %4998
      %5000 = vrot.lane.b32.xlu0 %v3527, 96
      %v5001 = vpop.permute.xlu0 %5000
      %5002 = vrot.lane.b32.xlu0 %v3532, 96
      %v5003 = vpop.permute.xlu0 %5002
      %5004 = vrot.lane.b32.xlu0 %v3537, 96
      %v5005 = vpop.permute.xlu0 %5004
      %5006 = vrot.lane.b32.xlu0 %v3542, 96
      %v5007 = vpop.permute.xlu0 %5006
      %5008 = vrot.lane.b32.xlu0 %v3547, 96
      %v5009 = vpop.permute.xlu0 %5008
      %5010 = vrot.lane.b32.xlu0 %v3552, 96
      %v5011 = vpop.permute.xlu0 %5010
      %5012 = vrot.lane.b32.xlu0 %v3557, 96
      %v5013 = vpop.permute.xlu0 %5012
      %5014 = vrot.lane.b32.xlu0 %v3562, 96
      %v5015 = vpop.permute.xlu0 %5014
      %5016 = vrot.lane.b32.xlu0 %v3567, 96
      %v5017 = vpop.permute.xlu0 %5016
      %5018 = vrot.lane.b32.xlu0 %v3572, 96
      %v5019 = vpop.permute.xlu0 %5018
      %5020 = vrot.lane.b32.xlu0 %v3577, 96
      %v5021 = vpop.permute.xlu0 %5020
      %5022 = vrot.lane.b32.xlu0 %v3582, 96
      %v5023 = vpop.permute.xlu0 %5022
      %5024 = vrot.lane.b32.xlu0 %v3587, 96
      %v5025 = vpop.permute.xlu0 %5024
      %5026 = vrot.lane.b32.xlu0 %v3592, 96
      %v5027 = vpop.permute.xlu0 %5026
      %5028 = vrot.lane.b32.xlu0 %v3597, 96
      %v5029 = vpop.permute.xlu0 %5028
      %5030 = vrot.lane.b32.xlu0 %v3602, 96
      %v5031 = vpop.permute.xlu0 %5030
      %5032 = vrot.lane.b32.xlu0 %v3607, 96
      %v5033 = vpop.permute.xlu0 %5032
      %5034 = vrot.lane.b32.xlu0 %v3612, 96
      %v5035 = vpop.permute.xlu0 %5034
      %5068 = vxpose.xlu0.b32.start [1/16] %v4973, 128
      %5069 = vxpose.xlu0.b32.cont [2/16] %v4975, 128
      %5070 = vxpose.xlu0.b32.cont [3/16] %v4977, 128
      %5071 = vxpose.xlu0.b32.cont [4/16] %v4979, 128
      %5072 = vxpose.xlu0.b32.cont [5/16] %v4981, 128
      %5073 = vxpose.xlu0.b32.cont [6/16] %v4983, 128
      %5074 = vxpose.xlu0.b32.cont [7/16] %v4985, 128
      %5075 = vxpose.xlu0.b32.cont [8/16] %v4987, 128
      %5076 = vxpose.xlu0.b32.cont [9/16] %v4989, 128
      %5077 = vxpose.xlu0.b32.cont [10/16] %v4991, 128
      %5078 = vxpose.xlu0.b32.cont [11/16] %v4993, 128
      %5079 = vxpose.xlu0.b32.cont [12/16] %v4995, 128
      %5080 = vxpose.xlu0.b32.cont [13/16] %v4997, 128
      %5081 = vxpose.xlu0.b32.cont [14/16] %v4999, 128
      %5082 = vxpose.xlu0.b32.cont [15/16] %v5001, 128
      %5083 = vxpose.xlu0.b32.end [16/16] %v5003, 128
      %v5084 = vpop.trf.xlu0
      %v5085 = vpop.trf.xlu0
      %v5086 = vpop.trf.xlu0
      %v5087 = vpop.trf.xlu0
      %v5088 = vpop.trf.xlu0
      %v5089 = vpop.trf.xlu0
      %v5090 = vpop.trf.xlu0
      %v5091 = vpop.trf.xlu0
      %v5092 = vpop.trf.xlu0
      %v5093 = vpop.trf.xlu0
      %v5094 = vpop.trf.xlu0
      %v5095 = vpop.trf.xlu0
      %v5096 = vpop.trf.xlu0
      %v5097 = vpop.trf.xlu0
      %v5098 = vpop.trf.xlu0
      %v5099 = vpop.trf.xlu0
      %5100 = vxpose.xlu0.b32.start [1/16] %v5005, 128
      %5101 = vxpose.xlu0.b32.cont [2/16] %v5007, 128
      %5102 = vxpose.xlu0.b32.cont [3/16] %v5009, 128
      %5103 = vxpose.xlu0.b32.cont [4/16] %v5011, 128
      %5104 = vxpose.xlu0.b32.cont [5/16] %v5013, 128
      %5105 = vxpose.xlu0.b32.cont [6/16] %v5015, 128
      %5106 = vxpose.xlu0.b32.cont [7/16] %v5017, 128
      %5107 = vxpose.xlu0.b32.cont [8/16] %v5019, 128
      %5108 = vxpose.xlu0.b32.cont [9/16] %v5021, 128
      %5109 = vxpose.xlu0.b32.cont [10/16] %v5023, 128
      %5110 = vxpose.xlu0.b32.cont [11/16] %v5025, 128
      %5111 = vxpose.xlu0.b32.cont [12/16] %v5027, 128
      %5112 = vxpose.xlu0.b32.cont [13/16] %v5029, 128
      %5113 = vxpose.xlu0.b32.cont [14/16] %v5031, 128
      %5114 = vxpose.xlu0.b32.cont [15/16] %v5033, 128
      %5115 = vxpose.xlu0.b32.end [16/16] %v5035, 128
      %v5116 = vpop.trf.xlu0
      %v5117 = vpop.trf.xlu0
      %v5118 = vpop.trf.xlu0
      %v5119 = vpop.trf.xlu0
      %v5120 = vpop.trf.xlu0
      %v5121 = vpop.trf.xlu0
      %v5122 = vpop.trf.xlu0
      %v5123 = vpop.trf.xlu0
      %v5124 = vpop.trf.xlu0
      %v5125 = vpop.trf.xlu0
      %v5126 = vpop.trf.xlu0
      %v5127 = vpop.trf.xlu0
      %v5128 = vpop.trf.xlu0
      %v5129 = vpop.trf.xlu0
      %v5130 = vpop.trf.xlu0
      %v5131 = vpop.trf.xlu0
      %5132 = vrot.lane.b32.xlu0 %v3457, 64
      %v5133 = vpop.permute.xlu0 %5132
      %5134 = vrot.lane.b32.xlu0 %v3462, 64
      %v5135 = vpop.permute.xlu0 %5134
      %5136 = vrot.lane.b32.xlu0 %v3467, 64
      %v5137 = vpop.permute.xlu0 %5136
      %5138 = vrot.lane.b32.xlu0 %v3472, 64
      %v5139 = vpop.permute.xlu0 %5138
      %5140 = vrot.lane.b32.xlu0 %v3477, 64
      %v5141 = vpop.permute.xlu0 %5140
      %5142 = vrot.lane.b32.xlu0 %v3482, 64
      %v5143 = vpop.permute.xlu0 %5142
      %5144 = vrot.lane.b32.xlu0 %v3487, 64
      %v5145 = vpop.permute.xlu0 %5144
      %5146 = vrot.lane.b32.xlu0 %v3492, 64
      %v5147 = vpop.permute.xlu0 %5146
      %5148 = vrot.lane.b32.xlu0 %v3497, 64
      %v5149 = vpop.permute.xlu0 %5148
      %5150 = vrot.lane.b32.xlu0 %v3502, 64
      %v5151 = vpop.permute.xlu0 %5150
      %5152 = vrot.lane.b32.xlu0 %v3507, 64
      %v5153 = vpop.permute.xlu0 %5152
      %5154 = vrot.lane.b32.xlu0 %v3512, 64
      %v5155 = vpop.permute.xlu0 %5154
      %5156 = vrot.lane.b32.xlu0 %v3517, 64
      %v5157 = vpop.permute.xlu0 %5156
      %5158 = vrot.lane.b32.xlu0 %v3522, 64
      %v5159 = vpop.permute.xlu0 %5158
      %5160 = vrot.lane.b32.xlu0 %v3527, 64
      %v5161 = vpop.permute.xlu0 %5160
      %5162 = vrot.lane.b32.xlu0 %v3532, 64
      %v5163 = vpop.permute.xlu0 %5162
      %5164 = vrot.lane.b32.xlu0 %v3537, 64
      %v5165 = vpop.permute.xlu0 %5164
      %5166 = vrot.lane.b32.xlu0 %v3542, 64
      %v5167 = vpop.permute.xlu0 %5166
      %5168 = vrot.lane.b32.xlu0 %v3547, 64
      %v5169 = vpop.permute.xlu0 %5168
      %5170 = vrot.lane.b32.xlu0 %v3552, 64
      %v5171 = vpop.permute.xlu0 %5170
      %5172 = vrot.lane.b32.xlu0 %v3557, 64
      %v5173 = vpop.permute.xlu0 %5172
      %5174 = vrot.lane.b32.xlu0 %v3562, 64
      %v5175 = vpop.permute.xlu0 %5174
      %5176 = vrot.lane.b32.xlu0 %v3567, 64
      %v5177 = vpop.permute.xlu0 %5176
      %5178 = vrot.lane.b32.xlu0 %v3572, 64
      %v5179 = vpop.permute.xlu0 %5178
      %5180 = vrot.lane.b32.xlu0 %v3577, 64
      %v5181 = vpop.permute.xlu0 %5180
      %5182 = vrot.lane.b32.xlu0 %v3582, 64
      %v5183 = vpop.permute.xlu0 %5182
      %5184 = vrot.lane.b32.xlu0 %v3587, 64
      %v5185 = vpop.permute.xlu0 %5184
      %5186 = vrot.lane.b32.xlu0 %v3592, 64
      %v5187 = vpop.permute.xlu0 %5186
      %5188 = vrot.lane.b32.xlu0 %v3597, 64
      %v5189 = vpop.permute.xlu0 %5188
      %5190 = vrot.lane.b32.xlu0 %v3602, 64
      %v5191 = vpop.permute.xlu0 %5190
      %5192 = vrot.lane.b32.xlu0 %v3607, 64
      %v5193 = vpop.permute.xlu0 %5192
      %5194 = vrot.lane.b32.xlu0 %v3612, 64
      %v5195 = vpop.permute.xlu0 %5194
      %5228 = vmatprep.subr.mxu0 0.0
      %5229 = vmatpush1.msra.mxu0 %v5133
      %5230 = vmatprep.subr.mxu0 0.0
      %5231 = vmatpush1.msra.mxu0 %v5135
      %5232 = vmatprep.subr.mxu0 0.0
      %5233 = vmatpush1.msra.mxu0 %v5137
      %5234 = vmatprep.subr.mxu0 0.0
      %5235 = vmatpush1.msra.mxu0 %v5139
      %5236 = vmatprep.subr.mxu0 0.0
      %5237 = vmatpush1.msra.mxu0 %v5141
      %5238 = vmatprep.subr.mxu0 0.0
      %5239 = vmatpush1.msra.mxu0 %v5143
      %5240 = vmatprep.subr.mxu0 0.0
      %5241 = vmatpush1.msra.mxu0 %v5145
      %5242 = vmatprep.subr.mxu0 0.0
      %5243 = vmatpush1.msra.mxu0 %v5147
      %5244 = vmatprep.subr.mxu0 0.0
      %5245 = vmatpush1.msra.mxu0 %v5149
      %5246 = vmatprep.subr.mxu0 0.0
      %5247 = vmatpush1.msra.mxu0 %v5151
      %5248 = vmatprep.subr.mxu0 0.0
      %5249 = vmatpush1.msra.mxu0 %v5153
      %5250 = vmatprep.subr.mxu0 0.0
      %5251 = vmatpush1.msra.mxu0 %v5155
      %5252 = vmatprep.subr.mxu0 0.0
      %5253 = vmatpush1.msra.mxu0 %v5157
      %5254 = vmatprep.subr.mxu0 0.0
      %5255 = vmatpush1.msra.mxu0 %v5159
      %5256 = vmatprep.subr.mxu0 0.0
      %5257 = vmatpush1.msra.mxu0 %v5161
      %5258 = vmatprep.subr.mxu0 0.0
      %5259 = vmatpush1.msra.mxu0 %v5163
      %5260 = vmatprep.subr.mxu0 0.0
      %5261 = vmatpush1.msra.mxu0 %v5165
      %5262 = vmatprep.subr.mxu0 0.0
      %5263 = vmatpush1.msra.mxu0 %v5167
      %5264 = vmatprep.subr.mxu0 0.0
      %5265 = vmatpush1.msra.mxu0 %v5169
      %5266 = vmatprep.subr.mxu0 0.0
      %5267 = vmatpush1.msra.mxu0 %v5171
      %5268 = vmatprep.subr.mxu0 0.0
      %5269 = vmatpush1.msra.mxu0 %v5173
      %5270 = vmatprep.subr.mxu0 0.0
      %5271 = vmatpush1.msra.mxu0 %v5175
      %5272 = vmatprep.subr.mxu0 0.0
      %5273 = vmatpush1.msra.mxu0 %v5177
      %5274 = vmatprep.subr.mxu0 0.0
      %5275 = vmatpush1.msra.mxu0 %v5179
      %5276 = vmatprep.subr.mxu0 0.0
      %5277 = vmatpush1.msra.mxu0 %v5181
      %5278 = vmatprep.subr.mxu0 0.0
      %5279 = vmatpush1.msra.mxu0 %v5183
      %5280 = vmatprep.subr.mxu0 0.0
      %5281 = vmatpush1.msra.mxu0 %v5185
      %5282 = vmatprep.subr.mxu0 0.0
      %5283 = vmatpush1.msra.mxu0 %v5187
      %5284 = vmatprep.subr.mxu0 0.0
      %5285 = vmatpush1.msra.mxu0 %v5189
      %5286 = vmatprep.subr.mxu0 0.0
      %5287 = vmatpush1.msra.mxu0 %v5191
      %5288 = vmatprep.subr.mxu0 0.0
      %5289 = vmatpush1.msra.mxu0 %v5193
      %5290 = vmatprep.subr.mxu0 0.0
      %5291 = vmatpush1.msra.mxu0 %v5195
      %5292 = vmatprep.mubr.f32.mxu0 %v5116
      %5293 = vmatmul.mubr.f32.gmra.mrb[0].mxu0 %v5084
      %v5294 = vpop.f32.mrb[0].mxu0
      %v5295 = vadd.f32 0.0, %v5294
      %v5296 = vpop.f32.mrb[0].mxu0
      %5297 = vmatprep.mubr.f32.mxu0 %v5117
      %5298 = vmatmul.mubr.f32.gmra.mrb[0].mxu0 %v5085
      %v5299 = vpop.f32.mrb[0].mxu0
      %v5300 = vadd.f32 0.0, %v5299
      %v5301 = vpop.f32.mrb[0].mxu0
      %5302 = vmatprep.mubr.f32.mxu0 %v5118
      %5303 = vmatmul.mubr.f32.gmra.mrb[0].mxu0 %v5086
      %v5304 = vpop.f32.mrb[0].mxu0
      %v5305 = vadd.f32 0.0, %v5304
      %v5306 = vpop.f32.mrb[0].mxu0
      %5307 = vmatprep.mubr.f32.mxu0 %v5119
      %5308 = vmatmul.mubr.f32.gmra.mrb[0].mxu0 %v5087
      %v5309 = vpop.f32.mrb[0].mxu0
      %v5310 = vadd.f32 0.0, %v5309
      %v5311 = vpop.f32.mrb[0].mxu0
      %5312 = vdwg.mxu0
      %v5313 = vsel %vm3293, %v5295, -inf
      %5314 = vmax.xlane.f32.xlu0 %v5313
      %v5315 = vpop.xlane.xlu0 %5314
      %v5316 = vsel %vm3293, %v5300, -inf
      %5317 = vmax.xlane.f32.xlu0 %v5316
      %v5318 = vpop.xlane.xlu0 %5317
      %v5319 = vsel %vm3293, %v5305, -inf
      %5320 = vmax.xlane.f32.xlu0 %v5319
      %v5321 = vpop.xlane.xlu0 %5320
      %v5322 = vsel %vm3293, %v5310, -inf
      %5323 = vmax.xlane.f32.xlu0 %v5322
      %v5324 = vpop.xlane.xlu0 %5323
      %v5325 = vsub.f32 %v5295, %v5315
      %v5326 = vsub.f32 %v5300, %v5318
      %v5327 = vsub.f32 %v5305, %v5321
      %v5328 = vsub.f32 %v5310, %v5324
      %v5329 = vmul.f32 %v5325, 1.442695
      %v5330 = vpow.pop %v5329
      %v5331 = vmul.f32 %v5326, 1.442695
      %v5332 = vpow.pop %v5331
      %v5333 = vmul.f32 %v5327, 1.442695
      %v5334 = vpow.pop %v5333
      %v5335 = vmul.f32 %v5328, 1.442695
      %v5336 = vpow.pop %v5335
      %v5337 = vsel %vm3293, %v5330, 0.0
      %5338 = vadd.xlane.f32.xlu0 %v5337
      %v5339 = vpop.xlane.xlu0 %5338
      %v5340 = vsel %vm3293, %v5332, 0.0
      %5341 = vadd.xlane.f32.xlu0 %v5340
      %v5342 = vpop.xlane.xlu0 %5341
      %v5343 = vsel %vm3293, %v5334, 0.0
      %5344 = vadd.xlane.f32.xlu0 %v5343
      %v5345 = vpop.xlane.xlu0 %5344
      %v5346 = vsel %vm3293, %v5336, 0.0
      %5347 = vadd.xlane.f32.xlu0 %v5346
      %v5348 = vpop.xlane.xlu0 %5347
      %v5349 = vrcp.pop %v5339
      %v5350 = vrcp.pop %v5342
      %v5351 = vrcp.pop %v5345
      %v5352 = vrcp.pop %v5348
      %v5353 = vmul.f32 %v5330, %v5349
      %v5354 = vmul.f32 %v5332, %v5350
      %v5355 = vmul.f32 %v5334, %v5351
      %v5356 = vmul.f32 %v5336, %v5352
      %5357 = vxpose.xlu0.b32.start [1/16] %v4908, 128
      %5358 = vxpose.xlu0.b32.cont [2/16] %v4910, 128
      %5359 = vxpose.xlu0.b32.cont [3/16] %v4912, 128
      %5360 = vxpose.xlu0.b32.cont [4/16] %v4914, 128
      %5361 = vxpose.xlu0.b32.cont [5/16] %v4916, 128
      %5362 = vxpose.xlu0.b32.cont [6/16] %v4918, 128
      %5363 = vxpose.xlu0.b32.cont [7/16] %v4920, 128
      %5364 = vxpose.xlu0.b32.cont [8/16] %v4922, 128
      %5365 = vxpose.xlu0.b32.cont [9/16] %v4924, 128
      %5366 = vxpose.xlu0.b32.cont [10/16] %v4926, 128
      %5367 = vxpose.xlu0.b32.cont [11/16] %v4928, 128
      %5368 = vxpose.xlu0.b32.cont [12/16] %v4930, 128
      %5369 = vxpose.xlu0.b32.cont [13/16] %v4932, 128
      %5370 = vxpose.xlu0.b32.cont [14/16] %v4934, 128
      %5371 = vxpose.xlu0.b32.cont [15/16] %v4936, 128
      %5372 = vxpose.xlu0.b32.end [16/16] %v4938, 128
      %v5373 = vpop.trf.xlu0
      %v5374 = vpop.trf.xlu0
      %v5375 = vpop.trf.xlu0
      %v5376 = vpop.trf.xlu0
      %v5377 = vpop.trf.xlu0
      %v5378 = vpop.trf.xlu0
      %v5379 = vpop.trf.xlu0
      %v5380 = vpop.trf.xlu0
      %v5381 = vpop.trf.xlu0
      %v5382 = vpop.trf.xlu0
      %v5383 = vpop.trf.xlu0
      %v5384 = vpop.trf.xlu0
      %v5385 = vpop.trf.xlu0
      %v5386 = vpop.trf.xlu0
      %v5387 = vpop.trf.xlu0
      %v5388 = vpop.trf.xlu0
      %5389 = vxpose.xlu0.b32.start [1/16] %v4909, 128
      %5390 = vxpose.xlu0.b32.cont [2/16] %v4911, 128
      %5391 = vxpose.xlu0.b32.cont [3/16] %v4913, 128
      %5392 = vxpose.xlu0.b32.cont [4/16] %v4915, 128
      %5393 = vxpose.xlu0.b32.cont [5/16] %v4917, 128
      %5394 = vxpose.xlu0.b32.cont [6/16] %v4919, 128
      %5395 = vxpose.xlu0.b32.cont [7/16] %v4921, 128
      %5396 = vxpose.xlu0.b32.cont [8/16] %v4923, 128
      %5397 = vxpose.xlu0.b32.cont [9/16] %v4925, 128
      %5398 = vxpose.xlu0.b32.cont [10/16] %v4927, 128
      %5399 = vxpose.xlu0.b32.cont [11/16] %v4929, 128
      %5400 = vxpose.xlu0.b32.cont [12/16] %v4931, 128
      %5401 = vxpose.xlu0.b32.cont [13/16] %v4933, 128
      %5402 = vxpose.xlu0.b32.cont [14/16] %v4935, 128
      %5403 = vxpose.xlu0.b32.cont [15/16] %v4937, 128
      %5404 = vxpose.xlu0.b32.end [16/16] %v4939, 128
      %v5405 = vpop.trf.xlu0
      %v5406 = vpop.trf.xlu0
      %v5407 = vpop.trf.xlu0
      %v5408 = vpop.trf.xlu0
      %v5409 = vpop.trf.xlu0
      %v5410 = vpop.trf.xlu0
      %v5411 = vpop.trf.xlu0
      %v5412 = vpop.trf.xlu0
      %v5413 = vpop.trf.xlu0
      %v5414 = vpop.trf.xlu0
      %v5415 = vpop.trf.xlu0
      %v5416 = vpop.trf.xlu0
      %v5417 = vpop.trf.xlu0
      %v5418 = vpop.trf.xlu0
      %v5419 = vpop.trf.xlu0
      %v5420 = vpop.trf.xlu0
      %5421 = vxpose.xlu0.b32.start [1/16] %v4940, 128
      %5422 = vxpose.xlu0.b32.cont [2/16] %v4942, 128
      %5423 = vxpose.xlu0.b32.cont [3/16] %v4944, 128
      %5424 = vxpose.xlu0.b32.cont [4/16] %v4946, 128
      %5425 = vxpose.xlu0.b32.cont [5/16] %v4948, 128
      %5426 = vxpose.xlu0.b32.cont [6/16] %v4950, 128
      %5427 = vxpose.xlu0.b32.cont [7/16] %v4952, 128
      %5428 = vxpose.xlu0.b32.cont [8/16] %v4954, 128
      %5429 = vxpose.xlu0.b32.cont [9/16] %v4956, 128
      %5430 = vxpose.xlu0.b32.cont [10/16] %v4958, 128
      %5431 = vxpose.xlu0.b32.cont [11/16] %v4960, 128
      %5432 = vxpose.xlu0.b32.cont [12/16] %v4962, 128
      %5433 = vxpose.xlu0.b32.cont [13/16] %v4964, 128
      %5434 = vxpose.xlu0.b32.cont [14/16] %v4966, 128
      %5435 = vxpose.xlu0.b32.cont [15/16] %v4968, 128
      %5436 = vxpose.xlu0.b32.end [16/16] %v4970, 128
      %v5437 = vpop.trf.xlu0
      %v5438 = vpop.trf.xlu0
      %v5439 = vpop.trf.xlu0
      %v5440 = vpop.trf.xlu0
      %v5441 = vpop.trf.xlu0
      %v5442 = vpop.trf.xlu0
      %v5443 = vpop.trf.xlu0
      %v5444 = vpop.trf.xlu0
      %v5445 = vpop.trf.xlu0
      %v5446 = vpop.trf.xlu0
      %v5447 = vpop.trf.xlu0
      %v5448 = vpop.trf.xlu0
      %v5449 = vpop.trf.xlu0
      %v5450 = vpop.trf.xlu0
      %v5451 = vpop.trf.xlu0
      %v5452 = vpop.trf.xlu0
      %5453 = vxpose.xlu0.b32.start [1/16] %v4941, 128
      %5454 = vxpose.xlu0.b32.cont [2/16] %v4943, 128
      %5455 = vxpose.xlu0.b32.cont [3/16] %v4945, 128
      %5456 = vxpose.xlu0.b32.cont [4/16] %v4947, 128
      %5457 = vxpose.xlu0.b32.cont [5/16] %v4949, 128
      %5458 = vxpose.xlu0.b32.cont [6/16] %v4951, 128
      %5459 = vxpose.xlu0.b32.cont [7/16] %v4953, 128
      %5460 = vxpose.xlu0.b32.cont [8/16] %v4955, 128
      %5461 = vxpose.xlu0.b32.cont [9/16] %v4957, 128
      %5462 = vxpose.xlu0.b32.cont [10/16] %v4959, 128
      %5463 = vxpose.xlu0.b32.cont [11/16] %v4961, 128
      %5464 = vxpose.xlu0.b32.cont [12/16] %v4963, 128
      %5465 = vxpose.xlu0.b32.cont [13/16] %v4965, 128
      %5466 = vxpose.xlu0.b32.cont [14/16] %v4967, 128
      %5467 = vxpose.xlu0.b32.cont [15/16] %v4969, 128
      %5468 = vxpose.xlu0.b32.end [16/16] %v4971, 128
      %v5469 = vpop.trf.xlu0
      %v5470 = vpop.trf.xlu0
      %v5471 = vpop.trf.xlu0
      %v5472 = vpop.trf.xlu0
      %v5473 = vpop.trf.xlu0
      %v5474 = vpop.trf.xlu0
      %v5475 = vpop.trf.xlu0
      %v5476 = vpop.trf.xlu0
      %v5477 = vpop.trf.xlu0
      %v5478 = vpop.trf.xlu0
      %v5479 = vpop.trf.xlu0
      %v5480 = vpop.trf.xlu0
      %v5481 = vpop.trf.xlu0
      %v5482 = vpop.trf.xlu0
      %v5483 = vpop.trf.xlu0
      %v5484 = vpop.trf.xlu0
      %5485 = vmatprep.subr.mxu0 0.0
      %5486 = vmatpush1.msra.mxu0 %v3853
      %5487 = vmatprep.subr.mxu0 0.0
      %5488 = vmatpush1.msra.mxu0 %v3858
      %5489 = vmatprep.subr.mxu0 0.0
      %5490 = vmatpush1.msra.mxu0 %v3863
      %5491 = vmatprep.subr.mxu0 0.0
      %5492 = vmatpush1.msra.mxu0 %v3868
      %5493 = vmatprep.subr.mxu0 0.0
      %5494 = vmatpush1.msra.mxu0 %v3873
      %5495 = vmatprep.subr.mxu0 0.0
      %5496 = vmatpush1.msra.mxu0 %v3878
      %5497 = vmatprep.subr.mxu0 0.0
      %5498 = vmatpush1.msra.mxu0 %v3883
      %5499 = vmatprep.subr.mxu0 0.0
      %5500 = vmatpush1.msra.mxu0 %v3888
      %5501 = vmatprep.subr.mxu0 0.0
      %5502 = vmatpush1.msra.mxu0 %v3893
      %5503 = vmatprep.subr.mxu0 0.0
      %5504 = vmatpush1.msra.mxu0 %v3898
      %5505 = vmatprep.subr.mxu0 0.0
      %5506 = vmatpush1.msra.mxu0 %v3903
      %5507 = vmatprep.subr.mxu0 0.0
      %5508 = vmatpush1.msra.mxu0 %v3908
      %5509 = vmatprep.subr.mxu0 0.0
      %5510 = vmatpush1.msra.mxu0 %v3913
      %5511 = vmatprep.subr.mxu0 0.0
      %5512 = vmatpush1.msra.mxu0 %v3918
      %5513 = vmatprep.subr.mxu0 0.0
      %5514 = vmatpush1.msra.mxu0 %v3923
      %5515 = vmatprep.subr.mxu0 0.0
      %5516 = vmatpush1.msra.mxu0 %v3928
      %5517 = vmatprep.subr.mxu0 0.0
      %5518 = vmatpush1.msra.mxu0 %v3933
      %5519 = vmatprep.subr.mxu0 0.0
      %5520 = vmatpush1.msra.mxu0 %v3938
      %5521 = vmatprep.subr.mxu0 0.0
      %5522 = vmatpush1.msra.mxu0 %v3943
      %5523 = vmatprep.subr.mxu0 0.0
      %5524 = vmatpush1.msra.mxu0 %v3948
      %5525 = vmatprep.subr.mxu0 0.0
      %5526 = vmatpush1.msra.mxu0 %v3953
      %5527 = vmatprep.subr.mxu0 0.0
      %5528 = vmatpush1.msra.mxu0 %v3958
      %5529 = vmatprep.subr.mxu0 0.0
      %5530 = vmatpush1.msra.mxu0 %v3963
      %5531 = vmatprep.subr.mxu0 0.0
      %5532 = vmatpush1.msra.mxu0 %v3968
      %5533 = vmatprep.subr.mxu0 0.0
      %5534 = vmatpush1.msra.mxu0 %v3973
      %5535 = vmatprep.subr.mxu0 0.0
      %5536 = vmatpush1.msra.mxu0 %v3978
      %5537 = vmatprep.subr.mxu0 0.0
      %5538 = vmatpush1.msra.mxu0 %v3983
      %5539 = vmatprep.subr.mxu0 0.0
      %5540 = vmatpush1.msra.mxu0 %v3988
      %5541 = vmatprep.subr.mxu0 0.0
      %5542 = vmatpush1.msra.mxu0 %v3993
      %5543 = vmatprep.subr.mxu0 0.0
      %5544 = vmatpush1.msra.mxu0 %v3998
      %5545 = vmatprep.subr.mxu0 0.0
      %5546 = vmatpush1.msra.mxu0 %v4003
      %5547 = vmatprep.subr.mxu0 0.0
      %5548 = vmatpush1.msra.mxu0 %v4008
      %5549 = vmatprep.mubr.f32.mxu0 %v5437
      %5550 = vmatmul.mubr.f32.gmra.mrb[0].mxu0 %v5373
      %v5551 = vpop.f32.mrb[0].mxu0
      %v5552 = vadd.f32 0.0, %v5551
      %v5553 = vpop.f32.mrb[0].mxu0
      %5554 = vmatprep.mubr.f32.mxu0 %v5438
      %5555 = vmatmul.mubr.f32.gmra.mrb[0].mxu0 %v5374
      %v5556 = vpop.f32.mrb[0].mxu0
      %v5557 = vadd.f32 0.0, %v5556
      %v5558 = vpop.f32.mrb[0].mxu0
      %5559 = vmatprep.mubr.f32.mxu0 %v5439
      %5560 = vmatmul.mubr.f32.gmra.mrb[0].mxu0 %v5375
      %v5561 = vpop.f32.mrb[0].mxu0
      %v5562 = vadd.f32 0.0, %v5561
      %v5563 = vpop.f32.mrb[0].mxu0
      %5564 = vmatprep.mubr.f32.mxu0 %v5440
      %5565 = vmatmul.mubr.f32.gmra.mrb[0].mxu0 %v5376
      %v5566 = vpop.f32.mrb[0].mxu0
      %v5567 = vadd.f32 0.0, %v5566
      %v5568 = vpop.f32.mrb[0].mxu0
      %5569 = vmatprep.mubr.f32.mxu0 %v5441
      %5570 = vmatmul.mubr.f32.gmra.mrb[0].mxu0 %v5377
      %v5571 = vpop.f32.mrb[0].mxu0
      %v5572 = vadd.f32 0.0, %v5571
      %v5573 = vpop.f32.mrb[0].mxu0
      %5574 = vmatprep.mubr.f32.mxu0 %v5442
      %5575 = vmatmul.mubr.f32.gmra.mrb[0].mxu0 %v5378
      %v5576 = vpop.f32.mrb[0].mxu0
      %v5577 = vadd.f32 0.0, %v5576
      %v5578 = vpop.f32.mrb[0].mxu0
      %5579 = vmatprep.mubr.f32.mxu0 %v5443
      %5580 = vmatmul.mubr.f32.gmra.mrb[0].mxu0 %v5379
      %v5581 = vpop.f32.mrb[0].mxu0
      %v5582 = vadd.f32 0.0, %v5581
      %v5583 = vpop.f32.mrb[0].mxu0
      %5584 = vmatprep.mubr.f32.mxu0 %v5444
      %5585 = vmatmul.mubr.f32.gmra.mrb[0].mxu0 %v5380
      %v5586 = vpop.f32.mrb[0].mxu0
      %v5587 = vadd.f32 0.0, %v5586
      %v5588 = vpop.f32.mrb[0].mxu0
      %5589 = vmatprep.mubr.f32.mxu0 %v5445
      %5590 = vmatmul.mubr.f32.gmra.mrb[0].mxu0 %v5381
      %v5591 = vpop.f32.mrb[0].mxu0
      %v5592 = vadd.f32 0.0, %v5591
      %v5593 = vpop.f32.mrb[0].mxu0
      %5594 = vmatprep.mubr.f32.mxu0 %v5446
      %5595 = vmatmul.mubr.f32.gmra.mrb[0].mxu0 %v5382
      %v5596 = vpop.f32.mrb[0].mxu0
      %v5597 = vadd.f32 0.0, %v5596
      %v5598 = vpop.f32.mrb[0].mxu0
      %5599 = vmatprep.mubr.f32.mxu0 %v5447
      %5600 = vmatmul.mubr.f32.gmra.mrb[0].mxu0 %v5383
      %v5601 = vpop.f32.mrb[0].mxu0
      %v5602 = vadd.f32 0.0, %v5601
      %v5603 = vpop.f32.mrb[0].mxu0
      %5604 = vmatprep.mubr.f32.mxu0 %v5448
      %5605 = vmatmul.mubr.f32.gmra.mrb[0].mxu0 %v5384
      %v5606 = vpop.f32.mrb[0].mxu0
      %v5607 = vadd.f32 0.0, %v5606
      %v5608 = vpop.f32.mrb[0].mxu0
      %5609 = vmatprep.mubr.f32.mxu0 %v5449
      %5610 = vmatmul.mubr.f32.gmra.mrb[0].mxu0 %v5385
      %v5611 = vpop.f32.mrb[0].mxu0
      %v5612 = vadd.f32 0.0, %v5611
      %v5613 = vpop.f32.mrb[0].mxu0
      %5614 = vmatprep.mubr.f32.mxu0 %v5450
      %5615 = vmatmul.mubr.f32.gmra.mrb[0].mxu0 %v5386
      %v5616 = vpop.f32.mrb[0].mxu0
      %v5617 = vadd.f32 0.0, %v5616
      %v5618 = vpop.f32.mrb[0].mxu0
      %5619 = vmatprep.mubr.f32.mxu0 %v5451
      %5620 = vmatmul.mubr.f32.gmra.mrb[0].mxu0 %v5387
      %v5621 = vpop.f32.mrb[0].mxu0
      %v5622 = vadd.f32 0.0, %v5621
      %v5623 = vpop.f32.mrb[0].mxu0
      %5624 = vmatprep.mubr.f32.mxu0 %v5452
      %5625 = vmatmul.mubr.f32.gmra.mrb[0].mxu0 %v5388
      %v5626 = vpop.f32.mrb[0].mxu0
      %v5627 = vadd.f32 0.0, %v5626
      %v5628 = vpop.f32.mrb[0].mxu0
      %5629 = vmatprep.mubr.f32.mxu0 %v5469
      %5630 = vmatmul.mubr.f32.gmra.mrb[0].mxu0 %v5405
      %v5631 = vpop.f32.mrb[0].mxu0
      %v5632 = vadd.f32 0.0, %v5631
      %v5633 = vpop.f32.mrb[0].mxu0
      %5634 = vmatprep.mubr.f32.mxu0 %v5470
      %5635 = vmatmul.mubr.f32.gmra.mrb[0].mxu0 %v5406
      %v5636 = vpop.f32.mrb[0].mxu0
      %v5637 = vadd.f32 0.0, %v5636
      %v5638 = vpop.f32.mrb[0].mxu0
      %5639 = vmatprep.mubr.f32.mxu0 %v5471
      %5640 = vmatmul.mubr.f32.gmra.mrb[0].mxu0 %v5407
      %v5641 = vpop.f32.mrb[0].mxu0
      %v5642 = vadd.f32 0.0, %v5641
      %v5643 = vpop.f32.mrb[0].mxu0
      %5644 = vmatprep.mubr.f32.mxu0 %v5472
      %5645 = vmatmul.mubr.f32.gmra.mrb[0].mxu0 %v5408
      %v5646 = vpop.f32.mrb[0].mxu0
      %v5647 = vadd.f32 0.0, %v5646
      %v5648 = vpop.f32.mrb[0].mxu0
      %5649 = vmatprep.mubr.f32.mxu0 %v5473
      %5650 = vmatmul.mubr.f32.gmra.mrb[0].mxu0 %v5409
      %v5651 = vpop.f32.mrb[0].mxu0
      %v5652 = vadd.f32 0.0, %v5651
      %v5653 = vpop.f32.mrb[0].mxu0
      %5654 = vmatprep.mubr.f32.mxu0 %v5474
      %5655 = vmatmul.mubr.f32.gmra.mrb[0].mxu0 %v5410
      %v5656 = vpop.f32.mrb[0].mxu0
      %v5657 = vadd.f32 0.0, %v5656
      %v5658 = vpop.f32.mrb[0].mxu0
      %5659 = vmatprep.mubr.f32.mxu0 %v5475
      %5660 = vmatmul.mubr.f32.gmra.mrb[0].mxu0 %v5411
      %v5661 = vpop.f32.mrb[0].mxu0
      %v5662 = vadd.f32 0.0, %v5661
      %v5663 = vpop.f32.mrb[0].mxu0
      %5664 = vmatprep.mubr.f32.mxu0 %v5476
      %5665 = vmatmul.mubr.f32.gmra.mrb[0].mxu0 %v5412
      %v5666 = vpop.f32.mrb[0].mxu0
      %v5667 = vadd.f32 0.0, %v5666
      %v5668 = vpop.f32.mrb[0].mxu0
      %5669 = vmatprep.mubr.f32.mxu0 %v5477
      %5670 = vmatmul.mubr.f32.gmra.mrb[0].mxu0 %v5413
      %v5671 = vpop.f32.mrb[0].mxu0
      %v5672 = vadd.f32 0.0, %v5671
      %v5673 = vpop.f32.mrb[0].mxu0
      %5674 = vmatprep.mubr.f32.mxu0 %v5478
      %5675 = vmatmul.mubr.f32.gmra.mrb[0].mxu0 %v5414
      %v5676 = vpop.f32.mrb[0].mxu0
      %v5677 = vadd.f32 0.0, %v5676
      %v5678 = vpop.f32.mrb[0].mxu0
      %5679 = vmatprep.mubr.f32.mxu0 %v5479
      %5680 = vmatmul.mubr.f32.gmra.mrb[0].mxu0 %v5415
      %v5681 = vpop.f32.mrb[0].mxu0
      %v5682 = vadd.f32 0.0, %v5681
      %v5683 = vpop.f32.mrb[0].mxu0
      %5684 = vmatprep.mubr.f32.mxu0 %v5480
      %5685 = vmatmul.mubr.f32.gmra.mrb[0].mxu0 %v5416
      %v5686 = vpop.f32.mrb[0].mxu0
      %v5687 = vadd.f32 0.0, %v5686
      %v5688 = vpop.f32.mrb[0].mxu0
      %5689 = vmatprep.mubr.f32.mxu0 %v5481
      %5690 = vmatmul.mubr.f32.gmra.mrb[0].mxu0 %v5417
      %v5691 = vpop.f32.mrb[0].mxu0
      %v5692 = vadd.f32 0.0, %v5691
      %v5693 = vpop.f32.mrb[0].mxu0
      %5694 = vmatprep.mubr.f32.mxu0 %v5482
      %5695 = vmatmul.mubr.f32.gmra.mrb[0].mxu0 %v5418
      %v5696 = vpop.f32.mrb[0].mxu0
      %v5697 = vadd.f32 0.0, %v5696
      %v5698 = vpop.f32.mrb[0].mxu0
      %5699 = vmatprep.mubr.f32.mxu0 %v5483
      %5700 = vmatmul.mubr.f32.gmra.mrb[0].mxu0 %v5419
      %v5701 = vpop.f32.mrb[0].mxu0
      %v5702 = vadd.f32 0.0, %v5701
      %v5703 = vpop.f32.mrb[0].mxu0
      %5704 = vmatprep.mubr.f32.mxu0 %v5484
      %5705 = vmatmul.mubr.f32.gmra.mrb[0].mxu0 %v5420
      %v5706 = vpop.f32.mrb[0].mxu0
      %v5707 = vadd.f32 0.0, %v5706
      %v5708 = vpop.f32.mrb[0].mxu0
      %5709 = vdwg.mxu0
      %5742 = vrot.lane.b32.xlu0 %v3853, 96
      %v5743 = vpop.permute.xlu0 %5742
      %5744 = vrot.lane.b32.xlu0 %v3858, 96
      %v5745 = vpop.permute.xlu0 %5744
      %5746 = vrot.lane.b32.xlu0 %v3863, 96
      %v5747 = vpop.permute.xlu0 %5746
      %5748 = vrot.lane.b32.xlu0 %v3868, 96
      %v5749 = vpop.permute.xlu0 %5748
      %5750 = vrot.lane.b32.xlu0 %v3873, 96
      %v5751 = vpop.permute.xlu0 %5750
      %5752 = vrot.lane.b32.xlu0 %v3878, 96
      %v5753 = vpop.permute.xlu0 %5752
      %5754 = vrot.lane.b32.xlu0 %v3883, 96
      %v5755 = vpop.permute.xlu0 %5754
      %5756 = vrot.lane.b32.xlu0 %v3888, 96
      %v5757 = vpop.permute.xlu0 %5756
      %5758 = vrot.lane.b32.xlu0 %v3893, 96
      %v5759 = vpop.permute.xlu0 %5758
      %5760 = vrot.lane.b32.xlu0 %v3898, 96
      %v5761 = vpop.permute.xlu0 %5760
      %5762 = vrot.lane.b32.xlu0 %v3903, 96
      %v5763 = vpop.permute.xlu0 %5762
      %5764 = vrot.lane.b32.xlu0 %v3908, 96
      %v5765 = vpop.permute.xlu0 %5764
      %5766 = vrot.lane.b32.xlu0 %v3913, 96
      %v5767 = vpop.permute.xlu0 %5766
      %5768 = vrot.lane.b32.xlu0 %v3918, 96
      %v5769 = vpop.permute.xlu0 %5768
      %5770 = vrot.lane.b32.xlu0 %v3923, 96
      %v5771 = vpop.permute.xlu0 %5770
      %5772 = vrot.lane.b32.xlu0 %v3928, 96
      %v5773 = vpop.permute.xlu0 %5772
      %5774 = vrot.lane.b32.xlu0 %v3933, 96
      %v5775 = vpop.permute.xlu0 %5774
      %5776 = vrot.lane.b32.xlu0 %v3938, 96
      %v5777 = vpop.permute.xlu0 %5776
      %5778 = vrot.lane.b32.xlu0 %v3943, 96
      %v5779 = vpop.permute.xlu0 %5778
      %5780 = vrot.lane.b32.xlu0 %v3948, 96
      %v5781 = vpop.permute.xlu0 %5780
      %5782 = vrot.lane.b32.xlu0 %v3953, 96
      %v5783 = vpop.permute.xlu0 %5782
      %5784 = vrot.lane.b32.xlu0 %v3958, 96
      %v5785 = vpop.permute.xlu0 %5784
      %5786 = vrot.lane.b32.xlu0 %v3963, 96
      %v5787 = vpop.permute.xlu0 %5786
      %5788 = vrot.lane.b32.xlu0 %v3968, 96
      %v5789 = vpop.permute.xlu0 %5788
      %5790 = vrot.lane.b32.xlu0 %v3973, 96
      %v5791 = vpop.permute.xlu0 %5790
      %5792 = vrot.lane.b32.xlu0 %v3978, 96
      %v5793 = vpop.permute.xlu0 %5792
      %5794 = vrot.lane.b32.xlu0 %v3983, 96
      %v5795 = vpop.permute.xlu0 %5794
      %5796 = vrot.lane.b32.xlu0 %v3988, 96
      %v5797 = vpop.permute.xlu0 %5796
      %5798 = vrot.lane.b32.xlu0 %v3993, 96
      %v5799 = vpop.permute.xlu0 %5798
      %5800 = vrot.lane.b32.xlu0 %v3998, 96
      %v5801 = vpop.permute.xlu0 %5800
      %5802 = vrot.lane.b32.xlu0 %v4003, 96
      %v5803 = vpop.permute.xlu0 %5802
      %5804 = vrot.lane.b32.xlu0 %v4008, 96
      %v5805 = vpop.permute.xlu0 %5804
      %v5806 = vsel %vm3293, %v5743, 0
      %v5808 = vsel %vm3293, %v5745, 0
      %v5810 = vsel %vm3293, %v5747, 0
      %v5812 = vsel %vm3293, %v5749, 0
      %v5814 = vsel %vm3293, %v5751, 0
      %v5816 = vsel %vm3293, %v5753, 0
      %v5818 = vsel %vm3293, %v5755, 0
      %v5820 = vsel %vm3293, %v5757, 0
      %v5822 = vsel %vm3293, %v5759, 0
      %v5824 = vsel %vm3293, %v5761, 0
      %v5826 = vsel %vm3293, %v5763, 0
      %v5828 = vsel %vm3293, %v5765, 0
      %v5830 = vsel %vm3293, %v5767, 0
      %v5832 = vsel %vm3293, %v5769, 0
      %v5834 = vsel %vm3293, %v5771, 0
      %v5836 = vsel %vm3293, %v5773, 0
      %v5838 = vsel %vm3293, %v5775, 0
      %v5840 = vsel %vm3293, %v5777, 0
      %v5842 = vsel %vm3293, %v5779, 0
      %v5844 = vsel %vm3293, %v5781, 0
      %v5846 = vsel %vm3293, %v5783, 0
      %v5848 = vsel %vm3293, %v5785, 0
      %v5850 = vsel %vm3293, %v5787, 0
      %v5852 = vsel %vm3293, %v5789, 0
      %v5854 = vsel %vm3293, %v5791, 0
      %v5856 = vsel %vm3293, %v5793, 0
      %v5858 = vsel %vm3293, %v5795, 0
      %v5860 = vsel %vm3293, %v5797, 0
      %v5862 = vsel %vm3293, %v5799, 0
      %v5864 = vsel %vm3293, %v5801, 0
      %v5866 = vsel %vm3293, %v5803, 0
      %v5868 = vsel %vm3293, %v5805, 0
      %5870 = vmatprep.subr.mxu0 0.0
      %5871 = vmatpush1.msra.mxu0 %v5353
      %5872 = vmatprep.subr.mxu0 0.0
      %5873 = vmatpush1.msra.mxu0 %v5354
      %5874 = vmatprep.subr.mxu0 0.0
      %5875 = vmatpush1.msra.mxu0 %v5355
      %5876 = vmatprep.subr.mxu0 0.0
      %5877 = vmatpush1.msra.mxu0 %v5356
      %5878 = vmatprep.subr.mxu0 0.0
      %5879 = vmatpush1.msra.mxu0 0.0
      %5880 = vmatprep.subr.mxu0 0.0
      %5881 = vmatpush1.msra.mxu0 0.0
      %5882 = vmatprep.subr.mxu0 0.0
      %5883 = vmatpush1.msra.mxu0 0.0
      %5884 = vmatprep.subr.mxu0 0.0
      %5885 = vmatpush1.msra.mxu0 0.0
      %5886 = vmatprep.subr.mxu0 0.0
      %5887 = vmatpush1.msra.mxu0 0.0
      %5888 = vmatprep.subr.mxu0 0.0
      %5889 = vmatpush1.msra.mxu0 0.0
      %5890 = vmatprep.subr.mxu0 0.0
      %5891 = vmatpush1.msra.mxu0 0.0
      %5892 = vmatprep.subr.mxu0 0.0
      %5893 = vmatpush1.msra.mxu0 0.0
      %5894 = vmatprep.subr.mxu0 0.0
      %5895 = vmatpush1.msra.mxu0 0.0
      %5896 = vmatprep.subr.mxu0 0.0
      %5897 = vmatpush1.msra.mxu0 0.0
      %5898 = vmatprep.subr.mxu0 0.0
      %5899 = vmatpush1.msra.mxu0 0.0
      %5900 = vmatprep.subr.mxu0 0.0
      %5901 = vmatpush1.msra.mxu0 0.0
      %5902 = vmatprep.subr.mxu0 0.0
      %5903 = vmatpush1.msra.mxu0 0.0
      %5904 = vmatprep.subr.mxu0 0.0
      %5905 = vmatpush1.msra.mxu0 0.0
      %5906 = vmatprep.subr.mxu0 0.0
      %5907 = vmatpush1.msra.mxu0 0.0
      %5908 = vmatprep.subr.mxu0 0.0
      %5909 = vmatpush1.msra.mxu0 0.0
      %5910 = vmatprep.subr.mxu0 0.0
      %5911 = vmatpush1.msra.mxu0 0.0
      %5912 = vmatprep.subr.mxu0 0.0
      %5913 = vmatpush1.msra.mxu0 0.0
      %5914 = vmatprep.subr.mxu0 0.0
      %5915 = vmatpush1.msra.mxu0 0.0
      %5916 = vmatprep.subr.mxu0 0.0
      %5917 = vmatpush1.msra.mxu0 0.0
      %5918 = vmatprep.subr.mxu0 0.0
      %5919 = vmatpush1.msra.mxu0 0.0
      %5920 = vmatprep.subr.mxu0 0.0
      %5921 = vmatpush1.msra.mxu0 0.0
      %5922 = vmatprep.subr.mxu0 0.0
      %5923 = vmatpush1.msra.mxu0 0.0
      %5924 = vmatprep.subr.mxu0 0.0
      %5925 = vmatpush1.msra.mxu0 0.0
      %5926 = vmatprep.subr.mxu0 0.0
      %5927 = vmatpush1.msra.mxu0 0.0
      %5928 = vmatprep.subr.mxu0 0.0
      %5929 = vmatpush1.msra.mxu0 0.0
      %5930 = vmatprep.subr.mxu0 0.0
      %5931 = vmatpush1.msra.mxu0 0.0
      %5932 = vmatprep.subr.mxu0 0.0
      %5933 = vmatpush1.msra.mxu0 0.0
      %5934 = vmatprep.mubr.f32.mxu0 0.0
      %5935 = vmatmul.mubr.f32.gmra.mrb[0].mxu0 %v5806
      %v5936 = vpop.f32.mrb[0].mxu0
      %v5937 = vadd.f32 0.0, %v5936
      %v5938 = vpop.f32.mrb[0].mxu0
      %5939 = vmatprep.mubr.f32.mxu0 0.0
      %5940 = vmatmul.mubr.f32.gmra.mrb[0].mxu0 %v5808
      %v5941 = vpop.f32.mrb[0].mxu0
      %v5942 = vadd.f32 0.0, %v5941
      %v5943 = vpop.f32.mrb[0].mxu0
      %5944 = vmatprep.mubr.f32.mxu0 0.0
      %5945 = vmatmul.mubr.f32.gmra.mrb[0].mxu0 %v5810
      %v5946 = vpop.f32.mrb[0].mxu0
      %v5947 = vadd.f32 0.0, %v5946
      %v5948 = vpop.f32.mrb[0].mxu0
      %5949 = vmatprep.mubr.f32.mxu0 0.0
      %5950 = vmatmul.mubr.f32.gmra.mrb[0].mxu0 %v5812
      %v5951 = vpop.f32.mrb[0].mxu0
      %v5952 = vadd.f32 0.0, %v5951
      %v5953 = vpop.f32.mrb[0].mxu0
      %5954 = vmatprep.mubr.f32.mxu0 0.0
      %5955 = vmatmul.mubr.f32.gmra.mrb[0].mxu0 %v5814
      %v5956 = vpop.f32.mrb[0].mxu0
      %v5957 = vadd.f32 0.0, %v5956
      %v5958 = vpop.f32.mrb[0].mxu0
      %5959 = vmatprep.mubr.f32.mxu0 0.0
      %5960 = vmatmul.mubr.f32.gmra.mrb[0].mxu0 %v5816
      %v5961 = vpop.f32.mrb[0].mxu0
      %v5962 = vadd.f32 0.0, %v5961
      %v5963 = vpop.f32.mrb[0].mxu0
      %5964 = vmatprep.mubr.f32.mxu0 0.0
      %5965 = vmatmul.mubr.f32.gmra.mrb[0].mxu0 %v5818
      %v5966 = vpop.f32.mrb[0].mxu0
      %v5967 = vadd.f32 0.0, %v5966
      %v5968 = vpop.f32.mrb[0].mxu0
      %5969 = vmatprep.mubr.f32.mxu0 0.0
      %5970 = vmatmul.mubr.f32.gmra.mrb[0].mxu0 %v5820
      %v5971 = vpop.f32.mrb[0].mxu0
      %v5972 = vadd.f32 0.0, %v5971
      %v5973 = vpop.f32.mrb[0].mxu0
      %5974 = vmatprep.mubr.f32.mxu0 0.0
      %5975 = vmatmul.mubr.f32.gmra.mrb[0].mxu0 %v5822
      %v5976 = vpop.f32.mrb[0].mxu0
      %v5977 = vadd.f32 0.0, %v5976
      %v5978 = vpop.f32.mrb[0].mxu0
      %5979 = vmatprep.mubr.f32.mxu0 0.0
      %5980 = vmatmul.mubr.f32.gmra.mrb[0].mxu0 %v5824
      %v5981 = vpop.f32.mrb[0].mxu0
      %v5982 = vadd.f32 0.0, %v5981
      %v5983 = vpop.f32.mrb[0].mxu0
      %5984 = vmatprep.mubr.f32.mxu0 0.0
      %5985 = vmatmul.mubr.f32.gmra.mrb[0].mxu0 %v5826
      %v5986 = vpop.f32.mrb[0].mxu0
      %v5987 = vadd.f32 0.0, %v5986
      %v5988 = vpop.f32.mrb[0].mxu0
      %5989 = vmatprep.mubr.f32.mxu0 0.0
      %5990 = vmatmul.mubr.f32.gmra.mrb[0].mxu0 %v5828
      %v5991 = vpop.f32.mrb[0].mxu0
      %v5992 = vadd.f32 0.0, %v5991
      %v5993 = vpop.f32.mrb[0].mxu0
      %5994 = vmatprep.mubr.f32.mxu0 0.0
      %5995 = vmatmul.mubr.f32.gmra.mrb[0].mxu0 %v5830
      %v5996 = vpop.f32.mrb[0].mxu0
      %v5997 = vadd.f32 0.0, %v5996
      %v5998 = vpop.f32.mrb[0].mxu0
      %5999 = vmatprep.mubr.f32.mxu0 0.0
      %6000 = vmatmul.mubr.f32.gmra.mrb[0].mxu0 %v5832
      %v6001 = vpop.f32.mrb[0].mxu0
      %v6002 = vadd.f32 0.0, %v6001
      %v6003 = vpop.f32.mrb[0].mxu0
      %6004 = vmatprep.mubr.f32.mxu0 0.0
      %6005 = vmatmul.mubr.f32.gmra.mrb[0].mxu0 %v5834
      %v6006 = vpop.f32.mrb[0].mxu0
      %v6007 = vadd.f32 0.0, %v6006
      %v6008 = vpop.f32.mrb[0].mxu0
      %6009 = vmatprep.mubr.f32.mxu0 0.0
      %6010 = vmatmul.mubr.f32.gmra.mrb[0].mxu0 %v5836
      %v6011 = vpop.f32.mrb[0].mxu0
      %v6012 = vadd.f32 0.0, %v6011
      %v6013 = vpop.f32.mrb[0].mxu0
      %6014 = vmatprep.mubr.f32.mxu0 0.0
      %6015 = vmatmul.mubr.f32.gmra.mrb[0].mxu0 %v5838
      %v6016 = vpop.f32.mrb[0].mxu0
      %v6017 = vadd.f32 0.0, %v6016
      %v6018 = vpop.f32.mrb[0].mxu0
      %6019 = vmatprep.mubr.f32.mxu0 0.0
      %6020 = vmatmul.mubr.f32.gmra.mrb[0].mxu0 %v5840
      %v6021 = vpop.f32.mrb[0].mxu0
      %v6022 = vadd.f32 0.0, %v6021
      %v6023 = vpop.f32.mrb[0].mxu0
      %6024 = vmatprep.mubr.f32.mxu0 0.0
      %6025 = vmatmul.mubr.f32.gmra.mrb[0].mxu0 %v5842
      %v6026 = vpop.f32.mrb[0].mxu0
      %v6027 = vadd.f32 0.0, %v6026
      %v6028 = vpop.f32.mrb[0].mxu0
      %6029 = vmatprep.mubr.f32.mxu0 0.0
      %6030 = vmatmul.mubr.f32.gmra.mrb[0].mxu0 %v5844
      %v6031 = vpop.f32.mrb[0].mxu0
      %v6032 = vadd.f32 0.0, %v6031
      %v6033 = vpop.f32.mrb[0].mxu0
      %6034 = vmatprep.mubr.f32.mxu0 0.0
      %6035 = vmatmul.mubr.f32.gmra.mrb[0].mxu0 %v5846
      %v6036 = vpop.f32.mrb[0].mxu0
      %v6037 = vadd.f32 0.0, %v6036
      %v6038 = vpop.f32.mrb[0].mxu0
      %6039 = vmatprep.mubr.f32.mxu0 0.0
      %6040 = vmatmul.mubr.f32.gmra.mrb[0].mxu0 %v5848
      %v6041 = vpop.f32.mrb[0].mxu0
      %v6042 = vadd.f32 0.0, %v6041
      %v6043 = vpop.f32.mrb[0].mxu0
      %6044 = vmatprep.mubr.f32.mxu0 0.0
      %6045 = vmatmul.mubr.f32.gmra.mrb[0].mxu0 %v5850
      %v6046 = vpop.f32.mrb[0].mxu0
      %v6047 = vadd.f32 0.0, %v6046
      %v6048 = vpop.f32.mrb[0].mxu0
      %6049 = vmatprep.mubr.f32.mxu0 0.0
      %6050 = vmatmul.mubr.f32.gmra.mrb[0].mxu0 %v5852
      %v6051 = vpop.f32.mrb[0].mxu0
      %v6052 = vadd.f32 0.0, %v6051
      %v6053 = vpop.f32.mrb[0].mxu0
      %6054 = vmatprep.mubr.f32.mxu0 0.0
      %6055 = vmatmul.mubr.f32.gmra.mrb[0].mxu0 %v5854
      %v6056 = vpop.f32.mrb[0].mxu0
      %v6057 = vadd.f32 0.0, %v6056
      %v6058 = vpop.f32.mrb[0].mxu0
      %6059 = vmatprep.mubr.f32.mxu0 0.0
      %6060 = vmatmul.mubr.f32.gmra.mrb[0].mxu0 %v5856
      %v6061 = vpop.f32.mrb[0].mxu0
      %v6062 = vadd.f32 0.0, %v6061
      %v6063 = vpop.f32.mrb[0].mxu0
      %6064 = vmatprep.mubr.f32.mxu0 0.0
      %6065 = vmatmul.mubr.f32.gmra.mrb[0].mxu0 %v5858
      %v6066 = vpop.f32.mrb[0].mxu0
      %v6067 = vadd.f32 0.0, %v6066
      %v6068 = vpop.f32.mrb[0].mxu0
      %6069 = vmatprep.mubr.f32.mxu0 0.0
      %6070 = vmatmul.mubr.f32.gmra.mrb[0].mxu0 %v5860
      %v6071 = vpop.f32.mrb[0].mxu0
      %v6072 = vadd.f32 0.0, %v6071
      %v6073 = vpop.f32.mrb[0].mxu0
      %6074 = vmatprep.mubr.f32.mxu0 0.0
      %6075 = vmatmul.mubr.f32.gmra.mrb[0].mxu0 %v5862
      %v6076 = vpop.f32.mrb[0].mxu0
      %v6077 = vadd.f32 0.0, %v6076
      %v6078 = vpop.f32.mrb[0].mxu0
      %6079 = vmatprep.mubr.f32.mxu0 0.0
      %6080 = vmatmul.mubr.f32.gmra.mrb[0].mxu0 %v5864
      %v6081 = vpop.f32.mrb[0].mxu0
      %v6082 = vadd.f32 0.0, %v6081
      %v6083 = vpop.f32.mrb[0].mxu0
      %6084 = vmatprep.mubr.f32.mxu0 0.0
      %6085 = vmatmul.mubr.f32.gmra.mrb[0].mxu0 %v5866
      %v6086 = vpop.f32.mrb[0].mxu0
      %v6087 = vadd.f32 0.0, %v6086
      %v6088 = vpop.f32.mrb[0].mxu0
      %6089 = vmatprep.mubr.f32.mxu0 0.0
      %6090 = vmatmul.mubr.f32.gmra.mrb[0].mxu0 %v5868
      %v6091 = vpop.f32.mrb[0].mxu0
      %v6092 = vadd.f32 0.0, %v6091
      %v6093 = vpop.f32.mrb[0].mxu0
      %6094 = vdwg.mxu0
      %v6095 = vld [vmem:[%s7] sm:$0xff]
      %v6096 = vld [vmem:[%s7 + $0x8] sm:$0xff]
      %v6097 = vld [vmem:[%s7 + $0x10] sm:$0xff]
      %v6098 = vld [vmem:[%s7 + $0x18] sm:$0xff]
      %v6100 = vsel %vm3293, %v5552, 0
      %v6103 = vsel %vm3293, %v5557, 0
      %v6106 = vsel %vm3293, %v5562, 0
      %v6109 = vsel %vm3293, %v5567, 0
      %v6112 = vsel %vm3293, %v5572, 0
      %v6115 = vsel %vm3293, %v5577, 0
      %v6118 = vsel %vm3293, %v5582, 0
      %v6121 = vsel %vm3293, %v5587, 0
      %v6124 = vsel %vm3293, %v5592, 0
      %v6127 = vsel %vm3293, %v5597, 0
      %v6130 = vsel %vm3293, %v5602, 0
      %v6133 = vsel %vm3293, %v5607, 0
      %v6136 = vsel %vm3293, %v5612, 0
      %v6139 = vsel %vm3293, %v5617, 0
      %v6142 = vsel %vm3293, %v5622, 0
      %v6145 = vsel %vm3293, %v5627, 0
      %v6148 = vsel %vm3293, %v5632, 0
      %v6151 = vsel %vm3293, %v5637, 0
      %v6154 = vsel %vm3293, %v5642, 0
      %v6157 = vsel %vm3293, %v5647, 0
      %v6160 = vsel %vm3293, %v5652, 0
      %v6163 = vsel %vm3293, %v5657, 0
      %v6166 = vsel %vm3293, %v5662, 0
      %v6169 = vsel %vm3293, %v5667, 0
      %v6172 = vsel %vm3293, %v5672, 0
      %v6175 = vsel %vm3293, %v5677, 0
      %v6178 = vsel %vm3293, %v5682, 0
      %v6181 = vsel %vm3293, %v5687, 0
      %v6184 = vsel %vm3293, %v5692, 0
      %v6187 = vsel %vm3293, %v5697, 0
      %v6190 = vsel %vm3293, %v5702, 0
      %v6193 = vsel %vm3293, %v5707, 0
      %6195 = vmatprep.subr.mxu0 0.0
      %6196 = vmatpush1.msra.mxu0 %v6095
      %6197 = vmatprep.subr.mxu0 0.0
      %6198 = vmatpush1.msra.mxu0 %v6096
      %6199 = vmatprep.subr.mxu0 0.0
      %6200 = vmatpush1.msra.mxu0 %v6097
      %6201 = vmatprep.subr.mxu0 0.0
      %6202 = vmatpush1.msra.mxu0 %v6098
      %6203 = vmatprep.subr.mxu0 0.0
      %6204 = vmatpush1.msra.mxu0 0.0
      %6205 = vmatprep.subr.mxu0 0.0
      %6206 = vmatpush1.msra.mxu0 0.0
      %6207 = vmatprep.subr.mxu0 0.0
      %6208 = vmatpush1.msra.mxu0 0.0
      %6209 = vmatprep.subr.mxu0 0.0
      %6210 = vmatpush1.msra.mxu0 0.0
      %6211 = vmatprep.subr.mxu0 0.0
      %6212 = vmatpush1.msra.mxu0 0.0
      %6213 = vmatprep.subr.mxu0 0.0
      %6214 = vmatpush1.msra.mxu0 0.0
      %6215 = vmatprep.subr.mxu0 0.0
      %6216 = vmatpush1.msra.mxu0 0.0
      %6217 = vmatprep.subr.mxu0 0.0
      %6218 = vmatpush1.msra.mxu0 0.0
      %6219 = vmatprep.subr.mxu0 0.0
      %6220 = vmatpush1.msra.mxu0 0.0
      %6221 = vmatprep.subr.mxu0 0.0
      %6222 = vmatpush1.msra.mxu0 0.0
      %6223 = vmatprep.subr.mxu0 0.0
      %6224 = vmatpush1.msra.mxu0 0.0
      %6225 = vmatprep.subr.mxu0 0.0
      %6226 = vmatpush1.msra.mxu0 0.0
      %6227 = vmatprep.subr.mxu0 0.0
      %6228 = vmatpush1.msra.mxu0 0.0
      %6229 = vmatprep.subr.mxu0 0.0
      %6230 = vmatpush1.msra.mxu0 0.0
      %6231 = vmatprep.subr.mxu0 0.0
      %6232 = vmatpush1.msra.mxu0 0.0
      %6233 = vmatprep.subr.mxu0 0.0
      %6234 = vmatpush1.msra.mxu0 0.0
      %6235 = vmatprep.subr.mxu0 0.0
      %6236 = vmatpush1.msra.mxu0 0.0
      %6237 = vmatprep.subr.mxu0 0.0
      %6238 = vmatpush1.msra.mxu0 0.0
      %6239 = vmatprep.subr.mxu0 0.0
      %6240 = vmatpush1.msra.mxu0 0.0
      %6241 = vmatprep.subr.mxu0 0.0
      %6242 = vmatpush1.msra.mxu0 0.0
      %6243 = vmatprep.subr.mxu0 0.0
      %6244 = vmatpush1.msra.mxu0 0.0
      %6245 = vmatprep.subr.mxu0 0.0
      %6246 = vmatpush1.msra.mxu0 0.0
      %6247 = vmatprep.subr.mxu0 0.0
      %6248 = vmatpush1.msra.mxu0 0.0
      %6249 = vmatprep.subr.mxu0 0.0
      %6250 = vmatpush1.msra.mxu0 0.0
      %6251 = vmatprep.subr.mxu0 0.0
      %6252 = vmatpush1.msra.mxu0 0.0
      %6253 = vmatprep.subr.mxu0 0.0
      %6254 = vmatpush1.msra.mxu0 0.0
      %6255 = vmatprep.subr.mxu0 0.0
      %6256 = vmatpush1.msra.mxu0 0.0
      %6257 = vmatprep.subr.mxu0 0.0
      %6258 = vmatpush1.msra.mxu0 0.0
      %6259 = vmatprep.mubr.f32.mxu0 0.0
      %6260 = vmatmul.mubr.f32.gmra.mrb[0].mxu0 %v6100
      %v6261 = vpop.f32.mrb[0].mxu0
      %v6262 = vadd.f32 0.0, %v6261
      %v6263 = vpop.f32.mrb[0].mxu0
      %6264 = vmatprep.mubr.f32.mxu0 0.0
      %6265 = vmatmul.mubr.f32.gmra.mrb[0].mxu0 %v6103
      %v6266 = vpop.f32.mrb[0].mxu0
      %v6267 = vadd.f32 0.0, %v6266
      %v6268 = vpop.f32.mrb[0].mxu0
      %6269 = vmatprep.mubr.f32.mxu0 0.0
      %6270 = vmatmul.mubr.f32.gmra.mrb[0].mxu0 %v6106
      %v6271 = vpop.f32.mrb[0].mxu0
      %v6272 = vadd.f32 0.0, %v6271
      %v6273 = vpop.f32.mrb[0].mxu0
      %6274 = vmatprep.mubr.f32.mxu0 0.0
      %6275 = vmatmul.mubr.f32.gmra.mrb[0].mxu0 %v6109
      %v6276 = vpop.f32.mrb[0].mxu0
      %v6277 = vadd.f32 0.0, %v6276
      %v6278 = vpop.f32.mrb[0].mxu0
      %6279 = vmatprep.mubr.f32.mxu0 0.0
      %6280 = vmatmul.mubr.f32.gmra.mrb[0].mxu0 %v6112
      %v6281 = vpop.f32.mrb[0].mxu0
      %v6282 = vadd.f32 0.0, %v6281
      %v6283 = vpop.f32.mrb[0].mxu0
      %6284 = vmatprep.mubr.f32.mxu0 0.0
      %6285 = vmatmul.mubr.f32.gmra.mrb[0].mxu0 %v6115
      %v6286 = vpop.f32.mrb[0].mxu0
      %v6287 = vadd.f32 0.0, %v6286
      %v6288 = vpop.f32.mrb[0].mxu0
      %6289 = vmatprep.mubr.f32.mxu0 0.0
      %6290 = vmatmul.mubr.f32.gmra.mrb[0].mxu0 %v6118
      %v6291 = vpop.f32.mrb[0].mxu0
      %v6292 = vadd.f32 0.0, %v6291
      %v6293 = vpop.f32.mrb[0].mxu0
      %6294 = vmatprep.mubr.f32.mxu0 0.0
      %6295 = vmatmul.mubr.f32.gmra.mrb[0].mxu0 %v6121
      %v6296 = vpop.f32.mrb[0].mxu0
      %v6297 = vadd.f32 0.0, %v6296
      %v6298 = vpop.f32.mrb[0].mxu0
      %6299 = vmatprep.mubr.f32.mxu0 0.0
      %6300 = vmatmul.mubr.f32.gmra.mrb[0].mxu0 %v6124
      %v6301 = vpop.f32.mrb[0].mxu0
      %v6302 = vadd.f32 0.0, %v6301
      %v6303 = vpop.f32.mrb[0].mxu0
      %6304 = vmatprep.mubr.f32.mxu0 0.0
      %6305 = vmatmul.mubr.f32.gmra.mrb[0].mxu0 %v6127
      %v6306 = vpop.f32.mrb[0].mxu0
      %v6307 = vadd.f32 0.0, %v6306
      %v6308 = vpop.f32.mrb[0].mxu0
      %6309 = vmatprep.mubr.f32.mxu0 0.0
      %6310 = vmatmul.mubr.f32.gmra.mrb[0].mxu0 %v6130
      %v6311 = vpop.f32.mrb[0].mxu0
      %v6312 = vadd.f32 0.0, %v6311
      %v6313 = vpop.f32.mrb[0].mxu0
      %6314 = vmatprep.mubr.f32.mxu0 0.0
      %6315 = vmatmul.mubr.f32.gmra.mrb[0].mxu0 %v6133
      %v6316 = vpop.f32.mrb[0].mxu0
      %v6317 = vadd.f32 0.0, %v6316
      %v6318 = vpop.f32.mrb[0].mxu0
      %6319 = vmatprep.mubr.f32.mxu0 0.0
      %6320 = vmatmul.mubr.f32.gmra.mrb[0].mxu0 %v6136
      %v6321 = vpop.f32.mrb[0].mxu0
      %v6322 = vadd.f32 0.0, %v6321
      %v6323 = vpop.f32.mrb[0].mxu0
      %6324 = vmatprep.mubr.f32.mxu0 0.0
      %6325 = vmatmul.mubr.f32.gmra.mrb[0].mxu0 %v6139
      %v6326 = vpop.f32.mrb[0].mxu0
      %v6327 = vadd.f32 0.0, %v6326
      %v6328 = vpop.f32.mrb[0].mxu0
      %6329 = vmatprep.mubr.f32.mxu0 0.0
      %6330 = vmatmul.mubr.f32.gmra.mrb[0].mxu0 %v6142
      %v6331 = vpop.f32.mrb[0].mxu0
      %v6332 = vadd.f32 0.0, %v6331
      %v6333 = vpop.f32.mrb[0].mxu0
      %6334 = vmatprep.mubr.f32.mxu0 0.0
      %6335 = vmatmul.mubr.f32.gmra.mrb[0].mxu0 %v6145
      %v6336 = vpop.f32.mrb[0].mxu0
      %v6337 = vadd.f32 0.0, %v6336
      %v6338 = vpop.f32.mrb[0].mxu0
      %6339 = vmatprep.mubr.f32.mxu0 0.0
      %6340 = vmatmul.mubr.f32.gmra.mrb[0].mxu0 %v6148
      %v6341 = vpop.f32.mrb[0].mxu0
      %v6342 = vadd.f32 0.0, %v6341
      %v6343 = vpop.f32.mrb[0].mxu0
      %6344 = vmatprep.mubr.f32.mxu0 0.0
      %6345 = vmatmul.mubr.f32.gmra.mrb[0].mxu0 %v6151
      %v6346 = vpop.f32.mrb[0].mxu0
      %v6347 = vadd.f32 0.0, %v6346
      %v6348 = vpop.f32.mrb[0].mxu0
      %6349 = vmatprep.mubr.f32.mxu0 0.0
      %6350 = vmatmul.mubr.f32.gmra.mrb[0].mxu0 %v6154
      %v6351 = vpop.f32.mrb[0].mxu0
      %v6352 = vadd.f32 0.0, %v6351
      %v6353 = vpop.f32.mrb[0].mxu0
      %6354 = vmatprep.mubr.f32.mxu0 0.0
      %6355 = vmatmul.mubr.f32.gmra.mrb[0].mxu0 %v6157
      %v6356 = vpop.f32.mrb[0].mxu0
      %v6357 = vadd.f32 0.0, %v6356
      %v6358 = vpop.f32.mrb[0].mxu0
      %6359 = vmatprep.mubr.f32.mxu0 0.0
      %6360 = vmatmul.mubr.f32.gmra.mrb[0].mxu0 %v6160
      %v6361 = vpop.f32.mrb[0].mxu0
      %v6362 = vadd.f32 0.0, %v6361
      %v6363 = vpop.f32.mrb[0].mxu0
      %6364 = vmatprep.mubr.f32.mxu0 0.0
      %6365 = vmatmul.mubr.f32.gmra.mrb[0].mxu0 %v6163
      %v6366 = vpop.f32.mrb[0].mxu0
      %v6367 = vadd.f32 0.0, %v6366
      %v6368 = vpop.f32.mrb[0].mxu0
      %6369 = vmatprep.mubr.f32.mxu0 0.0
      %6370 = vmatmul.mubr.f32.gmra.mrb[0].mxu0 %v6166
      %v6371 = vpop.f32.mrb[0].mxu0
      %v6372 = vadd.f32 0.0, %v6371
      %v6373 = vpop.f32.mrb[0].mxu0
      %6374 = vmatprep.mubr.f32.mxu0 0.0
      %6375 = vmatmul.mubr.f32.gmra.mrb[0].mxu0 %v6169
      %v6376 = vpop.f32.mrb[0].mxu0
      %v6377 = vadd.f32 0.0, %v6376
      %v6378 = vpop.f32.mrb[0].mxu0
      %6379 = vmatprep.mubr.f32.mxu0 0.0
      %6380 = vmatmul.mubr.f32.gmra.mrb[0].mxu0 %v6172
      %v6381 = vpop.f32.mrb[0].mxu0
      %v6382 = vadd.f32 0.0, %v6381
      %v6383 = vpop.f32.mrb[0].mxu0
      %6384 = vmatprep.mubr.f32.mxu0 0.0
      %6385 = vmatmul.mubr.f32.gmra.mrb[0].mxu0 %v6175
      %v6386 = vpop.f32.mrb[0].mxu0
      %v6387 = vadd.f32 0.0, %v6386
      %v6388 = vpop.f32.mrb[0].mxu0
      %6389 = vmatprep.mubr.f32.mxu0 0.0
      %6390 = vmatmul.mubr.f32.gmra.mrb[0].mxu0 %v6178
      %v6391 = vpop.f32.mrb[0].mxu0
      %v6392 = vadd.f32 0.0, %v6391
      %v6393 = vpop.f32.mrb[0].mxu0
      %6394 = vmatprep.mubr.f32.mxu0 0.0
      %6395 = vmatmul.mubr.f32.gmra.mrb[0].mxu0 %v6181
      %v6396 = vpop.f32.mrb[0].mxu0
      %v6397 = vadd.f32 0.0, %v6396
      %v6398 = vpop.f32.mrb[0].mxu0
      %6399 = vmatprep.mubr.f32.mxu0 0.0
      %6400 = vmatmul.mubr.f32.gmra.mrb[0].mxu0 %v6184
      %v6401 = vpop.f32.mrb[0].mxu0
      %v6402 = vadd.f32 0.0, %v6401
      %v6403 = vpop.f32.mrb[0].mxu0
      %6404 = vmatprep.mubr.f32.mxu0 0.0
      %6405 = vmatmul.mubr.f32.gmra.mrb[0].mxu0 %v6187
      %v6406 = vpop.f32.mrb[0].mxu0
      %v6407 = vadd.f32 0.0, %v6406
      %v6408 = vpop.f32.mrb[0].mxu0
      %6409 = vmatprep.mubr.f32.mxu0 0.0
      %6410 = vmatmul.mubr.f32.gmra.mrb[0].mxu0 %v6190
      %v6411 = vpop.f32.mrb[0].mxu0
      %v6412 = vadd.f32 0.0, %v6411
      %v6413 = vpop.f32.mrb[0].mxu0
      %6414 = vmatprep.mubr.f32.mxu0 0.0
      %6415 = vmatmul.mubr.f32.gmra.mrb[0].mxu0 %v6193
      %v6416 = vpop.f32.mrb[0].mxu0
      %v6417 = vadd.f32 0.0, %v6416
      %v6418 = vpop.f32.mrb[0].mxu0
      %6419 = vdwg.mxu0
      %v6420 = vadd.f32 %v454, %v6262
      %v6421 = vadd.f32 %v455, %v6267
      %v6422 = vadd.f32 %v456, %v6272
      %v6423 = vadd.f32 %v457, %v6277
      %v6424 = vadd.f32 %v458, %v6282
      %v6425 = vadd.f32 %v459, %v6287
      %v6426 = vadd.f32 %v460, %v6292
      %v6427 = vadd.f32 %v461, %v6297
      %v6428 = vadd.f32 %v462, %v6302
      %v6429 = vadd.f32 %v463, %v6307
      %v6430 = vadd.f32 %v464, %v6312
      %v6431 = vadd.f32 %v465, %v6317
      %v6432 = vadd.f32 %v466, %v6322
      %v6433 = vadd.f32 %v467, %v6327
      %v6434 = vadd.f32 %v468, %v6332
      %v6435 = vadd.f32 %v469, %v6337
      %v6436 = vadd.f32 %v470, %v6342
      %v6437 = vadd.f32 %v471, %v6347
      %v6438 = vadd.f32 %v472, %v6352
      %v6439 = vadd.f32 %v473, %v6357
      %v6440 = vadd.f32 %v474, %v6362
      %v6441 = vadd.f32 %v475, %v6367
      %v6442 = vadd.f32 %v476, %v6372
      %v6443 = vadd.f32 %v477, %v6377
      %v6444 = vadd.f32 %v478, %v6382
      %v6445 = vadd.f32 %v479, %v6387
      %v6446 = vadd.f32 %v480, %v6392
      %v6447 = vadd.f32 %v481, %v6397
      %v6448 = vadd.f32 %v482, %v6402
      %v6449 = vadd.f32 %v483, %v6407
      %v6450 = vadd.f32 %v484, %v6412
      %v6451 = vadd.f32 %v485, %v6417
      %v6452 = vld [vmem:[%s8] sm:$0xff]
      %v6453 = vld [vmem:[%s8 + $0x8] sm:$0xff]
      %v6454 = vld [vmem:[%s8 + $0x10] sm:$0xff]
      %v6455 = vld [vmem:[%s8 + $0x18] sm:$0xff]
      %v6457 = vsel %vm3293, %v5937, 0
      %v6460 = vsel %vm3293, %v5942, 0
      %v6463 = vsel %vm3293, %v5947, 0
      %v6466 = vsel %vm3293, %v5952, 0
      %v6469 = vsel %vm3293, %v5957, 0
      %v6472 = vsel %vm3293, %v5962, 0
      %v6475 = vsel %vm3293, %v5967, 0
      %v6478 = vsel %vm3293, %v5972, 0
      %v6481 = vsel %vm3293, %v5977, 0
      %v6484 = vsel %vm3293, %v5982, 0
      %v6487 = vsel %vm3293, %v5987, 0
      %v6490 = vsel %vm3293, %v5992, 0
      %v6493 = vsel %vm3293, %v5997, 0
      %v6496 = vsel %vm3293, %v6002, 0
      %v6499 = vsel %vm3293, %v6007, 0
      %v6502 = vsel %vm3293, %v6012, 0
      %v6505 = vsel %vm3293, %v6017, 0
      %v6508 = vsel %vm3293, %v6022, 0
      %v6511 = vsel %vm3293, %v6027, 0
      %v6514 = vsel %vm3293, %v6032, 0
      %v6517 = vsel %vm3293, %v6037, 0
      %v6520 = vsel %vm3293, %v6042, 0
      %v6523 = vsel %vm3293, %v6047, 0
      %v6526 = vsel %vm3293, %v6052, 0
      %v6529 = vsel %vm3293, %v6057, 0
      %v6532 = vsel %vm3293, %v6062, 0
      %v6535 = vsel %vm3293, %v6067, 0
      %v6538 = vsel %vm3293, %v6072, 0
      %v6541 = vsel %vm3293, %v6077, 0
      %v6544 = vsel %vm3293, %v6082, 0
      %v6547 = vsel %vm3293, %v6087, 0
      %v6550 = vsel %vm3293, %v6092, 0
      %6552 = vmatprep.subr.mxu0 0.0
      %6553 = vmatpush1.msra.mxu0 %v6452
      %6554 = vmatprep.subr.mxu0 0.0
      %6555 = vmatpush1.msra.mxu0 %v6453
      %6556 = vmatprep.subr.mxu0 0.0
      %6557 = vmatpush1.msra.mxu0 %v6454
      %6558 = vmatprep.subr.mxu0 0.0
      %6559 = vmatpush1.msra.mxu0 %v6455
      %6560 = vmatprep.subr.mxu0 0.0
      %6561 = vmatpush1.msra.mxu0 0.0
      %6562 = vmatprep.subr.mxu0 0.0
      %6563 = vmatpush1.msra.mxu0 0.0
      %6564 = vmatprep.subr.mxu0 0.0
      %6565 = vmatpush1.msra.mxu0 0.0
      %6566 = vmatprep.subr.mxu0 0.0
      %6567 = vmatpush1.msra.mxu0 0.0
      %6568 = vmatprep.subr.mxu0 0.0
      %6569 = vmatpush1.msra.mxu0 0.0
      %6570 = vmatprep.subr.mxu0 0.0
      %6571 = vmatpush1.msra.mxu0 0.0
      %6572 = vmatprep.subr.mxu0 0.0
      %6573 = vmatpush1.msra.mxu0 0.0
      %6574 = vmatprep.subr.mxu0 0.0
      %6575 = vmatpush1.msra.mxu0 0.0
      %6576 = vmatprep.subr.mxu0 0.0
      %6577 = vmatpush1.msra.mxu0 0.0
      %6578 = vmatprep.subr.mxu0 0.0
      %6579 = vmatpush1.msra.mxu0 0.0
      %6580 = vmatprep.subr.mxu0 0.0
      %6581 = vmatpush1.msra.mxu0 0.0
      %6582 = vmatprep.subr.mxu0 0.0
      %6583 = vmatpush1.msra.mxu0 0.0
      %6584 = vmatprep.subr.mxu0 0.0
      %6585 = vmatpush1.msra.mxu0 0.0
      %6586 = vmatprep.subr.mxu0 0.0
      %6587 = vmatpush1.msra.mxu0 0.0
      %6588 = vmatprep.subr.mxu0 0.0
      %6589 = vmatpush1.msra.mxu0 0.0
      %6590 = vmatprep.subr.mxu0 0.0
      %6591 = vmatpush1.msra.mxu0 0.0
      %6592 = vmatprep.subr.mxu0 0.0
      %6593 = vmatpush1.msra.mxu0 0.0
      %6594 = vmatprep.subr.mxu0 0.0
      %6595 = vmatpush1.msra.mxu0 0.0
      %6596 = vmatprep.subr.mxu0 0.0
      %6597 = vmatpush1.msra.mxu0 0.0
      %6598 = vmatprep.subr.mxu0 0.0
      %6599 = vmatpush1.msra.mxu0 0.0
      %6600 = vmatprep.subr.mxu0 0.0
      %6601 = vmatpush1.msra.mxu0 0.0
      %6602 = vmatprep.subr.mxu0 0.0
      %6603 = vmatpush1.msra.mxu0 0.0
      %6604 = vmatprep.subr.mxu0 0.0
      %6605 = vmatpush1.msra.mxu0 0.0
      %6606 = vmatprep.subr.mxu0 0.0
      %6607 = vmatpush1.msra.mxu0 0.0
      %6608 = vmatprep.subr.mxu0 0.0
      %6609 = vmatpush1.msra.mxu0 0.0
      %6610 = vmatprep.subr.mxu0 0.0
      %6611 = vmatpush1.msra.mxu0 0.0
      %6612 = vmatprep.subr.mxu0 0.0
      %6613 = vmatpush1.msra.mxu0 0.0
      %6614 = vmatprep.subr.mxu0 0.0
      %6615 = vmatpush1.msra.mxu0 0.0
      %6616 = vmatprep.mubr.f32.mxu0 0.0
      %6617 = vmatmul.mubr.f32.gmra.mrb[0].mxu0 %v6457
      %v6618 = vpop.f32.mrb[0].mxu0
      %v6619 = vadd.f32 0.0, %v6618
      %v6620 = vpop.f32.mrb[0].mxu0
      %6621 = vmatprep.mubr.f32.mxu0 0.0
      %6622 = vmatmul.mubr.f32.gmra.mrb[0].mxu0 %v6460
      %v6623 = vpop.f32.mrb[0].mxu0
      %v6624 = vadd.f32 0.0, %v6623
      %v6625 = vpop.f32.mrb[0].mxu0
      %6626 = vmatprep.mubr.f32.mxu0 0.0
      %6627 = vmatmul.mubr.f32.gmra.mrb[0].mxu0 %v6463
      %v6628 = vpop.f32.mrb[0].mxu0
      %v6629 = vadd.f32 0.0, %v6628
      %v6630 = vpop.f32.mrb[0].mxu0
      %6631 = vmatprep.mubr.f32.mxu0 0.0
      %6632 = vmatmul.mubr.f32.gmra.mrb[0].mxu0 %v6466
      %v6633 = vpop.f32.mrb[0].mxu0
      %v6634 = vadd.f32 0.0, %v6633
      %v6635 = vpop.f32.mrb[0].mxu0
      %6636 = vmatprep.mubr.f32.mxu0 0.0
      %6637 = vmatmul.mubr.f32.gmra.mrb[0].mxu0 %v6469
      %v6638 = vpop.f32.mrb[0].mxu0
      %v6639 = vadd.f32 0.0, %v6638
      %v6640 = vpop.f32.mrb[0].mxu0
      %6641 = vmatprep.mubr.f32.mxu0 0.0
      %6642 = vmatmul.mubr.f32.gmra.mrb[0].mxu0 %v6472
      %v6643 = vpop.f32.mrb[0].mxu0
      %v6644 = vadd.f32 0.0, %v6643
      %v6645 = vpop.f32.mrb[0].mxu0
      %6646 = vmatprep.mubr.f32.mxu0 0.0
      %6647 = vmatmul.mubr.f32.gmra.mrb[0].mxu0 %v6475
      %v6648 = vpop.f32.mrb[0].mxu0
      %v6649 = vadd.f32 0.0, %v6648
      %v6650 = vpop.f32.mrb[0].mxu0
      %6651 = vmatprep.mubr.f32.mxu0 0.0
      %6652 = vmatmul.mubr.f32.gmra.mrb[0].mxu0 %v6478
      %v6653 = vpop.f32.mrb[0].mxu0
      %v6654 = vadd.f32 0.0, %v6653
      %v6655 = vpop.f32.mrb[0].mxu0
      %6656 = vmatprep.mubr.f32.mxu0 0.0
      %6657 = vmatmul.mubr.f32.gmra.mrb[0].mxu0 %v6481
      %v6658 = vpop.f32.mrb[0].mxu0
      %v6659 = vadd.f32 0.0, %v6658
      %v6660 = vpop.f32.mrb[0].mxu0
      %6661 = vmatprep.mubr.f32.mxu0 0.0
      %6662 = vmatmul.mubr.f32.gmra.mrb[0].mxu0 %v6484
      %v6663 = vpop.f32.mrb[0].mxu0
      %v6664 = vadd.f32 0.0, %v6663
      %v6665 = vpop.f32.mrb[0].mxu0
      %6666 = vmatprep.mubr.f32.mxu0 0.0
      %6667 = vmatmul.mubr.f32.gmra.mrb[0].mxu0 %v6487
      %v6668 = vpop.f32.mrb[0].mxu0
      %v6669 = vadd.f32 0.0, %v6668
      %v6670 = vpop.f32.mrb[0].mxu0
      %6671 = vmatprep.mubr.f32.mxu0 0.0
      %6672 = vmatmul.mubr.f32.gmra.mrb[0].mxu0 %v6490
      %v6673 = vpop.f32.mrb[0].mxu0
      %v6674 = vadd.f32 0.0, %v6673
      %v6675 = vpop.f32.mrb[0].mxu0
      %6676 = vmatprep.mubr.f32.mxu0 0.0
      %6677 = vmatmul.mubr.f32.gmra.mrb[0].mxu0 %v6493
      %v6678 = vpop.f32.mrb[0].mxu0
      %v6679 = vadd.f32 0.0, %v6678
      %v6680 = vpop.f32.mrb[0].mxu0
      %6681 = vmatprep.mubr.f32.mxu0 0.0
      %6682 = vmatmul.mubr.f32.gmra.mrb[0].mxu0 %v6496
      %v6683 = vpop.f32.mrb[0].mxu0
      %v6684 = vadd.f32 0.0, %v6683
      %v6685 = vpop.f32.mrb[0].mxu0
      %6686 = vmatprep.mubr.f32.mxu0 0.0
      %6687 = vmatmul.mubr.f32.gmra.mrb[0].mxu0 %v6499
      %v6688 = vpop.f32.mrb[0].mxu0
      %v6689 = vadd.f32 0.0, %v6688
      %v6690 = vpop.f32.mrb[0].mxu0
      %6691 = vmatprep.mubr.f32.mxu0 0.0
      %6692 = vmatmul.mubr.f32.gmra.mrb[0].mxu0 %v6502
      %v6693 = vpop.f32.mrb[0].mxu0
      %v6694 = vadd.f32 0.0, %v6693
      %v6695 = vpop.f32.mrb[0].mxu0
      %6696 = vmatprep.mubr.f32.mxu0 0.0
      %6697 = vmatmul.mubr.f32.gmra.mrb[0].mxu0 %v6505
      %v6698 = vpop.f32.mrb[0].mxu0
      %v6699 = vadd.f32 0.0, %v6698
      %v6700 = vpop.f32.mrb[0].mxu0
      %6701 = vmatprep.mubr.f32.mxu0 0.0
      %6702 = vmatmul.mubr.f32.gmra.mrb[0].mxu0 %v6508
      %v6703 = vpop.f32.mrb[0].mxu0
      %v6704 = vadd.f32 0.0, %v6703
      %v6705 = vpop.f32.mrb[0].mxu0
      %6706 = vmatprep.mubr.f32.mxu0 0.0
      %6707 = vmatmul.mubr.f32.gmra.mrb[0].mxu0 %v6511
      %v6708 = vpop.f32.mrb[0].mxu0
      %v6709 = vadd.f32 0.0, %v6708
      %v6710 = vpop.f32.mrb[0].mxu0
      %6711 = vmatprep.mubr.f32.mxu0 0.0
      %6712 = vmatmul.mubr.f32.gmra.mrb[0].mxu0 %v6514
      %v6713 = vpop.f32.mrb[0].mxu0
      %v6714 = vadd.f32 0.0, %v6713
      %v6715 = vpop.f32.mrb[0].mxu0
      %6716 = vmatprep.mubr.f32.mxu0 0.0
      %6717 = vmatmul.mubr.f32.gmra.mrb[0].mxu0 %v6517
      %v6718 = vpop.f32.mrb[0].mxu0
      %v6719 = vadd.f32 0.0, %v6718
      %v6720 = vpop.f32.mrb[0].mxu0
      %6721 = vmatprep.mubr.f32.mxu0 0.0
      %6722 = vmatmul.mubr.f32.gmra.mrb[0].mxu0 %v6520
      %v6723 = vpop.f32.mrb[0].mxu0
      %v6724 = vadd.f32 0.0, %v6723
      %v6725 = vpop.f32.mrb[0].mxu0
      %6726 = vmatprep.mubr.f32.mxu0 0.0
      %6727 = vmatmul.mubr.f32.gmra.mrb[0].mxu0 %v6523
      %v6728 = vpop.f32.mrb[0].mxu0
      %v6729 = vadd.f32 0.0, %v6728
      %v6730 = vpop.f32.mrb[0].mxu0
      %6731 = vmatprep.mubr.f32.mxu0 0.0
      %6732 = vmatmul.mubr.f32.gmra.mrb[0].mxu0 %v6526
      %v6733 = vpop.f32.mrb[0].mxu0
      %v6734 = vadd.f32 0.0, %v6733
      %v6735 = vpop.f32.mrb[0].mxu0
      %6736 = vmatprep.mubr.f32.mxu0 0.0
      %6737 = vmatmul.mubr.f32.gmra.mrb[0].mxu0 %v6529
      %v6738 = vpop.f32.mrb[0].mxu0
      %v6739 = vadd.f32 0.0, %v6738
      %v6740 = vpop.f32.mrb[0].mxu0
      %6741 = vmatprep.mubr.f32.mxu0 0.0
      %6742 = vmatmul.mubr.f32.gmra.mrb[0].mxu0 %v6532
      %v6743 = vpop.f32.mrb[0].mxu0
      %v6744 = vadd.f32 0.0, %v6743
      %v6745 = vpop.f32.mrb[0].mxu0
      %6746 = vmatprep.mubr.f32.mxu0 0.0
      %6747 = vmatmul.mubr.f32.gmra.mrb[0].mxu0 %v6535
      %v6748 = vpop.f32.mrb[0].mxu0
      %v6749 = vadd.f32 0.0, %v6748
      %v6750 = vpop.f32.mrb[0].mxu0
      %6751 = vmatprep.mubr.f32.mxu0 0.0
      %6752 = vmatmul.mubr.f32.gmra.mrb[0].mxu0 %v6538
      %v6753 = vpop.f32.mrb[0].mxu0
      %v6754 = vadd.f32 0.0, %v6753
      %v6755 = vpop.f32.mrb[0].mxu0
      %6756 = vmatprep.mubr.f32.mxu0 0.0
      %6757 = vmatmul.mubr.f32.gmra.mrb[0].mxu0 %v6541
      %v6758 = vpop.f32.mrb[0].mxu0
      %v6759 = vadd.f32 0.0, %v6758
      %v6760 = vpop.f32.mrb[0].mxu0
      %6761 = vmatprep.mubr.f32.mxu0 0.0
      %6762 = vmatmul.mubr.f32.gmra.mrb[0].mxu0 %v6544
      %v6763 = vpop.f32.mrb[0].mxu0
      %v6764 = vadd.f32 0.0, %v6763
      %v6765 = vpop.f32.mrb[0].mxu0
      %6766 = vmatprep.mubr.f32.mxu0 0.0
      %6767 = vmatmul.mubr.f32.gmra.mrb[0].mxu0 %v6547
      %v6768 = vpop.f32.mrb[0].mxu0
      %v6769 = vadd.f32 0.0, %v6768
      %v6770 = vpop.f32.mrb[0].mxu0
      %6771 = vmatprep.mubr.f32.mxu0 0.0
      %6772 = vmatmul.mubr.f32.gmra.mrb[0].mxu0 %v6550
      %v6773 = vpop.f32.mrb[0].mxu0
      %v6774 = vadd.f32 0.0, %v6773
      %v6775 = vpop.f32.mrb[0].mxu0
      %6776 = vdwg.mxu0
      %v6777 = vadd.f32 %v6420, %v6619
      %v6778 = vadd.f32 %v6421, %v6624
      %v6779 = vadd.f32 %v6422, %v6629
      %v6780 = vadd.f32 %v6423, %v6634
      %v6781 = vadd.f32 %v6424, %v6639
      %v6782 = vadd.f32 %v6425, %v6644
      %v6783 = vadd.f32 %v6426, %v6649
      %v6784 = vadd.f32 %v6427, %v6654
      %v6785 = vadd.f32 %v6428, %v6659
      %v6786 = vadd.f32 %v6429, %v6664
      %v6787 = vadd.f32 %v6430, %v6669
      %v6788 = vadd.f32 %v6431, %v6674
      %v6789 = vadd.f32 %v6432, %v6679
      %v6790 = vadd.f32 %v6433, %v6684
      %v6791 = vadd.f32 %v6434, %v6689
      %v6792 = vadd.f32 %v6435, %v6694
      %v6793 = vadd.f32 %v6436, %v6699
      %v6794 = vadd.f32 %v6437, %v6704
      %v6795 = vadd.f32 %v6438, %v6709
      %v6796 = vadd.f32 %v6439, %v6714
      %v6797 = vadd.f32 %v6440, %v6719
      %v6798 = vadd.f32 %v6441, %v6724
      %v6799 = vadd.f32 %v6442, %v6729
      %v6800 = vadd.f32 %v6443, %v6734
      %v6801 = vadd.f32 %v6444, %v6739
      %v6802 = vadd.f32 %v6445, %v6744
      %v6803 = vadd.f32 %v6446, %v6749
      %v6804 = vadd.f32 %v6447, %v6754
      %v6805 = vadd.f32 %v6448, %v6759
      %v6806 = vadd.f32 %v6449, %v6764
      %v6807 = vadd.f32 %v6450, %v6769
      %v6808 = vadd.f32 %v6451, %v6774
      %v6809 = vld [vmem:[%s9] sm:$0x1]
      %v6811 = vlaneseq
      %v6812 = vshrl.u32 %v6811, 7
      %v6813 = vsub.s32 0, %v6812
      %v6814 = vrot.slane %v6809, %v6813
      %v6816 = vadd.f32 %v6777, %v6814
      %v6817 = vadd.f32 %v6778, %v6814
      %v6818 = vadd.f32 %v6779, %v6814
      %v6819 = vadd.f32 %v6780, %v6814
      %v6820 = vadd.f32 %v6781, %v6814
      %v6821 = vadd.f32 %v6782, %v6814
      %v6822 = vadd.f32 %v6783, %v6814
      %v6823 = vadd.f32 %v6784, %v6814
      %v6824 = vadd.f32 %v6785, %v6814
      %v6825 = vadd.f32 %v6786, %v6814
      %v6826 = vadd.f32 %v6787, %v6814
      %v6827 = vadd.f32 %v6788, %v6814
      %v6828 = vadd.f32 %v6789, %v6814
      %v6829 = vadd.f32 %v6790, %v6814
      %v6830 = vadd.f32 %v6791, %v6814
      %v6831 = vadd.f32 %v6792, %v6814
      %v6832 = vadd.f32 %v6793, %v6814
      %v6833 = vadd.f32 %v6794, %v6814
      %v6834 = vadd.f32 %v6795, %v6814
      %v6835 = vadd.f32 %v6796, %v6814
      %v6836 = vadd.f32 %v6797, %v6814
      %v6837 = vadd.f32 %v6798, %v6814
      %v6838 = vadd.f32 %v6799, %v6814
      %v6839 = vadd.f32 %v6800, %v6814
      %v6840 = vadd.f32 %v6801, %v6814
      %v6841 = vadd.f32 %v6802, %v6814
      %v6842 = vadd.f32 %v6803, %v6814
      %v6843 = vadd.f32 %v6804, %v6814
      %v6844 = vadd.f32 %v6805, %v6814
      %v6845 = vadd.f32 %v6806, %v6814
      %v6846 = vadd.f32 %v6807, %v6814
      %v6847 = vadd.f32 %v6808, %v6814
      %6848 = vst.msk [vmem:[#allocation2] sm:$0xff] %vm3293, 0.0
      %6849 = vst.msk [vmem:[#allocation2 + $0x8] sm:$0xff] %vm3293, 0.0
      %vm6850 = vcmask 254976
      %6851 = vst.msk [vmem:[#allocation2 + $0x10] sm:$0x3] %vm6850, 0.0
      %6852 = vst.msk [vmem:[#allocation2 + $0x18] sm:$0xff] %vm3293, 0.0
      %6853 = vst.msk [vmem:[#allocation2 + $0x20] sm:$0xff] %vm3293, 0.0
      %6854 = vst.msk [vmem:[#allocation2 + $0x28] sm:$0x3] %vm6850, 0.0
      %6855 = vst.msk [vmem:[#allocation2 + $0x30] sm:$0xff] %vm3293, 0.0
      %6856 = vst.msk [vmem:[#allocation2 + $0x38] sm:$0xff] %vm3293, 0.0
      %6857 = vst.msk [vmem:[#allocation2 + $0x40] sm:$0x3] %vm6850, 0.0
      %6858 = vst.msk [vmem:[#allocation2 + $0x48] sm:$0xff] %vm3293, 0.0
      %6859 = vst.msk [vmem:[#allocation2 + $0x50] sm:$0xff] %vm3293, 0.0
      %6860 = vst.msk [vmem:[#allocation2 + $0x58] sm:$0x3] %vm6850, 0.0
      %6861 = vst.msk [vmem:[#allocation2 + $0x60] sm:$0xff] %vm3293, 0.0
      %6862 = vst.msk [vmem:[#allocation2 + $0x68] sm:$0xff] %vm3293, 0.0
      %6863 = vst.msk [vmem:[#allocation2 + $0x70] sm:$0x3] %vm6850, 0.0
      %6864 = vst.msk [vmem:[#allocation2 + $0x78] sm:$0xff] %vm3293, 0.0
      %6865 = vst.msk [vmem:[#allocation2 + $0x80] sm:$0xff] %vm3293, 0.0
      %6866 = vst.msk [vmem:[#allocation2 + $0x88] sm:$0x3] %vm6850, 0.0
      %6867 = vst.msk [vmem:[#allocation2 + $0x90] sm:$0xff] %vm3293, 0.0
      %6868 = vst.msk [vmem:[#allocation2 + $0x98] sm:$0xff] %vm3293, 0.0
      %6869 = vst.msk [vmem:[#allocation2 + $0xa0] sm:$0x3] %vm6850, 0.0
      %6870 = vst.msk [vmem:[#allocation2 + $0xa8] sm:$0xff] %vm3293, 0.0
      %6871 = vst.msk [vmem:[#allocation2 + $0xb0] sm:$0xff] %vm3293, 0.0
      %6872 = vst.msk [vmem:[#allocation2 + $0xb8] sm:$0x3] %vm6850, 0.0
      %6873 = vst.msk [vmem:[#allocation2 + $0xc0] sm:$0xff] %vm3293, 0.0
      %6874 = vst.msk [vmem:[#allocation2 + $0xc8] sm:$0xff] %vm3293, 0.0
      %6875 = vst.msk [vmem:[#allocation2 + $0xd0] sm:$0x3] %vm6850, 0.0
      %6876 = vst.msk [vmem:[#allocation2 + $0xd8] sm:$0xff] %vm3293, 0.0
      %6877 = vst.msk [vmem:[#allocation2 + $0xe0] sm:$0xff] %vm3293, 0.0
      %6878 = vst.msk [vmem:[#allocation2 + $0xe8] sm:$0x3] %vm6850, 0.0
      %6879 = vst.msk [vmem:[#allocation2 + $0xf0] sm:$0xff] %vm3293, 0.0
      %6880 = vst.msk [vmem:[#allocation2 + $0xf8] sm:$0xff] %vm3293, 0.0
      %6881 = vst.msk [vmem:[#allocation2 + $0x100] sm:$0x3] %vm6850, 0.0
      %6882 = vst.msk [vmem:[#allocation2 + $0x108] sm:$0xff] %vm3293, 0.0
      %6883 = vst.msk [vmem:[#allocation2 + $0x110] sm:$0xff] %vm3293, 0.0
      %6884 = vst.msk [vmem:[#allocation2 + $0x118] sm:$0x3] %vm6850, 0.0
      %6885 = vst.msk [vmem:[#allocation2 + $0x120] sm:$0xff] %vm3293, 0.0
      %6886 = vst.msk [vmem:[#allocation2 + $0x128] sm:$0xff] %vm3293, 0.0
      %6887 = vst.msk [vmem:[#allocation2 + $0x130] sm:$0x3] %vm6850, 0.0
      %6888 = vst.msk [vmem:[#allocation2 + $0x138] sm:$0xff] %vm3293, 0.0
      %6889 = vst.msk [vmem:[#allocation2 + $0x140] sm:$0xff] %vm3293, 0.0
      %6890 = vst.msk [vmem:[#allocation2 + $0x148] sm:$0x3] %vm6850, 0.0
      %6891 = vst.msk [vmem:[#allocation2 + $0x150] sm:$0xff] %vm3293, 0.0
      %6892 = vst.msk [vmem:[#allocation2 + $0x158] sm:$0xff] %vm3293, 0.0
      %6893 = vst.msk [vmem:[#allocation2 + $0x160] sm:$0x3] %vm6850, 0.0
      %6894 = vst.msk [vmem:[#allocation2 + $0x168] sm:$0xff] %vm3293, 0.0
      %6895 = vst.msk [vmem:[#allocation2 + $0x170] sm:$0xff] %vm3293, 0.0
      %6896 = vst.msk [vmem:[#allocation2 + $0x178] sm:$0x3] %vm6850, 0.0
      %6897 = vst.msk [vmem:[#allocation2 + $0x180] sm:$0xff] %vm3293, 0.0
      %6898 = vst.msk [vmem:[#allocation2 + $0x188] sm:$0xff] %vm3293, 0.0
      %6899 = vst.msk [vmem:[#allocation2 + $0x190] sm:$0x3] %vm6850, 0.0
      %6900 = vst.msk [vmem:[#allocation2 + $0x198] sm:$0xff] %vm3293, 0.0
      %6901 = vst.msk [vmem:[#allocation2 + $0x1a0] sm:$0xff] %vm3293, 0.0
      %6902 = vst.msk [vmem:[#allocation2 + $0x1a8] sm:$0x3] %vm6850, 0.0
      %s6903 = scalar_lea.vmem [#allocation2], 24
      %6904 = vst.msk [vmem:[%s6903 + $0x1] sm:$0xff] %vm3293, %v6816
      %6905 = vst.msk [vmem:[%s6903 + $0x9] sm:$0xff] %vm3293, %v6817
      %6906 = vst.msk [vmem:[%s6903 + $0x19] sm:$0xff] %vm3293, %v6818
      %6907 = vst.msk [vmem:[%s6903 + $0x21] sm:$0xff] %vm3293, %v6819
      %6908 = vst.msk [vmem:[%s6903 + $0x31] sm:$0xff] %vm3293, %v6820
      %6909 = vst.msk [vmem:[%s6903 + $0x39] sm:$0xff] %vm3293, %v6821
      %6910 = vst.msk [vmem:[%s6903 + $0x49] sm:$0xff] %vm3293, %v6822
      %6911 = vst.msk [vmem:[%s6903 + $0x51] sm:$0xff] %vm3293, %v6823
      %6912 = vst.msk [vmem:[%s6903 + $0x61] sm:$0xff] %vm3293, %v6824
      %6913 = vst.msk [vmem:[%s6903 + $0x69] sm:$0xff] %vm3293, %v6825
      %6914 = vst.msk [vmem:[%s6903 + $0x79] sm:$0xff] %vm3293, %v6826
      %6915 = vst.msk [vmem:[%s6903 + $0x81] sm:$0xff] %vm3293, %v6827
      %6916 = vst.msk [vmem:[%s6903 + $0x91] sm:$0xff] %vm3293, %v6828
      %6917 = vst.msk [vmem:[%s6903 + $0x99] sm:$0xff] %vm3293, %v6829
      %6918 = vst.msk [vmem:[%s6903 + $0xa9] sm:$0xff] %vm3293, %v6830
      %6919 = vst.msk [vmem:[%s6903 + $0xb1] sm:$0xff] %vm3293, %v6831
      %6920 = vst.msk [vmem:[%s6903 + $0xc1] sm:$0xff] %vm3293, %v6832
      %6921 = vst.msk [vmem:[%s6903 + $0xc9] sm:$0xff] %vm3293, %v6833
      %6922 = vst.msk [vmem:[%s6903 + $0xd9] sm:$0xff] %vm3293, %v6834
      %6923 = vst.msk [vmem:[%s6903 + $0xe1] sm:$0xff] %vm3293, %v6835
      %6924 = vst.msk [vmem:[%s6903 + $0xf1] sm:$0xff] %vm3293, %v6836
      %6925 = vst.msk [vmem:[%s6903 + $0xf9] sm:$0xff] %vm3293, %v6837
      %6926 = vst.msk [vmem:[%s6903 + $0x109] sm:$0xff] %vm3293, %v6838
      %6927 = vst.msk [vmem:[%s6903 + $0x111] sm:$0xff] %vm3293, %v6839
      %6928 = vst.msk [vmem:[%s6903 + $0x121] sm:$0xff] %vm3293, %v6840
      %6929 = vst.msk [vmem:[%s6903 + $0x129] sm:$0xff] %vm3293, %v6841
      %6930 = vst.msk [vmem:[%s6903 + $0x139] sm:$0xff] %vm3293, %v6842
      %6931 = vst.msk [vmem:[%s6903 + $0x141] sm:$0xff] %vm3293, %v6843
      %6932 = vst.msk [vmem:[%s6903 + $0x151] sm:$0xff] %vm3293, %v6844
      %6933 = vst.msk [vmem:[%s6903 + $0x159] sm:$0xff] %vm3293, %v6845
      %6934 = vst.msk [vmem:[%s6903 + $0x169] sm:$0xff] %vm3293, %v6846
      %6935 = vst.msk [vmem:[%s6903 + $0x171] sm:$0xff] %vm3293, %v6847
      %v6936 = vld [vmem:[#allocation2] sm:$0xff]
      %v6937 = vld [vmem:[#allocation2 + $0x8] sm:$0xff]
      %v6938 = vld [vmem:[#allocation2 + $0x18] sm:$0xff]
      %v6939 = vld [vmem:[#allocation2 + $0x20] sm:$0xff]
      %v6940 = vld [vmem:[#allocation2 + $0x30] sm:$0xff]
      %v6941 = vld [vmem:[#allocation2 + $0x38] sm:$0xff]
      %v6942 = vld [vmem:[#allocation2 + $0x48] sm:$0xff]
      %v6943 = vld [vmem:[#allocation2 + $0x50] sm:$0xff]
      %v6944 = vld [vmem:[#allocation2 + $0x60] sm:$0xff]
      %v6945 = vld [vmem:[#allocation2 + $0x68] sm:$0xff]
      %v6946 = vld [vmem:[#allocation2 + $0x78] sm:$0xff]
      %v6947 = vld [vmem:[#allocation2 + $0x80] sm:$0xff]
      %v6948 = vld [vmem:[#allocation2 + $0x90] sm:$0xff]
      %v6949 = vld [vmem:[#allocation2 + $0x98] sm:$0xff]
      %v6950 = vld [vmem:[#allocation2 + $0xa8] sm:$0xff]
      %v6951 = vld [vmem:[#allocation2 + $0xb0] sm:$0xff]
      %v6952 = vld [vmem:[#allocation2 + $0xc0] sm:$0xff]
      %v6953 = vld [vmem:[#allocation2 + $0xc8] sm:$0xff]
      %v6954 = vld [vmem:[#allocation2 + $0xd8] sm:$0xff]
      %v6955 = vld [vmem:[#allocation2 + $0xe0] sm:$0xff]
      %v6956 = vld [vmem:[#allocation2 + $0xf0] sm:$0xff]
      %v6957 = vld [vmem:[#allocation2 + $0xf8] sm:$0xff]
      %v6958 = vld [vmem:[#allocation2 + $0x108] sm:$0xff]
      %v6959 = vld [vmem:[#allocation2 + $0x110] sm:$0xff]
      %v6960 = vld [vmem:[#allocation2 + $0x120] sm:$0xff]
      %v6961 = vld [vmem:[#allocation2 + $0x128] sm:$0xff]
      %v6962 = vld [vmem:[#allocation2 + $0x138] sm:$0xff]
      %v6963 = vld [vmem:[#allocation2 + $0x140] sm:$0xff]
      %v6964 = vld [vmem:[#allocation2 + $0x150] sm:$0xff]
      %v6965 = vld [vmem:[#allocation2 + $0x158] sm:$0xff]
      %v6966 = vld [vmem:[#allocation2 + $0x168] sm:$0xff]
      %v6967 = vld [vmem:[#allocation2 + $0x170] sm:$0xff]
      %v6968 = vld [vmem:[#allocation2 + $0x180] sm:$0xff]
      %v6969 = vld [vmem:[#allocation2 + $0x188] sm:$0xff]
      %v6970 = vld [vmem:[#allocation2 + $0x198] sm:$0xff]
      %v6971 = vld [vmem:[#allocation2 + $0x1a0] sm:$0xff]
      %v6972 = vld [vmem:[#allocation2 + $0x1] sm:$0xff]
      %v6973 = vld [vmem:[#allocation2 + $0x9] sm:$0xff]
      %v6974 = vld [vmem:[#allocation2 + $0x19] sm:$0xff]
      %v6975 = vld [vmem:[#allocation2 + $0x21] sm:$0xff]
      %v6976 = vld [vmem:[#allocation2 + $0x31] sm:$0xff]
      %v6977 = vld [vmem:[#allocation2 + $0x39] sm:$0xff]
      %v6978 = vld [vmem:[#allocation2 + $0x49] sm:$0xff]
      %v6979 = vld [vmem:[#allocation2 + $0x51] sm:$0xff]
      %v6980 = vld [vmem:[#allocation2 + $0x61] sm:$0xff]
      %v6981 = vld [vmem:[#allocation2 + $0x69] sm:$0xff]
      %v6982 = vld [vmem:[#allocation2 + $0x79] sm:$0xff]
      %v6983 = vld [vmem:[#allocation2 + $0x81] sm:$0xff]
      %v6984 = vld [vmem:[#allocation2 + $0x91] sm:$0xff]
      %v6985 = vld [vmem:[#allocation2 + $0x99] sm:$0xff]
      %v6986 = vld [vmem:[#allocation2 + $0xa9] sm:$0xff]
      %v6987 = vld [vmem:[#allocation2 + $0xb1] sm:$0xff]
      %v6988 = vld [vmem:[#allocation2 + $0xc1] sm:$0xff]
      %v6989 = vld [vmem:[#allocation2 + $0xc9] sm:$0xff]
      %v6990 = vld [vmem:[#allocation2 + $0xd9] sm:$0xff]
      %v6991 = vld [vmem:[#allocation2 + $0xe1] sm:$0xff]
      %v6992 = vld [vmem:[#allocation2 + $0xf1] sm:$0xff]
      %v6993 = vld [vmem:[#allocation2 + $0xf9] sm:$0xff]
      %v6994 = vld [vmem:[#allocation2 + $0x109] sm:$0xff]
      %v6995 = vld [vmem:[#allocation2 + $0x111] sm:$0xff]
      %v6996 = vld [vmem:[#allocation2 + $0x121] sm:$0xff]
      %v6997 = vld [vmem:[#allocation2 + $0x129] sm:$0xff]
      %v6998 = vld [vmem:[#allocation2 + $0x139] sm:$0xff]
      %v6999 = vld [vmem:[#allocation2 + $0x141] sm:$0xff]
      %v7000 = vld [vmem:[#allocation2 + $0x151] sm:$0xff]
      %v7001 = vld [vmem:[#allocation2 + $0x159] sm:$0xff]
      %v7002 = vld [vmem:[#allocation2 + $0x169] sm:$0xff]
      %v7003 = vld [vmem:[#allocation2 + $0x171] sm:$0xff]
      %v7004 = vld [vmem:[#allocation2 + $0x181] sm:$0xff]
      %v7005 = vld [vmem:[#allocation2 + $0x189] sm:$0xff]
      %v7006 = vld [vmem:[#allocation2 + $0x199] sm:$0xff]
      %v7007 = vld [vmem:[#allocation2 + $0x1a1] sm:$0xff]
      %v7008 = vld [vmem:[#allocation2 + $0x2] sm:$0xff]
      %v7009 = vld [vmem:[#allocation2 + $0xa] sm:$0xff]
      %v7010 = vld [vmem:[#allocation2 + $0x1a] sm:$0xff]
      %v7011 = vld [vmem:[#allocation2 + $0x22] sm:$0xff]
      %v7012 = vld [vmem:[#allocation2 + $0x32] sm:$0xff]
      %v7013 = vld [vmem:[#allocation2 + $0x3a] sm:$0xff]
      %v7014 = vld [vmem:[#allocation2 + $0x4a] sm:$0xff]
      %v7015 = vld [vmem:[#allocation2 + $0x52] sm:$0xff]
      %v7016 = vld [vmem:[#allocation2 + $0x62] sm:$0xff]
      %v7017 = vld [vmem:[#allocation2 + $0x6a] sm:$0xff]
      %v7018 = vld [vmem:[#allocation2 + $0x7a] sm:$0xff]
      %v7019 = vld [vmem:[#allocation2 + $0x82] sm:$0xff]
      %v7020 = vld [vmem:[#allocation2 + $0x92] sm:$0xff]
      %v7021 = vld [vmem:[#allocation2 + $0x9a] sm:$0xff]
      %v7022 = vld [vmem:[#allocation2 + $0xaa] sm:$0xff]
      %v7023 = vld [vmem:[#allocation2 + $0xb2] sm:$0xff]
      %v7024 = vld [vmem:[#allocation2 + $0xc2] sm:$0xff]
      %v7025 = vld [vmem:[#allocation2 + $0xca] sm:$0xff]
      %v7026 = vld [vmem:[#allocation2 + $0xda] sm:$0xff]
      %v7027 = vld [vmem:[#allocation2 + $0xe2] sm:$0xff]
      %v7028 = vld [vmem:[#allocation2 + $0xf2] sm:$0xff]
      %v7029 = vld [vmem:[#allocation2 + $0xfa] sm:$0xff]
      %v7030 = vld [vmem:[#allocation2 + $0x10a] sm:$0xff]
      %v7031 = vld [vmem:[#allocation2 + $0x112] sm:$0xff]
      %v7032 = vld [vmem:[#allocation2 + $0x122] sm:$0xff]
      %v7033 = vld [vmem:[#allocation2 + $0x12a] sm:$0xff]
      %v7034 = vld [vmem:[#allocation2 + $0x13a] sm:$0xff]
      %v7035 = vld [vmem:[#allocation2 + $0x142] sm:$0xff]
      %v7036 = vld [vmem:[#allocation2 + $0x152] sm:$0xff]
      %v7037 = vld [vmem:[#allocation2 + $0x15a] sm:$0xff]
      %v7038 = vld [vmem:[#allocation2 + $0x16a] sm:$0xff]
      %v7039 = vld [vmem:[#allocation2 + $0x172] sm:$0xff]
      %v7040 = vld [vmem:[#allocation2 + $0x182] sm:$0xff]
      %v7041 = vld [vmem:[#allocation2 + $0x18a] sm:$0xff]
      %v7042 = vld [vmem:[#allocation2 + $0x19a] sm:$0xff]
      %v7043 = vld [vmem:[#allocation2 + $0x1a2] sm:$0xff]
      %v7044 = vld [vmem:[#allocation3] sm:$0x1]
      %v7046 = vlaneseq
      %v7047 = vshrl.u32 %v7046, 7
      %v7048 = vsub.s32 0, %v7047
      %v7049 = vrot.slane %v7044, %v7048
      %v7051 = vld [vmem:[%s10] sm:$0x1]
      %v7052 = vlaneseq
      %v7053 = vshrl.u32 %v7052, 7
      %v7054 = vsub.s32 0, %v7053
      %v7055 = vrot.slane %v7051, %v7054
      %v7056 = vmul.f32 %v6936, %v7055
      %v7057 = vmul.f32 %v6937, %v7055
      %v7058 = vmul.f32 %v6938, %v7055
      %v7059 = vmul.f32 %v6939, %v7055
      %v7060 = vmul.f32 %v6940, %v7055
      %v7061 = vmul.f32 %v6941, %v7055
      %v7062 = vmul.f32 %v6942, %v7055
      %v7063 = vmul.f32 %v6943, %v7055
      %v7064 = vmul.f32 %v6944, %v7055
      %v7065 = vmul.f32 %v6945, %v7055
      %v7066 = vmul.f32 %v6946, %v7055
      %v7067 = vmul.f32 %v6947, %v7055
      %v7068 = vmul.f32 %v6948, %v7055
      %v7069 = vmul.f32 %v6949, %v7055
      %v7070 = vmul.f32 %v6950, %v7055
      %v7071 = vmul.f32 %v6951, %v7055
      %v7072 = vmul.f32 %v6952, %v7055
      %v7073 = vmul.f32 %v6953, %v7055
      %v7074 = vmul.f32 %v6954, %v7055
      %v7075 = vmul.f32 %v6955, %v7055
      %v7076 = vmul.f32 %v6956, %v7055
      %v7077 = vmul.f32 %v6957, %v7055
      %v7078 = vmul.f32 %v6958, %v7055
      %v7079 = vmul.f32 %v6959, %v7055
      %v7080 = vmul.f32 %v6960, %v7055
      %v7081 = vmul.f32 %v6961, %v7055
      %v7082 = vmul.f32 %v6962, %v7055
      %v7083 = vmul.f32 %v6963, %v7055
      %v7084 = vmul.f32 %v6964, %v7055
      %v7085 = vmul.f32 %v6965, %v7055
      %v7086 = vmul.f32 %v6966, %v7055
      %v7087 = vmul.f32 %v6967, %v7055
      %v7088 = vsel %vm3293, %v7056, 0.0
      %7089 = vadd.xlane.f32.xlu0 %v7088
      %v7090 = vpop.xlane.xlu0 %7089
      %v7091 = vsel %vm3293, %v7057, 0.0
      %7092 = vadd.xlane.f32.xlu0 %v7091
      %v7093 = vpop.xlane.xlu0 %7092
      %v7094 = vsel %vm3293, %v7058, 0.0
      %7095 = vadd.xlane.f32.xlu0 %v7094
      %v7096 = vpop.xlane.xlu0 %7095
      %v7097 = vsel %vm3293, %v7059, 0.0
      %7098 = vadd.xlane.f32.xlu0 %v7097
      %v7099 = vpop.xlane.xlu0 %7098
      %v7100 = vsel %vm3293, %v7060, 0.0
      %7101 = vadd.xlane.f32.xlu0 %v7100
      %v7102 = vpop.xlane.xlu0 %7101
      %v7103 = vsel %vm3293, %v7061, 0.0
      %7104 = vadd.xlane.f32.xlu0 %v7103
      %v7105 = vpop.xlane.xlu0 %7104
      %v7106 = vsel %vm3293, %v7062, 0.0
      %7107 = vadd.xlane.f32.xlu0 %v7106
      %v7108 = vpop.xlane.xlu0 %7107
      %v7109 = vsel %vm3293, %v7063, 0.0
      %7110 = vadd.xlane.f32.xlu0 %v7109
      %v7111 = vpop.xlane.xlu0 %7110
      %v7112 = vsel %vm3293, %v7064, 0.0
      %7113 = vadd.xlane.f32.xlu0 %v7112
      %v7114 = vpop.xlane.xlu0 %7113
      %v7115 = vsel %vm3293, %v7065, 0.0
      %7116 = vadd.xlane.f32.xlu0 %v7115
      %v7117 = vpop.xlane.xlu0 %7116
      %v7118 = vsel %vm3293, %v7066, 0.0
      %7119 = vadd.xlane.f32.xlu0 %v7118
      %v7120 = vpop.xlane.xlu0 %7119
      %v7121 = vsel %vm3293, %v7067, 0.0
      %7122 = vadd.xlane.f32.xlu0 %v7121
      %v7123 = vpop.xlane.xlu0 %7122
      %v7124 = vsel %vm3293, %v7068, 0.0
      %7125 = vadd.xlane.f32.xlu0 %v7124
      %v7126 = vpop.xlane.xlu0 %7125
      %v7127 = vsel %vm3293, %v7069, 0.0
      %7128 = vadd.xlane.f32.xlu0 %v7127
      %v7129 = vpop.xlane.xlu0 %7128
      %v7130 = vsel %vm3293, %v7070, 0.0
      %7131 = vadd.xlane.f32.xlu0 %v7130
      %v7132 = vpop.xlane.xlu0 %7131
      %v7133 = vsel %vm3293, %v7071, 0.0
      %7134 = vadd.xlane.f32.xlu0 %v7133
      %v7135 = vpop.xlane.xlu0 %7134
      %v7136 = vsel %vm3293, %v7072, 0.0
      %7137 = vadd.xlane.f32.xlu0 %v7136
      %v7138 = vpop.xlane.xlu0 %7137
      %v7139 = vsel %vm3293, %v7073, 0.0
      %7140 = vadd.xlane.f32.xlu0 %v7139
      %v7141 = vpop.xlane.xlu0 %7140
      %v7142 = vsel %vm3293, %v7074, 0.0
      %7143 = vadd.xlane.f32.xlu0 %v7142
      %v7144 = vpop.xlane.xlu0 %7143
      %v7145 = vsel %vm3293, %v7075, 0.0
      %7146 = vadd.xlane.f32.xlu0 %v7145
      %v7147 = vpop.xlane.xlu0 %7146
      %v7148 = vsel %vm3293, %v7076, 0.0
      %7149 = vadd.xlane.f32.xlu0 %v7148
      %v7150 = vpop.xlane.xlu0 %7149
      %v7151 = vsel %vm3293, %v7077, 0.0
      %7152 = vadd.xlane.f32.xlu0 %v7151
      %v7153 = vpop.xlane.xlu0 %7152
      %v7154 = vsel %vm3293, %v7078, 0.0
      %7155 = vadd.xlane.f32.xlu0 %v7154
      %v7156 = vpop.xlane.xlu0 %7155
      %v7157 = vsel %vm3293, %v7079, 0.0
      %7158 = vadd.xlane.f32.xlu0 %v7157
      %v7159 = vpop.xlane.xlu0 %7158
      %v7160 = vsel %vm3293, %v7080, 0.0
      %7161 = vadd.xlane.f32.xlu0 %v7160
      %v7162 = vpop.xlane.xlu0 %7161
      %v7163 = vsel %vm3293, %v7081, 0.0
      %7164 = vadd.xlane.f32.xlu0 %v7163
      %v7165 = vpop.xlane.xlu0 %7164
      %v7166 = vsel %vm3293, %v7082, 0.0
      %7167 = vadd.xlane.f32.xlu0 %v7166
      %v7168 = vpop.xlane.xlu0 %7167
      %v7169 = vsel %vm3293, %v7083, 0.0
      %7170 = vadd.xlane.f32.xlu0 %v7169
      %v7171 = vpop.xlane.xlu0 %7170
      %v7172 = vsel %vm3293, %v7084, 0.0
      %7173 = vadd.xlane.f32.xlu0 %v7172
      %v7174 = vpop.xlane.xlu0 %7173
      %v7175 = vsel %vm3293, %v7085, 0.0
      %7176 = vadd.xlane.f32.xlu0 %v7175
      %v7177 = vpop.xlane.xlu0 %7176
      %v7178 = vsel %vm3293, %v7086, 0.0
      %7179 = vadd.xlane.f32.xlu0 %v7178
      %v7180 = vpop.xlane.xlu0 %7179
      %v7181 = vsel %vm3293, %v7087, 0.0
      %7182 = vadd.xlane.f32.xlu0 %v7181
      %v7183 = vpop.xlane.xlu0 %7182
      %v7184 = vadd.f32 %v7049, %v7090
      %v7185 = vadd.f32 %v7049, %v7093
      %v7186 = vadd.f32 %v7049, %v7096
      %v7187 = vadd.f32 %v7049, %v7099
      %v7188 = vadd.f32 %v7049, %v7102
      %v7189 = vadd.f32 %v7049, %v7105
      %v7190 = vadd.f32 %v7049, %v7108
      %v7191 = vadd.f32 %v7049, %v7111
      %v7192 = vadd.f32 %v7049, %v7114
      %v7193 = vadd.f32 %v7049, %v7117
      %v7194 = vadd.f32 %v7049, %v7120
      %v7195 = vadd.f32 %v7049, %v7123
      %v7196 = vadd.f32 %v7049, %v7126
      %v7197 = vadd.f32 %v7049, %v7129
      %v7198 = vadd.f32 %v7049, %v7132
      %v7199 = vadd.f32 %v7049, %v7135
      %v7200 = vadd.f32 %v7049, %v7138
      %v7201 = vadd.f32 %v7049, %v7141
      %v7202 = vadd.f32 %v7049, %v7144
      %v7203 = vadd.f32 %v7049, %v7147
      %v7204 = vadd.f32 %v7049, %v7150
      %v7205 = vadd.f32 %v7049, %v7153
      %v7206 = vadd.f32 %v7049, %v7156
      %v7207 = vadd.f32 %v7049, %v7159
      %v7208 = vadd.f32 %v7049, %v7162
      %v7209 = vadd.f32 %v7049, %v7165
      %v7210 = vadd.f32 %v7049, %v7168
      %v7211 = vadd.f32 %v7049, %v7171
      %v7212 = vadd.f32 %v7049, %v7174
      %v7213 = vadd.f32 %v7049, %v7177
      %v7214 = vadd.f32 %v7049, %v7180
      %v7215 = vadd.f32 %v7049, %v7183
      %v7216 = vld [vmem:[%s10 + $0x1] sm:$0x1]
      %v7217 = vlaneseq
      %v7218 = vshrl.u32 %v7217, 7
      %v7219 = vsub.s32 0, %v7218
      %v7220 = vrot.slane %v7216, %v7219
      %v7221 = vmul.f32 %v6972, %v7220
      %v7222 = vmul.f32 %v6973, %v7220
      %v7223 = vmul.f32 %v6974, %v7220
      %v7224 = vmul.f32 %v6975, %v7220
      %v7225 = vmul.f32 %v6976, %v7220
      %v7226 = vmul.f32 %v6977, %v7220
      %v7227 = vmul.f32 %v6978, %v7220
      %v7228 = vmul.f32 %v6979, %v7220
      %v7229 = vmul.f32 %v6980, %v7220
      %v7230 = vmul.f32 %v6981, %v7220
      %v7231 = vmul.f32 %v6982, %v7220
      %v7232 = vmul.f32 %v6983, %v7220
      %v7233 = vmul.f32 %v6984, %v7220
      %v7234 = vmul.f32 %v6985, %v7220
      %v7235 = vmul.f32 %v6986, %v7220
      %v7236 = vmul.f32 %v6987, %v7220
      %v7237 = vmul.f32 %v6988, %v7220
      %v7238 = vmul.f32 %v6989, %v7220
      %v7239 = vmul.f32 %v6990, %v7220
      %v7240 = vmul.f32 %v6991, %v7220
      %v7241 = vmul.f32 %v6992, %v7220
      %v7242 = vmul.f32 %v6993, %v7220
      %v7243 = vmul.f32 %v6994, %v7220
      %v7244 = vmul.f32 %v6995, %v7220
      %v7245 = vmul.f32 %v6996, %v7220
      %v7246 = vmul.f32 %v6997, %v7220
      %v7247 = vmul.f32 %v6998, %v7220
      %v7248 = vmul.f32 %v6999, %v7220
      %v7249 = vmul.f32 %v7000, %v7220
      %v7250 = vmul.f32 %v7001, %v7220
      %v7251 = vmul.f32 %v7002, %v7220
      %v7252 = vmul.f32 %v7003, %v7220
      %v7253 = vsel %vm3293, %v7221, 0.0
      %7254 = vadd.xlane.f32.xlu0 %v7253
      %v7255 = vpop.xlane.xlu0 %7254
      %v7256 = vsel %vm3293, %v7222, 0.0
      %7257 = vadd.xlane.f32.xlu0 %v7256
      %v7258 = vpop.xlane.xlu0 %7257
      %v7259 = vsel %vm3293, %v7223, 0.0
      %7260 = vadd.xlane.f32.xlu0 %v7259
      %v7261 = vpop.xlane.xlu0 %7260
      %v7262 = vsel %vm3293, %v7224, 0.0
      %7263 = vadd.xlane.f32.xlu0 %v7262
      %v7264 = vpop.xlane.xlu0 %7263
      %v7265 = vsel %vm3293, %v7225, 0.0
      %7266 = vadd.xlane.f32.xlu0 %v7265
      %v7267 = vpop.xlane.xlu0 %7266
      %v7268 = vsel %vm3293, %v7226, 0.0
      %7269 = vadd.xlane.f32.xlu0 %v7268
      %v7270 = vpop.xlane.xlu0 %7269
      %v7271 = vsel %vm3293, %v7227, 0.0
      %7272 = vadd.xlane.f32.xlu0 %v7271
      %v7273 = vpop.xlane.xlu0 %7272
      %v7274 = vsel %vm3293, %v7228, 0.0
      %7275 = vadd.xlane.f32.xlu0 %v7274
      %v7276 = vpop.xlane.xlu0 %7275
      %v7277 = vsel %vm3293, %v7229, 0.0
      %7278 = vadd.xlane.f32.xlu0 %v7277
      %v7279 = vpop.xlane.xlu0 %7278
      %v7280 = vsel %vm3293, %v7230, 0.0
      %7281 = vadd.xlane.f32.xlu0 %v7280
      %v7282 = vpop.xlane.xlu0 %7281
      %v7283 = vsel %vm3293, %v7231, 0.0
      %7284 = vadd.xlane.f32.xlu0 %v7283
      %v7285 = vpop.xlane.xlu0 %7284
      %v7286 = vsel %vm3293, %v7232, 0.0
      %7287 = vadd.xlane.f32.xlu0 %v7286
      %v7288 = vpop.xlane.xlu0 %7287
      %v7289 = vsel %vm3293, %v7233, 0.0
      %7290 = vadd.xlane.f32.xlu0 %v7289
      %v7291 = vpop.xlane.xlu0 %7290
      %v7292 = vsel %vm3293, %v7234, 0.0
      %7293 = vadd.xlane.f32.xlu0 %v7292
      %v7294 = vpop.xlane.xlu0 %7293
      %v7295 = vsel %vm3293, %v7235, 0.0
      %7296 = vadd.xlane.f32.xlu0 %v7295
      %v7297 = vpop.xlane.xlu0 %7296
      %v7298 = vsel %vm3293, %v7236, 0.0
      %7299 = vadd.xlane.f32.xlu0 %v7298
      %v7300 = vpop.xlane.xlu0 %7299
      %v7301 = vsel %vm3293, %v7237, 0.0
      %7302 = vadd.xlane.f32.xlu0 %v7301
      %v7303 = vpop.xlane.xlu0 %7302
      %v7304 = vsel %vm3293, %v7238, 0.0
      %7305 = vadd.xlane.f32.xlu0 %v7304
      %v7306 = vpop.xlane.xlu0 %7305
      %v7307 = vsel %vm3293, %v7239, 0.0
      %7308 = vadd.xlane.f32.xlu0 %v7307
      %v7309 = vpop.xlane.xlu0 %7308
      %v7310 = vsel %vm3293, %v7240, 0.0
      %7311 = vadd.xlane.f32.xlu0 %v7310
      %v7312 = vpop.xlane.xlu0 %7311
      %v7313 = vsel %vm3293, %v7241, 0.0
      %7314 = vadd.xlane.f32.xlu0 %v7313
      %v7315 = vpop.xlane.xlu0 %7314
      %v7316 = vsel %vm3293, %v7242, 0.0
      %7317 = vadd.xlane.f32.xlu0 %v7316
      %v7318 = vpop.xlane.xlu0 %7317
      %v7319 = vsel %vm3293, %v7243, 0.0
      %7320 = vadd.xlane.f32.xlu0 %v7319
      %v7321 = vpop.xlane.xlu0 %7320
      %v7322 = vsel %vm3293, %v7244, 0.0
      %7323 = vadd.xlane.f32.xlu0 %v7322
      %v7324 = vpop.xlane.xlu0 %7323
      %v7325 = vsel %vm3293, %v7245, 0.0
      %7326 = vadd.xlane.f32.xlu0 %v7325
      %v7327 = vpop.xlane.xlu0 %7326
      %v7328 = vsel %vm3293, %v7246, 0.0
      %7329 = vadd.xlane.f32.xlu0 %v7328
      %v7330 = vpop.xlane.xlu0 %7329
      %v7331 = vsel %vm3293, %v7247, 0.0
      %7332 = vadd.xlane.f32.xlu0 %v7331
      %v7333 = vpop.xlane.xlu0 %7332
      %v7334 = vsel %vm3293, %v7248, 0.0
      %7335 = vadd.xlane.f32.xlu0 %v7334
      %v7336 = vpop.xlane.xlu0 %7335
      %v7337 = vsel %vm3293, %v7249, 0.0
      %7338 = vadd.xlane.f32.xlu0 %v7337
      %v7339 = vpop.xlane.xlu0 %7338
      %v7340 = vsel %vm3293, %v7250, 0.0
      %7341 = vadd.xlane.f32.xlu0 %v7340
      %v7342 = vpop.xlane.xlu0 %7341
      %v7343 = vsel %vm3293, %v7251, 0.0
      %7344 = vadd.xlane.f32.xlu0 %v7343
      %v7345 = vpop.xlane.xlu0 %7344
      %v7346 = vsel %vm3293, %v7252, 0.0
      %7347 = vadd.xlane.f32.xlu0 %v7346
      %v7348 = vpop.xlane.xlu0 %7347
      %v7349 = vadd.f32 %v7184, %v7255
      %v7350 = vadd.f32 %v7185, %v7258
      %v7351 = vadd.f32 %v7186, %v7261
      %v7352 = vadd.f32 %v7187, %v7264
      %v7353 = vadd.f32 %v7188, %v7267
      %v7354 = vadd.f32 %v7189, %v7270
      %v7355 = vadd.f32 %v7190, %v7273
      %v7356 = vadd.f32 %v7191, %v7276
      %v7357 = vadd.f32 %v7192, %v7279
      %v7358 = vadd.f32 %v7193, %v7282
      %v7359 = vadd.f32 %v7194, %v7285
      %v7360 = vadd.f32 %v7195, %v7288
      %v7361 = vadd.f32 %v7196, %v7291
      %v7362 = vadd.f32 %v7197, %v7294
      %v7363 = vadd.f32 %v7198, %v7297
      %v7364 = vadd.f32 %v7199, %v7300
      %v7365 = vadd.f32 %v7200, %v7303
      %v7366 = vadd.f32 %v7201, %v7306
      %v7367 = vadd.f32 %v7202, %v7309
      %v7368 = vadd.f32 %v7203, %v7312
      %v7369 = vadd.f32 %v7204, %v7315
      %v7370 = vadd.f32 %v7205, %v7318
      %v7371 = vadd.f32 %v7206, %v7321
      %v7372 = vadd.f32 %v7207, %v7324
      %v7373 = vadd.f32 %v7208, %v7327
      %v7374 = vadd.f32 %v7209, %v7330
      %v7375 = vadd.f32 %v7210, %v7333
      %v7376 = vadd.f32 %v7211, %v7336
      %v7377 = vadd.f32 %v7212, %v7339
      %v7378 = vadd.f32 %v7213, %v7342
      %v7379 = vadd.f32 %v7214, %v7345
      %v7380 = vadd.f32 %v7215, %v7348
      %v7381 = vld [vmem:[%s10 + $0x2] sm:$0x1]
      %v7382 = vlaneseq
      %v7383 = vshrl.u32 %v7382, 7
      %v7384 = vsub.s32 0, %v7383
      %v7385 = vrot.slane %v7381, %v7384
      %v7386 = vmul.f32 %v7008, %v7385
      %v7387 = vmul.f32 %v7009, %v7385
      %v7388 = vmul.f32 %v7010, %v7385
      %v7389 = vmul.f32 %v7011, %v7385
      %v7390 = vmul.f32 %v7012, %v7385
      %v7391 = vmul.f32 %v7013, %v7385
      %v7392 = vmul.f32 %v7014, %v7385
      %v7393 = vmul.f32 %v7015, %v7385
      %v7394 = vmul.f32 %v7016, %v7385
      %v7395 = vmul.f32 %v7017, %v7385
      %v7396 = vmul.f32 %v7018, %v7385
      %v7397 = vmul.f32 %v7019, %v7385
      %v7398 = vmul.f32 %v7020, %v7385
      %v7399 = vmul.f32 %v7021, %v7385
      %v7400 = vmul.f32 %v7022, %v7385
      %v7401 = vmul.f32 %v7023, %v7385
      %v7402 = vmul.f32 %v7024, %v7385
      %v7403 = vmul.f32 %v7025, %v7385
      %v7404 = vmul.f32 %v7026, %v7385
      %v7405 = vmul.f32 %v7027, %v7385
      %v7406 = vmul.f32 %v7028, %v7385
      %v7407 = vmul.f32 %v7029, %v7385
      %v7408 = vmul.f32 %v7030, %v7385
      %v7409 = vmul.f32 %v7031, %v7385
      %v7410 = vmul.f32 %v7032, %v7385
      %v7411 = vmul.f32 %v7033, %v7385
      %v7412 = vmul.f32 %v7034, %v7385
      %v7413 = vmul.f32 %v7035, %v7385
      %v7414 = vmul.f32 %v7036, %v7385
      %v7415 = vmul.f32 %v7037, %v7385
      %v7416 = vmul.f32 %v7038, %v7385
      %v7417 = vmul.f32 %v7039, %v7385
      %v7418 = vsel %vm3293, %v7386, 0.0
      %7419 = vadd.xlane.f32.xlu0 %v7418
      %v7420 = vpop.xlane.xlu0 %7419
      %v7421 = vsel %vm3293, %v7387, 0.0
      %7422 = vadd.xlane.f32.xlu0 %v7421
      %v7423 = vpop.xlane.xlu0 %7422
      %v7424 = vsel %vm3293, %v7388, 0.0
      %7425 = vadd.xlane.f32.xlu0 %v7424
      %v7426 = vpop.xlane.xlu0 %7425
      %v7427 = vsel %vm3293, %v7389, 0.0
      %7428 = vadd.xlane.f32.xlu0 %v7427
      %v7429 = vpop.xlane.xlu0 %7428
      %v7430 = vsel %vm3293, %v7390, 0.0
      %7431 = vadd.xlane.f32.xlu0 %v7430
      %v7432 = vpop.xlane.xlu0 %7431
      %v7433 = vsel %vm3293, %v7391, 0.0
      %7434 = vadd.xlane.f32.xlu0 %v7433
      %v7435 = vpop.xlane.xlu0 %7434
      %v7436 = vsel %vm3293, %v7392, 0.0
      %7437 = vadd.xlane.f32.xlu0 %v7436
      %v7438 = vpop.xlane.xlu0 %7437
      %v7439 = vsel %vm3293, %v7393, 0.0
      %7440 = vadd.xlane.f32.xlu0 %v7439
      %v7441 = vpop.xlane.xlu0 %7440
      %v7442 = vsel %vm3293, %v7394, 0.0
      %7443 = vadd.xlane.f32.xlu0 %v7442
      %v7444 = vpop.xlane.xlu0 %7443
      %v7445 = vsel %vm3293, %v7395, 0.0
      %7446 = vadd.xlane.f32.xlu0 %v7445
      %v7447 = vpop.xlane.xlu0 %7446
      %v7448 = vsel %vm3293, %v7396, 0.0
      %7449 = vadd.xlane.f32.xlu0 %v7448
      %v7450 = vpop.xlane.xlu0 %7449
      %v7451 = vsel %vm3293, %v7397, 0.0
      %7452 = vadd.xlane.f32.xlu0 %v7451
      %v7453 = vpop.xlane.xlu0 %7452
      %v7454 = vsel %vm3293, %v7398, 0.0
      %7455 = vadd.xlane.f32.xlu0 %v7454
      %v7456 = vpop.xlane.xlu0 %7455
      %v7457 = vsel %vm3293, %v7399, 0.0
      %7458 = vadd.xlane.f32.xlu0 %v7457
      %v7459 = vpop.xlane.xlu0 %7458
      %v7460 = vsel %vm3293, %v7400, 0.0
      %7461 = vadd.xlane.f32.xlu0 %v7460
      %v7462 = vpop.xlane.xlu0 %7461
      %v7463 = vsel %vm3293, %v7401, 0.0
      %7464 = vadd.xlane.f32.xlu0 %v7463
      %v7465 = vpop.xlane.xlu0 %7464
      %v7466 = vsel %vm3293, %v7402, 0.0
      %7467 = vadd.xlane.f32.xlu0 %v7466
      %v7468 = vpop.xlane.xlu0 %7467
      %v7469 = vsel %vm3293, %v7403, 0.0
      %7470 = vadd.xlane.f32.xlu0 %v7469
      %v7471 = vpop.xlane.xlu0 %7470
      %v7472 = vsel %vm3293, %v7404, 0.0
      %7473 = vadd.xlane.f32.xlu0 %v7472
      %v7474 = vpop.xlane.xlu0 %7473
      %v7475 = vsel %vm3293, %v7405, 0.0
      %7476 = vadd.xlane.f32.xlu0 %v7475
      %v7477 = vpop.xlane.xlu0 %7476
      %v7478 = vsel %vm3293, %v7406, 0.0
      %7479 = vadd.xlane.f32.xlu0 %v7478
      %v7480 = vpop.xlane.xlu0 %7479
      %v7481 = vsel %vm3293, %v7407, 0.0
      %7482 = vadd.xlane.f32.xlu0 %v7481
      %v7483 = vpop.xlane.xlu0 %7482
      %v7484 = vsel %vm3293, %v7408, 0.0
      %7485 = vadd.xlane.f32.xlu0 %v7484
      %v7486 = vpop.xlane.xlu0 %7485
      %v7487 = vsel %vm3293, %v7409, 0.0
      %7488 = vadd.xlane.f32.xlu0 %v7487
      %v7489 = vpop.xlane.xlu0 %7488
      %v7490 = vsel %vm3293, %v7410, 0.0
      %7491 = vadd.xlane.f32.xlu0 %v7490
      %v7492 = vpop.xlane.xlu0 %7491
      %v7493 = vsel %vm3293, %v7411, 0.0
      %7494 = vadd.xlane.f32.xlu0 %v7493
      %v7495 = vpop.xlane.xlu0 %7494
      %v7496 = vsel %vm3293, %v7412, 0.0
      %7497 = vadd.xlane.f32.xlu0 %v7496
      %v7498 = vpop.xlane.xlu0 %7497
      %v7499 = vsel %vm3293, %v7413, 0.0
      %7500 = vadd.xlane.f32.xlu0 %v7499
      %v7501 = vpop.xlane.xlu0 %7500
      %v7502 = vsel %vm3293, %v7414, 0.0
      %7503 = vadd.xlane.f32.xlu0 %v7502
      %v7504 = vpop.xlane.xlu0 %7503
      %v7505 = vsel %vm3293, %v7415, 0.0
      %7506 = vadd.xlane.f32.xlu0 %v7505
      %v7507 = vpop.xlane.xlu0 %7506
      %v7508 = vsel %vm3293, %v7416, 0.0
      %7509 = vadd.xlane.f32.xlu0 %v7508
      %v7510 = vpop.xlane.xlu0 %7509
      %v7511 = vsel %vm3293, %v7417, 0.0
      %7512 = vadd.xlane.f32.xlu0 %v7511
      %v7513 = vpop.xlane.xlu0 %7512
      %v7514 = vadd.f32 %v7349, %v7420
      %v7515 = vadd.f32 %v7350, %v7423
      %v7516 = vadd.f32 %v7351, %v7426
      %v7517 = vadd.f32 %v7352, %v7429
      %v7518 = vadd.f32 %v7353, %v7432
      %v7519 = vadd.f32 %v7354, %v7435
      %v7520 = vadd.f32 %v7355, %v7438
      %v7521 = vadd.f32 %v7356, %v7441
      %v7522 = vadd.f32 %v7357, %v7444
      %v7523 = vadd.f32 %v7358, %v7447
      %v7524 = vadd.f32 %v7359, %v7450
      %v7525 = vadd.f32 %v7360, %v7453
      %v7526 = vadd.f32 %v7361, %v7456
      %v7527 = vadd.f32 %v7362, %v7459
      %v7528 = vadd.f32 %v7363, %v7462
      %v7529 = vadd.f32 %v7364, %v7465
      %v7530 = vadd.f32 %v7365, %v7468
      %v7531 = vadd.f32 %v7366, %v7471
      %v7532 = vadd.f32 %v7367, %v7474
      %v7533 = vadd.f32 %v7368, %v7477
      %v7534 = vadd.f32 %v7369, %v7480
      %v7535 = vadd.f32 %v7370, %v7483
      %v7536 = vadd.f32 %v7371, %v7486
      %v7537 = vadd.f32 %v7372, %v7489
      %v7538 = vadd.f32 %v7373, %v7492
      %v7539 = vadd.f32 %v7374, %v7495
      %v7540 = vadd.f32 %v7375, %v7498
      %v7541 = vadd.f32 %v7376, %v7501
      %v7542 = vadd.f32 %v7377, %v7504
      %v7543 = vadd.f32 %v7378, %v7507
      %v7544 = vadd.f32 %v7379, %v7510
      %v7545 = vadd.f32 %v7380, %v7513
      %v7546 = vld [vmem:[%s10 + $0x3] sm:$0x1]
      %v7547 = vlaneseq
      %v7548 = vshrl.u32 %v7547, 7
      %v7549 = vsub.s32 0, %v7548
      %v7550 = vrot.slane %v7546, %v7549
      %v7551 = vmul.f32 %v6938, %v7550
      %v7552 = vmul.f32 %v6939, %v7550
      %v7553 = vmul.f32 %v6940, %v7550
      %v7554 = vmul.f32 %v6941, %v7550
      %v7555 = vmul.f32 %v6942, %v7550
      %v7556 = vmul.f32 %v6943, %v7550
      %v7557 = vmul.f32 %v6944, %v7550
      %v7558 = vmul.f32 %v6945, %v7550
      %v7559 = vmul.f32 %v6946, %v7550
      %v7560 = vmul.f32 %v6947, %v7550
      %v7561 = vmul.f32 %v6948, %v7550
      %v7562 = vmul.f32 %v6949, %v7550
      %v7563 = vmul.f32 %v6950, %v7550
      %v7564 = vmul.f32 %v6951, %v7550
      %v7565 = vmul.f32 %v6952, %v7550
      %v7566 = vmul.f32 %v6953, %v7550
      %v7567 = vmul.f32 %v6954, %v7550
      %v7568 = vmul.f32 %v6955, %v7550
      %v7569 = vmul.f32 %v6956, %v7550
      %v7570 = vmul.f32 %v6957, %v7550
      %v7571 = vmul.f32 %v6958, %v7550
      %v7572 = vmul.f32 %v6959, %v7550
      %v7573 = vmul.f32 %v6960, %v7550
      %v7574 = vmul.f32 %v6961, %v7550
      %v7575 = vmul.f32 %v6962, %v7550
      %v7576 = vmul.f32 %v6963, %v7550
      %v7577 = vmul.f32 %v6964, %v7550
      %v7578 = vmul.f32 %v6965, %v7550
      %v7579 = vmul.f32 %v6966, %v7550
      %v7580 = vmul.f32 %v6967, %v7550
      %v7581 = vmul.f32 %v6968, %v7550
      %v7582 = vmul.f32 %v6969, %v7550
      %v7583 = vsel %vm3293, %v7551, 0.0
      %7584 = vadd.xlane.f32.xlu0 %v7583
      %v7585 = vpop.xlane.xlu0 %7584
      %v7586 = vsel %vm3293, %v7552, 0.0
      %7587 = vadd.xlane.f32.xlu0 %v7586
      %v7588 = vpop.xlane.xlu0 %7587
      %v7589 = vsel %vm3293, %v7553, 0.0
      %7590 = vadd.xlane.f32.xlu0 %v7589
      %v7591 = vpop.xlane.xlu0 %7590
      %v7592 = vsel %vm3293, %v7554, 0.0
      %7593 = vadd.xlane.f32.xlu0 %v7592
      %v7594 = vpop.xlane.xlu0 %7593
      %v7595 = vsel %vm3293, %v7555, 0.0
      %7596 = vadd.xlane.f32.xlu0 %v7595
      %v7597 = vpop.xlane.xlu0 %7596
      %v7598 = vsel %vm3293, %v7556, 0.0
      %7599 = vadd.xlane.f32.xlu0 %v7598
      %v7600 = vpop.xlane.xlu0 %7599
      %v7601 = vsel %vm3293, %v7557, 0.0
      %7602 = vadd.xlane.f32.xlu0 %v7601
      %v7603 = vpop.xlane.xlu0 %7602
      %v7604 = vsel %vm3293, %v7558, 0.0
      %7605 = vadd.xlane.f32.xlu0 %v7604
      %v7606 = vpop.xlane.xlu0 %7605
      %v7607 = vsel %vm3293, %v7559, 0.0
      %7608 = vadd.xlane.f32.xlu0 %v7607
      %v7609 = vpop.xlane.xlu0 %7608
      %v7610 = vsel %vm3293, %v7560, 0.0
      %7611 = vadd.xlane.f32.xlu0 %v7610
      %v7612 = vpop.xlane.xlu0 %7611
      %v7613 = vsel %vm3293, %v7561, 0.0
      %7614 = vadd.xlane.f32.xlu0 %v7613
      %v7615 = vpop.xlane.xlu0 %7614
      %v7616 = vsel %vm3293, %v7562, 0.0
      %7617 = vadd.xlane.f32.xlu0 %v7616
      %v7618 = vpop.xlane.xlu0 %7617
      %v7619 = vsel %vm3293, %v7563, 0.0
      %7620 = vadd.xlane.f32.xlu0 %v7619
      %v7621 = vpop.xlane.xlu0 %7620
      %v7622 = vsel %vm3293, %v7564, 0.0
      %7623 = vadd.xlane.f32.xlu0 %v7622
      %v7624 = vpop.xlane.xlu0 %7623
      %v7625 = vsel %vm3293, %v7565, 0.0
      %7626 = vadd.xlane.f32.xlu0 %v7625
      %v7627 = vpop.xlane.xlu0 %7626
      %v7628 = vsel %vm3293, %v7566, 0.0
      %7629 = vadd.xlane.f32.xlu0 %v7628
      %v7630 = vpop.xlane.xlu0 %7629
      %v7631 = vsel %vm3293, %v7567, 0.0
      %7632 = vadd.xlane.f32.xlu0 %v7631
      %v7633 = vpop.xlane.xlu0 %7632
      %v7634 = vsel %vm3293, %v7568, 0.0
      %7635 = vadd.xlane.f32.xlu0 %v7634
      %v7636 = vpop.xlane.xlu0 %7635
      %v7637 = vsel %vm3293, %v7569, 0.0
      %7638 = vadd.xlane.f32.xlu0 %v7637
      %v7639 = vpop.xlane.xlu0 %7638
      %v7640 = vsel %vm3293, %v7570, 0.0
      %7641 = vadd.xlane.f32.xlu0 %v7640
      %v7642 = vpop.xlane.xlu0 %7641
      %v7643 = vsel %vm3293, %v7571, 0.0
      %7644 = vadd.xlane.f32.xlu0 %v7643
      %v7645 = vpop.xlane.xlu0 %7644
      %v7646 = vsel %vm3293, %v7572, 0.0
      %7647 = vadd.xlane.f32.xlu0 %v7646
      %v7648 = vpop.xlane.xlu0 %7647
      %v7649 = vsel %vm3293, %v7573, 0.0
      %7650 = vadd.xlane.f32.xlu0 %v7649
      %v7651 = vpop.xlane.xlu0 %7650
      %v7652 = vsel %vm3293, %v7574, 0.0
      %7653 = vadd.xlane.f32.xlu0 %v7652
      %v7654 = vpop.xlane.xlu0 %7653
      %v7655 = vsel %vm3293, %v7575, 0.0
      %7656 = vadd.xlane.f32.xlu0 %v7655
      %v7657 = vpop.xlane.xlu0 %7656
      %v7658 = vsel %vm3293, %v7576, 0.0
      %7659 = vadd.xlane.f32.xlu0 %v7658
      %v7660 = vpop.xlane.xlu0 %7659
      %v7661 = vsel %vm3293, %v7577, 0.0
      %7662 = vadd.xlane.f32.xlu0 %v7661
      %v7663 = vpop.xlane.xlu0 %7662
      %v7664 = vsel %vm3293, %v7578, 0.0
      %7665 = vadd.xlane.f32.xlu0 %v7664
      %v7666 = vpop.xlane.xlu0 %7665
      %v7667 = vsel %vm3293, %v7579, 0.0
      %7668 = vadd.xlane.f32.xlu0 %v7667
      %v7669 = vpop.xlane.xlu0 %7668
      %v7670 = vsel %vm3293, %v7580, 0.0
      %7671 = vadd.xlane.f32.xlu0 %v7670
      %v7672 = vpop.xlane.xlu0 %7671
      %v7673 = vsel %vm3293, %v7581, 0.0
      %7674 = vadd.xlane.f32.xlu0 %v7673
      %v7675 = vpop.xlane.xlu0 %7674
      %v7676 = vsel %vm3293, %v7582, 0.0
      %7677 = vadd.xlane.f32.xlu0 %v7676
      %v7678 = vpop.xlane.xlu0 %7677
      %v7679 = vadd.f32 %v7514, %v7585
      %v7680 = vadd.f32 %v7515, %v7588
      %v7681 = vadd.f32 %v7516, %v7591
      %v7682 = vadd.f32 %v7517, %v7594
      %v7683 = vadd.f32 %v7518, %v7597
      %v7684 = vadd.f32 %v7519, %v7600
      %v7685 = vadd.f32 %v7520, %v7603
      %v7686 = vadd.f32 %v7521, %v7606
      %v7687 = vadd.f32 %v7522, %v7609
      %v7688 = vadd.f32 %v7523, %v7612
      %v7689 = vadd.f32 %v7524, %v7615
      %v7690 = vadd.f32 %v7525, %v7618
      %v7691 = vadd.f32 %v7526, %v7621
      %v7692 = vadd.f32 %v7527, %v7624
      %v7693 = vadd.f32 %v7528, %v7627
      %v7694 = vadd.f32 %v7529, %v7630
      %v7695 = vadd.f32 %v7530, %v7633
      %v7696 = vadd.f32 %v7531, %v7636
      %v7697 = vadd.f32 %v7532, %v7639
      %v7698 = vadd.f32 %v7533, %v7642
      %v7699 = vadd.f32 %v7534, %v7645
      %v7700 = vadd.f32 %v7535, %v7648
      %v7701 = vadd.f32 %v7536, %v7651
      %v7702 = vadd.f32 %v7537, %v7654
      %v7703 = vadd.f32 %v7538, %v7657
      %v7704 = vadd.f32 %v7539, %v7660
      %v7705 = vadd.f32 %v7540, %v7663
      %v7706 = vadd.f32 %v7541, %v7666
      %v7707 = vadd.f32 %v7542, %v7669
      %v7708 = vadd.f32 %v7543, %v7672
      %v7709 = vadd.f32 %v7544, %v7675
      %v7710 = vadd.f32 %v7545, %v7678
      %v7711 = vld [vmem:[%s10 + $0x4] sm:$0x1]
      %v7712 = vlaneseq
      %v7713 = vshrl.u32 %v7712, 7
      %v7714 = vsub.s32 0, %v7713
      %v7715 = vrot.slane %v7711, %v7714
      %v7716 = vmul.f32 %v6974, %v7715
      %v7717 = vmul.f32 %v6975, %v7715
      %v7718 = vmul.f32 %v6976, %v7715
      %v7719 = vmul.f32 %v6977, %v7715
      %v7720 = vmul.f32 %v6978, %v7715
      %v7721 = vmul.f32 %v6979, %v7715
      %v7722 = vmul.f32 %v6980, %v7715
      %v7723 = vmul.f32 %v6981, %v7715
      %v7724 = vmul.f32 %v6982, %v7715
      %v7725 = vmul.f32 %v6983, %v7715
      %v7726 = vmul.f32 %v6984, %v7715
      %v7727 = vmul.f32 %v6985, %v7715
      %v7728 = vmul.f32 %v6986, %v7715
      %v7729 = vmul.f32 %v6987, %v7715
      %v7730 = vmul.f32 %v6988, %v7715
      %v7731 = vmul.f32 %v6989, %v7715
      %v7732 = vmul.f32 %v6990, %v7715
      %v7733 = vmul.f32 %v6991, %v7715
      %v7734 = vmul.f32 %v6992, %v7715
      %v7735 = vmul.f32 %v6993, %v7715
      %v7736 = vmul.f32 %v6994, %v7715
      %v7737 = vmul.f32 %v6995, %v7715
      %v7738 = vmul.f32 %v6996, %v7715
      %v7739 = vmul.f32 %v6997, %v7715
      %v7740 = vmul.f32 %v6998, %v7715
      %v7741 = vmul.f32 %v6999, %v7715
      %v7742 = vmul.f32 %v7000, %v7715
      %v7743 = vmul.f32 %v7001, %v7715
      %v7744 = vmul.f32 %v7002, %v7715
      %v7745 = vmul.f32 %v7003, %v7715
      %v7746 = vmul.f32 %v7004, %v7715
      %v7747 = vmul.f32 %v7005, %v7715
      %v7748 = vsel %vm3293, %v7716, 0.0
      %7749 = vadd.xlane.f32.xlu0 %v7748
      %v7750 = vpop.xlane.xlu0 %7749
      %v7751 = vsel %vm3293, %v7717, 0.0
      %7752 = vadd.xlane.f32.xlu0 %v7751
      %v7753 = vpop.xlane.xlu0 %7752
      %v7754 = vsel %vm3293, %v7718, 0.0
      %7755 = vadd.xlane.f32.xlu0 %v7754
      %v7756 = vpop.xlane.xlu0 %7755
      %v7757 = vsel %vm3293, %v7719, 0.0
      %7758 = vadd.xlane.f32.xlu0 %v7757
      %v7759 = vpop.xlane.xlu0 %7758
      %v7760 = vsel %vm3293, %v7720, 0.0
      %7761 = vadd.xlane.f32.xlu0 %v7760
      %v7762 = vpop.xlane.xlu0 %7761
      %v7763 = vsel %vm3293, %v7721, 0.0
      %7764 = vadd.xlane.f32.xlu0 %v7763
      %v7765 = vpop.xlane.xlu0 %7764
      %v7766 = vsel %vm3293, %v7722, 0.0
      %7767 = vadd.xlane.f32.xlu0 %v7766
      %v7768 = vpop.xlane.xlu0 %7767
      %v7769 = vsel %vm3293, %v7723, 0.0
      %7770 = vadd.xlane.f32.xlu0 %v7769
      %v7771 = vpop.xlane.xlu0 %7770
      %v7772 = vsel %vm3293, %v7724, 0.0
      %7773 = vadd.xlane.f32.xlu0 %v7772
      %v7774 = vpop.xlane.xlu0 %7773
      %v7775 = vsel %vm3293, %v7725, 0.0
      %7776 = vadd.xlane.f32.xlu0 %v7775
      %v7777 = vpop.xlane.xlu0 %7776
      %v7778 = vsel %vm3293, %v7726, 0.0
      %7779 = vadd.xlane.f32.xlu0 %v7778
      %v7780 = vpop.xlane.xlu0 %7779
      %v7781 = vsel %vm3293, %v7727, 0.0
      %7782 = vadd.xlane.f32.xlu0 %v7781
      %v7783 = vpop.xlane.xlu0 %7782
      %v7784 = vsel %vm3293, %v7728, 0.0
      %7785 = vadd.xlane.f32.xlu0 %v7784
      %v7786 = vpop.xlane.xlu0 %7785
      %v7787 = vsel %vm3293, %v7729, 0.0
      %7788 = vadd.xlane.f32.xlu0 %v7787
      %v7789 = vpop.xlane.xlu0 %7788
      %v7790 = vsel %vm3293, %v7730, 0.0
      %7791 = vadd.xlane.f32.xlu0 %v7790
      %v7792 = vpop.xlane.xlu0 %7791
      %v7793 = vsel %vm3293, %v7731, 0.0
      %7794 = vadd.xlane.f32.xlu0 %v7793
      %v7795 = vpop.xlane.xlu0 %7794
      %v7796 = vsel %vm3293, %v7732, 0.0
      %7797 = vadd.xlane.f32.xlu0 %v7796
      %v7798 = vpop.xlane.xlu0 %7797
      %v7799 = vsel %vm3293, %v7733, 0.0
      %7800 = vadd.xlane.f32.xlu0 %v7799
      %v7801 = vpop.xlane.xlu0 %7800
      %v7802 = vsel %vm3293, %v7734, 0.0
      %7803 = vadd.xlane.f32.xlu0 %v7802
      %v7804 = vpop.xlane.xlu0 %7803
      %v7805 = vsel %vm3293, %v7735, 0.0
      %7806 = vadd.xlane.f32.xlu0 %v7805
      %v7807 = vpop.xlane.xlu0 %7806
      %v7808 = vsel %vm3293, %v7736, 0.0
      %7809 = vadd.xlane.f32.xlu0 %v7808
      %v7810 = vpop.xlane.xlu0 %7809
      %v7811 = vsel %vm3293, %v7737, 0.0
      %7812 = vadd.xlane.f32.xlu0 %v7811
      %v7813 = vpop.xlane.xlu0 %7812
      %v7814 = vsel %vm3293, %v7738, 0.0
      %7815 = vadd.xlane.f32.xlu0 %v7814
      %v7816 = vpop.xlane.xlu0 %7815
      %v7817 = vsel %vm3293, %v7739, 0.0
      %7818 = vadd.xlane.f32.xlu0 %v7817
      %v7819 = vpop.xlane.xlu0 %7818
      %v7820 = vsel %vm3293, %v7740, 0.0
      %7821 = vadd.xlane.f32.xlu0 %v7820
      %v7822 = vpop.xlane.xlu0 %7821
      %v7823 = vsel %vm3293, %v7741, 0.0
      %7824 = vadd.xlane.f32.xlu0 %v7823
      %v7825 = vpop.xlane.xlu0 %7824
      %v7826 = vsel %vm3293, %v7742, 0.0
      %7827 = vadd.xlane.f32.xlu0 %v7826
      %v7828 = vpop.xlane.xlu0 %7827
      %v7829 = vsel %vm3293, %v7743, 0.0
      %7830 = vadd.xlane.f32.xlu0 %v7829
      %v7831 = vpop.xlane.xlu0 %7830
      %v7832 = vsel %vm3293, %v7744, 0.0
      %7833 = vadd.xlane.f32.xlu0 %v7832
      %v7834 = vpop.xlane.xlu0 %7833
      %v7835 = vsel %vm3293, %v7745, 0.0
      %7836 = vadd.xlane.f32.xlu0 %v7835
      %v7837 = vpop.xlane.xlu0 %7836
      %v7838 = vsel %vm3293, %v7746, 0.0
      %7839 = vadd.xlane.f32.xlu0 %v7838
      %v7840 = vpop.xlane.xlu0 %7839
      %v7841 = vsel %vm3293, %v7747, 0.0
      %7842 = vadd.xlane.f32.xlu0 %v7841
      %v7843 = vpop.xlane.xlu0 %7842
      %v7844 = vadd.f32 %v7679, %v7750
      %v7845 = vadd.f32 %v7680, %v7753
      %v7846 = vadd.f32 %v7681, %v7756
      %v7847 = vadd.f32 %v7682, %v7759
      %v7848 = vadd.f32 %v7683, %v7762
      %v7849 = vadd.f32 %v7684, %v7765
      %v7850 = vadd.f32 %v7685, %v7768
      %v7851 = vadd.f32 %v7686, %v7771
      %v7852 = vadd.f32 %v7687, %v7774
      %v7853 = vadd.f32 %v7688, %v7777
      %v7854 = vadd.f32 %v7689, %v7780
      %v7855 = vadd.f32 %v7690, %v7783
      %v7856 = vadd.f32 %v7691, %v7786
      %v7857 = vadd.f32 %v7692, %v7789
      %v7858 = vadd.f32 %v7693, %v7792
      %v7859 = vadd.f32 %v7694, %v7795
      %v7860 = vadd.f32 %v7695, %v7798
      %v7861 = vadd.f32 %v7696, %v7801
      %v7862 = vadd.f32 %v7697, %v7804
      %v7863 = vadd.f32 %v7698, %v7807
      %v7864 = vadd.f32 %v7699, %v7810
      %v7865 = vadd.f32 %v7700, %v7813
      %v7866 = vadd.f32 %v7701, %v7816
      %v7867 = vadd.f32 %v7702, %v7819
      %v7868 = vadd.f32 %v7703, %v7822
      %v7869 = vadd.f32 %v7704, %v7825
      %v7870 = vadd.f32 %v7705, %v7828
      %v7871 = vadd.f32 %v7706, %v7831
      %v7872 = vadd.f32 %v7707, %v7834
      %v7873 = vadd.f32 %v7708, %v7837
      %v7874 = vadd.f32 %v7709, %v7840
      %v7875 = vadd.f32 %v7710, %v7843
      %v7876 = vld [vmem:[%s10 + $0x5] sm:$0x1]
      %v7877 = vlaneseq
      %v7878 = vshrl.u32 %v7877, 7
      %v7879 = vsub.s32 0, %v7878
      %v7880 = vrot.slane %v7876, %v7879
      %v7881 = vmul.f32 %v7010, %v7880
      %v7882 = vmul.f32 %v7011, %v7880
      %v7883 = vmul.f32 %v7012, %v7880
      %v7884 = vmul.f32 %v7013, %v7880
      %v7885 = vmul.f32 %v7014, %v7880
      %v7886 = vmul.f32 %v7015, %v7880
      %v7887 = vmul.f32 %v7016, %v7880
      %v7888 = vmul.f32 %v7017, %v7880
      %v7889 = vmul.f32 %v7018, %v7880
      %v7890 = vmul.f32 %v7019, %v7880
      %v7891 = vmul.f32 %v7020, %v7880
      %v7892 = vmul.f32 %v7021, %v7880
      %v7893 = vmul.f32 %v7022, %v7880
      %v7894 = vmul.f32 %v7023, %v7880
      %v7895 = vmul.f32 %v7024, %v7880
      %v7896 = vmul.f32 %v7025, %v7880
      %v7897 = vmul.f32 %v7026, %v7880
      %v7898 = vmul.f32 %v7027, %v7880
      %v7899 = vmul.f32 %v7028, %v7880
      %v7900 = vmul.f32 %v7029, %v7880
      %v7901 = vmul.f32 %v7030, %v7880
      %v7902 = vmul.f32 %v7031, %v7880
      %v7903 = vmul.f32 %v7032, %v7880
      %v7904 = vmul.f32 %v7033, %v7880
      %v7905 = vmul.f32 %v7034, %v7880
      %v7906 = vmul.f32 %v7035, %v7880
      %v7907 = vmul.f32 %v7036, %v7880
      %v7908 = vmul.f32 %v7037, %v7880
      %v7909 = vmul.f32 %v7038, %v7880
      %v7910 = vmul.f32 %v7039, %v7880
      %v7911 = vmul.f32 %v7040, %v7880
      %v7912 = vmul.f32 %v7041, %v7880
      %v7913 = vsel %vm3293, %v7881, 0.0
      %7914 = vadd.xlane.f32.xlu0 %v7913
      %v7915 = vpop.xlane.xlu0 %7914
      %v7916 = vsel %vm3293, %v7882, 0.0
      %7917 = vadd.xlane.f32.xlu0 %v7916
      %v7918 = vpop.xlane.xlu0 %7917
      %v7919 = vsel %vm3293, %v7883, 0.0
      %7920 = vadd.xlane.f32.xlu0 %v7919
      %v7921 = vpop.xlane.xlu0 %7920
      %v7922 = vsel %vm3293, %v7884, 0.0
      %7923 = vadd.xlane.f32.xlu0 %v7922
      %v7924 = vpop.xlane.xlu0 %7923
      %v7925 = vsel %vm3293, %v7885, 0.0
      %7926 = vadd.xlane.f32.xlu0 %v7925
      %v7927 = vpop.xlane.xlu0 %7926
      %v7928 = vsel %vm3293, %v7886, 0.0
      %7929 = vadd.xlane.f32.xlu0 %v7928
      %v7930 = vpop.xlane.xlu0 %7929
      %v7931 = vsel %vm3293, %v7887, 0.0
      %7932 = vadd.xlane.f32.xlu0 %v7931
      %v7933 = vpop.xlane.xlu0 %7932
      %v7934 = vsel %vm3293, %v7888, 0.0
      %7935 = vadd.xlane.f32.xlu0 %v7934
      %v7936 = vpop.xlane.xlu0 %7935
      %v7937 = vsel %vm3293, %v7889, 0.0
      %7938 = vadd.xlane.f32.xlu0 %v7937
      %v7939 = vpop.xlane.xlu0 %7938
      %v7940 = vsel %vm3293, %v7890, 0.0
      %7941 = vadd.xlane.f32.xlu0 %v7940
      %v7942 = vpop.xlane.xlu0 %7941
      %v7943 = vsel %vm3293, %v7891, 0.0
      %7944 = vadd.xlane.f32.xlu0 %v7943
      %v7945 = vpop.xlane.xlu0 %7944
      %v7946 = vsel %vm3293, %v7892, 0.0
      %7947 = vadd.xlane.f32.xlu0 %v7946
      %v7948 = vpop.xlane.xlu0 %7947
      %v7949 = vsel %vm3293, %v7893, 0.0
      %7950 = vadd.xlane.f32.xlu0 %v7949
      %v7951 = vpop.xlane.xlu0 %7950
      %v7952 = vsel %vm3293, %v7894, 0.0
      %7953 = vadd.xlane.f32.xlu0 %v7952
      %v7954 = vpop.xlane.xlu0 %7953
      %v7955 = vsel %vm3293, %v7895, 0.0
      %7956 = vadd.xlane.f32.xlu0 %v7955
      %v7957 = vpop.xlane.xlu0 %7956
      %v7958 = vsel %vm3293, %v7896, 0.0
      %7959 = vadd.xlane.f32.xlu0 %v7958
      %v7960 = vpop.xlane.xlu0 %7959
      %v7961 = vsel %vm3293, %v7897, 0.0
      %7962 = vadd.xlane.f32.xlu0 %v7961
      %v7963 = vpop.xlane.xlu0 %7962
      %v7964 = vsel %vm3293, %v7898, 0.0
      %7965 = vadd.xlane.f32.xlu0 %v7964
      %v7966 = vpop.xlane.xlu0 %7965
      %v7967 = vsel %vm3293, %v7899, 0.0
      %7968 = vadd.xlane.f32.xlu0 %v7967
      %v7969 = vpop.xlane.xlu0 %7968
      %v7970 = vsel %vm3293, %v7900, 0.0
      %7971 = vadd.xlane.f32.xlu0 %v7970
      %v7972 = vpop.xlane.xlu0 %7971
      %v7973 = vsel %vm3293, %v7901, 0.0
      %7974 = vadd.xlane.f32.xlu0 %v7973
      %v7975 = vpop.xlane.xlu0 %7974
      %v7976 = vsel %vm3293, %v7902, 0.0
      %7977 = vadd.xlane.f32.xlu0 %v7976
      %v7978 = vpop.xlane.xlu0 %7977
      %v7979 = vsel %vm3293, %v7903, 0.0
      %7980 = vadd.xlane.f32.xlu0 %v7979
      %v7981 = vpop.xlane.xlu0 %7980
      %v7982 = vsel %vm3293, %v7904, 0.0
      %7983 = vadd.xlane.f32.xlu0 %v7982
      %v7984 = vpop.xlane.xlu0 %7983
      %v7985 = vsel %vm3293, %v7905, 0.0
      %7986 = vadd.xlane.f32.xlu0 %v7985
      %v7987 = vpop.xlane.xlu0 %7986
      %v7988 = vsel %vm3293, %v7906, 0.0
      %7989 = vadd.xlane.f32.xlu0 %v7988
      %v7990 = vpop.xlane.xlu0 %7989
      %v7991 = vsel %vm3293, %v7907, 0.0
      %7992 = vadd.xlane.f32.xlu0 %v7991
      %v7993 = vpop.xlane.xlu0 %7992
      %v7994 = vsel %vm3293, %v7908, 0.0
      %7995 = vadd.xlane.f32.xlu0 %v7994
      %v7996 = vpop.xlane.xlu0 %7995
      %v7997 = vsel %vm3293, %v7909, 0.0
      %7998 = vadd.xlane.f32.xlu0 %v7997
      %v7999 = vpop.xlane.xlu0 %7998
      %v8000 = vsel %vm3293, %v7910, 0.0
      %8001 = vadd.xlane.f32.xlu0 %v8000
      %v8002 = vpop.xlane.xlu0 %8001
      %v8003 = vsel %vm3293, %v7911, 0.0
      %8004 = vadd.xlane.f32.xlu0 %v8003
      %v8005 = vpop.xlane.xlu0 %8004
      %v8006 = vsel %vm3293, %v7912, 0.0
      %8007 = vadd.xlane.f32.xlu0 %v8006
      %v8008 = vpop.xlane.xlu0 %8007
      %v8009 = vadd.f32 %v7844, %v7915
      %v8010 = vadd.f32 %v7845, %v7918
      %v8011 = vadd.f32 %v7846, %v7921
      %v8012 = vadd.f32 %v7847, %v7924
      %v8013 = vadd.f32 %v7848, %v7927
      %v8014 = vadd.f32 %v7849, %v7930
      %v8015 = vadd.f32 %v7850, %v7933
      %v8016 = vadd.f32 %v7851, %v7936
      %v8017 = vadd.f32 %v7852, %v7939
      %v8018 = vadd.f32 %v7853, %v7942
      %v8019 = vadd.f32 %v7854, %v7945
      %v8020 = vadd.f32 %v7855, %v7948
      %v8021 = vadd.f32 %v7856, %v7951
      %v8022 = vadd.f32 %v7857, %v7954
      %v8023 = vadd.f32 %v7858, %v7957
      %v8024 = vadd.f32 %v7859, %v7960
      %v8025 = vadd.f32 %v7860, %v7963
      %v8026 = vadd.f32 %v7861, %v7966
      %v8027 = vadd.f32 %v7862, %v7969
      %v8028 = vadd.f32 %v7863, %v7972
      %v8029 = vadd.f32 %v7864, %v7975
      %v8030 = vadd.f32 %v7865, %v7978
      %v8031 = vadd.f32 %v7866, %v7981
      %v8032 = vadd.f32 %v7867, %v7984
      %v8033 = vadd.f32 %v7868, %v7987
      %v8034 = vadd.f32 %v7869, %v7990
      %v8035 = vadd.f32 %v7870, %v7993
      %v8036 = vadd.f32 %v7871, %v7996
      %v8037 = vadd.f32 %v7872, %v7999
      %v8038 = vadd.f32 %v7873, %v8002
      %v8039 = vadd.f32 %v7874, %v8005
      %v8040 = vadd.f32 %v7875, %v8008
      %v8041 = vld [vmem:[%s10 + $0x6] sm:$0x1]
      %v8042 = vlaneseq
      %v8043 = vshrl.u32 %v8042, 7
      %v8044 = vsub.s32 0, %v8043
      %v8045 = vrot.slane %v8041, %v8044
      %v8046 = vmul.f32 %v6940, %v8045
      %v8047 = vmul.f32 %v6941, %v8045
      %v8048 = vmul.f32 %v6942, %v8045
      %v8049 = vmul.f32 %v6943, %v8045
      %v8050 = vmul.f32 %v6944, %v8045
      %v8051 = vmul.f32 %v6945, %v8045
      %v8052 = vmul.f32 %v6946, %v8045
      %v8053 = vmul.f32 %v6947, %v8045
      %v8054 = vmul.f32 %v6948, %v8045
      %v8055 = vmul.f32 %v6949, %v8045
      %v8056 = vmul.f32 %v6950, %v8045
      %v8057 = vmul.f32 %v6951, %v8045
      %v8058 = vmul.f32 %v6952, %v8045
      %v8059 = vmul.f32 %v6953, %v8045
      %v8060 = vmul.f32 %v6954, %v8045
      %v8061 = vmul.f32 %v6955, %v8045
      %v8062 = vmul.f32 %v6956, %v8045
      %v8063 = vmul.f32 %v6957, %v8045
      %v8064 = vmul.f32 %v6958, %v8045
      %v8065 = vmul.f32 %v6959, %v8045
      %v8066 = vmul.f32 %v6960, %v8045
      %v8067 = vmul.f32 %v6961, %v8045
      %v8068 = vmul.f32 %v6962, %v8045
      %v8069 = vmul.f32 %v6963, %v8045
      %v8070 = vmul.f32 %v6964, %v8045
      %v8071 = vmul.f32 %v6965, %v8045
      %v8072 = vmul.f32 %v6966, %v8045
      %v8073 = vmul.f32 %v6967, %v8045
      %v8074 = vmul.f32 %v6968, %v8045
      %v8075 = vmul.f32 %v6969, %v8045
      %v8076 = vmul.f32 %v6970, %v8045
      %v8077 = vmul.f32 %v6971, %v8045
      %v8078 = vsel %vm3293, %v8046, 0.0
      %8079 = vadd.xlane.f32.xlu0 %v8078
      %v8080 = vpop.xlane.xlu0 %8079
      %v8081 = vsel %vm3293, %v8047, 0.0
      %8082 = vadd.xlane.f32.xlu0 %v8081
      %v8083 = vpop.xlane.xlu0 %8082
      %v8084 = vsel %vm3293, %v8048, 0.0
      %8085 = vadd.xlane.f32.xlu0 %v8084
      %v8086 = vpop.xlane.xlu0 %8085
      %v8087 = vsel %vm3293, %v8049, 0.0
      %8088 = vadd.xlane.f32.xlu0 %v8087
      %v8089 = vpop.xlane.xlu0 %8088
      %v8090 = vsel %vm3293, %v8050, 0.0
      %8091 = vadd.xlane.f32.xlu0 %v8090
      %v8092 = vpop.xlane.xlu0 %8091
      %v8093 = vsel %vm3293, %v8051, 0.0
      %8094 = vadd.xlane.f32.xlu0 %v8093
      %v8095 = vpop.xlane.xlu0 %8094
      %v8096 = vsel %vm3293, %v8052, 0.0
      %8097 = vadd.xlane.f32.xlu0 %v8096
      %v8098 = vpop.xlane.xlu0 %8097
      %v8099 = vsel %vm3293, %v8053, 0.0
      %8100 = vadd.xlane.f32.xlu0 %v8099
      %v8101 = vpop.xlane.xlu0 %8100
      %v8102 = vsel %vm3293, %v8054, 0.0
      %8103 = vadd.xlane.f32.xlu0 %v8102
      %v8104 = vpop.xlane.xlu0 %8103
      %v8105 = vsel %vm3293, %v8055, 0.0
      %8106 = vadd.xlane.f32.xlu0 %v8105
      %v8107 = vpop.xlane.xlu0 %8106
      %v8108 = vsel %vm3293, %v8056, 0.0
      %8109 = vadd.xlane.f32.xlu0 %v8108
      %v8110 = vpop.xlane.xlu0 %8109
      %v8111 = vsel %vm3293, %v8057, 0.0
      %8112 = vadd.xlane.f32.xlu0 %v8111
      %v8113 = vpop.xlane.xlu0 %8112
      %v8114 = vsel %vm3293, %v8058, 0.0
      %8115 = vadd.xlane.f32.xlu0 %v8114
      %v8116 = vpop.xlane.xlu0 %8115
      %v8117 = vsel %vm3293, %v8059, 0.0
      %8118 = vadd.xlane.f32.xlu0 %v8117
      %v8119 = vpop.xlane.xlu0 %8118
      %v8120 = vsel %vm3293, %v8060, 0.0
      %8121 = vadd.xlane.f32.xlu0 %v8120
      %v8122 = vpop.xlane.xlu0 %8121
      %v8123 = vsel %vm3293, %v8061, 0.0
      %8124 = vadd.xlane.f32.xlu0 %v8123
      %v8125 = vpop.xlane.xlu0 %8124
      %v8126 = vsel %vm3293, %v8062, 0.0
      %8127 = vadd.xlane.f32.xlu0 %v8126
      %v8128 = vpop.xlane.xlu0 %8127
      %v8129 = vsel %vm3293, %v8063, 0.0
      %8130 = vadd.xlane.f32.xlu0 %v8129
      %v8131 = vpop.xlane.xlu0 %8130
      %v8132 = vsel %vm3293, %v8064, 0.0
      %8133 = vadd.xlane.f32.xlu0 %v8132
      %v8134 = vpop.xlane.xlu0 %8133
      %v8135 = vsel %vm3293, %v8065, 0.0
      %8136 = vadd.xlane.f32.xlu0 %v8135
      %v8137 = vpop.xlane.xlu0 %8136
      %v8138 = vsel %vm3293, %v8066, 0.0
      %8139 = vadd.xlane.f32.xlu0 %v8138
      %v8140 = vpop.xlane.xlu0 %8139
      %v8141 = vsel %vm3293, %v8067, 0.0
      %8142 = vadd.xlane.f32.xlu0 %v8141
      %v8143 = vpop.xlane.xlu0 %8142
      %v8144 = vsel %vm3293, %v8068, 0.0
      %8145 = vadd.xlane.f32.xlu0 %v8144
      %v8146 = vpop.xlane.xlu0 %8145
      %v8147 = vsel %vm3293, %v8069, 0.0
      %8148 = vadd.xlane.f32.xlu0 %v8147
      %v8149 = vpop.xlane.xlu0 %8148
      %v8150 = vsel %vm3293, %v8070, 0.0
      %8151 = vadd.xlane.f32.xlu0 %v8150
      %v8152 = vpop.xlane.xlu0 %8151
      %v8153 = vsel %vm3293, %v8071, 0.0
      %8154 = vadd.xlane.f32.xlu0 %v8153
      %v8155 = vpop.xlane.xlu0 %8154
      %v8156 = vsel %vm3293, %v8072, 0.0
      %8157 = vadd.xlane.f32.xlu0 %v8156
      %v8158 = vpop.xlane.xlu0 %8157
      %v8159 = vsel %vm3293, %v8073, 0.0
      %8160 = vadd.xlane.f32.xlu0 %v8159
      %v8161 = vpop.xlane.xlu0 %8160
      %v8162 = vsel %vm3293, %v8074, 0.0
      %8163 = vadd.xlane.f32.xlu0 %v8162
      %v8164 = vpop.xlane.xlu0 %8163
      %v8165 = vsel %vm3293, %v8075, 0.0
      %8166 = vadd.xlane.f32.xlu0 %v8165
      %v8167 = vpop.xlane.xlu0 %8166
      %v8168 = vsel %vm3293, %v8076, 0.0
      %8169 = vadd.xlane.f32.xlu0 %v8168
      %v8170 = vpop.xlane.xlu0 %8169
      %v8171 = vsel %vm3293, %v8077, 0.0
      %8172 = vadd.xlane.f32.xlu0 %v8171
      %v8173 = vpop.xlane.xlu0 %8172
      %v8174 = vadd.f32 %v8009, %v8080
      %v8175 = vadd.f32 %v8010, %v8083
      %v8176 = vadd.f32 %v8011, %v8086
      %v8177 = vadd.f32 %v8012, %v8089
      %v8178 = vadd.f32 %v8013, %v8092
      %v8179 = vadd.f32 %v8014, %v8095
      %v8180 = vadd.f32 %v8015, %v8098
      %v8181 = vadd.f32 %v8016, %v8101
      %v8182 = vadd.f32 %v8017, %v8104
      %v8183 = vadd.f32 %v8018, %v8107
      %v8184 = vadd.f32 %v8019, %v8110
      %v8185 = vadd.f32 %v8020, %v8113
      %v8186 = vadd.f32 %v8021, %v8116
      %v8187 = vadd.f32 %v8022, %v8119
      %v8188 = vadd.f32 %v8023, %v8122
      %v8189 = vadd.f32 %v8024, %v8125
      %v8190 = vadd.f32 %v8025, %v8128
      %v8191 = vadd.f32 %v8026, %v8131
      %v8192 = vadd.f32 %v8027, %v8134
      %v8193 = vadd.f32 %v8028, %v8137
      %v8194 = vadd.f32 %v8029, %v8140
      %v8195 = vadd.f32 %v8030, %v8143
      %v8196 = vadd.f32 %v8031, %v8146
      %v8197 = vadd.f32 %v8032, %v8149
      %v8198 = vadd.f32 %v8033, %v8152
      %v8199 = vadd.f32 %v8034, %v8155
      %v8200 = vadd.f32 %v8035, %v8158
      %v8201 = vadd.f32 %v8036, %v8161
      %v8202 = vadd.f32 %v8037, %v8164
      %v8203 = vadd.f32 %v8038, %v8167
      %v8204 = vadd.f32 %v8039, %v8170
      %v8205 = vadd.f32 %v8040, %v8173
      %v8206 = vld [vmem:[%s10 + $0x7] sm:$0x1]
      %v8207 = vlaneseq
      %v8208 = vshrl.u32 %v8207, 7
      %v8209 = vsub.s32 0, %v8208
      %v8210 = vrot.slane %v8206, %v8209
      %v8211 = vmul.f32 %v6976, %v8210
      %v8212 = vmul.f32 %v6977, %v8210
      %v8213 = vmul.f32 %v6978, %v8210
      %v8214 = vmul.f32 %v6979, %v8210
      %v8215 = vmul.f32 %v6980, %v8210
      %v8216 = vmul.f32 %v6981, %v8210
      %v8217 = vmul.f32 %v6982, %v8210
      %v8218 = vmul.f32 %v6983, %v8210
      %v8219 = vmul.f32 %v6984, %v8210
      %v8220 = vmul.f32 %v6985, %v8210
      %v8221 = vmul.f32 %v6986, %v8210
      %v8222 = vmul.f32 %v6987, %v8210
      %v8223 = vmul.f32 %v6988, %v8210
      %v8224 = vmul.f32 %v6989, %v8210
      %v8225 = vmul.f32 %v6990, %v8210
      %v8226 = vmul.f32 %v6991, %v8210
      %v8227 = vmul.f32 %v6992, %v8210
      %v8228 = vmul.f32 %v6993, %v8210
      %v8229 = vmul.f32 %v6994, %v8210
      %v8230 = vmul.f32 %v6995, %v8210
      %v8231 = vmul.f32 %v6996, %v8210
      %v8232 = vmul.f32 %v6997, %v8210
      %v8233 = vmul.f32 %v6998, %v8210
      %v8234 = vmul.f32 %v6999, %v8210
      %v8235 = vmul.f32 %v7000, %v8210
      %v8236 = vmul.f32 %v7001, %v8210
      %v8237 = vmul.f32 %v7002, %v8210
      %v8238 = vmul.f32 %v7003, %v8210
      %v8239 = vmul.f32 %v7004, %v8210
      %v8240 = vmul.f32 %v7005, %v8210
      %v8241 = vmul.f32 %v7006, %v8210
      %v8242 = vmul.f32 %v7007, %v8210
      %v8243 = vsel %vm3293, %v8211, 0.0
      %8244 = vadd.xlane.f32.xlu0 %v8243
      %v8245 = vpop.xlane.xlu0 %8244
      %v8246 = vsel %vm3293, %v8212, 0.0
      %8247 = vadd.xlane.f32.xlu0 %v8246
      %v8248 = vpop.xlane.xlu0 %8247
      %v8249 = vsel %vm3293, %v8213, 0.0
      %8250 = vadd.xlane.f32.xlu0 %v8249
      %v8251 = vpop.xlane.xlu0 %8250
      %v8252 = vsel %vm3293, %v8214, 0.0
      %8253 = vadd.xlane.f32.xlu0 %v8252
      %v8254 = vpop.xlane.xlu0 %8253
      %v8255 = vsel %vm3293, %v8215, 0.0
      %8256 = vadd.xlane.f32.xlu0 %v8255
      %v8257 = vpop.xlane.xlu0 %8256
      %v8258 = vsel %vm3293, %v8216, 0.0
      %8259 = vadd.xlane.f32.xlu0 %v8258
      %v8260 = vpop.xlane.xlu0 %8259
      %v8261 = vsel %vm3293, %v8217, 0.0
      %8262 = vadd.xlane.f32.xlu0 %v8261
      %v8263 = vpop.xlane.xlu0 %8262
      %v8264 = vsel %vm3293, %v8218, 0.0
      %8265 = vadd.xlane.f32.xlu0 %v8264
      %v8266 = vpop.xlane.xlu0 %8265
      %v8267 = vsel %vm3293, %v8219, 0.0
      %8268 = vadd.xlane.f32.xlu0 %v8267
      %v8269 = vpop.xlane.xlu0 %8268
      %v8270 = vsel %vm3293, %v8220, 0.0
      %8271 = vadd.xlane.f32.xlu0 %v8270
      %v8272 = vpop.xlane.xlu0 %8271
      %v8273 = vsel %vm3293, %v8221, 0.0
      %8274 = vadd.xlane.f32.xlu0 %v8273
      %v8275 = vpop.xlane.xlu0 %8274
      %v8276 = vsel %vm3293, %v8222, 0.0
      %8277 = vadd.xlane.f32.xlu0 %v8276
      %v8278 = vpop.xlane.xlu0 %8277
      %v8279 = vsel %vm3293, %v8223, 0.0
      %8280 = vadd.xlane.f32.xlu0 %v8279
      %v8281 = vpop.xlane.xlu0 %8280
      %v8282 = vsel %vm3293, %v8224, 0.0
      %8283 = vadd.xlane.f32.xlu0 %v8282
      %v8284 = vpop.xlane.xlu0 %8283
      %v8285 = vsel %vm3293, %v8225, 0.0
      %8286 = vadd.xlane.f32.xlu0 %v8285
      %v8287 = vpop.xlane.xlu0 %8286
      %v8288 = vsel %vm3293, %v8226, 0.0
      %8289 = vadd.xlane.f32.xlu0 %v8288
      %v8290 = vpop.xlane.xlu0 %8289
      %v8291 = vsel %vm3293, %v8227, 0.0
      %8292 = vadd.xlane.f32.xlu0 %v8291
      %v8293 = vpop.xlane.xlu0 %8292
      %v8294 = vsel %vm3293, %v8228, 0.0
      %8295 = vadd.xlane.f32.xlu0 %v8294
      %v8296 = vpop.xlane.xlu0 %8295
      %v8297 = vsel %vm3293, %v8229, 0.0
      %8298 = vadd.xlane.f32.xlu0 %v8297
      %v8299 = vpop.xlane.xlu0 %8298
      %v8300 = vsel %vm3293, %v8230, 0.0
      %8301 = vadd.xlane.f32.xlu0 %v8300
      %v8302 = vpop.xlane.xlu0 %8301
      %v8303 = vsel %vm3293, %v8231, 0.0
      %8304 = vadd.xlane.f32.xlu0 %v8303
      %v8305 = vpop.xlane.xlu0 %8304
      %v8306 = vsel %vm3293, %v8232, 0.0
      %8307 = vadd.xlane.f32.xlu0 %v8306
      %v8308 = vpop.xlane.xlu0 %8307
      %v8309 = vsel %vm3293, %v8233, 0.0
      %8310 = vadd.xlane.f32.xlu0 %v8309
      %v8311 = vpop.xlane.xlu0 %8310
      %v8312 = vsel %vm3293, %v8234, 0.0
      %8313 = vadd.xlane.f32.xlu0 %v8312
      %v8314 = vpop.xlane.xlu0 %8313
      %v8315 = vsel %vm3293, %v8235, 0.0
      %8316 = vadd.xlane.f32.xlu0 %v8315
      %v8317 = vpop.xlane.xlu0 %8316
      %v8318 = vsel %vm3293, %v8236, 0.0
      %8319 = vadd.xlane.f32.xlu0 %v8318
      %v8320 = vpop.xlane.xlu0 %8319
      %v8321 = vsel %vm3293, %v8237, 0.0
      %8322 = vadd.xlane.f32.xlu0 %v8321
      %v8323 = vpop.xlane.xlu0 %8322
      %v8324 = vsel %vm3293, %v8238, 0.0
      %8325 = vadd.xlane.f32.xlu0 %v8324
      %v8326 = vpop.xlane.xlu0 %8325
      %v8327 = vsel %vm3293, %v8239, 0.0
      %8328 = vadd.xlane.f32.xlu0 %v8327
      %v8329 = vpop.xlane.xlu0 %8328
      %v8330 = vsel %vm3293, %v8240, 0.0
      %8331 = vadd.xlane.f32.xlu0 %v8330
      %v8332 = vpop.xlane.xlu0 %8331
      %v8333 = vsel %vm3293, %v8241, 0.0
      %8334 = vadd.xlane.f32.xlu0 %v8333
      %v8335 = vpop.xlane.xlu0 %8334
      %v8336 = vsel %vm3293, %v8242, 0.0
      %8337 = vadd.xlane.f32.xlu0 %v8336
      %v8338 = vpop.xlane.xlu0 %8337
      %v8339 = vadd.f32 %v8174, %v8245
      %v8340 = vadd.f32 %v8175, %v8248
      %v8341 = vadd.f32 %v8176, %v8251
      %v8342 = vadd.f32 %v8177, %v8254
      %v8343 = vadd.f32 %v8178, %v8257
      %v8344 = vadd.f32 %v8179, %v8260
      %v8345 = vadd.f32 %v8180, %v8263
      %v8346 = vadd.f32 %v8181, %v8266
      %v8347 = vadd.f32 %v8182, %v8269
      %v8348 = vadd.f32 %v8183, %v8272
      %v8349 = vadd.f32 %v8184, %v8275
      %v8350 = vadd.f32 %v8185, %v8278
      %v8351 = vadd.f32 %v8186, %v8281
      %v8352 = vadd.f32 %v8187, %v8284
      %v8353 = vadd.f32 %v8188, %v8287
      %v8354 = vadd.f32 %v8189, %v8290
      %v8355 = vadd.f32 %v8190, %v8293
      %v8356 = vadd.f32 %v8191, %v8296
      %v8357 = vadd.f32 %v8192, %v8299
      %v8358 = vadd.f32 %v8193, %v8302
      %v8359 = vadd.f32 %v8194, %v8305
      %v8360 = vadd.f32 %v8195, %v8308
      %v8361 = vadd.f32 %v8196, %v8311
      %v8362 = vadd.f32 %v8197, %v8314
      %v8363 = vadd.f32 %v8198, %v8317
      %v8364 = vadd.f32 %v8199, %v8320
      %v8365 = vadd.f32 %v8200, %v8323
      %v8366 = vadd.f32 %v8201, %v8326
      %v8367 = vadd.f32 %v8202, %v8329
      %v8368 = vadd.f32 %v8203, %v8332
      %v8369 = vadd.f32 %v8204, %v8335
      %v8370 = vadd.f32 %v8205, %v8338
      %v8371 = vld [vmem:[%s10 + $0x8] sm:$0x1]
      %v8372 = vlaneseq
      %v8373 = vshrl.u32 %v8372, 7
      %v8374 = vsub.s32 0, %v8373
      %v8375 = vrot.slane %v8371, %v8374
      %v8376 = vmul.f32 %v7012, %v8375
      %v8377 = vmul.f32 %v7013, %v8375
      %v8378 = vmul.f32 %v7014, %v8375
      %v8379 = vmul.f32 %v7015, %v8375
      %v8380 = vmul.f32 %v7016, %v8375
      %v8381 = vmul.f32 %v7017, %v8375
      %v8382 = vmul.f32 %v7018, %v8375
      %v8383 = vmul.f32 %v7019, %v8375
      %v8384 = vmul.f32 %v7020, %v8375
      %v8385 = vmul.f32 %v7021, %v8375
      %v8386 = vmul.f32 %v7022, %v8375
      %v8387 = vmul.f32 %v7023, %v8375
      %v8388 = vmul.f32 %v7024, %v8375
      %v8389 = vmul.f32 %v7025, %v8375
      %v8390 = vmul.f32 %v7026, %v8375
      %v8391 = vmul.f32 %v7027, %v8375
      %v8392 = vmul.f32 %v7028, %v8375
      %v8393 = vmul.f32 %v7029, %v8375
      %v8394 = vmul.f32 %v7030, %v8375
      %v8395 = vmul.f32 %v7031, %v8375
      %v8396 = vmul.f32 %v7032, %v8375
      %v8397 = vmul.f32 %v7033, %v8375
      %v8398 = vmul.f32 %v7034, %v8375
      %v8399 = vmul.f32 %v7035, %v8375
      %v8400 = vmul.f32 %v7036, %v8375
      %v8401 = vmul.f32 %v7037, %v8375
      %v8402 = vmul.f32 %v7038, %v8375
      %v8403 = vmul.f32 %v7039, %v8375
      %v8404 = vmul.f32 %v7040, %v8375
      %v8405 = vmul.f32 %v7041, %v8375
      %v8406 = vmul.f32 %v7042, %v8375
      %v8407 = vmul.f32 %v7043, %v8375
      %v8408 = vsel %vm3293, %v8376, 0.0
      %8409 = vadd.xlane.f32.xlu0 %v8408
      %v8410 = vpop.xlane.xlu0 %8409
      %v8411 = vsel %vm3293, %v8377, 0.0
      %8412 = vadd.xlane.f32.xlu0 %v8411
      %v8413 = vpop.xlane.xlu0 %8412
      %v8414 = vsel %vm3293, %v8378, 0.0
      %8415 = vadd.xlane.f32.xlu0 %v8414
      %v8416 = vpop.xlane.xlu0 %8415
      %v8417 = vsel %vm3293, %v8379, 0.0
      %8418 = vadd.xlane.f32.xlu0 %v8417
      %v8419 = vpop.xlane.xlu0 %8418
      %v8420 = vsel %vm3293, %v8380, 0.0
      %8421 = vadd.xlane.f32.xlu0 %v8420
      %v8422 = vpop.xlane.xlu0 %8421
      %v8423 = vsel %vm3293, %v8381, 0.0
      %8424 = vadd.xlane.f32.xlu0 %v8423
      %v8425 = vpop.xlane.xlu0 %8424
      %v8426 = vsel %vm3293, %v8382, 0.0
      %8427 = vadd.xlane.f32.xlu0 %v8426
      %v8428 = vpop.xlane.xlu0 %8427
      %v8429 = vsel %vm3293, %v8383, 0.0
      %8430 = vadd.xlane.f32.xlu0 %v8429
      %v8431 = vpop.xlane.xlu0 %8430
      %v8432 = vsel %vm3293, %v8384, 0.0
      %8433 = vadd.xlane.f32.xlu0 %v8432
      %v8434 = vpop.xlane.xlu0 %8433
      %v8435 = vsel %vm3293, %v8385, 0.0
      %8436 = vadd.xlane.f32.xlu0 %v8435
      %v8437 = vpop.xlane.xlu0 %8436
      %v8438 = vsel %vm3293, %v8386, 0.0
      %8439 = vadd.xlane.f32.xlu0 %v8438
      %v8440 = vpop.xlane.xlu0 %8439
      %v8441 = vsel %vm3293, %v8387, 0.0
      %8442 = vadd.xlane.f32.xlu0 %v8441
      %v8443 = vpop.xlane.xlu0 %8442
      %v8444 = vsel %vm3293, %v8388, 0.0
      %8445 = vadd.xlane.f32.xlu0 %v8444
      %v8446 = vpop.xlane.xlu0 %8445
      %v8447 = vsel %vm3293, %v8389, 0.0
      %8448 = vadd.xlane.f32.xlu0 %v8447
      %v8449 = vpop.xlane.xlu0 %8448
      %v8450 = vsel %vm3293, %v8390, 0.0
      %8451 = vadd.xlane.f32.xlu0 %v8450
      %v8452 = vpop.xlane.xlu0 %8451
      %v8453 = vsel %vm3293, %v8391, 0.0
      %8454 = vadd.xlane.f32.xlu0 %v8453
      %v8455 = vpop.xlane.xlu0 %8454
      %v8456 = vsel %vm3293, %v8392, 0.0
      %8457 = vadd.xlane.f32.xlu0 %v8456
      %v8458 = vpop.xlane.xlu0 %8457
      %v8459 = vsel %vm3293, %v8393, 0.0
      %8460 = vadd.xlane.f32.xlu0 %v8459
      %v8461 = vpop.xlane.xlu0 %8460
      %v8462 = vsel %vm3293, %v8394, 0.0
      %8463 = vadd.xlane.f32.xlu0 %v8462
      %v8464 = vpop.xlane.xlu0 %8463
      %v8465 = vsel %vm3293, %v8395, 0.0
      %8466 = vadd.xlane.f32.xlu0 %v8465
      %v8467 = vpop.xlane.xlu0 %8466
      %v8468 = vsel %vm3293, %v8396, 0.0
      %8469 = vadd.xlane.f32.xlu0 %v8468
      %v8470 = vpop.xlane.xlu0 %8469
      %v8471 = vsel %vm3293, %v8397, 0.0
      %8472 = vadd.xlane.f32.xlu0 %v8471
      %v8473 = vpop.xlane.xlu0 %8472
      %v8474 = vsel %vm3293, %v8398, 0.0
      %8475 = vadd.xlane.f32.xlu0 %v8474
      %v8476 = vpop.xlane.xlu0 %8475
      %v8477 = vsel %vm3293, %v8399, 0.0
      %8478 = vadd.xlane.f32.xlu0 %v8477
      %v8479 = vpop.xlane.xlu0 %8478
      %v8480 = vsel %vm3293, %v8400, 0.0
      %8481 = vadd.xlane.f32.xlu0 %v8480
      %v8482 = vpop.xlane.xlu0 %8481
      %v8483 = vsel %vm3293, %v8401, 0.0
      %8484 = vadd.xlane.f32.xlu0 %v8483
      %v8485 = vpop.xlane.xlu0 %8484
      %v8486 = vsel %vm3293, %v8402, 0.0
      %8487 = vadd.xlane.f32.xlu0 %v8486
      %v8488 = vpop.xlane.xlu0 %8487
      %v8489 = vsel %vm3293, %v8403, 0.0
      %8490 = vadd.xlane.f32.xlu0 %v8489
      %v8491 = vpop.xlane.xlu0 %8490
      %v8492 = vsel %vm3293, %v8404, 0.0
      %8493 = vadd.xlane.f32.xlu0 %v8492
      %v8494 = vpop.xlane.xlu0 %8493
      %v8495 = vsel %vm3293, %v8405, 0.0
      %8496 = vadd.xlane.f32.xlu0 %v8495
      %v8497 = vpop.xlane.xlu0 %8496
      %v8498 = vsel %vm3293, %v8406, 0.0
      %8499 = vadd.xlane.f32.xlu0 %v8498
      %v8500 = vpop.xlane.xlu0 %8499
      %v8501 = vsel %vm3293, %v8407, 0.0
      %8502 = vadd.xlane.f32.xlu0 %v8501
      %v8503 = vpop.xlane.xlu0 %8502
      %v8504 = vadd.f32 %v8339, %v8410
      %v8505 = vadd.f32 %v8340, %v8413
      %v8506 = vadd.f32 %v8341, %v8416
      %v8507 = vadd.f32 %v8342, %v8419
      %v8508 = vadd.f32 %v8343, %v8422
      %v8509 = vadd.f32 %v8344, %v8425
      %v8510 = vadd.f32 %v8345, %v8428
      %v8511 = vadd.f32 %v8346, %v8431
      %v8512 = vadd.f32 %v8347, %v8434
      %v8513 = vadd.f32 %v8348, %v8437
      %v8514 = vadd.f32 %v8349, %v8440
      %v8515 = vadd.f32 %v8350, %v8443
      %v8516 = vadd.f32 %v8351, %v8446
      %v8517 = vadd.f32 %v8352, %v8449
      %v8518 = vadd.f32 %v8353, %v8452
      %v8519 = vadd.f32 %v8354, %v8455
      %v8520 = vadd.f32 %v8355, %v8458
      %v8521 = vadd.f32 %v8356, %v8461
      %v8522 = vadd.f32 %v8357, %v8464
      %v8523 = vadd.f32 %v8358, %v8467
      %v8524 = vadd.f32 %v8359, %v8470
      %v8525 = vadd.f32 %v8360, %v8473
      %v8526 = vadd.f32 %v8361, %v8476
      %v8527 = vadd.f32 %v8362, %v8479
      %v8528 = vadd.f32 %v8363, %v8482
      %v8529 = vadd.f32 %v8364, %v8485
      %v8530 = vadd.f32 %v8365, %v8488
      %v8531 = vadd.f32 %v8366, %v8491
      %v8532 = vadd.f32 %v8367, %v8494
      %v8533 = vadd.f32 %v8368, %v8497
      %v8534 = vadd.f32 %v8369, %v8500
      %v8535 = vadd.f32 %v8370, %v8503
      %8568 = vrot.lane.b32.xlu0 %v8504, 32
      %v8569 = vpop.permute.xlu0 %8568
      %8570 = vrot.lane.b32.xlu0 %v8505, 32
      %v8571 = vpop.permute.xlu0 %8570
      %8572 = vrot.lane.b32.xlu0 %v8506, 32
      %v8573 = vpop.permute.xlu0 %8572
      %8574 = vrot.lane.b32.xlu0 %v8507, 32
      %v8575 = vpop.permute.xlu0 %8574
      %8576 = vrot.lane.b32.xlu0 %v8508, 32
      %v8577 = vpop.permute.xlu0 %8576
      %8578 = vrot.lane.b32.xlu0 %v8509, 32
      %v8579 = vpop.permute.xlu0 %8578
      %8580 = vrot.lane.b32.xlu0 %v8510, 32
      %v8581 = vpop.permute.xlu0 %8580
      %8582 = vrot.lane.b32.xlu0 %v8511, 32
      %v8583 = vpop.permute.xlu0 %8582
      %8584 = vrot.lane.b32.xlu0 %v8512, 32
      %v8585 = vpop.permute.xlu0 %8584
      %8586 = vrot.lane.b32.xlu0 %v8513, 32
      %v8587 = vpop.permute.xlu0 %8586
      %8588 = vrot.lane.b32.xlu0 %v8514, 32
      %v8589 = vpop.permute.xlu0 %8588
      %8590 = vrot.lane.b32.xlu0 %v8515, 32
      %v8591 = vpop.permute.xlu0 %8590
      %8592 = vrot.lane.b32.xlu0 %v8516, 32
      %v8593 = vpop.permute.xlu0 %8592
      %8594 = vrot.lane.b32.xlu0 %v8517, 32
      %v8595 = vpop.permute.xlu0 %8594
      %8596 = vrot.lane.b32.xlu0 %v8518, 32
      %v8597 = vpop.permute.xlu0 %8596
      %8598 = vrot.lane.b32.xlu0 %v8519, 32
      %v8599 = vpop.permute.xlu0 %8598
      %8600 = vrot.lane.b32.xlu0 %v8520, 32
      %v8601 = vpop.permute.xlu0 %8600
      %8602 = vrot.lane.b32.xlu0 %v8521, 32
      %v8603 = vpop.permute.xlu0 %8602
      %8604 = vrot.lane.b32.xlu0 %v8522, 32
      %v8605 = vpop.permute.xlu0 %8604
      %8606 = vrot.lane.b32.xlu0 %v8523, 32
      %v8607 = vpop.permute.xlu0 %8606
      %8608 = vrot.lane.b32.xlu0 %v8524, 32
      %v8609 = vpop.permute.xlu0 %8608
      %8610 = vrot.lane.b32.xlu0 %v8525, 32
      %v8611 = vpop.permute.xlu0 %8610
      %8612 = vrot.lane.b32.xlu0 %v8526, 32
      %v8613 = vpop.permute.xlu0 %8612
      %8614 = vrot.lane.b32.xlu0 %v8527, 32
      %v8615 = vpop.permute.xlu0 %8614
      %8616 = vrot.lane.b32.xlu0 %v8528, 32
      %v8617 = vpop.permute.xlu0 %8616
      %8618 = vrot.lane.b32.xlu0 %v8529, 32
      %v8619 = vpop.permute.xlu0 %8618
      %8620 = vrot.lane.b32.xlu0 %v8530, 32
      %v8621 = vpop.permute.xlu0 %8620
      %8622 = vrot.lane.b32.xlu0 %v8531, 32
      %v8623 = vpop.permute.xlu0 %8622
      %8624 = vrot.lane.b32.xlu0 %v8532, 32
      %v8625 = vpop.permute.xlu0 %8624
      %8626 = vrot.lane.b32.xlu0 %v8533, 32
      %v8627 = vpop.permute.xlu0 %8626
      %8628 = vrot.lane.b32.xlu0 %v8534, 32
      %v8629 = vpop.permute.xlu0 %8628
      %8630 = vrot.lane.b32.xlu0 %v8535, 32
      %v8631 = vpop.permute.xlu0 %8630
      %v8664 = vadd.f32 %v454, %v8569
      %v8665 = vadd.f32 %v455, %v8571
      %v8666 = vadd.f32 %v456, %v8573
      %v8667 = vadd.f32 %v457, %v8575
      %v8668 = vadd.f32 %v458, %v8577
      %v8669 = vadd.f32 %v459, %v8579
      %v8670 = vadd.f32 %v460, %v8581
      %v8671 = vadd.f32 %v461, %v8583
      %v8672 = vadd.f32 %v462, %v8585
      %v8673 = vadd.f32 %v463, %v8587
      %v8674 = vadd.f32 %v464, %v8589
      %v8675 = vadd.f32 %v465, %v8591
      %v8676 = vadd.f32 %v466, %v8593
      %v8677 = vadd.f32 %v467, %v8595
      %v8678 = vadd.f32 %v468, %v8597
      %v8679 = vadd.f32 %v469, %v8599
      %v8680 = vadd.f32 %v470, %v8601
      %v8681 = vadd.f32 %v471, %v8603
      %v8682 = vadd.f32 %v472, %v8605
      %v8683 = vadd.f32 %v473, %v8607
      %v8684 = vadd.f32 %v474, %v8609
      %v8685 = vadd.f32 %v475, %v8611
      %v8686 = vadd.f32 %v476, %v8613
      %v8687 = vadd.f32 %v477, %v8615
      %v8688 = vadd.f32 %v478, %v8617
      %v8689 = vadd.f32 %v479, %v8619
      %v8690 = vadd.f32 %v480, %v8621
      %v8691 = vadd.f32 %v481, %v8623
      %v8692 = vadd.f32 %v482, %v8625
      %v8693 = vadd.f32 %v483, %v8627
      %v8694 = vadd.f32 %v484, %v8629
      %v8695 = vadd.f32 %v485, %v8631
      %8728 = vrot.lane.b32.xlu0 %v8664, 96
      %v8729 = vpop.permute.xlu0 %8728
      %8730 = vrot.lane.b32.xlu0 %v8665, 96
      %v8731 = vpop.permute.xlu0 %8730
      %8732 = vrot.lane.b32.xlu0 %v8666, 96
      %v8733 = vpop.permute.xlu0 %8732
      %8734 = vrot.lane.b32.xlu0 %v8667, 96
      %v8735 = vpop.permute.xlu0 %8734
      %8736 = vrot.lane.b32.xlu0 %v8668, 96
      %v8737 = vpop.permute.xlu0 %8736
      %8738 = vrot.lane.b32.xlu0 %v8669, 96
      %v8739 = vpop.permute.xlu0 %8738
      %8740 = vrot.lane.b32.xlu0 %v8670, 96
      %v8741 = vpop.permute.xlu0 %8740
      %8742 = vrot.lane.b32.xlu0 %v8671, 96
      %v8743 = vpop.permute.xlu0 %8742
      %8744 = vrot.lane.b32.xlu0 %v8672, 96
      %v8745 = vpop.permute.xlu0 %8744
      %8746 = vrot.lane.b32.xlu0 %v8673, 96
      %v8747 = vpop.permute.xlu0 %8746
      %8748 = vrot.lane.b32.xlu0 %v8674, 96
      %v8749 = vpop.permute.xlu0 %8748
      %8750 = vrot.lane.b32.xlu0 %v8675, 96
      %v8751 = vpop.permute.xlu0 %8750
      %8752 = vrot.lane.b32.xlu0 %v8676, 96
      %v8753 = vpop.permute.xlu0 %8752
      %8754 = vrot.lane.b32.xlu0 %v8677, 96
      %v8755 = vpop.permute.xlu0 %8754
      %8756 = vrot.lane.b32.xlu0 %v8678, 96
      %v8757 = vpop.permute.xlu0 %8756
      %8758 = vrot.lane.b32.xlu0 %v8679, 96
      %v8759 = vpop.permute.xlu0 %8758
      %8760 = vrot.lane.b32.xlu0 %v8680, 96
      %v8761 = vpop.permute.xlu0 %8760
      %8762 = vrot.lane.b32.xlu0 %v8681, 96
      %v8763 = vpop.permute.xlu0 %8762
      %8764 = vrot.lane.b32.xlu0 %v8682, 96
      %v8765 = vpop.permute.xlu0 %8764
      %8766 = vrot.lane.b32.xlu0 %v8683, 96
      %v8767 = vpop.permute.xlu0 %8766
      %8768 = vrot.lane.b32.xlu0 %v8684, 96
      %v8769 = vpop.permute.xlu0 %8768
      %8770 = vrot.lane.b32.xlu0 %v8685, 96
      %v8771 = vpop.permute.xlu0 %8770
      %8772 = vrot.lane.b32.xlu0 %v8686, 96
      %v8773 = vpop.permute.xlu0 %8772
      %8774 = vrot.lane.b32.xlu0 %v8687, 96
      %v8775 = vpop.permute.xlu0 %8774
      %8776 = vrot.lane.b32.xlu0 %v8688, 96
      %v8777 = vpop.permute.xlu0 %8776
      %8778 = vrot.lane.b32.xlu0 %v8689, 96
      %v8779 = vpop.permute.xlu0 %8778
      %8780 = vrot.lane.b32.xlu0 %v8690, 96
      %v8781 = vpop.permute.xlu0 %8780
      %8782 = vrot.lane.b32.xlu0 %v8691, 96
      %v8783 = vpop.permute.xlu0 %8782
      %8784 = vrot.lane.b32.xlu0 %v8692, 96
      %v8785 = vpop.permute.xlu0 %8784
      %8786 = vrot.lane.b32.xlu0 %v8693, 96
      %v8787 = vpop.permute.xlu0 %8786
      %8788 = vrot.lane.b32.xlu0 %v8694, 96
      %v8789 = vpop.permute.xlu0 %8788
      %8790 = vrot.lane.b32.xlu0 %v8695, 96
      %v8791 = vpop.permute.xlu0 %8790
      %vm8824 = vcmask 7168
      %8825 = vst.msk [vmem:[%s415] sm:$0xff] %vm8824, %v8729
      %8826 = vst.msk [vmem:[%s415 + $0x8] sm:$0xff] %vm8824, %v8731
      %8827 = vst.msk [vmem:[%s415 + $0x10] sm:$0xff] %vm8824, %v8733
      %8828 = vst.msk [vmem:[%s415 + $0x18] sm:$0xff] %vm8824, %v8735
      %8829 = vst.msk [vmem:[%s415 + $0x20] sm:$0xff] %vm8824, %v8737
      %8830 = vst.msk [vmem:[%s415 + $0x28] sm:$0xff] %vm8824, %v8739
      %8831 = vst.msk [vmem:[%s415 + $0x30] sm:$0xff] %vm8824, %v8741
      %8832 = vst.msk [vmem:[%s415 + $0x38] sm:$0xff] %vm8824, %v8743
      %8833 = vst.msk [vmem:[%s415 + $0x40] sm:$0xff] %vm8824, %v8745
      %8834 = vst.msk [vmem:[%s415 + $0x48] sm:$0xff] %vm8824, %v8747
      %8835 = vst.msk [vmem:[%s415 + $0x50] sm:$0xff] %vm8824, %v8749
      %8836 = vst.msk [vmem:[%s415 + $0x58] sm:$0xff] %vm8824, %v8751
      %8837 = vst.msk [vmem:[%s415 + $0x60] sm:$0xff] %vm8824, %v8753
      %8838 = vst.msk [vmem:[%s415 + $0x68] sm:$0xff] %vm8824, %v8755
      %8839 = vst.msk [vmem:[%s415 + $0x70] sm:$0xff] %vm8824, %v8757
      %8840 = vst.msk [vmem:[%s415 + $0x78] sm:$0xff] %vm8824, %v8759
      %8841 = vst.msk [vmem:[%s415 + $0x80] sm:$0xff] %vm8824, %v8761
      %8842 = vst.msk [vmem:[%s415 + $0x88] sm:$0xff] %vm8824, %v8763
      %8843 = vst.msk [vmem:[%s415 + $0x90] sm:$0xff] %vm8824, %v8765
      %8844 = vst.msk [vmem:[%s415 + $0x98] sm:$0xff] %vm8824, %v8767
      %8845 = vst.msk [vmem:[%s415 + $0xa0] sm:$0xff] %vm8824, %v8769
      %8846 = vst.msk [vmem:[%s415 + $0xa8] sm:$0xff] %vm8824, %v8771
      %8847 = vst.msk [vmem:[%s415 + $0xb0] sm:$0xff] %vm8824, %v8773
      %8848 = vst.msk [vmem:[%s415 + $0xb8] sm:$0xff] %vm8824, %v8775
      %8849 = vst.msk [vmem:[%s415 + $0xc0] sm:$0xff] %vm8824, %v8777
      %8850 = vst.msk [vmem:[%s415 + $0xc8] sm:$0xff] %vm8824, %v8779
      %8851 = vst.msk [vmem:[%s415 + $0xd0] sm:$0xff] %vm8824, %v8781
      %8852 = vst.msk [vmem:[%s415 + $0xd8] sm:$0xff] %vm8824, %v8783
      %8853 = vst.msk [vmem:[%s415 + $0xe0] sm:$0xff] %vm8824, %v8785
      %8854 = vst.msk [vmem:[%s415 + $0xe8] sm:$0xff] %vm8824, %v8787
      %8855 = vst.msk [vmem:[%s415 + $0xf0] sm:$0xff] %vm8824, %v8789
      %8856 = vst.msk [vmem:[%s415 + $0xf8] sm:$0xff] %vm8824, %v8791
      %p8857 = scmp.lt.s32.totalorder %s25, 1
      %s8858 = scalar_select %p8857, %s25, 1
      %s8859 = smul.addr %s8858, 32
      %s8860 = smul.addr %s8859, 8
      %s8861 = scalar_lea.vmem %s12, %s8860
      // Predicated region
      $region69: #{reverse_stage_forward.1} parent=67 // pred_check
        %p8862 = pneg %p300
      $region70: #{reverse_stage_forward.1} parent=67 // pred_check_branch
        %8864 = sbr.rel (%p8862) target = $region72
      $region71: #{reverse_stage_forward.1} parent=67 // pred_region
        _
      $region72: #{reverse_stage_forward.1} parent=67 // pred_fallthru
        _
    $region68: #{reverse_stage_forward.1} parent=5 // pred_fallthru
      _
    %p8865 = scmp.le.s32.totalorder 2, %s20
    // Predicated region
    $region73: #{reverse_stage_forward.1} parent=5 // pred_check
      %p8866 = pneg %p8865
    $region74: #{reverse_stage_forward.1} parent=5 // pred_check_branch
      %8868 = sbr.rel (%p8866) target = $region76
    $region75: #{reverse_stage_forward.1} parent=5 // pred_region
      %s8869 = ssub.s32 %s20, 2
      // Predicated region
      $region77: #{reverse_stage_forward.1} parent=75 // pred_check
        %p8870 = pneg %p306
      $region78: #{reverse_stage_forward.1} parent=75 // pred_check_branch
        %8872 = sbr.rel (%p8870) target = $region80
      $region79: #{reverse_stage_forward.1} parent=75 // pred_region
        %p8873 = scmp.lt.s32.totalorder %s26, 1
        %s8874 = scalar_select %p8873, %s26, 1
        %s8875 = smul.addr %s8874, 32
        %s8876 = smul.addr %s8875, 8
        %s8877 = scalar_lea.vmem %s12, %s8876
      $region80: #{reverse_stage_forward.1} parent=75 // pred_fallthru
        _
    $region76: #{reverse_stage_forward.1} parent=5 // pred_fallthru
      _
  $region6: #{reverse_stage_forward.1} parent=0 // loop_footer
    %s24 = sadd.s32 1, %s20
  $region7: #{reverse_stage_forward.1} parent=0 // loop_footer_branch
    %19 = sbr.rel target = $region3
  $region8: #{reverse_stage_forward.1} parent=0 // loop_exit
    _

</llo_original>
